<compile_context>
chip_gen: v5e
topology: v5e:2x2
jax: 0.10.0
libtpu: 0.0.40
codegen_flags: <defaults>
</compile_context>

<pallas_src>
import functools

import jax
import jax.numpy as jnp
from jax import lax
from jax.experimental import pallas as pl
from jax.experimental.pallas import tpu as pltpu

BN_EPS = 1e-5

_TM_MAX = 1024        # GEMM row tile (multiple of 16 for bf16 sublane packing)
_TK_MAX = 2048        # GEMM K tile (multiple of 128 lanes); most layers get nk == 1
_TM_SPLIT_MIN = 256   # split M into >=2 tiles when P==1 and Mp >= 2*this (v7x megacore)


def _round_up(x, m):
    return (x + m - 1) // m * m


def _default_vmem_limit():
    # Derive the scoped-VMEM budget from the chip with headroom (feedback: do not
    # hand the compiler the entire physical VMEM on v7x).
    try:
        cap = int(pltpu.get_tpu_info().vmem_capacity_bytes)
    except Exception:
        cap = 64 * 1024 * 1024
    return min(int(cap * 3 // 4), 100 * 1024 * 1024)


_VMEM_LIMIT = _default_vmem_limit()


# ----------------------------------------------------------------------------
# Pallas kernel 1: tiled bf16 GEMM (f32 accumulation) with fused epilogue
#   grid = (phase, m_tile[, k_tile]); optional bias / relu / tanh epilogue,
#   optional per-tile per-channel sum / sum^2 outputs (f32) for two-pass BN.
# ----------------------------------------------------------------------------
def _make_gemm_kernel(add_bias, tanh_out, relu_out, compute_stats, multi_k):
    def kernel(*refs):
        i = 0
        a_ref = refs[i]; i += 1
        w_ref = refs[i]; i += 1
        b_ref = None
        if add_bias:
            b_ref = refs[i]; i += 1
        z_ref = refs[i]; i += 1
        zsum_ref = zsq_ref = None
        if compute_stats:
            zsum_ref = refs[i]; i += 1
            zsq_ref = refs[i]; i += 1
        acc_ref = refs[i] if multi_k else None

        def epilogue(z):                       # z: (TM, Cp) f32
            if compute_stats:
                # Padded rows/channels are exactly zero -> contribute nothing.
                zsum_ref[...] = jnp.sum(z, axis=0, keepdims=True).reshape(zsum_ref.shape)
                zsq_ref[...] = jnp.sum(z * z, axis=0, keepdims=True).reshape(zsq_ref.shape)
            if add_bias:
                z = z + b_ref[...]
            if relu_out:
                z = jnp.maximum(z, 0.0)
            if tanh_out:
                z = jnp.tanh(z)
            z_ref[...] = z.astype(z_ref.dtype).reshape(z_ref.shape)

        if multi_k:
            k = pl.program_id(2)

            @pl.when(k == 0)
            def _():
                acc_ref[...] = jnp.zeros_like(acc_ref)

            acc_ref[...] += jnp.dot(a_ref[0], w_ref[0],
                                    preferred_element_type=jnp.float32)

            @pl.when(k == pl.num_programs(2) - 1)
            def _():
                epilogue(acc_ref[...])
        else:
            # nk == 1: single dot per (phase, m) step, no scratch accumulator.
            epilogue(jnp.dot(a_ref[0], w_ref[0],
                             preferred_element_type=jnp.float32))

    return kernel


def phased_gemm(a, w, *, bias=None, tanh_out=False, relu_out=False,
                compute_stats=False, out_dtype=jnp.bfloat16):
    """Batched-over-phase tiled GEMM.

    a: (P, M, K) patches (bf16), w: (P, K, C) weights.  Returns z: (P, Mp, Cp) in
    out_dtype and, if compute_stats, per-tile f32 (sum, sum^2).  Mp/Cp/Kp are
    lane-dense padded; caller slices back.
    """
    P, M, K = a.shape
    C = w.shape[-1]

    Cp = _round_up(C, 256 if C >= 256 else 128)     # 256-wide MXU N on v6e/v7x
    Kp = _round_up(K, 128)
    TK = Kp if Kp <= _TK_MAX else _TK_MAX
    Kp = _round_up(Kp, TK)
    nk = Kp // TK

    Mp = _round_up(M, 16)
    TM = min(Mp, _TM_MAX)
    if P == 1 and Mp <= _TM_MAX and Mp >= 2 * _TM_SPLIT_MIN:
        TM = _round_up((Mp + 1) // 2, 16)           # >=2 parallel M tiles (v7x megacore)
    Mp = _round_up(Mp, TM)
    nm = Mp // TM

    a_p = jnp.pad(a.astype(jnp.bfloat16), ((0, 0), (0, Mp - M), (0, Kp - K)))
    w_p = jnp.pad(w.astype(jnp.bfloat16), ((0, 0), (0, Kp - K), (0, Cp - C)))

    multi_k = nk > 1
    if multi_k:
        grid = (P, nm, nk)
        sems = ("parallel", "parallel", "arbitrary")
        a_spec = pl.BlockSpec((1, TM, TK), lambda p, m, k: (p, m, k))
        w_spec = pl.BlockSpec((1, TK, Cp), lambda p, m, k: (p, k, 0))
        b_spec = pl.BlockSpec((1, Cp), lambda p, m, k: (0, 0))
        z_spec = pl.BlockSpec((1, TM, Cp), lambda p, m, k: (p, m, 0))
        stat_spec = pl.BlockSpec((1, 1, 1, Cp), lambda p, m, k: (p, m, 0, 0))
        scratch = [pltpu.VMEM((TM, Cp), jnp.float32)]
    else:
        grid = (P, nm)
        sems = ("parallel", "parallel")
        a_spec = pl.BlockSpec((1, TM, TK), lambda p, m: (p, m, 0))
        w_spec = pl.BlockSpec((1, TK, Cp), lambda p, m: (p, 0, 0))
        b_spec = pl.BlockSpec((1, Cp), lambda p, m: (0, 0))
        z_spec = pl.BlockSpec((1, TM, Cp), lambda p, m: (p, m, 0))
        stat_spec = pl.BlockSpec((1, 1, 1, Cp), lambda p, m: (p, m, 0, 0))
        scratch = []

    in_specs = [a_spec, w_spec]
    inputs = [a_p, w_p]
    if bias is not None:
        inputs.append(jnp.pad(bias.astype(jnp.float32), (0, Cp - C)).reshape(1, Cp))
        in_specs.append(b_spec)

    z_shape = jax.ShapeDtypeStruct((P, Mp, Cp), out_dtype)
    if compute_stats:
        stat_shape = jax.ShapeDtypeStruct((P, nm, 1, Cp), jnp.float32)
        out_shape = (z_shape, stat_shape, stat_shape)
        out_specs = (z_spec, stat_spec, stat_spec)
    else:
        out_shape = z_shape
        out_specs = z_spec

    return pl.pallas_call(
        _make_gemm_kernel(bias is not None, tanh_out, relu_out, compute_stats, multi_k),
        out_shape=out_shape,
        grid=grid,
        in_specs=in_specs,
        out_specs=out_specs,
        scratch_shapes=scratch,
        compiler_params=pltpu.CompilerParams(
            dimension_semantics=sems,
            vmem_limit_bytes=_VMEM_LIMIT),
    )(*inputs)


# ----------------------------------------------------------------------------
# Pallas kernel 2: BatchNorm affine apply (pass 2 of two-pass BN), optional ReLU.
# ----------------------------------------------------------------------------
def _make_bn_kernel(relu_out):
    def kernel(z_ref, scale_ref, shift_ref, o_ref):
        y = z_ref[0].astype(jnp.float32) * scale_ref[...] + shift_ref[...]
        if relu_out:
            y = jnp.maximum(y, 0.0)
        o_ref[...] = y.astype(o_ref.dtype).reshape(o_ref.shape)
    return kernel


def bn_apply(z, zsum, zsq, gamma, beta, m_true, relu_out=False):
    """z: (P, Mp, Cp) bf16 conv output; zsum/zsq: per-tile f32 channel sums."""
    P, Mp, Cp = z.shape
    C = gamma.shape[0]
    total = jnp.sum(zsum, axis=(0, 1, 2))
    total_sq = jnp.sum(zsq, axis=(0, 1, 2))
    mean = total / m_true
    # NOTE: single-pass E[z^2]-mean^2 in f32 (clamped); a centered second pass would
    # be safer for |mean| >> std, at the cost of re-reading z.
    var = jnp.maximum(total_sq / m_true - mean * mean, 0.0)
    inv = lax.rsqrt(var + BN_EPS)
    g = jnp.pad(gamma.astype(jnp.float32), (0, Cp - C))
    b = jnp.pad(beta.astype(jnp.float32), (0, Cp - C))
    scale = (g * inv).reshape(1, Cp)
    shift = (b - mean * g * inv).reshape(1, Cp)

    TM = Mp if Mp <= _TM_MAX else _TM_MAX
    if Mp % TM:                               # defensive; never hit with our padding
        TM = 16
    if (P == 1 and Mp <= _TM_MAX and Mp >= 2 * _TM_SPLIT_MIN
            and Mp % 2 == 0 and (Mp // 2) % 16 == 0):
        TM = Mp // 2                          # >=2 parallel steps for v7x megacore
    nm = Mp // TM

    return pl.pallas_call(
        _make_bn_kernel(relu_out),
        out_shape=jax.ShapeDtypeStruct((P, Mp, Cp), jnp.bfloat16),
        grid=(P, nm),
        in_specs=[
            pl.BlockSpec((1, TM, Cp), lambda p, m: (p, m, 0)),
            pl.BlockSpec((1, Cp), lambda p, m: (0, 0)),
            pl.BlockSpec((1, Cp), lambda p, m: (0, 0)),
        ],
        out_specs=pl.BlockSpec((1, TM, Cp), lambda p, m: (p, m, 0)),
        compiler_params=pltpu.CompilerParams(
            dimension_semantics=("parallel", "parallel"),
            vmem_limit_bytes=_VMEM_LIMIT),
    )(z, scale, shift)


# ----------------------------------------------------------------------------
# im2col glue (plain JAX, bf16: pad / strided slice; XLA fuses the cast & activation)
# ----------------------------------------------------------------------------
def _im2col(xp, K, stride, Hout, Wout):
    N, _, _, C = xp.shape
    cols = []
    for ki in range(K):
        for kj in range(K):
            cols.append(
                lax.slice(
                    xp,
                    (0, ki, kj, 0),
                    (N, ki + stride * (Hout - 1) + 1, kj + stride * (Wout - 1) + 1, C),
                    (1, stride, stride, 1),
                )
            )
    a = jnp.stack(cols, axis=3)                     # (N, Hout, Wout, K*K, C)
    return a.reshape(N * Hout * Wout, K * K * C)


def _leaky_relu(x):
    return jnp.where(x > 0, x, 0.2 * x)


def conv_down(x, w, pre_act, gamma=None, beta=None, relu_out=False):
    """Conv2d(4,2,1, bias=False) [+ BatchNorm2d] on bf16 NHWC input. w: (4,4,Cin,Cout).
    relu_out fuses the consumer's ReLU into the GEMM epilogue (innermost block only)."""
    N, H, W, Cin = x.shape
    Cout = w.shape[-1]
    Ho, Wo = H // 2, W // 2
    M = N * Ho * Wo
    if pre_act == "leaky":
        x = _leaky_relu(x)
    xp = jnp.pad(x, ((0, 0), (1, 1), (1, 1), (0, 0)))
    a = _im2col(xp, 4, 2, Ho, Wo)[None]             # (1, M, 16*Cin) bf16
    wm = w.reshape(16 * Cin, Cout)[None]            # (1, 16*Cin, Cout)
    if gamma is not None:
        z, zsum, zsq = phased_gemm(a, wm, compute_stats=True)
        y = bn_apply(z, zsum, zsq, gamma, beta, m_true=M)
    else:
        y = phased_gemm(a, wm, relu_out=relu_out)
    return y[0, :M, :Cout].reshape(N, Ho, Wo, Cout)


def conv_transpose_up(x, w, gamma=None, beta=None, bias=None,
                      tanh_out=False, relu_out=False):
    """ConvTranspose2d(4,2,1) [+ BatchNorm2d / bias+Tanh] on bf16 NHWC input.

    Polyphase decomposition: each output phase (sh, sw) in {0,1}^2 is a stride-1 2x2
    conv of the UN-dilated input (no zero-stuffing).  w[kh,kw,ci,co] == torch_w[ci,co,kh,kw].
    The pre-activation ReLU is already folded into the producer (see forward_block),
    so no elementwise pass happens here; relu_out fuses the NEXT ReLU into bn_apply.
    """
    N, H, W, Cin = x.shape
    Cout = w.shape[-1]
    M = N * H * W
    taps = ((3, 1), (2, 0))    # output phase s -> transposed-conv kernel tap index
    a_list, w_list = [], []
    for sh in (0, 1):
        for sw in (0, 1):
            xp = jnp.pad(x, ((0, 0), (1 - sh, sh), (1 - sw, sw), (0, 0)))
            a_list.append(_im2col(xp, 2, 1, H, W))                       # (M, 4*Cin)
            w_list.append(
                jnp.stack([w[taps[sh][a], taps[sw][b]]
                           for a in (0, 1) for b in (0, 1)], axis=0).reshape(4 * Cin, Cout))
    a = jnp.stack(a_list, axis=0)       # (4, M, 4*Cin) bf16
    wm = jnp.stack(w_list, axis=0)      # (4, 4*Cin, Cout)
    if gamma is not None:
        z, zsum, zsq = phased_gemm(a, wm, compute_stats=True)
        y = bn_apply(z, zsum, zsq, gamma, beta, m_true=4 * M, relu_out=relu_out)
    else:
        y = phased_gemm(a, wm, bias=bias, tanh_out=tanh_out, out_dtype=jnp.float32)
    y = y[:, :M, :Cout].reshape(2, 2, N, H, W, Cout)
    # interleave phases: out[n, 2h+sh, 2w+sw, c] = phase(sh,sw)[n, h, w, c]  (bf16 for BN layers)
    y = jnp.transpose(y, (2, 3, 0, 4, 1, 5)).reshape(N, 2 * H, 2 * W, Cout)
    return y


# ----------------------------------------------------------------------------
# U-Net parameter construction (deterministic synthetic init) and forward pass
# ----------------------------------------------------------------------------
def _make_block(key, outer_nc, inner_nc, input_nc=None, submodule=None,
                innermost=False, outermost=False):
    if input_nc is None:
        input_nc = outer_nc
    k = jax.random.split(key, 6)
    p = dict(outermost=outermost, innermost=innermost, sub=submodule)
    # downconv: Conv2d(input_nc -> inner_nc, 4, 2, 1, bias=False)   (BatchNorm => no bias)
    p["down_w"] = 0.05 * jax.random.normal(k[0], (4, 4, input_nc, inner_nc), jnp.float32)
    if (not outermost) and (not innermost):
        p["down_gamma"] = 1.0 + 0.1 * jax.random.normal(k[1], (inner_nc,), jnp.float32)
        p["down_beta"] = 0.1 * jax.random.normal(k[2], (inner_nc,), jnp.float32)
    # upconv: ConvTranspose2d(up_in -> outer_nc, 4, 2, 1)
    up_in = inner_nc if innermost else inner_nc * 2
    p["up_w"] = 0.05 * jax.random.normal(k[3], (4, 4, up_in, outer_nc), jnp.float32)
    if outermost:
        p["up_b"] = 0.1 * jax.random.normal(k[4], (outer_nc,), jnp.float32)  # only conv with bias
    else:
        p["up_gamma"] = 1.0 + 0.1 * jax.random.normal(k[4], (outer_nc,), jnp.float32)
        p["up_beta"] = 0.1 * jax.random.normal(k[5], (outer_nc,), jnp.float32)
    return p


def make_unet_params(key, input_nc, output_nc, num_downs, ngf):
    keys = iter(jax.random.split(key, num_downs + 2))
    blk = _make_block(next(keys), ngf * 8, ngf * 8, innermost=True)
    for _ in range(num_downs - 5):
        blk = _make_block(next(keys), ngf * 8, ngf * 8, submodule=blk)
    blk = _make_block(next(keys), ngf * 4, ngf * 8, submodule=blk)
    blk = _make_block(next(keys), ngf * 2, ngf * 4, submodule=blk)
    blk = _make_block(next(keys), ngf, ngf * 2, submodule=blk)
    blk = _make_block(next(keys), output_nc, ngf, input_nc=input_nc,
                      submodule=blk, outermost=True)
    return blk


def forward_block(p, x):
    """x: bf16 NHWC. Mirrors UnetSkipConnectionBlock.forward.

    For non-outermost blocks this returns relu(cat([x, model(x)], ch)) — the ReLU the
    PARENT applies before its up-conv is folded here (into bn_apply for the y half,
    into the concat copy for the x half), so conv_transpose_up needs no pre-activation.
    relu(cat([x, y])) == cat([relu(x), relu(y)]), so semantics are unchanged.
    """
    if p["outermost"]:
        h = conv_down(x, p["down_w"], pre_act=None)
    elif p["innermost"]:
        # The only consumer of h is the innermost up-conv's ReLU -> fuse it here.
        h = conv_down(x, p["down_w"], pre_act="leaky", relu_out=True)
    else:
        h = conv_down(x, p["down_w"], pre_act="leaky",
                      gamma=p["down_gamma"], beta=p["down_beta"])

    s = forward_block(p["sub"], h) if p["sub"] is not None else h

    if p["outermost"]:
        return conv_transpose_up(s, p["up_w"], bias=p["up_b"], tanh_out=True)
    y = conv_transpose_up(s, p["up_w"], gamma=p["up_gamma"], beta=p["up_beta"],
                          relu_out=True)
    # TODO(synk): the concat itself could be removed by splitting the consumer GEMM's K axis.
    return jnp.concatenate([jnp.maximum(x, 0.0).astype(y.dtype), y], axis=-1)


def unet_generator_forward(params, x_nchw):
    x = jnp.transpose(x_nchw, (0, 2, 3, 1)).astype(jnp.bfloat16)   # NCHW -> NHWC, bf16
    y = forward_block(params, x)                                   # outermost output is f32
    return jnp.transpose(y, (0, 3, 1, 2)).astype(jnp.float32)      # NHWC -> NCHW


# ----------------------------------------------------------------------------
if __name__ == "__main__":
    # Small deterministic config: 3ch -> 3ch, 5 down-samplings, ngf=8.
    # Spatial 32x32 -> 1x1 at the bottleneck (num_downs=5), batch=2.
    input_nc, output_nc, num_downs, ngf = 3, 3, 5, 8
    key = jax.random.PRNGKey(0)
    kp, kx = jax.random.split(key)
    params = make_unet_params(kp, input_nc, output_nc, num_downs, ngf)

    x = jax.random.normal(kx, (2, input_nc, 32, 32), jnp.float32)    # NCHW like PyTorch

    fwd = jax.jit(functools.partial(unet_generator_forward, params))
    out = fwd(x)
    out = jax.block_until_ready(out)

    assert out.shape == (2, output_nc, 32, 32), out.shape
    assert bool(jnp.all(jnp.isfinite(out)))
    print("KERNEL_OK")
</pallas_src>

<mosaic_0001>
module attributes {stable_mosaic.version = 11 : i64} {
  func.func @kernel(%arg0: i32, %arg1: i32, %arg2: memref<1x256x128xbf16, #tpu.memory_space<vmem>>, %arg3: memref<1x128x128xbf16, #tpu.memory_space<vmem>>, %arg4: memref<1x256x128xbf16, #tpu.memory_space<vmem>>) attributes {dimension_semantics = [#tpu.dimension_semantics<parallel>, #tpu.dimension_semantics<parallel>], iteration_bounds = array<i64: 1, 2>, scalar_prefetch = 0 : i64, scratch_operands = 0 : i64, tpu.core_type = #tpu.core_type<tc>, window_params = [{transform_indices = @transform_0, window_bounds = array<i64: 1, 256, 128>}, {transform_indices = @transform_1, window_bounds = array<i64: 1, 128, 128>}, {transform_indices = @transform_2, window_bounds = array<i64: 1, 256, 128>}]} {
    %c0 = arith.constant 0 : index
    %c0_0 = arith.constant 0 : index
    %c0_1 = arith.constant 0 : index
    %0 = vector.load %arg2[%c0, %c0_0, %c0_1] : memref<1x256x128xbf16, #tpu.memory_space<vmem>>, vector<1x256x128xbf16>
    %1 = vector.shape_cast %0 : vector<1x256x128xbf16> to vector<256x128xbf16>
    %c0_2 = arith.constant 0 : index
    %c0_3 = arith.constant 0 : index
    %c0_4 = arith.constant 0 : index
    %2 = vector.load %arg3[%c0_2, %c0_3, %c0_4] : memref<1x128x128xbf16, #tpu.memory_space<vmem>>, vector<1x128x128xbf16>
    %3 = vector.shape_cast %2 : vector<1x128x128xbf16> to vector<128x128xbf16>
    %cst = arith.constant dense<0.000000e+00> : vector<256x128xf32>
    %4 = tpu.matmul %1, %3, %cst {dimension_numbers = #tpu.dot_dimension_numbers<[1], [0], [0], [1], [0, 0, 1, 1], [], []>} : vector<256x128xbf16>, vector<128x128xbf16>, vector<256x128xf32> -> vector<256x128xf32>
    %5 = arith.truncf %4 : vector<256x128xf32> to vector<256x128xbf16>
    %6 = vector.shape_cast %5 : vector<256x128xbf16> to vector<1x256x128xbf16>
    %c0_5 = arith.constant 0 : index
    %c0_6 = arith.constant 0 : index
    %c0_7 = arith.constant 0 : index
    %7 = vector.load %arg4[%c0_5, %c0_6, %c0_7] : memref<1x256x128xbf16, #tpu.memory_space<vmem>>, vector<1x256x128xbf16>
    tpu.vector_store %arg4[%c0_5, %c0_6, %c0_7], %6 {strides = array<i32>} : memref<1x256x128xbf16, #tpu.memory_space<vmem>>, vector<1x256x128xbf16>,
    return
  }
  func.func @transform_0(%arg0: i32, %arg1: i32) -> (i32, i32, i32) {
    %c0_i32 = arith.constant 0 : i32
    %c0_i32_0 = arith.constant 0 : i32
    return %arg0, %arg1, %c0_i32 : i32, i32, i32
  }
  func.func @transform_1(%arg0: i32, %arg1: i32) -> (i32, i32, i32) {
    %c0_i32 = arith.constant 0 : i32
    %c0_i32_0 = arith.constant 0 : i32
    %c0_i32_1 = arith.constant 0 : i32
    return %arg0, %c0_i32, %c0_i32_0 : i32, i32, i32
  }
  func.func @transform_2(%arg0: i32, %arg1: i32) -> (i32, i32, i32) {
    %c0_i32 = arith.constant 0 : i32
    %c0_i32_0 = arith.constant 0 : i32
    return %arg0, %arg1, %c0_i32 : i32, i32, i32
  }
}

module attributes {stable_mosaic.version = 11 : i64} {
  func.func @kernel(%arg0: i32, %arg1: i32, %arg2: memref<1x128x128xbf16, #tpu.memory_space<vmem>>, %arg3: memref<1x128x128xbf16, #tpu.memory_space<vmem>>, %arg4: memref<1x128x128xbf16, #tpu.memory_space<vmem>>, %arg5: memref<1x1x1x128xf32, #tpu.memory_space<vmem>>, %arg6: memref<1x1x1x128xf32, #tpu.memory_space<vmem>>) attributes {dimension_semantics = [#tpu.dimension_semantics<parallel>, #tpu.dimension_semantics<parallel>], iteration_bounds = array<i64: 1, 1>, scalar_prefetch = 0 : i64, scratch_operands = 0 : i64, tpu.core_type = #tpu.core_type<tc>, window_params = [{transform_indices = @transform_0, window_bounds = array<i64: 1, 128, 128>}, {transform_indices = @transform_1, window_bounds = array<i64: 1, 128, 128>}, {transform_indices = @transform_2, window_bounds = array<i64: 1, 128, 128>}, {transform_indices = @transform_3, window_bounds = array<i64: 1, 1, 1, 128>}, {transform_indices = @transform_4, window_bounds = array<i64: 1, 1, 1, 128>}]} {
    %c0 = arith.constant 0 : index
    %c0_0 = arith.constant 0 : index
    %c0_1 = arith.constant 0 : index
    %0 = vector.load %arg2[%c0, %c0_0, %c0_1] : memref<1x128x128xbf16, #tpu.memory_space<vmem>>, vector<1x128x128xbf16>
    %1 = vector.shape_cast %0 : vector<1x128x128xbf16> to vector<128x128xbf16>
    %c0_2 = arith.constant 0 : index
    %c0_3 = arith.constant 0 : index
    %c0_4 = arith.constant 0 : index
    %2 = vector.load %arg3[%c0_2, %c0_3, %c0_4] : memref<1x128x128xbf16, #tpu.memory_space<vmem>>, vector<1x128x128xbf16>
    %3 = vector.shape_cast %2 : vector<1x128x128xbf16> to vector<128x128xbf16>
    %cst = arith.constant dense<0.000000e+00> : vector<128x128xf32>
    %4 = tpu.matmul %1, %3, %cst {dimension_numbers = #tpu.dot_dimension_numbers<[1], [0], [0], [1], [0, 0, 1, 1], [], []>} : vector<128x128xbf16>, vector<128x128xbf16>, vector<128x128xf32> -> vector<128x128xf32>
    %cst_5 = arith.constant dense<0.000000e+00> : vector<128xf32>
    %5 = vector.multi_reduction <add>, %4, %cst_5 [0] : vector<128x128xf32> to vector<128xf32>
    %6 = vector.shape_cast %5 : vector<128xf32> to vector<1x128xf32>
    %7 = vector.shape_cast %6 : vector<1x128xf32> to vector<1x1x1x128xf32>
    %c0_6 = arith.constant 0 : index
    %c0_7 = arith.constant 0 : index
    %c0_8 = arith.constant 0 : index
    %c0_9 = arith.constant 0 : index
    %8 = vector.load %arg5[%c0_6, %c0_7, %c0_8, %c0_9] : memref<1x1x1x128xf32, #tpu.memory_space<vmem>>, vector<1x1x1x128xf32>
    tpu.vector_store %arg5[%c0_6, %c0_7, %c0_8, %c0_9], %7 {strides = array<i32>} : memref<1x1x1x128xf32, #tpu.memory_space<vmem>>, vector<1x1x1x128xf32>,
    %9 = arith.mulf %4, %4 : vector<128x128xf32>
    %cst_10 = arith.constant dense<0.000000e+00> : vector<128xf32>
    %10 = vector.multi_reduction <add>, %9, %cst_10 [0] : vector<128x128xf32> to vector<128xf32>
    %11 = vector.shape_cast %10 : vector<128xf32> to vector<1x128xf32>
    %12 = vector.shape_cast %11 : vector<1x128xf32> to vector<1x1x1x128xf32>
    %c0_11 = arith.constant 0 : index
    %c0_12 = arith.constant 0 : index
    %c0_13 = arith.constant 0 : index
    %c0_14 = arith.constant 0 : index
    %13 = vector.load %arg6[%c0_11, %c0_12, %c0_13, %c0_14] : memref<1x1x1x128xf32, #tpu.memory_space<vmem>>, vector<1x1x1x128xf32>
    tpu.vector_store %arg6[%c0_11, %c0_12, %c0_13, %c0_14], %12 {strides = array<i32>} : memref<1x1x1x128xf32, #tpu.memory_space<vmem>>, vector<1x1x1x128xf32>,
    %14 = arith.truncf %4 : vector<128x128xf32> to vector<128x128xbf16>
    %15 = vector.shape_cast %14 : vector<128x128xbf16> to vector<1x128x128xbf16>
    %c0_15 = arith.constant 0 : index
    %c0_16 = arith.constant 0 : index
    %c0_17 = arith.constant 0 : index
    %16 = vector.load %arg4[%c0_15, %c0_16, %c0_17] : memref<1x128x128xbf16, #tpu.memory_space<vmem>>, vector<1x128x128xbf16>
    tpu.vector_store %arg4[%c0_15, %c0_16, %c0_17], %15 {strides = array<i32>} : memref<1x128x128xbf16, #tpu.memory_space<vmem>>, vector<1x128x128xbf16>,
    return
  }
  func.func @transform_0(%arg0: i32, %arg1: i32) -> (i32, i32, i32) {
    %c0_i32 = arith.constant 0 : i32
    %c0_i32_0 = arith.constant 0 : i32
    return %arg0, %arg1, %c0_i32 : i32, i32, i32
  }
  func.func @transform_1(%arg0: i32, %arg1: i32) -> (i32, i32, i32) {
    %c0_i32 = arith.constant 0 : i32
    %c0_i32_0 = arith.constant 0 : i32
    %c0_i32_1 = arith.constant 0 : i32
    return %arg0, %c0_i32, %c0_i32_0 : i32, i32, i32
  }
  func.func @transform_2(%arg0: i32, %arg1: i32) -> (i32, i32, i32) {
    %c0_i32 = arith.constant 0 : i32
    %c0_i32_0 = arith.constant 0 : i32
    return %arg0, %arg1, %c0_i32 : i32, i32, i32
  }
  func.func @transform_3(%arg0: i32, %arg1: i32) -> (i32, i32, i32, i32) {
    %c0_i32 = arith.constant 0 : i32
    %c0_i32_0 = arith.constant 0 : i32
    %c0_i32_1 = arith.constant 0 : i32
    return %arg0, %arg1, %c0_i32, %c0_i32_0 : i32, i32, i32, i32
  }
  func.func @transform_4(%arg0: i32, %arg1: i32) -> (i32, i32, i32, i32) {
    %c0_i32 = arith.constant 0 : i32
    %c0_i32_0 = arith.constant 0 : i32
    %c0_i32_1 = arith.constant 0 : i32
    return %arg0, %arg1, %c0_i32, %c0_i32_0 : i32, i32, i32, i32
  }
}

module attributes {stable_mosaic.version = 11 : i64} {
  func.func @kernel(%arg0: i32, %arg1: i32, %arg2: memref<1x128x128xbf16, #tpu.memory_space<vmem>>, %arg3: memref<1x128xf32, #tpu.memory_space<vmem>>, %arg4: memref<1x128xf32, #tpu.memory_space<vmem>>, %arg5: memref<1x128x128xbf16, #tpu.memory_space<vmem>>) attributes {dimension_semantics = [#tpu.dimension_semantics<parallel>, #tpu.dimension_semantics<parallel>], iteration_bounds = array<i64: 1, 1>, scalar_prefetch = 0 : i64, scratch_operands = 0 : i64, tpu.core_type = #tpu.core_type<tc>, window_params = [{transform_indices = @transform_0, window_bounds = array<i64: 1, 128, 128>}, {pipeline_mode = #tpu.pipeline_mode<synchronous>, transform_indices = @transform_1, window_bounds = array<i64: 1, 128>}, {pipeline_mode = #tpu.pipeline_mode<synchronous>, transform_indices = @transform_2, window_bounds = array<i64: 1, 128>}, {transform_indices = @transform_3, window_bounds = array<i64: 1, 128, 128>}]} {
    %c0 = arith.constant 0 : index
    %c0_0 = arith.constant 0 : index
    %c0_1 = arith.constant 0 : index
    %0 = vector.load %arg2[%c0, %c0_0, %c0_1] : memref<1x128x128xbf16, #tpu.memory_space<vmem>>, vector<1x128x128xbf16>
    %1 = vector.shape_cast %0 : vector<1x128x128xbf16> to vector<128x128xbf16>
    %2 = arith.extf %1 : vector<128x128xbf16> to vector<128x128xf32>
    %c0_2 = arith.constant 0 : index
    %c0_3 = arith.constant 0 : index
    %3 = vector.load %arg3[%c0_2, %c0_3] : memref<1x128xf32, #tpu.memory_space<vmem>>, vector<1x128xf32>
    %4 = vector.broadcast %3 : vector<1x128xf32> to vector<128x128xf32>
    %5 = arith.mulf %2, %4 : vector<128x128xf32>
    %c0_4 = arith.constant 0 : index
    %c0_5 = arith.constant 0 : index
    %6 = vector.load %arg4[%c0_4, %c0_5] : memref<1x128xf32, #tpu.memory_space<vmem>>, vector<1x128xf32>
    %7 = vector.broadcast %6 : vector<1x128xf32> to vector<128x128xf32>
    %8 = arith.addf %5, %7 : vector<128x128xf32>
    %9 = arith.truncf %8 : vector<128x128xf32> to vector<128x128xbf16>
    %10 = vector.shape_cast %9 : vector<128x128xbf16> to vector<1x128x128xbf16>
    %c0_6 = arith.constant 0 : index
    %c0_7 = arith.constant 0 : index
    %c0_8 = arith.constant 0 : index
    %11 = vector.load %arg5[%c0_6, %c0_7, %c0_8] : memref<1x128x128xbf16, #tpu.memory_space<vmem>>, vector<1x128x128xbf16>
    tpu.vector_store %arg5[%c0_6, %c0_7, %c0_8], %10 {strides = array<i32>} : memref<1x128x128xbf16, #tpu.memory_space<vmem>>, vector<1x128x128xbf16>,
    return
  }
  func.func @transform_0(%arg0: i32, %arg1: i32) -> (i32, i32, i32) {
    %c0_i32 = arith.constant 0 : i32
    %c0_i32_0 = arith.constant 0 : i32
    return %arg0, %arg1, %c0_i32 : i32, i32, i32
  }
  func.func @transform_1(%arg0: i32, %arg1: i32) -> (i32, i32) {
    %c0_i32 = arith.constant 0 : i32
    %c0_i32_0 = arith.constant 0 : i32
    %c0_i32_1 = arith.constant 0 : i32
    return %c0_i32, %c0_i32_0 : i32, i32
  }
  func.func @transform_2(%arg0: i32, %arg1: i32) -> (i32, i32) {
    %c0_i32 = arith.constant 0 : i32
    %c0_i32_0 = arith.constant 0 : i32
    %c0_i32_1 = arith.constant 0 : i32
    return %c0_i32, %c0_i32_0 : i32, i32
  }
  func.func @transform_3(%arg0: i32, %arg1: i32) -> (i32, i32, i32) {
    %c0_i32 = arith.constant 0 : i32
    %c0_i32_0 = arith.constant 0 : i32
    return %arg0, %arg1, %c0_i32 : i32, i32, i32
  }
}

module attributes {stable_mosaic.version = 11 : i64} {
  func.func @kernel(%arg0: i32, %arg1: i32, %arg2: memref<1x32x128xbf16, #tpu.memory_space<vmem>>, %arg3: memref<1x128xf32, #tpu.memory_space<vmem>>, %arg4: memref<1x128xf32, #tpu.memory_space<vmem>>, %arg5: memref<1x32x128xbf16, #tpu.memory_space<vmem>>) attributes {dimension_semantics = [#tpu.dimension_semantics<parallel>, #tpu.dimension_semantics<parallel>], iteration_bounds = array<i64: 1, 1>, scalar_prefetch = 0 : i64, scratch_operands = 0 : i64, tpu.core_type = #tpu.core_type<tc>, window_params = [{transform_indices = @transform_0, window_bounds = array<i64: 1, 32, 128>}, {pipeline_mode = #tpu.pipeline_mode<synchronous>, transform_indices = @transform_1, window_bounds = array<i64: 1, 128>}, {pipeline_mode = #tpu.pipeline_mode<synchronous>, transform_indices = @transform_2, window_bounds = array<i64: 1, 128>}, {transform_indices = @transform_3, window_bounds = array<i64: 1, 32, 128>}]} {
    %c0 = arith.constant 0 : index
    %c0_0 = arith.constant 0 : index
    %c0_1 = arith.constant 0 : index
    %0 = vector.load %arg2[%c0, %c0_0, %c0_1] : memref<1x32x128xbf16, #tpu.memory_space<vmem>>, vector<1x32x128xbf16>
    %1 = vector.shape_cast %0 : vector<1x32x128xbf16> to vector<32x128xbf16>
    %2 = arith.extf %1 : vector<32x128xbf16> to vector<32x128xf32>
    %c0_2 = arith.constant 0 : index
    %c0_3 = arith.constant 0 : index
    %3 = vector.load %arg3[%c0_2, %c0_3] : memref<1x128xf32, #tpu.memory_space<vmem>>, vector<1x128xf32>
    %4 = vector.broadcast %3 : vector<1x128xf32> to vector<32x128xf32>
    %5 = arith.mulf %2, %4 : vector<32x128xf32>
    %c0_4 = arith.constant 0 : index
    %c0_5 = arith.constant 0 : index
    %6 = vector.load %arg4[%c0_4, %c0_5] : memref<1x128xf32, #tpu.memory_space<vmem>>, vector<1x128xf32>
    %7 = vector.broadcast %6 : vector<1x128xf32> to vector<32x128xf32>
    %8 = arith.addf %5, %7 : vector<32x128xf32>
    %9 = arith.truncf %8 : vector<32x128xf32> to vector<32x128xbf16>
    %10 = vector.shape_cast %9 : vector<32x128xbf16> to vector<1x32x128xbf16>
    %c0_6 = arith.constant 0 : index
    %c0_7 = arith.constant 0 : index
    %c0_8 = arith.constant 0 : index
    %11 = vector.load %arg5[%c0_6, %c0_7, %c0_8] : memref<1x32x128xbf16, #tpu.memory_space<vmem>>, vector<1x32x128xbf16>
    tpu.vector_store %arg5[%c0_6, %c0_7, %c0_8], %10 {strides = array<i32>} : memref<1x32x128xbf16, #tpu.memory_space<vmem>>, vector<1x32x128xbf16>,
    return
  }
  func.func @transform_0(%arg0: i32, %arg1: i32) -> (i32, i32, i32) {
    %c0_i32 = arith.constant 0 : i32
    %c0_i32_0 = arith.constant 0 : i32
    return %arg0, %arg1, %c0_i32 : i32, i32, i32
  }
  func.func @transform_1(%arg0: i32, %arg1: i32) -> (i32, i32) {
    %c0_i32 = arith.constant 0 : i32
    %c0_i32_0 = arith.constant 0 : i32
    %c0_i32_1 = arith.constant 0 : i32
    return %c0_i32, %c0_i32_0 : i32, i32
  }
  func.func @transform_2(%arg0: i32, %arg1: i32) -> (i32, i32) {
    %c0_i32 = arith.constant 0 : i32
    %c0_i32_0 = arith.constant 0 : i32
    %c0_i32_1 = arith.constant 0 : i32
    return %c0_i32, %c0_i32_0 : i32, i32
  }
  func.func @transform_3(%arg0: i32, %arg1: i32) -> (i32, i32, i32) {
    %c0_i32 = arith.constant 0 : i32
    %c0_i32_0 = arith.constant 0 : i32
    return %arg0, %arg1, %c0_i32 : i32, i32, i32
  }
}

module attributes {stable_mosaic.version = 11 : i64} {
  func.func @kernel(%arg0: i32, %arg1: i32, %arg2: memref<1x32x256xbf16, #tpu.memory_space<vmem>>, %arg3: memref<1x256x128xbf16, #tpu.memory_space<vmem>>, %arg4: memref<1x32x128xbf16, #tpu.memory_space<vmem>>, %arg5: memref<1x1x1x128xf32, #tpu.memory_space<vmem>>, %arg6: memref<1x1x1x128xf32, #tpu.memory_space<vmem>>) attributes {dimension_semantics = [#tpu.dimension_semantics<parallel>, #tpu.dimension_semantics<parallel>], iteration_bounds = array<i64: 1, 1>, scalar_prefetch = 0 : i64, scratch_operands = 0 : i64, tpu.core_type = #tpu.core_type<tc>, window_params = [{transform_indices = @transform_0, window_bounds = array<i64: 1, 32, 256>}, {transform_indices = @transform_1, window_bounds = array<i64: 1, 256, 128>}, {transform_indices = @transform_2, window_bounds = array<i64: 1, 32, 128>}, {transform_indices = @transform_3, window_bounds = array<i64: 1, 1, 1, 128>}, {transform_indices = @transform_4, window_bounds = array<i64: 1, 1, 1, 128>}]} {
    %c0 = arith.constant 0 : index
    %c0_0 = arith.constant 0 : index
    %c0_1 = arith.constant 0 : index
    %0 = vector.load %arg2[%c0, %c0_0, %c0_1] : memref<1x32x256xbf16, #tpu.memory_space<vmem>>, vector<1x32x256xbf16>
    %1 = vector.shape_cast %0 : vector<1x32x256xbf16> to vector<32x256xbf16>
    %c0_2 = arith.constant 0 : index
    %c0_3 = arith.constant 0 : index
    %c0_4 = arith.constant 0 : index
    %2 = vector.load %arg3[%c0_2, %c0_3, %c0_4] : memref<1x256x128xbf16, #tpu.memory_space<vmem>>, vector<1x256x128xbf16>
    %3 = vector.shape_cast %2 : vector<1x256x128xbf16> to vector<256x128xbf16>
    %cst = arith.constant dense<0.000000e+00> : vector<32x128xf32>
    %4 = tpu.matmul %1, %3, %cst {dimension_numbers = #tpu.dot_dimension_numbers<[1], [0], [0], [1], [0, 0, 1, 1], [], []>} : vector<32x256xbf16>, vector<256x128xbf16>, vector<32x128xf32> -> vector<32x128xf32>
    %cst_5 = arith.constant dense<0.000000e+00> : vector<128xf32>
    %5 = vector.multi_reduction <add>, %4, %cst_5 [0] : vector<32x128xf32> to vector<128xf32>
    %6 = vector.shape_cast %5 : vector<128xf32> to vector<1x128xf32>
    %7 = vector.shape_cast %6 : vector<1x128xf32> to vector<1x1x1x128xf32>
    %c0_6 = arith.constant 0 : index
    %c0_7 = arith.constant 0 : index
    %c0_8 = arith.constant 0 : index
    %c0_9 = arith.constant 0 : index
    %8 = vector.load %arg5[%c0_6, %c0_7, %c0_8, %c0_9] : memref<1x1x1x128xf32, #tpu.memory_space<vmem>>, vector<1x1x1x128xf32>
    tpu.vector_store %arg5[%c0_6, %c0_7, %c0_8, %c0_9], %7 {strides = array<i32>} : memref<1x1x1x128xf32, #tpu.memory_space<vmem>>, vector<1x1x1x128xf32>,
    %9 = arith.mulf %4, %4 : vector<32x128xf32>
    %cst_10 = arith.constant dense<0.000000e+00> : vector<128xf32>
    %10 = vector.multi_reduction <add>, %9, %cst_10 [0] : vector<32x128xf32> to vector<128xf32>
    %11 = vector.shape_cast %10 : vector<128xf32> to vector<1x128xf32>
    %12 = vector.shape_cast %11 : vector<1x128xf32> to vector<1x1x1x128xf32>
    %c0_11 = arith.constant 0 : index
    %c0_12 = arith.constant 0 : index
    %c0_13 = arith.constant 0 : index
    %c0_14 = arith.constant 0 : index
    %13 = vector.load %arg6[%c0_11, %c0_12, %c0_13, %c0_14] : memref<1x1x1x128xf32, #tpu.memory_space<vmem>>, vector<1x1x1x128xf32>
    tpu.vector_store %arg6[%c0_11, %c0_12, %c0_13, %c0_14], %12 {strides = array<i32>} : memref<1x1x1x128xf32, #tpu.memory_space<vmem>>, vector<1x1x1x128xf32>,
    %14 = arith.truncf %4 : vector<32x128xf32> to vector<32x128xbf16>
    %15 = vector.shape_cast %14 : vector<32x128xbf16> to vector<1x32x128xbf16>
    %c0_15 = arith.constant 0 : index
    %c0_16 = arith.constant 0 : index
    %c0_17 = arith.constant 0 : index
    %16 = vector.load %arg4[%c0_15, %c0_16, %c0_17] : memref<1x32x128xbf16, #tpu.memory_space<vmem>>, vector<1x32x128xbf16>
    tpu.vector_store %arg4[%c0_15, %c0_16, %c0_17], %15 {strides = array<i32>} : memref<1x32x128xbf16, #tpu.memory_space<vmem>>, vector<1x32x128xbf16>,
    return
  }
  func.func @transform_0(%arg0: i32, %arg1: i32) -> (i32, i32, i32) {
    %c0_i32 = arith.constant 0 : i32
    %c0_i32_0 = arith.constant 0 : i32
    return %arg0, %arg1, %c0_i32 : i32, i32, i32
  }
  func.func @transform_1(%arg0: i32, %arg1: i32) -> (i32, i32, i32) {
    %c0_i32 = arith.constant 0 : i32
    %c0_i32_0 = arith.constant 0 : i32
    %c0_i32_1 = arith.constant 0 : i32
    return %arg0, %c0_i32, %c0_i32_0 : i32, i32, i32
  }
  func.func @transform_2(%arg0: i32, %arg1: i32) -> (i32, i32, i32) {
    %c0_i32 = arith.constant 0 : i32
    %c0_i32_0 = arith.constant 0 : i32
    return %arg0, %arg1, %c0_i32 : i32, i32, i32
  }
  func.func @transform_3(%arg0: i32, %arg1: i32) -> (i32, i32, i32, i32) {
    %c0_i32 = arith.constant 0 : i32
    %c0_i32_0 = arith.constant 0 : i32
    %c0_i32_1 = arith.constant 0 : i32
    return %arg0, %arg1, %c0_i32, %c0_i32_0 : i32, i32, i32, i32
  }
  func.func @transform_4(%arg0: i32, %arg1: i32) -> (i32, i32, i32, i32) {
    %c0_i32 = arith.constant 0 : i32
    %c0_i32_0 = arith.constant 0 : i32
    %c0_i32_1 = arith.constant 0 : i32
    return %arg0, %arg1, %c0_i32, %c0_i32_0 : i32, i32, i32, i32
  }
}

module attributes {stable_mosaic.version = 11 : i64} {
  func.func @kernel(%arg0: i32, %arg1: i32, %arg2: memref<1x16x512xbf16, #tpu.memory_space<vmem>>, %arg3: memref<1x512x128xbf16, #tpu.memory_space<vmem>>, %arg4: memref<1x16x128xbf16, #tpu.memory_space<vmem>>, %arg5: memref<1x1x1x128xf32, #tpu.memory_space<vmem>>, %arg6: memref<1x1x1x128xf32, #tpu.memory_space<vmem>>) attributes {dimension_semantics = [#tpu.dimension_semantics<parallel>, #tpu.dimension_semantics<parallel>], iteration_bounds = array<i64: 1, 1>, scalar_prefetch = 0 : i64, scratch_operands = 0 : i64, tpu.core_type = #tpu.core_type<tc>, window_params = [{transform_indices = @transform_0, window_bounds = array<i64: 1, 16, 512>}, {transform_indices = @transform_1, window_bounds = array<i64: 1, 512, 128>}, {transform_indices = @transform_2, window_bounds = array<i64: 1, 16, 128>}, {transform_indices = @transform_3, window_bounds = array<i64: 1, 1, 1, 128>}, {transform_indices = @transform_4, window_bounds = array<i64: 1, 1, 1, 128>}]} {
    %c0 = arith.constant 0 : index
    %c0_0 = arith.constant 0 : index
    %c0_1 = arith.constant 0 : index
    %0 = vector.load %arg2[%c0, %c0_0, %c0_1] : memref<1x16x512xbf16, #tpu.memory_space<vmem>>, vector<1x16x512xbf16>
    %1 = vector.shape_cast %0 : vector<1x16x512xbf16> to vector<16x512xbf16>
    %c0_2 = arith.constant 0 : index
    %c0_3 = arith.constant 0 : index
    %c0_4 = arith.constant 0 : index
    %2 = vector.load %arg3[%c0_2, %c0_3, %c0_4] : memref<1x512x128xbf16, #tpu.memory_space<vmem>>, vector<1x512x128xbf16>
    %3 = vector.shape_cast %2 : vector<1x512x128xbf16> to vector<512x128xbf16>
    %cst = arith.constant dense<0.000000e+00> : vector<16x128xf32>
    %4 = tpu.matmul %1, %3, %cst {dimension_numbers = #tpu.dot_dimension_numbers<[1], [0], [0], [1], [0, 0, 1, 1], [], []>} : vector<16x512xbf16>, vector<512x128xbf16>, vector<16x128xf32> -> vector<16x128xf32>
    %cst_5 = arith.constant dense<0.000000e+00> : vector<128xf32>
    %5 = vector.multi_reduction <add>, %4, %cst_5 [0] : vector<16x128xf32> to vector<128xf32>
    %6 = vector.shape_cast %5 : vector<128xf32> to vector<1x128xf32>
    %7 = vector.shape_cast %6 : vector<1x128xf32> to vector<1x1x1x128xf32>
    %c0_6 = arith.constant 0 : index
    %c0_7 = arith.constant 0 : index
    %c0_8 = arith.constant 0 : index
    %c0_9 = arith.constant 0 : index
    %8 = vector.load %arg5[%c0_6, %c0_7, %c0_8, %c0_9] : memref<1x1x1x128xf32, #tpu.memory_space<vmem>>, vector<1x1x1x128xf32>
    tpu.vector_store %arg5[%c0_6, %c0_7, %c0_8, %c0_9], %7 {strides = array<i32>} : memref<1x1x1x128xf32, #tpu.memory_space<vmem>>, vector<1x1x1x128xf32>,
    %9 = arith.mulf %4, %4 : vector<16x128xf32>
    %cst_10 = arith.constant dense<0.000000e+00> : vector<128xf32>
    %10 = vector.multi_reduction <add>, %9, %cst_10 [0] : vector<16x128xf32> to vector<128xf32>
    %11 = vector.shape_cast %10 : vector<128xf32> to vector<1x128xf32>
    %12 = vector.shape_cast %11 : vector<1x128xf32> to vector<1x1x1x128xf32>
    %c0_11 = arith.constant 0 : index
    %c0_12 = arith.constant 0 : index
    %c0_13 = arith.constant 0 : index
    %c0_14 = arith.constant 0 : index
    %13 = vector.load %arg6[%c0_11, %c0_12, %c0_13, %c0_14] : memref<1x1x1x128xf32, #tpu.memory_space<vmem>>, vector<1x1x1x128xf32>
    tpu.vector_store %arg6[%c0_11, %c0_12, %c0_13, %c0_14], %12 {strides = array<i32>} : memref<1x1x1x128xf32, #tpu.memory_space<vmem>>, vector<1x1x1x128xf32>,
    %14 = arith.truncf %4 : vector<16x128xf32> to vector<16x128xbf16>
    %15 = vector.shape_cast %14 : vector<16x128xbf16> to vector<1x16x128xbf16>
    %c0_15 = arith.constant 0 : index
    %c0_16 = arith.constant 0 : index
    %c0_17 = arith.constant 0 : index
    %16 = vector.load %arg4[%c0_15, %c0_16, %c0_17] : memref<1x16x128xbf16, #tpu.memory_space<vmem>>, vector<1x16x128xbf16>
    tpu.vector_store %arg4[%c0_15, %c0_16, %c0_17], %15 {strides = array<i32>} : memref<1x16x128xbf16, #tpu.memory_space<vmem>>, vector<1x16x128xbf16>,
    return
  }
  func.func @transform_0(%arg0: i32, %arg1: i32) -> (i32, i32, i32) {
    %c0_i32 = arith.constant 0 : i32
    %c0_i32_0 = arith.constant 0 : i32
    return %arg0, %arg1, %c0_i32 : i32, i32, i32
  }
  func.func @transform_1(%arg0: i32, %arg1: i32) -> (i32, i32, i32) {
    %c0_i32 = arith.constant 0 : i32
    %c0_i32_0 = arith.constant 0 : i32
    %c0_i32_1 = arith.constant 0 : i32
    return %arg0, %c0_i32, %c0_i32_0 : i32, i32, i32
  }
  func.func @transform_2(%arg0: i32, %arg1: i32) -> (i32, i32, i32) {
    %c0_i32 = arith.constant 0 : i32
    %c0_i32_0 = arith.constant 0 : i32
    return %arg0, %arg1, %c0_i32 : i32, i32, i32
  }
  func.func @transform_3(%arg0: i32, %arg1: i32) -> (i32, i32, i32, i32) {
    %c0_i32 = arith.constant 0 : i32
    %c0_i32_0 = arith.constant 0 : i32
    %c0_i32_1 = arith.constant 0 : i32
    return %arg0, %arg1, %c0_i32, %c0_i32_0 : i32, i32, i32, i32
  }
  func.func @transform_4(%arg0: i32, %arg1: i32) -> (i32, i32, i32, i32) {
    %c0_i32 = arith.constant 0 : i32
    %c0_i32_0 = arith.constant 0 : i32
    %c0_i32_1 = arith.constant 0 : i32
    return %arg0, %arg1, %c0_i32, %c0_i32_0 : i32, i32, i32, i32
  }
}

module attributes {stable_mosaic.version = 11 : i64} {
  func.func @kernel(%arg0: i32, %arg1: i32, %arg2: memref<1x16x128xbf16, #tpu.memory_space<vmem>>, %arg3: memref<1x128xf32, #tpu.memory_space<vmem>>, %arg4: memref<1x128xf32, #tpu.memory_space<vmem>>, %arg5: memref<1x16x128xbf16, #tpu.memory_space<vmem>>) attributes {dimension_semantics = [#tpu.dimension_semantics<parallel>, #tpu.dimension_semantics<parallel>], iteration_bounds = array<i64: 1, 1>, scalar_prefetch = 0 : i64, scratch_operands = 0 : i64, tpu.core_type = #tpu.core_type<tc>, window_params = [{transform_indices = @transform_0, window_bounds = array<i64: 1, 16, 128>}, {pipeline_mode = #tpu.pipeline_mode<synchronous>, transform_indices = @transform_1, window_bounds = array<i64: 1, 128>}, {pipeline_mode = #tpu.pipeline_mode<synchronous>, transform_indices = @transform_2, window_bounds = array<i64: 1, 128>}, {transform_indices = @transform_3, window_bounds = array<i64: 1, 16, 128>}]} {
    %c0 = arith.constant 0 : index
    %c0_0 = arith.constant 0 : index
    %c0_1 = arith.constant 0 : index
    %0 = vector.load %arg2[%c0, %c0_0, %c0_1] : memref<1x16x128xbf16, #tpu.memory_space<vmem>>, vector<1x16x128xbf16>
    %1 = vector.shape_cast %0 : vector<1x16x128xbf16> to vector<16x128xbf16>
    %2 = arith.extf %1 : vector<16x128xbf16> to vector<16x128xf32>
    %c0_2 = arith.constant 0 : index
    %c0_3 = arith.constant 0 : index
    %3 = vector.load %arg3[%c0_2, %c0_3] : memref<1x128xf32, #tpu.memory_space<vmem>>, vector<1x128xf32>
    %4 = vector.broadcast %3 : vector<1x128xf32> to vector<16x128xf32>
    %5 = arith.mulf %2, %4 : vector<16x128xf32>
    %c0_4 = arith.constant 0 : index
    %c0_5 = arith.constant 0 : index
    %6 = vector.load %arg4[%c0_4, %c0_5] : memref<1x128xf32, #tpu.memory_space<vmem>>, vector<1x128xf32>
    %7 = vector.broadcast %6 : vector<1x128xf32> to vector<16x128xf32>
    %8 = arith.addf %5, %7 : vector<16x128xf32>
    %9 = arith.truncf %8 : vector<16x128xf32> to vector<16x128xbf16>
    %10 = vector.shape_cast %9 : vector<16x128xbf16> to vector<1x16x128xbf16>
    %c0_6 = arith.constant 0 : index
    %c0_7 = arith.constant 0 : index
    %c0_8 = arith.constant 0 : index
    %11 = vector.load %arg5[%c0_6, %c0_7, %c0_8] : memref<1x16x128xbf16, #tpu.memory_space<vmem>>, vector<1x16x128xbf16>
    tpu.vector_store %arg5[%c0_6, %c0_7, %c0_8], %10 {strides = array<i32>} : memref<1x16x128xbf16, #tpu.memory_space<vmem>>, vector<1x16x128xbf16>,
    return
  }
  func.func @transform_0(%arg0: i32, %arg1: i32) -> (i32, i32, i32) {
    %c0_i32 = arith.constant 0 : i32
    %c0_i32_0 = arith.constant 0 : i32
    return %arg0, %arg1, %c0_i32 : i32, i32, i32
  }
  func.func @transform_1(%arg0: i32, %arg1: i32) -> (i32, i32) {
    %c0_i32 = arith.constant 0 : i32
    %c0_i32_0 = arith.constant 0 : i32
    %c0_i32_1 = arith.constant 0 : i32
    return %c0_i32, %c0_i32_0 : i32, i32
  }
  func.func @transform_2(%arg0: i32, %arg1: i32) -> (i32, i32) {
    %c0_i32 = arith.constant 0 : i32
    %c0_i32_0 = arith.constant 0 : i32
    %c0_i32_1 = arith.constant 0 : i32
    return %c0_i32, %c0_i32_0 : i32, i32
  }
  func.func @transform_3(%arg0: i32, %arg1: i32) -> (i32, i32, i32) {
    %c0_i32 = arith.constant 0 : i32
    %c0_i32_0 = arith.constant 0 : i32
    return %arg0, %arg1, %c0_i32 : i32, i32, i32
  }
}

module attributes {stable_mosaic.version = 11 : i64} {
  func.func @kernel(%arg0: i32, %arg1: i32, %arg2: memref<1x16x1024xbf16, #tpu.memory_space<vmem>>, %arg3: memref<1x1024x128xbf16, #tpu.memory_space<vmem>>, %arg4: memref<1x16x128xbf16, #tpu.memory_space<vmem>>) attributes {dimension_semantics = [#tpu.dimension_semantics<parallel>, #tpu.dimension_semantics<parallel>], iteration_bounds = array<i64: 1, 1>, scalar_prefetch = 0 : i64, scratch_operands = 0 : i64, tpu.core_type = #tpu.core_type<tc>, window_params = [{transform_indices = @transform_0, window_bounds = array<i64: 1, 16, 1024>}, {transform_indices = @transform_1, window_bounds = array<i64: 1, 1024, 128>}, {transform_indices = @transform_2, window_bounds = array<i64: 1, 16, 128>}]} {
    %c0 = arith.constant 0 : index
    %c0_0 = arith.constant 0 : index
    %c0_1 = arith.constant 0 : index
    %0 = vector.load %arg2[%c0, %c0_0, %c0_1] : memref<1x16x1024xbf16, #tpu.memory_space<vmem>>, vector<1x16x1024xbf16>
    %1 = vector.shape_cast %0 : vector<1x16x1024xbf16> to vector<16x1024xbf16>
    %c0_2 = arith.constant 0 : index
    %c0_3 = arith.constant 0 : index
    %c0_4 = arith.constant 0 : index
    %2 = vector.load %arg3[%c0_2, %c0_3, %c0_4] : memref<1x1024x128xbf16, #tpu.memory_space<vmem>>, vector<1x1024x128xbf16>
    %3 = vector.shape_cast %2 : vector<1x1024x128xbf16> to vector<1024x128xbf16>
    %cst = arith.constant dense<0.000000e+00> : vector<16x128xf32>
    %4 = tpu.matmul %1, %3, %cst {dimension_numbers = #tpu.dot_dimension_numbers<[1], [0], [0], [1], [0, 0, 1, 1], [], []>} : vector<16x1024xbf16>, vector<1024x128xbf16>, vector<16x128xf32> -> vector<16x128xf32>
    %cst_5 = arith.constant 0.000000e+00 : f32
    %5 = vector.broadcast %cst_5 : f32 to vector<16x128xf32>
    %6 = arith.maximumf %4, %5 : vector<16x128xf32>
    %7 = arith.truncf %6 : vector<16x128xf32> to vector<16x128xbf16>
    %8 = vector.shape_cast %7 : vector<16x128xbf16> to vector<1x16x128xbf16>
    %c0_6 = arith.constant 0 : index
    %c0_7 = arith.constant 0 : index
    %c0_8 = arith.constant 0 : index
    %9 = vector.load %arg4[%c0_6, %c0_7, %c0_8] : memref<1x16x128xbf16, #tpu.memory_space<vmem>>, vector<1x16x128xbf16>
    tpu.vector_store %arg4[%c0_6, %c0_7, %c0_8], %8 {strides = array<i32>} : memref<1x16x128xbf16, #tpu.memory_space<vmem>>, vector<1x16x128xbf16>,
    return
  }
  func.func @transform_0(%arg0: i32, %arg1: i32) -> (i32, i32, i32) {
    %c0_i32 = arith.constant 0 : i32
    %c0_i32_0 = arith.constant 0 : i32
    return %arg0, %arg1, %c0_i32 : i32, i32, i32
  }
  func.func @transform_1(%arg0: i32, %arg1: i32) -> (i32, i32, i32) {
    %c0_i32 = arith.constant 0 : i32
    %c0_i32_0 = arith.constant 0 : i32
    %c0_i32_1 = arith.constant 0 : i32
    return %arg0, %c0_i32, %c0_i32_0 : i32, i32, i32
  }
  func.func @transform_2(%arg0: i32, %arg1: i32) -> (i32, i32, i32) {
    %c0_i32 = arith.constant 0 : i32
    %c0_i32_0 = arith.constant 0 : i32
    return %arg0, %arg1, %c0_i32 : i32, i32, i32
  }
}

module attributes {stable_mosaic.version = 11 : i64} {
  func.func @kernel(%arg0: i32, %arg1: i32, %arg2: memref<1x16x256xbf16, #tpu.memory_space<vmem>>, %arg3: memref<1x256x128xbf16, #tpu.memory_space<vmem>>, %arg4: memref<1x16x128xbf16, #tpu.memory_space<vmem>>, %arg5: memref<1x1x1x128xf32, #tpu.memory_space<vmem>>, %arg6: memref<1x1x1x128xf32, #tpu.memory_space<vmem>>) attributes {dimension_semantics = [#tpu.dimension_semantics<parallel>, #tpu.dimension_semantics<parallel>], iteration_bounds = array<i64: 4, 1>, scalar_prefetch = 0 : i64, scratch_operands = 0 : i64, tpu.core_type = #tpu.core_type<tc>, window_params = [{transform_indices = @transform_0, window_bounds = array<i64: 1, 16, 256>}, {transform_indices = @transform_1, window_bounds = array<i64: 1, 256, 128>}, {transform_indices = @transform_2, window_bounds = array<i64: 1, 16, 128>}, {transform_indices = @transform_3, window_bounds = array<i64: 1, 1, 1, 128>}, {transform_indices = @transform_4, window_bounds = array<i64: 1, 1, 1, 128>}]} {
    %c0 = arith.constant 0 : index
    %c0_0 = arith.constant 0 : index
    %c0_1 = arith.constant 0 : index
    %0 = vector.load %arg2[%c0, %c0_0, %c0_1] : memref<1x16x256xbf16, #tpu.memory_space<vmem>>, vector<1x16x256xbf16>
    %1 = vector.shape_cast %0 : vector<1x16x256xbf16> to vector<16x256xbf16>
    %c0_2 = arith.constant 0 : index
    %c0_3 = arith.constant 0 : index
    %c0_4 = arith.constant 0 : index
    %2 = vector.load %arg3[%c0_2, %c0_3, %c0_4] : memref<1x256x128xbf16, #tpu.memory_space<vmem>>, vector<1x256x128xbf16>
    %3 = vector.shape_cast %2 : vector<1x256x128xbf16> to vector<256x128xbf16>
    %cst = arith.constant dense<0.000000e+00> : vector<16x128xf32>
    %4 = tpu.matmul %1, %3, %cst {dimension_numbers = #tpu.dot_dimension_numbers<[1], [0], [0], [1], [0, 0, 1, 1], [], []>} : vector<16x256xbf16>, vector<256x128xbf16>, vector<16x128xf32> -> vector<16x128xf32>
    %cst_5 = arith.constant dense<0.000000e+00> : vector<128xf32>
    %5 = vector.multi_reduction <add>, %4, %cst_5 [0] : vector<16x128xf32> to vector<128xf32>
    %6 = vector.shape_cast %5 : vector<128xf32> to vector<1x128xf32>
    %7 = vector.shape_cast %6 : vector<1x128xf32> to vector<1x1x1x128xf32>
    %c0_6 = arith.constant 0 : index
    %c0_7 = arith.constant 0 : index
    %c0_8 = arith.constant 0 : index
    %c0_9 = arith.constant 0 : index
    %8 = vector.load %arg5[%c0_6, %c0_7, %c0_8, %c0_9] : memref<1x1x1x128xf32, #tpu.memory_space<vmem>>, vector<1x1x1x128xf32>
    tpu.vector_store %arg5[%c0_6, %c0_7, %c0_8, %c0_9], %7 {strides = array<i32>} : memref<1x1x1x128xf32, #tpu.memory_space<vmem>>, vector<1x1x1x128xf32>,
    %9 = arith.mulf %4, %4 : vector<16x128xf32>
    %cst_10 = arith.constant dense<0.000000e+00> : vector<128xf32>
    %10 = vector.multi_reduction <add>, %9, %cst_10 [0] : vector<16x128xf32> to vector<128xf32>
    %11 = vector.shape_cast %10 : vector<128xf32> to vector<1x128xf32>
    %12 = vector.shape_cast %11 : vector<1x128xf32> to vector<1x1x1x128xf32>
    %c0_11 = arith.constant 0 : index
    %c0_12 = arith.constant 0 : index
    %c0_13 = arith.constant 0 : index
    %c0_14 = arith.constant 0 : index
    %13 = vector.load %arg6[%c0_11, %c0_12, %c0_13, %c0_14] : memref<1x1x1x128xf32, #tpu.memory_space<vmem>>, vector<1x1x1x128xf32>
    tpu.vector_store %arg6[%c0_11, %c0_12, %c0_13, %c0_14], %12 {strides = array<i32>} : memref<1x1x1x128xf32, #tpu.memory_space<vmem>>, vector<1x1x1x128xf32>,
    %14 = arith.truncf %4 : vector<16x128xf32> to vector<16x128xbf16>
    %15 = vector.shape_cast %14 : vector<16x128xbf16> to vector<1x16x128xbf16>
    %c0_15 = arith.constant 0 : index
    %c0_16 = arith.constant 0 : index
    %c0_17 = arith.constant 0 : index
    %16 = vector.load %arg4[%c0_15, %c0_16, %c0_17] : memref<1x16x128xbf16, #tpu.memory_space<vmem>>, vector<1x16x128xbf16>
    tpu.vector_store %arg4[%c0_15, %c0_16, %c0_17], %15 {strides = array<i32>} : memref<1x16x128xbf16, #tpu.memory_space<vmem>>, vector<1x16x128xbf16>,
    return
  }
  func.func @transform_0(%arg0: i32, %arg1: i32) -> (i32, i32, i32) {
    %c0_i32 = arith.constant 0 : i32
    %c0_i32_0 = arith.constant 0 : i32
    return %arg0, %arg1, %c0_i32 : i32, i32, i32
  }
  func.func @transform_1(%arg0: i32, %arg1: i32) -> (i32, i32, i32) {
    %c0_i32 = arith.constant 0 : i32
    %c0_i32_0 = arith.constant 0 : i32
    %c0_i32_1 = arith.constant 0 : i32
    return %arg0, %c0_i32, %c0_i32_0 : i32, i32, i32
  }
  func.func @transform_2(%arg0: i32, %arg1: i32) -> (i32, i32, i32) {
    %c0_i32 = arith.constant 0 : i32
    %c0_i32_0 = arith.constant 0 : i32
    return %arg0, %arg1, %c0_i32 : i32, i32, i32
  }
  func.func @transform_3(%arg0: i32, %arg1: i32) -> (i32, i32, i32, i32) {
    %c0_i32 = arith.constant 0 : i32
    %c0_i32_0 = arith.constant 0 : i32
    %c0_i32_1 = arith.constant 0 : i32
    return %arg0, %arg1, %c0_i32, %c0_i32_0 : i32, i32, i32, i32
  }
  func.func @transform_4(%arg0: i32, %arg1: i32) -> (i32, i32, i32, i32) {
    %c0_i32 = arith.constant 0 : i32
    %c0_i32_0 = arith.constant 0 : i32
    %c0_i32_1 = arith.constant 0 : i32
    return %arg0, %arg1, %c0_i32, %c0_i32_0 : i32, i32, i32, i32
  }
}

module attributes {stable_mosaic.version = 11 : i64} {
  func.func @kernel(%arg0: i32, %arg1: i32, %arg2: memref<1x16x128xbf16, #tpu.memory_space<vmem>>, %arg3: memref<1x128xf32, #tpu.memory_space<vmem>>, %arg4: memref<1x128xf32, #tpu.memory_space<vmem>>, %arg5: memref<1x16x128xbf16, #tpu.memory_space<vmem>>) attributes {dimension_semantics = [#tpu.dimension_semantics<parallel>, #tpu.dimension_semantics<parallel>], iteration_bounds = array<i64: 4, 1>, scalar_prefetch = 0 : i64, scratch_operands = 0 : i64, tpu.core_type = #tpu.core_type<tc>, window_params = [{transform_indices = @transform_0, window_bounds = array<i64: 1, 16, 128>}, {pipeline_mode = #tpu.pipeline_mode<synchronous>, transform_indices = @transform_1, window_bounds = array<i64: 1, 128>}, {pipeline_mode = #tpu.pipeline_mode<synchronous>, transform_indices = @transform_2, window_bounds = array<i64: 1, 128>}, {transform_indices = @transform_3, window_bounds = array<i64: 1, 16, 128>}]} {
    %c0 = arith.constant 0 : index
    %c0_0 = arith.constant 0 : index
    %c0_1 = arith.constant 0 : index
    %0 = vector.load %arg2[%c0, %c0_0, %c0_1] : memref<1x16x128xbf16, #tpu.memory_space<vmem>>, vector<1x16x128xbf16>
    %1 = vector.shape_cast %0 : vector<1x16x128xbf16> to vector<16x128xbf16>
    %2 = arith.extf %1 : vector<16x128xbf16> to vector<16x128xf32>
    %c0_2 = arith.constant 0 : index
    %c0_3 = arith.constant 0 : index
    %3 = vector.load %arg3[%c0_2, %c0_3] : memref<1x128xf32, #tpu.memory_space<vmem>>, vector<1x128xf32>
    %4 = vector.broadcast %3 : vector<1x128xf32> to vector<16x128xf32>
    %5 = arith.mulf %2, %4 : vector<16x128xf32>
    %c0_4 = arith.constant 0 : index
    %c0_5 = arith.constant 0 : index
    %6 = vector.load %arg4[%c0_4, %c0_5] : memref<1x128xf32, #tpu.memory_space<vmem>>, vector<1x128xf32>
    %7 = vector.broadcast %6 : vector<1x128xf32> to vector<16x128xf32>
    %8 = arith.addf %5, %7 : vector<16x128xf32>
    %cst = arith.constant 0.000000e+00 : f32
    %9 = vector.broadcast %cst : f32 to vector<16x128xf32>
    %10 = arith.maximumf %8, %9 : vector<16x128xf32>
    %11 = arith.truncf %10 : vector<16x128xf32> to vector<16x128xbf16>
    %12 = vector.shape_cast %11 : vector<16x128xbf16> to vector<1x16x128xbf16>
    %c0_6 = arith.constant 0 : index
    %c0_7 = arith.constant 0 : index
    %c0_8 = arith.constant 0 : index
    %13 = vector.load %arg5[%c0_6, %c0_7, %c0_8] : memref<1x16x128xbf16, #tpu.memory_space<vmem>>, vector<1x16x128xbf16>
    tpu.vector_store %arg5[%c0_6, %c0_7, %c0_8], %12 {strides = array<i32>} : memref<1x16x128xbf16, #tpu.memory_space<vmem>>, vector<1x16x128xbf16>,
    return
  }
  func.func @transform_0(%arg0: i32, %arg1: i32) -> (i32, i32, i32) {
    %c0_i32 = arith.constant 0 : i32
    %c0_i32_0 = arith.constant 0 : i32
    return %arg0, %arg1, %c0_i32 : i32, i32, i32
  }
  func.func @transform_1(%arg0: i32, %arg1: i32) -> (i32, i32) {
    %c0_i32 = arith.constant 0 : i32
    %c0_i32_0 = arith.constant 0 : i32
    %c0_i32_1 = arith.constant 0 : i32
    return %c0_i32, %c0_i32_0 : i32, i32
  }
  func.func @transform_2(%arg0: i32, %arg1: i32) -> (i32, i32) {
    %c0_i32 = arith.constant 0 : i32
    %c0_i32_0 = arith.constant 0 : i32
    %c0_i32_1 = arith.constant 0 : i32
    return %c0_i32, %c0_i32_0 : i32, i32
  }
  func.func @transform_3(%arg0: i32, %arg1: i32) -> (i32, i32, i32) {
    %c0_i32 = arith.constant 0 : i32
    %c0_i32_0 = arith.constant 0 : i32
    return %arg0, %arg1, %c0_i32 : i32, i32, i32
  }
}

module attributes {stable_mosaic.version = 11 : i64} {
  func.func @kernel(%arg0: i32, %arg1: i32, %arg2: memref<1x16x512xbf16, #tpu.memory_space<vmem>>, %arg3: memref<1x512x128xbf16, #tpu.memory_space<vmem>>, %arg4: memref<1x16x128xbf16, #tpu.memory_space<vmem>>, %arg5: memref<1x1x1x128xf32, #tpu.memory_space<vmem>>, %arg6: memref<1x1x1x128xf32, #tpu.memory_space<vmem>>) attributes {dimension_semantics = [#tpu.dimension_semantics<parallel>, #tpu.dimension_semantics<parallel>], iteration_bounds = array<i64: 4, 1>, scalar_prefetch = 0 : i64, scratch_operands = 0 : i64, tpu.core_type = #tpu.core_type<tc>, window_params = [{transform_indices = @transform_0, window_bounds = array<i64: 1, 16, 512>}, {transform_indices = @transform_1, window_bounds = array<i64: 1, 512, 128>}, {transform_indices = @transform_2, window_bounds = array<i64: 1, 16, 128>}, {transform_indices = @transform_3, window_bounds = array<i64: 1, 1, 1, 128>}, {transform_indices = @transform_4, window_bounds = array<i64: 1, 1, 1, 128>}]} {
    %c0 = arith.constant 0 : index
    %c0_0 = arith.constant 0 : index
    %c0_1 = arith.constant 0 : index
    %0 = vector.load %arg2[%c0, %c0_0, %c0_1] : memref<1x16x512xbf16, #tpu.memory_space<vmem>>, vector<1x16x512xbf16>
    %1 = vector.shape_cast %0 : vector<1x16x512xbf16> to vector<16x512xbf16>
    %c0_2 = arith.constant 0 : index
    %c0_3 = arith.constant 0 : index
    %c0_4 = arith.constant 0 : index
    %2 = vector.load %arg3[%c0_2, %c0_3, %c0_4] : memref<1x512x128xbf16, #tpu.memory_space<vmem>>, vector<1x512x128xbf16>
    %3 = vector.shape_cast %2 : vector<1x512x128xbf16> to vector<512x128xbf16>
    %cst = arith.constant dense<0.000000e+00> : vector<16x128xf32>
    %4 = tpu.matmul %1, %3, %cst {dimension_numbers = #tpu.dot_dimension_numbers<[1], [0], [0], [1], [0, 0, 1, 1], [], []>} : vector<16x512xbf16>, vector<512x128xbf16>, vector<16x128xf32> -> vector<16x128xf32>
    %cst_5 = arith.constant dense<0.000000e+00> : vector<128xf32>
    %5 = vector.multi_reduction <add>, %4, %cst_5 [0] : vector<16x128xf32> to vector<128xf32>
    %6 = vector.shape_cast %5 : vector<128xf32> to vector<1x128xf32>
    %7 = vector.shape_cast %6 : vector<1x128xf32> to vector<1x1x1x128xf32>
    %c0_6 = arith.constant 0 : index
    %c0_7 = arith.constant 0 : index
    %c0_8 = arith.constant 0 : index
    %c0_9 = arith.constant 0 : index
    %8 = vector.load %arg5[%c0_6, %c0_7, %c0_8, %c0_9] : memref<1x1x1x128xf32, #tpu.memory_space<vmem>>, vector<1x1x1x128xf32>
    tpu.vector_store %arg5[%c0_6, %c0_7, %c0_8, %c0_9], %7 {strides = array<i32>} : memref<1x1x1x128xf32, #tpu.memory_space<vmem>>, vector<1x1x1x128xf32>,
    %9 = arith.mulf %4, %4 : vector<16x128xf32>
    %cst_10 = arith.constant dense<0.000000e+00> : vector<128xf32>
    %10 = vector.multi_reduction <add>, %9, %cst_10 [0] : vector<16x128xf32> to vector<128xf32>
    %11 = vector.shape_cast %10 : vector<128xf32> to vector<1x128xf32>
    %12 = vector.shape_cast %11 : vector<1x128xf32> to vector<1x1x1x128xf32>
    %c0_11 = arith.constant 0 : index
    %c0_12 = arith.constant 0 : index
    %c0_13 = arith.constant 0 : index
    %c0_14 = arith.constant 0 : index
    %13 = vector.load %arg6[%c0_11, %c0_12, %c0_13, %c0_14] : memref<1x1x1x128xf32, #tpu.memory_space<vmem>>, vector<1x1x1x128xf32>
    tpu.vector_store %arg6[%c0_11, %c0_12, %c0_13, %c0_14], %12 {strides = array<i32>} : memref<1x1x1x128xf32, #tpu.memory_space<vmem>>, vector<1x1x1x128xf32>,
    %14 = arith.truncf %4 : vector<16x128xf32> to vector<16x128xbf16>
    %15 = vector.shape_cast %14 : vector<16x128xbf16> to vector<1x16x128xbf16>
    %c0_15 = arith.constant 0 : index
    %c0_16 = arith.constant 0 : index
    %c0_17 = arith.constant 0 : index
    %16 = vector.load %arg4[%c0_15, %c0_16, %c0_17] : memref<1x16x128xbf16, #tpu.memory_space<vmem>>, vector<1x16x128xbf16>
    tpu.vector_store %arg4[%c0_15, %c0_16, %c0_17], %15 {strides = array<i32>} : memref<1x16x128xbf16, #tpu.memory_space<vmem>>, vector<1x16x128xbf16>,
    return
  }
  func.func @transform_0(%arg0: i32, %arg1: i32) -> (i32, i32, i32) {
    %c0_i32 = arith.constant 0 : i32
    %c0_i32_0 = arith.constant 0 : i32
    return %arg0, %arg1, %c0_i32 : i32, i32, i32
  }
  func.func @transform_1(%arg0: i32, %arg1: i32) -> (i32, i32, i32) {
    %c0_i32 = arith.constant 0 : i32
    %c0_i32_0 = arith.constant 0 : i32
    %c0_i32_1 = arith.constant 0 : i32
    return %arg0, %c0_i32, %c0_i32_0 : i32, i32, i32
  }
  func.func @transform_2(%arg0: i32, %arg1: i32) -> (i32, i32, i32) {
    %c0_i32 = arith.constant 0 : i32
    %c0_i32_0 = arith.constant 0 : i32
    return %arg0, %arg1, %c0_i32 : i32, i32, i32
  }
  func.func @transform_3(%arg0: i32, %arg1: i32) -> (i32, i32, i32, i32) {
    %c0_i32 = arith.constant 0 : i32
    %c0_i32_0 = arith.constant 0 : i32
    %c0_i32_1 = arith.constant 0 : i32
    return %arg0, %arg1, %c0_i32, %c0_i32_0 : i32, i32, i32, i32
  }
  func.func @transform_4(%arg0: i32, %arg1: i32) -> (i32, i32, i32, i32) {
    %c0_i32 = arith.constant 0 : i32
    %c0_i32_0 = arith.constant 0 : i32
    %c0_i32_1 = arith.constant 0 : i32
    return %arg0, %arg1, %c0_i32, %c0_i32_0 : i32, i32, i32, i32
  }
}

module attributes {stable_mosaic.version = 11 : i64} {
  func.func @kernel(%arg0: i32, %arg1: i32, %arg2: memref<1x32x256xbf16, #tpu.memory_space<vmem>>, %arg3: memref<1x256x128xbf16, #tpu.memory_space<vmem>>, %arg4: memref<1x32x128xbf16, #tpu.memory_space<vmem>>, %arg5: memref<1x1x1x128xf32, #tpu.memory_space<vmem>>, %arg6: memref<1x1x1x128xf32, #tpu.memory_space<vmem>>) attributes {dimension_semantics = [#tpu.dimension_semantics<parallel>, #tpu.dimension_semantics<parallel>], iteration_bounds = array<i64: 4, 1>, scalar_prefetch = 0 : i64, scratch_operands = 0 : i64, tpu.core_type = #tpu.core_type<tc>, window_params = [{transform_indices = @transform_0, window_bounds = array<i64: 1, 32, 256>}, {transform_indices = @transform_1, window_bounds = array<i64: 1, 256, 128>}, {transform_indices = @transform_2, window_bounds = array<i64: 1, 32, 128>}, {transform_indices = @transform_3, window_bounds = array<i64: 1, 1, 1, 128>}, {transform_indices = @transform_4, window_bounds = array<i64: 1, 1, 1, 128>}]} {
    %c0 = arith.constant 0 : index
    %c0_0 = arith.constant 0 : index
    %c0_1 = arith.constant 0 : index
    %0 = vector.load %arg2[%c0, %c0_0, %c0_1] : memref<1x32x256xbf16, #tpu.memory_space<vmem>>, vector<1x32x256xbf16>
    %1 = vector.shape_cast %0 : vector<1x32x256xbf16> to vector<32x256xbf16>
    %c0_2 = arith.constant 0 : index
    %c0_3 = arith.constant 0 : index
    %c0_4 = arith.constant 0 : index
    %2 = vector.load %arg3[%c0_2, %c0_3, %c0_4] : memref<1x256x128xbf16, #tpu.memory_space<vmem>>, vector<1x256x128xbf16>
    %3 = vector.shape_cast %2 : vector<1x256x128xbf16> to vector<256x128xbf16>
    %cst = arith.constant dense<0.000000e+00> : vector<32x128xf32>
    %4 = tpu.matmul %1, %3, %cst {dimension_numbers = #tpu.dot_dimension_numbers<[1], [0], [0], [1], [0, 0, 1, 1], [], []>} : vector<32x256xbf16>, vector<256x128xbf16>, vector<32x128xf32> -> vector<32x128xf32>
    %cst_5 = arith.constant dense<0.000000e+00> : vector<128xf32>
    %5 = vector.multi_reduction <add>, %4, %cst_5 [0] : vector<32x128xf32> to vector<128xf32>
    %6 = vector.shape_cast %5 : vector<128xf32> to vector<1x128xf32>
    %7 = vector.shape_cast %6 : vector<1x128xf32> to vector<1x1x1x128xf32>
    %c0_6 = arith.constant 0 : index
    %c0_7 = arith.constant 0 : index
    %c0_8 = arith.constant 0 : index
    %c0_9 = arith.constant 0 : index
    %8 = vector.load %arg5[%c0_6, %c0_7, %c0_8, %c0_9] : memref<1x1x1x128xf32, #tpu.memory_space<vmem>>, vector<1x1x1x128xf32>
    tpu.vector_store %arg5[%c0_6, %c0_7, %c0_8, %c0_9], %7 {strides = array<i32>} : memref<1x1x1x128xf32, #tpu.memory_space<vmem>>, vector<1x1x1x128xf32>,
    %9 = arith.mulf %4, %4 : vector<32x128xf32>
    %cst_10 = arith.constant dense<0.000000e+00> : vector<128xf32>
    %10 = vector.multi_reduction <add>, %9, %cst_10 [0] : vector<32x128xf32> to vector<128xf32>
    %11 = vector.shape_cast %10 : vector<128xf32> to vector<1x128xf32>
    %12 = vector.shape_cast %11 : vector<1x128xf32> to vector<1x1x1x128xf32>
    %c0_11 = arith.constant 0 : index
    %c0_12 = arith.constant 0 : index
    %c0_13 = arith.constant 0 : index
    %c0_14 = arith.constant 0 : index
    %13 = vector.load %arg6[%c0_11, %c0_12, %c0_13, %c0_14] : memref<1x1x1x128xf32, #tpu.memory_space<vmem>>, vector<1x1x1x128xf32>
    tpu.vector_store %arg6[%c0_11, %c0_12, %c0_13, %c0_14], %12 {strides = array<i32>} : memref<1x1x1x128xf32, #tpu.memory_space<vmem>>, vector<1x1x1x128xf32>,
    %14 = arith.truncf %4 : vector<32x128xf32> to vector<32x128xbf16>
    %15 = vector.shape_cast %14 : vector<32x128xbf16> to vector<1x32x128xbf16>
    %c0_15 = arith.constant 0 : index
    %c0_16 = arith.constant 0 : index
    %c0_17 = arith.constant 0 : index
    %16 = vector.load %arg4[%c0_15, %c0_16, %c0_17] : memref<1x32x128xbf16, #tpu.memory_space<vmem>>, vector<1x32x128xbf16>
    tpu.vector_store %arg4[%c0_15, %c0_16, %c0_17], %15 {strides = array<i32>} : memref<1x32x128xbf16, #tpu.memory_space<vmem>>, vector<1x32x128xbf16>,
    return
  }
  func.func @transform_0(%arg0: i32, %arg1: i32) -> (i32, i32, i32) {
    %c0_i32 = arith.constant 0 : i32
    %c0_i32_0 = arith.constant 0 : i32
    return %arg0, %arg1, %c0_i32 : i32, i32, i32
  }
  func.func @transform_1(%arg0: i32, %arg1: i32) -> (i32, i32, i32) {
    %c0_i32 = arith.constant 0 : i32
    %c0_i32_0 = arith.constant 0 : i32
    %c0_i32_1 = arith.constant 0 : i32
    return %arg0, %c0_i32, %c0_i32_0 : i32, i32, i32
  }
  func.func @transform_2(%arg0: i32, %arg1: i32) -> (i32, i32, i32) {
    %c0_i32 = arith.constant 0 : i32
    %c0_i32_0 = arith.constant 0 : i32
    return %arg0, %arg1, %c0_i32 : i32, i32, i32
  }
  func.func @transform_3(%arg0: i32, %arg1: i32) -> (i32, i32, i32, i32) {
    %c0_i32 = arith.constant 0 : i32
    %c0_i32_0 = arith.constant 0 : i32
    %c0_i32_1 = arith.constant 0 : i32
    return %arg0, %arg1, %c0_i32, %c0_i32_0 : i32, i32, i32, i32
  }
  func.func @transform_4(%arg0: i32, %arg1: i32) -> (i32, i32, i32, i32) {
    %c0_i32 = arith.constant 0 : i32
    %c0_i32_0 = arith.constant 0 : i32
    %c0_i32_1 = arith.constant 0 : i32
    return %arg0, %arg1, %c0_i32, %c0_i32_0 : i32, i32, i32, i32
  }
}

module attributes {stable_mosaic.version = 11 : i64} {
  func.func @kernel(%arg0: i32, %arg1: i32, %arg2: memref<1x32x128xbf16, #tpu.memory_space<vmem>>, %arg3: memref<1x128xf32, #tpu.memory_space<vmem>>, %arg4: memref<1x128xf32, #tpu.memory_space<vmem>>, %arg5: memref<1x32x128xbf16, #tpu.memory_space<vmem>>) attributes {dimension_semantics = [#tpu.dimension_semantics<parallel>, #tpu.dimension_semantics<parallel>], iteration_bounds = array<i64: 4, 1>, scalar_prefetch = 0 : i64, scratch_operands = 0 : i64, tpu.core_type = #tpu.core_type<tc>, window_params = [{transform_indices = @transform_0, window_bounds = array<i64: 1, 32, 128>}, {pipeline_mode = #tpu.pipeline_mode<synchronous>, transform_indices = @transform_1, window_bounds = array<i64: 1, 128>}, {pipeline_mode = #tpu.pipeline_mode<synchronous>, transform_indices = @transform_2, window_bounds = array<i64: 1, 128>}, {transform_indices = @transform_3, window_bounds = array<i64: 1, 32, 128>}]} {
    %c0 = arith.constant 0 : index
    %c0_0 = arith.constant 0 : index
    %c0_1 = arith.constant 0 : index
    %0 = vector.load %arg2[%c0, %c0_0, %c0_1] : memref<1x32x128xbf16, #tpu.memory_space<vmem>>, vector<1x32x128xbf16>
    %1 = vector.shape_cast %0 : vector<1x32x128xbf16> to vector<32x128xbf16>
    %2 = arith.extf %1 : vector<32x128xbf16> to vector<32x128xf32>
    %c0_2 = arith.constant 0 : index
    %c0_3 = arith.constant 0 : index
    %3 = vector.load %arg3[%c0_2, %c0_3] : memref<1x128xf32, #tpu.memory_space<vmem>>, vector<1x128xf32>
    %4 = vector.broadcast %3 : vector<1x128xf32> to vector<32x128xf32>
    %5 = arith.mulf %2, %4 : vector<32x128xf32>
    %c0_4 = arith.constant 0 : index
    %c0_5 = arith.constant 0 : index
    %6 = vector.load %arg4[%c0_4, %c0_5] : memref<1x128xf32, #tpu.memory_space<vmem>>, vector<1x128xf32>
    %7 = vector.broadcast %6 : vector<1x128xf32> to vector<32x128xf32>
    %8 = arith.addf %5, %7 : vector<32x128xf32>
    %cst = arith.constant 0.000000e+00 : f32
    %9 = vector.broadcast %cst : f32 to vector<32x128xf32>
    %10 = arith.maximumf %8, %9 : vector<32x128xf32>
    %11 = arith.truncf %10 : vector<32x128xf32> to vector<32x128xbf16>
    %12 = vector.shape_cast %11 : vector<32x128xbf16> to vector<1x32x128xbf16>
    %c0_6 = arith.constant 0 : index
    %c0_7 = arith.constant 0 : index
    %c0_8 = arith.constant 0 : index
    %13 = vector.load %arg5[%c0_6, %c0_7, %c0_8] : memref<1x32x128xbf16, #tpu.memory_space<vmem>>, vector<1x32x128xbf16>
    tpu.vector_store %arg5[%c0_6, %c0_7, %c0_8], %12 {strides = array<i32>} : memref<1x32x128xbf16, #tpu.memory_space<vmem>>, vector<1x32x128xbf16>,
    return
  }
  func.func @transform_0(%arg0: i32, %arg1: i32) -> (i32, i32, i32) {
    %c0_i32 = arith.constant 0 : i32
    %c0_i32_0 = arith.constant 0 : i32
    return %arg0, %arg1, %c0_i32 : i32, i32, i32
  }
  func.func @transform_1(%arg0: i32, %arg1: i32) -> (i32, i32) {
    %c0_i32 = arith.constant 0 : i32
    %c0_i32_0 = arith.constant 0 : i32
    %c0_i32_1 = arith.constant 0 : i32
    return %c0_i32, %c0_i32_0 : i32, i32
  }
  func.func @transform_2(%arg0: i32, %arg1: i32) -> (i32, i32) {
    %c0_i32 = arith.constant 0 : i32
    %c0_i32_0 = arith.constant 0 : i32
    %c0_i32_1 = arith.constant 0 : i32
    return %c0_i32, %c0_i32_0 : i32, i32
  }
  func.func @transform_3(%arg0: i32, %arg1: i32) -> (i32, i32, i32) {
    %c0_i32 = arith.constant 0 : i32
    %c0_i32_0 = arith.constant 0 : i32
    return %arg0, %arg1, %c0_i32 : i32, i32, i32
  }
}

module attributes {stable_mosaic.version = 11 : i64} {
  func.func @kernel(%arg0: i32, %arg1: i32, %arg2: memref<1x128x128xbf16, #tpu.memory_space<vmem>>, %arg3: memref<1x128x128xbf16, #tpu.memory_space<vmem>>, %arg4: memref<1x128x128xbf16, #tpu.memory_space<vmem>>, %arg5: memref<1x1x1x128xf32, #tpu.memory_space<vmem>>, %arg6: memref<1x1x1x128xf32, #tpu.memory_space<vmem>>) attributes {dimension_semantics = [#tpu.dimension_semantics<parallel>, #tpu.dimension_semantics<parallel>], iteration_bounds = array<i64: 4, 1>, scalar_prefetch = 0 : i64, scratch_operands = 0 : i64, tpu.core_type = #tpu.core_type<tc>, window_params = [{transform_indices = @transform_0, window_bounds = array<i64: 1, 128, 128>}, {transform_indices = @transform_1, window_bounds = array<i64: 1, 128, 128>}, {transform_indices = @transform_2, window_bounds = array<i64: 1, 128, 128>}, {transform_indices = @transform_3, window_bounds = array<i64: 1, 1, 1, 128>}, {transform_indices = @transform_4, window_bounds = array<i64: 1, 1, 1, 128>}]} {
    %c0 = arith.constant 0 : index
    %c0_0 = arith.constant 0 : index
    %c0_1 = arith.constant 0 : index
    %0 = vector.load %arg2[%c0, %c0_0, %c0_1] : memref<1x128x128xbf16, #tpu.memory_space<vmem>>, vector<1x128x128xbf16>
    %1 = vector.shape_cast %0 : vector<1x128x128xbf16> to vector<128x128xbf16>
    %c0_2 = arith.constant 0 : index
    %c0_3 = arith.constant 0 : index
    %c0_4 = arith.constant 0 : index
    %2 = vector.load %arg3[%c0_2, %c0_3, %c0_4] : memref<1x128x128xbf16, #tpu.memory_space<vmem>>, vector<1x128x128xbf16>
    %3 = vector.shape_cast %2 : vector<1x128x128xbf16> to vector<128x128xbf16>
    %cst = arith.constant dense<0.000000e+00> : vector<128x128xf32>
    %4 = tpu.matmul %1, %3, %cst {dimension_numbers = #tpu.dot_dimension_numbers<[1], [0], [0], [1], [0, 0, 1, 1], [], []>} : vector<128x128xbf16>, vector<128x128xbf16>, vector<128x128xf32> -> vector<128x128xf32>
    %cst_5 = arith.constant dense<0.000000e+00> : vector<128xf32>
    %5 = vector.multi_reduction <add>, %4, %cst_5 [0] : vector<128x128xf32> to vector<128xf32>
    %6 = vector.shape_cast %5 : vector<128xf32> to vector<1x128xf32>
    %7 = vector.shape_cast %6 : vector<1x128xf32> to vector<1x1x1x128xf32>
    %c0_6 = arith.constant 0 : index
    %c0_7 = arith.constant 0 : index
    %c0_8 = arith.constant 0 : index
    %c0_9 = arith.constant 0 : index
    %8 = vector.load %arg5[%c0_6, %c0_7, %c0_8, %c0_9] : memref<1x1x1x128xf32, #tpu.memory_space<vmem>>, vector<1x1x1x128xf32>
    tpu.vector_store %arg5[%c0_6, %c0_7, %c0_8, %c0_9], %7 {strides = array<i32>} : memref<1x1x1x128xf32, #tpu.memory_space<vmem>>, vector<1x1x1x128xf32>,
    %9 = arith.mulf %4, %4 : vector<128x128xf32>
    %cst_10 = arith.constant dense<0.000000e+00> : vector<128xf32>
    %10 = vector.multi_reduction <add>, %9, %cst_10 [0] : vector<128x128xf32> to vector<128xf32>
    %11 = vector.shape_cast %10 : vector<128xf32> to vector<1x128xf32>
    %12 = vector.shape_cast %11 : vector<1x128xf32> to vector<1x1x1x128xf32>
    %c0_11 = arith.constant 0 : index
    %c0_12 = arith.constant 0 : index
    %c0_13 = arith.constant 0 : index
    %c0_14 = arith.constant 0 : index
    %13 = vector.load %arg6[%c0_11, %c0_12, %c0_13, %c0_14] : memref<1x1x1x128xf32, #tpu.memory_space<vmem>>, vector<1x1x1x128xf32>
    tpu.vector_store %arg6[%c0_11, %c0_12, %c0_13, %c0_14], %12 {strides = array<i32>} : memref<1x1x1x128xf32, #tpu.memory_space<vmem>>, vector<1x1x1x128xf32>,
    %14 = arith.truncf %4 : vector<128x128xf32> to vector<128x128xbf16>
    %15 = vector.shape_cast %14 : vector<128x128xbf16> to vector<1x128x128xbf16>
    %c0_15 = arith.constant 0 : index
    %c0_16 = arith.constant 0 : index
    %c0_17 = arith.constant 0 : index
    %16 = vector.load %arg4[%c0_15, %c0_16, %c0_17] : memref<1x128x128xbf16, #tpu.memory_space<vmem>>, vector<1x128x128xbf16>
    tpu.vector_store %arg4[%c0_15, %c0_16, %c0_17], %15 {strides = array<i32>} : memref<1x128x128xbf16, #tpu.memory_space<vmem>>, vector<1x128x128xbf16>,
    return
  }
  func.func @transform_0(%arg0: i32, %arg1: i32) -> (i32, i32, i32) {
    %c0_i32 = arith.constant 0 : i32
    %c0_i32_0 = arith.constant 0 : i32
    return %arg0, %arg1, %c0_i32 : i32, i32, i32
  }
  func.func @transform_1(%arg0: i32, %arg1: i32) -> (i32, i32, i32) {
    %c0_i32 = arith.constant 0 : i32
    %c0_i32_0 = arith.constant 0 : i32
    %c0_i32_1 = arith.constant 0 : i32
    return %arg0, %c0_i32, %c0_i32_0 : i32, i32, i32
  }
  func.func @transform_2(%arg0: i32, %arg1: i32) -> (i32, i32, i32) {
    %c0_i32 = arith.constant 0 : i32
    %c0_i32_0 = arith.constant 0 : i32
    return %arg0, %arg1, %c0_i32 : i32, i32, i32
  }
  func.func @transform_3(%arg0: i32, %arg1: i32) -> (i32, i32, i32, i32) {
    %c0_i32 = arith.constant 0 : i32
    %c0_i32_0 = arith.constant 0 : i32
    %c0_i32_1 = arith.constant 0 : i32
    return %arg0, %arg1, %c0_i32, %c0_i32_0 : i32, i32, i32, i32
  }
  func.func @transform_4(%arg0: i32, %arg1: i32) -> (i32, i32, i32, i32) {
    %c0_i32 = arith.constant 0 : i32
    %c0_i32_0 = arith.constant 0 : i32
    %c0_i32_1 = arith.constant 0 : i32
    return %arg0, %arg1, %c0_i32, %c0_i32_0 : i32, i32, i32, i32
  }
}

module attributes {stable_mosaic.version = 11 : i64} {
  func.func @kernel(%arg0: i32, %arg1: i32, %arg2: memref<1x128x128xbf16, #tpu.memory_space<vmem>>, %arg3: memref<1x128xf32, #tpu.memory_space<vmem>>, %arg4: memref<1x128xf32, #tpu.memory_space<vmem>>, %arg5: memref<1x128x128xbf16, #tpu.memory_space<vmem>>) attributes {dimension_semantics = [#tpu.dimension_semantics<parallel>, #tpu.dimension_semantics<parallel>], iteration_bounds = array<i64: 4, 1>, scalar_prefetch = 0 : i64, scratch_operands = 0 : i64, tpu.core_type = #tpu.core_type<tc>, window_params = [{transform_indices = @transform_0, window_bounds = array<i64: 1, 128, 128>}, {pipeline_mode = #tpu.pipeline_mode<synchronous>, transform_indices = @transform_1, window_bounds = array<i64: 1, 128>}, {pipeline_mode = #tpu.pipeline_mode<synchronous>, transform_indices = @transform_2, window_bounds = array<i64: 1, 128>}, {transform_indices = @transform_3, window_bounds = array<i64: 1, 128, 128>}]} {
    %c0 = arith.constant 0 : index
    %c0_0 = arith.constant 0 : index
    %c0_1 = arith.constant 0 : index
    %0 = vector.load %arg2[%c0, %c0_0, %c0_1] : memref<1x128x128xbf16, #tpu.memory_space<vmem>>, vector<1x128x128xbf16>
    %1 = vector.shape_cast %0 : vector<1x128x128xbf16> to vector<128x128xbf16>
    %2 = arith.extf %1 : vector<128x128xbf16> to vector<128x128xf32>
    %c0_2 = arith.constant 0 : index
    %c0_3 = arith.constant 0 : index
    %3 = vector.load %arg3[%c0_2, %c0_3] : memref<1x128xf32, #tpu.memory_space<vmem>>, vector<1x128xf32>
    %4 = vector.broadcast %3 : vector<1x128xf32> to vector<128x128xf32>
    %5 = arith.mulf %2, %4 : vector<128x128xf32>
    %c0_4 = arith.constant 0 : index
    %c0_5 = arith.constant 0 : index
    %6 = vector.load %arg4[%c0_4, %c0_5] : memref<1x128xf32, #tpu.memory_space<vmem>>, vector<1x128xf32>
    %7 = vector.broadcast %6 : vector<1x128xf32> to vector<128x128xf32>
    %8 = arith.addf %5, %7 : vector<128x128xf32>
    %cst = arith.constant 0.000000e+00 : f32
    %9 = vector.broadcast %cst : f32 to vector<128x128xf32>
    %10 = arith.maximumf %8, %9 : vector<128x128xf32>
    %11 = arith.truncf %10 : vector<128x128xf32> to vector<128x128xbf16>
    %12 = vector.shape_cast %11 : vector<128x128xbf16> to vector<1x128x128xbf16>
    %c0_6 = arith.constant 0 : index
    %c0_7 = arith.constant 0 : index
    %c0_8 = arith.constant 0 : index
    %13 = vector.load %arg5[%c0_6, %c0_7, %c0_8] : memref<1x128x128xbf16, #tpu.memory_space<vmem>>, vector<1x128x128xbf16>
    tpu.vector_store %arg5[%c0_6, %c0_7, %c0_8], %12 {strides = array<i32>} : memref<1x128x128xbf16, #tpu.memory_space<vmem>>, vector<1x128x128xbf16>,
    return
  }
  func.func @transform_0(%arg0: i32, %arg1: i32) -> (i32, i32, i32) {
    %c0_i32 = arith.constant 0 : i32
    %c0_i32_0 = arith.constant 0 : i32
    return %arg0, %arg1, %c0_i32 : i32, i32, i32
  }
  func.func @transform_1(%arg0: i32, %arg1: i32) -> (i32, i32) {
    %c0_i32 = arith.constant 0 : i32
    %c0_i32_0 = arith.constant 0 : i32
    %c0_i32_1 = arith.constant 0 : i32
    return %c0_i32, %c0_i32_0 : i32, i32
  }
  func.func @transform_2(%arg0: i32, %arg1: i32) -> (i32, i32) {
    %c0_i32 = arith.constant 0 : i32
    %c0_i32_0 = arith.constant 0 : i32
    %c0_i32_1 = arith.constant 0 : i32
    return %c0_i32, %c0_i32_0 : i32, i32
  }
  func.func @transform_3(%arg0: i32, %arg1: i32) -> (i32, i32, i32) {
    %c0_i32 = arith.constant 0 : i32
    %c0_i32_0 = arith.constant 0 : i32
    return %arg0, %arg1, %c0_i32 : i32, i32, i32
  }
}

module attributes {stable_mosaic.version = 11 : i64} {
  func.func @kernel(%arg0: i32, %arg1: i32, %arg2: memref<1x512x128xbf16, #tpu.memory_space<vmem>>, %arg3: memref<1x128x128xbf16, #tpu.memory_space<vmem>>, %arg4: memref<1x128xf32, #tpu.memory_space<vmem>>, %arg5: memref<1x512x128xf32, #tpu.memory_space<vmem>>) attributes {dimension_semantics = [#tpu.dimension_semantics<parallel>, #tpu.dimension_semantics<parallel>], iteration_bounds = array<i64: 4, 1>, scalar_prefetch = 0 : i64, scratch_operands = 0 : i64, tpu.core_type = #tpu.core_type<tc>, window_params = [{transform_indices = @transform_0, window_bounds = array<i64: 1, 512, 128>}, {transform_indices = @transform_1, window_bounds = array<i64: 1, 128, 128>}, {pipeline_mode = #tpu.pipeline_mode<synchronous>, transform_indices = @transform_2, window_bounds = array<i64: 1, 128>}, {transform_indices = @transform_3, window_bounds = array<i64: 1, 512, 128>}]} {
    %c0 = arith.constant 0 : index
    %c0_0 = arith.constant 0 : index
    %c0_1 = arith.constant 0 : index
    %0 = vector.load %arg2[%c0, %c0_0, %c0_1] : memref<1x512x128xbf16, #tpu.memory_space<vmem>>, vector<1x512x128xbf16>
    %1 = vector.shape_cast %0 : vector<1x512x128xbf16> to vector<512x128xbf16>
    %c0_2 = arith.constant 0 : index
    %c0_3 = arith.constant 0 : index
    %c0_4 = arith.constant 0 : index
    %2 = vector.load %arg3[%c0_2, %c0_3, %c0_4] : memref<1x128x128xbf16, #tpu.memory_space<vmem>>, vector<1x128x128xbf16>
    %3 = vector.shape_cast %2 : vector<1x128x128xbf16> to vector<128x128xbf16>
    %cst = arith.constant dense<0.000000e+00> : vector<512x128xf32>
    %4 = tpu.matmul %1, %3, %cst {dimension_numbers = #tpu.dot_dimension_numbers<[1], [0], [0], [1], [0, 0, 1, 1], [], []>} : vector<512x128xbf16>, vector<128x128xbf16>, vector<512x128xf32> -> vector<512x128xf32>
    %c0_5 = arith.constant 0 : index
    %c0_6 = arith.constant 0 : index
    %5 = vector.load %arg4[%c0_5, %c0_6] : memref<1x128xf32, #tpu.memory_space<vmem>>, vector<1x128xf32>
    %6 = vector.broadcast %5 : vector<1x128xf32> to vector<512x128xf32>
    %7 = arith.addf %4, %6 : vector<512x128xf32>
    %8 = math.tanh %7 : vector<512x128xf32>
    %9 = vector.shape_cast %8 : vector<512x128xf32> to vector<1x512x128xf32>
    %c0_7 = arith.constant 0 : index
    %c0_8 = arith.constant 0 : index
    %c0_9 = arith.constant 0 : index
    %10 = vector.load %arg5[%c0_7, %c0_8, %c0_9] : memref<1x512x128xf32, #tpu.memory_space<vmem>>, vector<1x512x128xf32>
    tpu.vector_store %arg5[%c0_7, %c0_8, %c0_9], %9 {strides = array<i32>} : memref<1x512x128xf32, #tpu.memory_space<vmem>>, vector<1x512x128xf32>,
    return
  }
  func.func @transform_0(%arg0: i32, %arg1: i32) -> (i32, i32, i32) {
    %c0_i32 = arith.constant 0 : i32
    %c0_i32_0 = arith.constant 0 : i32
    return %arg0, %arg1, %c0_i32 : i32, i32, i32
  }
  func.func @transform_1(%arg0: i32, %arg1: i32) -> (i32, i32, i32) {
    %c0_i32 = arith.constant 0 : i32
    %c0_i32_0 = arith.constant 0 : i32
    %c0_i32_1 = arith.constant 0 : i32
    return %arg0, %c0_i32, %c0_i32_0 : i32, i32, i32
  }
  func.func @transform_2(%arg0: i32, %arg1: i32) -> (i32, i32) {
    %c0_i32 = arith.constant 0 : i32
    %c0_i32_0 = arith.constant 0 : i32
    %c0_i32_1 = arith.constant 0 : i32
    return %c0_i32, %c0_i32_0 : i32, i32
  }
  func.func @transform_3(%arg0: i32, %arg1: i32) -> (i32, i32, i32) {
    %c0_i32 = arith.constant 0 : i32
    %c0_i32_0 = arith.constant 0 : i32
    return %arg0, %arg1, %c0_i32 : i32, i32, i32
  }
}

</mosaic_0001>

<llo_original>
// kernel: unet_generator_forward.17
$region0: #{unet_generator_forward.17}
  #allocation0 [shape = 'u32[]', space=smem, size = 0x4, offset = 0x4, fixed_abs, tag = 'smem constant byte address 0x4 - core index']
  #allocation1 [shape = 'u32[72,128]{1,0:T(1,128)}', space=vmem, size = 0x9000, scoped, tag = 'internal scratch']
  %s0 = inlined_call_operand.vmem [shape: bf16[1,512,128], index: 0, kind: input, shape index: {}]
  %s1 = inlined_call_operand.vmem [shape: bf16[1,128,128], index: 1, kind: input, shape index: {}]
  %s2 = inlined_call_operand.vmem [shape: bf16[1,512,128], index: 2, kind: output, shape index: {}]
  %s3 = sld [smem:[#allocation0]]
  $region41: #{unet_generator_forward.17} parent=0
    _
  %s5 = ssub.s32 1, %s3
  %s6 = scalar_select 0, %s5, %s3
  loop: start=0, step=1, limit=4
  $region2: #{unet_generator_forward.17} parent=0 // loop_pre_header
    _
  $region3: #{unet_generator_forward.17} parent=0 // loop_header
    %s8 = sphi 0, %s12
    %p9 = scmp.ge.s32.totalorder %s8, 4
    %s15 = sphi 0, %s27
    %s16 = sphi 0, %s23
    %s17 = sphi 0, %s15
    %s18 = sphi 0, %s16
    %s19 = sphi 0, %s17
    %s20 = sphi 0, %s18
    %s32 = sphi 0, %s34
    %s35 = sphi 0, %s32
    %s36 = sphi 0, %s35
    %s52 = sphi 0, %s36
    %s58 = sphi 0, %s60
    %s61 = sphi 0, %s58
    %s62 = sphi 0, %s61
    %s78 = sphi 0, %s62
    %s86 = sphi 0, %s88
    %s89 = sphi 0, %s86
    %s90 = sphi 0, %s89
    %s106 = sphi 0, %s90
  $region4: #{unet_generator_forward.17} parent=0 // loop_header_branch
    %11 = sbr.rel (%p9) target = $region8
  $region5: #{unet_generator_forward.17} parent=0 // loop_body
    %s13 = ssub.s32 %s8, 1
    %s14 = ssub.s32 %s8, 2
    %s21 = sadd.s32 1, %s16
    %p22 = scmp.ge.s32.totalorder %s21, 2
    %s23 = scalar_select %p22, 0, %s21
    %s24 = sadd.s32 1, %s15
    %s25 = scalar_select %p22, %s24, %s15
    %p26 = scmp.ge.s32.totalorder %s25, 1
    %s27 = scalar_select %p26, 0, %s25
    %s28 = ssub.s32 %s15, %s27
    %s29 = ssub.s32 %s16, %s23
    %s30 = sor.u32 %s28, %s29
    %p31 = scmp.eq.s32.totalorder %s30, 0
    %s33 = sadd.s32 %s32, 1
    %s34 = scalar_select %p31, %s32, %s33
    %p37 = pneg %p31
    %p38 = scmp.eq.s32.totalorder %s8, 1
    %p39 = por %p37, %p38
    %p40 = scmp.ne.s32.totalorder %s32, %s35
    %p41 = scmp.eq.s32.totalorder %s8, 0
    %p42 = por %p40, %p41
    %p43 = scmp.ne.s32.totalorder %s32, %s35
    %p44 = scmp.eq.s32.totalorder %s13, 1
    %p45 = por %p43, %p44
    %p46 = scmp.ne.s32.totalorder %s35, %s36
    %p47 = scmp.eq.s32.totalorder %s13, 0
    %p48 = por %p46, %p47
    %p49 = scmp.ne.s32.totalorder %s35, %s36
    %p50 = scmp.eq.s32.totalorder %s14, 1
    %p51 = por %p49, %p50
    %p53 = scmp.ne.s32.totalorder %s36, %s52
    %p54 = scmp.eq.s32.totalorder %s14, 0
    %p55 = por %p53, %p54
    %s56 = ssub.s32 %s15, %s27
    %p57 = scmp.eq.s32.totalorder %s56, 0
    %s59 = sadd.s32 %s58, 1
    %s60 = scalar_select %p57, %s58, %s59
    %p63 = pneg %p57
    %p64 = scmp.eq.s32.totalorder %s8, 1
    %p65 = por %p63, %p64
    %p66 = scmp.ne.s32.totalorder %s58, %s61
    %p67 = scmp.eq.s32.totalorder %s8, 0
    %p68 = por %p66, %p67
    %p69 = scmp.ne.s32.totalorder %s58, %s61
    %p70 = scmp.eq.s32.totalorder %s13, 1
    %p71 = por %p69, %p70
    %p72 = scmp.ne.s32.totalorder %s61, %s62
    %p73 = scmp.eq.s32.totalorder %s13, 0
    %p74 = por %p72, %p73
    %p75 = scmp.ne.s32.totalorder %s61, %s62
    %p76 = scmp.eq.s32.totalorder %s14, 1
    %p77 = por %p75, %p76
    %p79 = scmp.ne.s32.totalorder %s62, %s78
    %p80 = scmp.eq.s32.totalorder %s14, 0
    %p81 = por %p79, %p80
    %s82 = ssub.s32 %s15, %s27
    %s83 = ssub.s32 %s16, %s23
    %s84 = sor.u32 %s82, %s83
    %p85 = scmp.eq.s32.totalorder %s84, 0
    %s87 = sadd.s32 %s86, 1
    %s88 = scalar_select %p85, %s86, %s87
    %p91 = pneg %p85
    %p92 = scmp.eq.s32.totalorder %s8, 1
    %p93 = por %p91, %p92
    %p94 = scmp.ne.s32.totalorder %s86, %s89
    %p95 = scmp.eq.s32.totalorder %s8, 0
    %p96 = por %p94, %p95
    %p97 = scmp.ne.s32.totalorder %s86, %s89
    %p98 = scmp.eq.s32.totalorder %s13, 1
    %p99 = por %p97, %p98
    %p100 = scmp.ne.s32.totalorder %s89, %s90
    %p101 = scmp.eq.s32.totalorder %s13, 0
    %p102 = por %p100, %p101
    %p103 = scmp.ne.s32.totalorder %s89, %s90
    %p104 = scmp.eq.s32.totalorder %s14, 1
    %p105 = por %p103, %p104
    %p107 = scmp.ne.s32.totalorder %s90, %s106
    %p108 = scmp.eq.s32.totalorder %s14, 0
    %p109 = por %p107, %p108
    %p110 = scmp.le.s32.totalorder 1, %s8
    %p111 = scmp.lt.s32.totalorder %s8, 3
    %p112 = pnand %p110, %p111
    %p113 = pneg %p112
    // Predicated region
    $region9: #{unet_generator_forward.17} parent=5 // pred_check
      _
    $region10: #{unet_generator_forward.17} parent=5 // pred_check_branch
      %115 = sbr.rel (%p112) target = $region12
    $region11: #{unet_generator_forward.17} parent=5 // pred_region
      %s116 = ssub.s32 %s8, 1
      // Predicated region
      $region13: #{unet_generator_forward.17} parent=11 // pred_check
        %p117 = pneg %p74
      $region14: #{unet_generator_forward.17} parent=11 // pred_check_branch
        %119 = sbr.rel (%p117) target = $region16
      $region15: #{unet_generator_forward.17} parent=11 // pred_region
        %p120 = scmp.lt.s32.totalorder %s17, 0
        %s121 = scalar_select %p120, %s17, 0
        %s122 = smul.addr %s121, 16
        %s123 = smul.addr %s122, 4
        %s124 = scalar_lea.vmem %s1, %s123
      $region16: #{unet_generator_forward.17} parent=11 // pred_fallthru
        _
    $region12: #{unet_generator_forward.17} parent=5 // pred_fallthru
      _
    %p125 = scmp.lt.s32.totalorder %s8, 2
    // Predicated region
    $region17: #{unet_generator_forward.17} parent=5 // pred_check
      %p126 = pneg %p125
    $region18: #{unet_generator_forward.17} parent=5 // pred_check_branch
      %128 = sbr.rel (%p126) target = $region20
    $region19: #{unet_generator_forward.17} parent=5 // pred_region
      // Predicated region
      $region21: #{unet_generator_forward.17} parent=19 // pred_check
        %p129 = pneg %p42
      $region22: #{unet_generator_forward.17} parent=19 // pred_check_branch
        %131 = sbr.rel (%p129) target = $region24
      $region23: #{unet_generator_forward.17} parent=19 // pred_region
        %s132 = smul.u32 32, %s16
        %p133 = scmp.lt.s32.totalorder %s15, 0
        %s134 = scalar_select %p133, %s15, 0
        %p135 = scmp.lt.s32.totalorder %s132, 63
        %s136 = scalar_select %p135, %s132, 63
        %s137 = smul.addr %s134, 64
        %s138 = sadd.s32 %s136, %s137
        %s139 = smul.addr %s138, 4
        %s140 = scalar_lea.vmem %s0, %s139
        %s141 = smul.u32 32, %s16
      $region24: #{unet_generator_forward.17} parent=19 // pred_fallthru
        _
    $region20: #{unet_generator_forward.17} parent=5 // pred_fallthru
      _
    %p142 = scmp.le.s32.totalorder 1, %s8
    %p143 = scmp.lt.s32.totalorder %s8, 3
    %p144 = pnand %p142, %p143
    %p145 = pneg %p144
    // Predicated region
    $region25: #{unet_generator_forward.17} parent=5 // pred_check
      _
    $region26: #{unet_generator_forward.17} parent=5 // pred_check_branch
      %147 = sbr.rel (%p144) target = $region28
    $region27: #{unet_generator_forward.17} parent=5 // pred_region
      %s148 = ssub.s32 %s8, 1
      %s149 = smul.u32 32, %s18
      %p150 = scmp.lt.s32.totalorder %s17, 0
      %s151 = scalar_select %p150, %s17, 0
      %p152 = scmp.lt.s32.totalorder %s149, 63
      %s153 = scalar_select %p152, %s149, 63
      %s154 = smul.addr %s151, 64
      %s155 = sadd.s32 %s153, %s154
      %s156 = smul.addr %s155, 4
      %s157 = scalar_lea.vmem %s0, %s156
      %p158 = pneg %p48
      %p159 = pneg %p45
      %p160 = scmp.lt.s32.totalorder %s17, 0
      %s161 = scalar_select %p160, %s17, 0
      %s162 = smul.addr %s161, 16
      %s163 = smul.addr %s162, 4
      %s164 = scalar_lea.vmem %s1, %s163
      %p165 = pneg %p74
      %p166 = pneg %p71
      %p167 = pneg %p102
      %p168 = pneg %p99
      %s169 = smul.u32 32, %s18
      %p170 = scmp.lt.s32.totalorder %s17, 0
      %s171 = scalar_select %p170, %s17, 0
      %p172 = scmp.lt.s32.totalorder %s169, 63
      %s173 = scalar_select %p172, %s169, 63
      %s174 = smul.addr %s171, 64
      %s175 = sadd.s32 %s173, %s174
      %s176 = smul.addr %s175, 4
      %s177 = scalar_lea.vmem %s2, %s176
      %s178 = smul.u32 32, %s18
      %p179 = scmp.lt.s32.totalorder %s17, 0
      %s180 = scalar_select %p179, %s17, 0
      %p181 = scmp.lt.s32.totalorder %s178, 63
      %s182 = scalar_select %p181, %s178, 63
      %s183 = smul.addr %s180, 64
      %s184 = sadd.s32 %s182, %s183
      %s185 = smul.addr %s184, 4
      %s186 = scalar_lea.vmem %s0, %s185
      %s187 = smul.u32 32, %s18
      %p188 = scmp.lt.s32.totalorder %s17, 0
      %s189 = scalar_select %p188, %s17, 0
      %s190 = smul.addr %s189, 16
      %s191 = smul.addr %s190, 4
      %s192 = scalar_lea.vmem %s1, %s191
      %s193 = smul.u32 32, %s18
      %p194 = scmp.lt.s32.totalorder %s17, 0
      %s195 = scalar_select %p194, %s17, 0
      %p196 = scmp.lt.s32.totalorder %s193, 63
      %s197 = scalar_select %p196, %s193, 63
      %s198 = smul.addr %s195, 64
      %s199 = sadd.s32 %s197, %s198
      %s200 = smul.addr %s199, 4
      %s201 = scalar_lea.vmem %s2, %s200
      %s202 = smul.u32 32, %s18
      %v203 = vld [vmem:[%s186] sm:$0xf]
      %v204 = vld [vmem:[%s186 + $0x4] sm:$0xf]
      %v205 = vld [vmem:[%s186 + $0x8] sm:$0xf]
      %v206 = vld [vmem:[%s186 + $0xc] sm:$0xf]
      %v207 = vld [vmem:[%s186 + $0x10] sm:$0xf]
      %v208 = vld [vmem:[%s186 + $0x14] sm:$0xf]
      %v209 = vld [vmem:[%s186 + $0x18] sm:$0xf]
      %v210 = vld [vmem:[%s186 + $0x1c] sm:$0xf]
      %v211 = vld [vmem:[%s186 + $0x20] sm:$0xf]
      %v212 = vld [vmem:[%s186 + $0x24] sm:$0xf]
      %v213 = vld [vmem:[%s186 + $0x28] sm:$0xf]
      %v214 = vld [vmem:[%s186 + $0x2c] sm:$0xf]
      %v215 = vld [vmem:[%s186 + $0x30] sm:$0xf]
      %v216 = vld [vmem:[%s186 + $0x34] sm:$0xf]
      %v217 = vld [vmem:[%s186 + $0x38] sm:$0xf]
      %v218 = vld [vmem:[%s186 + $0x3c] sm:$0xf]
      %v219 = vld [vmem:[%s186 + $0x40] sm:$0xf]
      %v220 = vld [vmem:[%s186 + $0x44] sm:$0xf]
      %v221 = vld [vmem:[%s186 + $0x48] sm:$0xf]
      %v222 = vld [vmem:[%s186 + $0x4c] sm:$0xf]
      %v223 = vld [vmem:[%s186 + $0x50] sm:$0xf]
      %v224 = vld [vmem:[%s186 + $0x54] sm:$0xf]
      %v225 = vld [vmem:[%s186 + $0x58] sm:$0xf]
      %v226 = vld [vmem:[%s186 + $0x5c] sm:$0xf]
      %v227 = vld [vmem:[%s186 + $0x60] sm:$0xf]
      %v228 = vld [vmem:[%s186 + $0x64] sm:$0xf]
      %v229 = vld [vmem:[%s186 + $0x68] sm:$0xf]
      %v230 = vld [vmem:[%s186 + $0x6c] sm:$0xf]
      %v231 = vld [vmem:[%s186 + $0x70] sm:$0xf]
      %v232 = vld [vmem:[%s186 + $0x74] sm:$0xf]
      %v233 = vld [vmem:[%s186 + $0x78] sm:$0xf]
      %v234 = vld [vmem:[%s186 + $0x7c] sm:$0xf]
      %v235 = vld [vmem:[%s192] sm:$0xf]
      %v236 = vld [vmem:[%s192 + $0x4] sm:$0xf]
      %v237 = vld [vmem:[%s192 + $0x8] sm:$0xf]
      %v238 = vld [vmem:[%s192 + $0xc] sm:$0xf]
      %v239 = vld [vmem:[%s192 + $0x10] sm:$0xf]
      %v240 = vld [vmem:[%s192 + $0x14] sm:$0xf]
      %v241 = vld [vmem:[%s192 + $0x18] sm:$0xf]
      %v242 = vld [vmem:[%s192 + $0x1c] sm:$0xf]
      %v243 = vld [vmem:[%s192 + $0x20] sm:$0xf]
      %v244 = vld [vmem:[%s192 + $0x24] sm:$0xf]
      %v245 = vld [vmem:[%s192 + $0x28] sm:$0xf]
      %v246 = vld [vmem:[%s192 + $0x2c] sm:$0xf]
      %v247 = vld [vmem:[%s192 + $0x30] sm:$0xf]
      %v248 = vld [vmem:[%s192 + $0x34] sm:$0xf]
      %v249 = vld [vmem:[%s192 + $0x38] sm:$0xf]
      %v250 = vld [vmem:[%s192 + $0x3c] sm:$0xf]
      %v283 = vunpack.c.l.b16 %v203
      %v284 = vunpack.c.l.b16 %v204
      %v285 = vunpack.c.l.b16 %v205
      %v286 = vunpack.c.l.b16 %v206
      %v287 = vunpack.c.l.b16 %v207
      %v288 = vunpack.c.l.b16 %v208
      %v289 = vunpack.c.l.b16 %v209
      %v290 = vunpack.c.l.b16 %v210
      %v291 = vunpack.c.l.b16 %v211
      %v292 = vunpack.c.l.b16 %v212
      %v293 = vunpack.c.l.b16 %v213
      %v294 = vunpack.c.l.b16 %v214
      %v295 = vunpack.c.l.b16 %v215
      %v296 = vunpack.c.l.b16 %v216
      %v297 = vunpack.c.l.b16 %v217
      %v298 = vunpack.c.l.b16 %v218
      %v299 = vunpack.c.l.b16 %v219
      %v300 = vunpack.c.l.b16 %v220
      %v301 = vunpack.c.l.b16 %v221
      %v302 = vunpack.c.l.b16 %v222
      %v303 = vunpack.c.l.b16 %v223
      %v304 = vunpack.c.l.b16 %v224
      %v305 = vunpack.c.l.b16 %v225
      %v306 = vunpack.c.l.b16 %v226
      %v307 = vunpack.c.l.b16 %v227
      %v308 = vunpack.c.l.b16 %v228
      %v309 = vunpack.c.l.b16 %v229
      %v310 = vunpack.c.l.b16 %v230
      %v311 = vunpack.c.l.b16 %v231
      %v312 = vunpack.c.l.b16 %v232
      %v313 = vunpack.c.l.b16 %v233
      %v314 = vunpack.c.l.b16 %v234
      %v315 = vpack.c.b16 %v284, %v283
      %v316 = vpack.c.b16 %v286, %v285
      %v317 = vpack.c.b16 %v288, %v287
      %v318 = vpack.c.b16 %v290, %v289
      %v319 = vpack.c.b16 %v292, %v291
      %v320 = vpack.c.b16 %v294, %v293
      %v321 = vpack.c.b16 %v296, %v295
      %v322 = vpack.c.b16 %v298, %v297
      %v323 = vpack.c.b16 %v300, %v299
      %v324 = vpack.c.b16 %v302, %v301
      %v325 = vpack.c.b16 %v304, %v303
      %v326 = vpack.c.b16 %v306, %v305
      %v327 = vpack.c.b16 %v308, %v307
      %v328 = vpack.c.b16 %v310, %v309
      %v329 = vpack.c.b16 %v312, %v311
      %v330 = vpack.c.b16 %v314, %v313
      %v363 = vunpack.c.l.b16 %v235
      %v364 = vunpack.c.l.b16 %v236
      %v365 = vunpack.c.l.b16 %v237
      %v366 = vunpack.c.l.b16 %v238
      %v367 = vunpack.c.l.b16 %v239
      %v368 = vunpack.c.l.b16 %v240
      %v369 = vunpack.c.l.b16 %v241
      %v370 = vunpack.c.l.b16 %v242
      %v371 = vunpack.c.l.b16 %v243
      %v372 = vunpack.c.l.b16 %v244
      %v373 = vunpack.c.l.b16 %v245
      %v374 = vunpack.c.l.b16 %v246
      %v375 = vunpack.c.l.b16 %v247
      %v376 = vunpack.c.l.b16 %v248
      %v377 = vunpack.c.l.b16 %v249
      %v378 = vunpack.c.l.b16 %v250
      %v379 = vpack.c.b16 %v364, %v363
      %v380 = vpack.c.b16 %v366, %v365
      %v381 = vpack.c.b16 %v368, %v367
      %v382 = vpack.c.b16 %v370, %v369
      %v383 = vpack.c.b16 %v372, %v371
      %v384 = vpack.c.b16 %v374, %v373
      %v385 = vpack.c.b16 %v376, %v375
      %v386 = vpack.c.b16 %v378, %v377
      %395 = vmatpush.bf16.msra.mxu0 %v386
      %396 = vmatpush.bf16.msra.mxu0 %v385
      %397 = vmatpush.bf16.msra.mxu0 %v384
      %398 = vmatpush.bf16.msra.mxu0 %v383
      %399 = vmatpush.bf16.msra.mxu0 %v382
      %400 = vmatpush.bf16.msra.mxu0 %v381
      %401 = vmatpush.bf16.msra.mxu0 %v380
      %402 = vmatpush.bf16.msra.mxu0 %v379
      %403 = vmatmul.bf16.gmra.mxu0 %v315
      %v404 = vpop.f32.mrf.mxu0
      %v405 = vadd.f32 0.0, %v404
      %v406 = vpop.f32.mrf.mxu0
      %v407 = vadd.f32 0.0, %v406
      %408 = vmatmul.bf16.gmra.mxu0 %v316
      %v409 = vpop.f32.mrf.mxu0
      %v410 = vadd.f32 0.0, %v409
      %v411 = vpop.f32.mrf.mxu0
      %v412 = vadd.f32 0.0, %v411
      %413 = vmatmul.bf16.gmra.mxu0 %v317
      %v414 = vpop.f32.mrf.mxu0
      %v415 = vadd.f32 0.0, %v414
      %v416 = vpop.f32.mrf.mxu0
      %v417 = vadd.f32 0.0, %v416
      %418 = vmatmul.bf16.gmra.mxu0 %v318
      %v419 = vpop.f32.mrf.mxu0
      %v420 = vadd.f32 0.0, %v419
      %v421 = vpop.f32.mrf.mxu0
      %v422 = vadd.f32 0.0, %v421
      %423 = vmatmul.bf16.gmra.mxu0 %v319
      %v424 = vpop.f32.mrf.mxu0
      %v425 = vadd.f32 0.0, %v424
      %v426 = vpop.f32.mrf.mxu0
      %v427 = vadd.f32 0.0, %v426
      %428 = vmatmul.bf16.gmra.mxu0 %v320
      %v429 = vpop.f32.mrf.mxu0
      %v430 = vadd.f32 0.0, %v429
      %v431 = vpop.f32.mrf.mxu0
      %v432 = vadd.f32 0.0, %v431
      %433 = vmatmul.bf16.gmra.mxu0 %v321
      %v434 = vpop.f32.mrf.mxu0
      %v435 = vadd.f32 0.0, %v434
      %v436 = vpop.f32.mrf.mxu0
      %v437 = vadd.f32 0.0, %v436
      %438 = vmatmul.bf16.gmra.mxu0 %v322
      %v439 = vpop.f32.mrf.mxu0
      %v440 = vadd.f32 0.0, %v439
      %v441 = vpop.f32.mrf.mxu0
      %v442 = vadd.f32 0.0, %v441
      %443 = vmatmul.bf16.gmra.mxu0 %v323
      %v444 = vpop.f32.mrf.mxu0
      %v445 = vadd.f32 0.0, %v444
      %v446 = vpop.f32.mrf.mxu0
      %v447 = vadd.f32 0.0, %v446
      %448 = vmatmul.bf16.gmra.mxu0 %v324
      %v449 = vpop.f32.mrf.mxu0
      %v450 = vadd.f32 0.0, %v449
      %v451 = vpop.f32.mrf.mxu0
      %v452 = vadd.f32 0.0, %v451
      %453 = vmatmul.bf16.gmra.mxu0 %v325
      %v454 = vpop.f32.mrf.mxu0
      %v455 = vadd.f32 0.0, %v454
      %v456 = vpop.f32.mrf.mxu0
      %v457 = vadd.f32 0.0, %v456
      %458 = vmatmul.bf16.gmra.mxu0 %v326
      %v459 = vpop.f32.mrf.mxu0
      %v460 = vadd.f32 0.0, %v459
      %v461 = vpop.f32.mrf.mxu0
      %v462 = vadd.f32 0.0, %v461
      %463 = vmatmul.bf16.gmra.mxu0 %v327
      %v464 = vpop.f32.mrf.mxu0
      %v465 = vadd.f32 0.0, %v464
      %v466 = vpop.f32.mrf.mxu0
      %v467 = vadd.f32 0.0, %v466
      %468 = vmatmul.bf16.gmra.mxu0 %v328
      %v469 = vpop.f32.mrf.mxu0
      %v470 = vadd.f32 0.0, %v469
      %v471 = vpop.f32.mrf.mxu0
      %v472 = vadd.f32 0.0, %v471
      %473 = vmatmul.bf16.gmra.mxu0 %v329
      %v474 = vpop.f32.mrf.mxu0
      %v475 = vadd.f32 0.0, %v474
      %v476 = vpop.f32.mrf.mxu0
      %v477 = vadd.f32 0.0, %v476
      %478 = vmatmul.bf16.gmra.mxu0 %v330
      %v479 = vpop.f32.mrf.mxu0
      %v480 = vadd.f32 0.0, %v479
      %v481 = vpop.f32.mrf.mxu0
      %v482 = vadd.f32 0.0, %v481
      %483 = vdwg.mxu0
      %v484 = vpack.c.bf16 %v405, %v405
      %v485 = vpack.c.bf16 %v407, %v407
      %v486 = vpack.c.bf16 %v410, %v410
      %v487 = vpack.c.bf16 %v412, %v412
      %v488 = vpack.c.bf16 %v415, %v415
      %v489 = vpack.c.bf16 %v417, %v417
      %v490 = vpack.c.bf16 %v420, %v420
      %v491 = vpack.c.bf16 %v422, %v422
      %v492 = vpack.c.bf16 %v425, %v425
      %v493 = vpack.c.bf16 %v427, %v427
      %v494 = vpack.c.bf16 %v430, %v430
      %v495 = vpack.c.bf16 %v432, %v432
      %v496 = vpack.c.bf16 %v435, %v435
      %v497 = vpack.c.bf16 %v437, %v437
      %v498 = vpack.c.bf16 %v440, %v440
      %v499 = vpack.c.bf16 %v442, %v442
      %v500 = vpack.c.bf16 %v445, %v445
      %v501 = vpack.c.bf16 %v447, %v447
      %v502 = vpack.c.bf16 %v450, %v450
      %v503 = vpack.c.bf16 %v452, %v452
      %v504 = vpack.c.bf16 %v455, %v455
      %v505 = vpack.c.bf16 %v457, %v457
      %v506 = vpack.c.bf16 %v460, %v460
      %v507 = vpack.c.bf16 %v462, %v462
      %v508 = vpack.c.bf16 %v465, %v465
      %v509 = vpack.c.bf16 %v467, %v467
      %v510 = vpack.c.bf16 %v470, %v470
      %v511 = vpack.c.bf16 %v472, %v472
      %v512 = vpack.c.bf16 %v475, %v475
      %v513 = vpack.c.bf16 %v477, %v477
      %v514 = vpack.c.bf16 %v480, %v480
      %v515 = vpack.c.bf16 %v482, %v482
      %516 = vst [vmem:[%s201] sm:$0xf] %v484
      %517 = vst [vmem:[%s201 + $0x4] sm:$0xf] %v485
      %518 = vst [vmem:[%s201 + $0x8] sm:$0xf] %v486
      %519 = vst [vmem:[%s201 + $0xc] sm:$0xf] %v487
      %520 = vst [vmem:[%s201 + $0x10] sm:$0xf] %v488
      %521 = vst [vmem:[%s201 + $0x14] sm:$0xf] %v489
      %522 = vst [vmem:[%s201 + $0x18] sm:$0xf] %v490
      %523 = vst [vmem:[%s201 + $0x1c] sm:$0xf] %v491
      %524 = vst [vmem:[%s201 + $0x20] sm:$0xf] %v492
      %525 = vst [vmem:[%s201 + $0x24] sm:$0xf] %v493
      %526 = vst [vmem:[%s201 + $0x28] sm:$0xf] %v494
      %527 = vst [vmem:[%s201 + $0x2c] sm:$0xf] %v495
      %528 = vst [vmem:[%s201 + $0x30] sm:$0xf] %v496
      %529 = vst [vmem:[%s201 + $0x34] sm:$0xf] %v497
      %530 = vst [vmem:[%s201 + $0x38] sm:$0xf] %v498
      %531 = vst [vmem:[%s201 + $0x3c] sm:$0xf] %v499
      %532 = vst [vmem:[%s201 + $0x40] sm:$0xf] %v500
      %533 = vst [vmem:[%s201 + $0x44] sm:$0xf] %v501
      %534 = vst [vmem:[%s201 + $0x48] sm:$0xf] %v502
      %535 = vst [vmem:[%s201 + $0x4c] sm:$0xf] %v503
      %536 = vst [vmem:[%s201 + $0x50] sm:$0xf] %v504
      %537 = vst [vmem:[%s201 + $0x54] sm:$0xf] %v505
      %538 = vst [vmem:[%s201 + $0x58] sm:$0xf] %v506
      %539 = vst [vmem:[%s201 + $0x5c] sm:$0xf] %v507
      %540 = vst [vmem:[%s201 + $0x60] sm:$0xf] %v508
      %541 = vst [vmem:[%s201 + $0x64] sm:$0xf] %v509
      %542 = vst [vmem:[%s201 + $0x68] sm:$0xf] %v510
      %543 = vst [vmem:[%s201 + $0x6c] sm:$0xf] %v511
      %544 = vst [vmem:[%s201 + $0x70] sm:$0xf] %v512
      %545 = vst [vmem:[%s201 + $0x74] sm:$0xf] %v513
      %546 = vst [vmem:[%s201 + $0x78] sm:$0xf] %v514
      %547 = vst [vmem:[%s201 + $0x7c] sm:$0xf] %v515
      %s548 = smul.u32 32, %s18
      %p549 = scmp.lt.s32.totalorder %s17, 0
      %s550 = scalar_select %p549, %s17, 0
      %p551 = scmp.lt.s32.totalorder %s548, 63
      %s552 = scalar_select %p551, %s548, 63
      %s553 = smul.addr %s550, 64
      %s554 = sadd.s32 %s552, %s553
      %s555 = smul.addr %s554, 4
      %s556 = scalar_lea.vmem %s2, %s555
      // Predicated region
      $region29: #{unet_generator_forward.17} parent=27 // pred_check
        %p557 = pneg %p99
      $region30: #{unet_generator_forward.17} parent=27 // pred_check_branch
        %559 = sbr.rel (%p557) target = $region32
      $region31: #{unet_generator_forward.17} parent=27 // pred_region
        %s560 = smul.u32 32, %s18
      $region32: #{unet_generator_forward.17} parent=27 // pred_fallthru
        _
    $region28: #{unet_generator_forward.17} parent=5 // pred_fallthru
      _
    %p561 = scmp.le.s32.totalorder 2, %s8
    // Predicated region
    $region33: #{unet_generator_forward.17} parent=5 // pred_check
      %p562 = pneg %p561
    $region34: #{unet_generator_forward.17} parent=5 // pred_check_branch
      %564 = sbr.rel (%p562) target = $region36
    $region35: #{unet_generator_forward.17} parent=5 // pred_region
      %s565 = ssub.s32 %s8, 2
      // Predicated region
      $region37: #{unet_generator_forward.17} parent=35 // pred_check
        %p566 = pneg %p105
      $region38: #{unet_generator_forward.17} parent=35 // pred_check_branch
        %568 = sbr.rel (%p566) target = $region40
      $region39: #{unet_generator_forward.17} parent=35 // pred_region
        %s569 = smul.u32 32, %s20
        %p570 = scmp.lt.s32.totalorder %s19, 0
        %s571 = scalar_select %p570, %s19, 0
        %p572 = scmp.lt.s32.totalorder %s569, 63
        %s573 = scalar_select %p572, %s569, 63
        %s574 = smul.addr %s571, 64
        %s575 = sadd.s32 %s573, %s574
        %s576 = smul.addr %s575, 4
        %s577 = scalar_lea.vmem %s2, %s576
      $region40: #{unet_generator_forward.17} parent=35 // pred_fallthru
        _
    $region36: #{unet_generator_forward.17} parent=5 // pred_fallthru
      _
  $region6: #{unet_generator_forward.17} parent=0 // loop_footer
    %s12 = sadd.s32 1, %s8
  $region7: #{unet_generator_forward.17} parent=0 // loop_footer_branch
    %7 = sbr.rel target = $region3
  $region8: #{unet_generator_forward.17} parent=0 // loop_exit
    _

// kernel: unet_generator_forward.18
$region0: #{unet_generator_forward.18}
  #allocation0 [shape = 'u32[]', space=smem, size = 0x4, offset = 0x4, fixed_abs, tag = 'smem constant byte address 0x4 - core index']
  #allocation1 [shape = 'u32[72,128]{1,0:T(1,128)}', space=vmem, size = 0x9000, scoped, tag = 'internal scratch']
  %s0 = inlined_call_operand.vmem [shape: bf16[1,128,128], index: 0, kind: input, shape index: {}]
  %s1 = inlined_call_operand.vmem [shape: bf16[1,128,128], index: 1, kind: input, shape index: {}]
  %s2 = inlined_call_operand.vmem [shape: bf16[1,128,128], index: 2, kind: output, shape index: {0}]
  %s3 = inlined_call_operand.vmem [shape: f32[1,1,1,128], index: 3, kind: output, shape index: {1}]
  %s4 = inlined_call_operand.vmem [shape: f32[1,1,1,128], index: 4, kind: output, shape index: {2}]
  %5 = xla_tuple %s2, %s3, %s4
  %s6 = sld [smem:[#allocation0]]
  $region34: #{unet_generator_forward.18} parent=0
    _
  %s8 = ssub.s32 1, %s6
  %s9 = scalar_select 0, %s8, %s6
  // Predicated region
  $region2: #{unet_generator_forward.18} parent=0 // pred_check
    _
  $region3: #{unet_generator_forward.18} parent=0 // pred_check_branch
    %11 = sbr.rel (0) target = $region5
  $region4: #{unet_generator_forward.18} parent=0 // pred_region
    _
  $region5: #{unet_generator_forward.18} parent=0 // pred_fallthru
    _
  // Predicated region
  $region6: #{unet_generator_forward.18} parent=0 // pred_check
    _
  $region7: #{unet_generator_forward.18} parent=0 // pred_check_branch
    %13 = sbr.rel (0) target = $region9
  $region8: #{unet_generator_forward.18} parent=0 // pred_region
    _
  $region9: #{unet_generator_forward.18} parent=0 // pred_fallthru
    _
  %v14 = vld [vmem:[%s0] sm:$0xf]
  %v15 = vld [vmem:[%s0 + $0x4] sm:$0xf]
  %v16 = vld [vmem:[%s0 + $0x8] sm:$0xf]
  %v17 = vld [vmem:[%s0 + $0xc] sm:$0xf]
  %v18 = vld [vmem:[%s0 + $0x10] sm:$0xf]
  %v19 = vld [vmem:[%s0 + $0x14] sm:$0xf]
  %v20 = vld [vmem:[%s0 + $0x18] sm:$0xf]
  %v21 = vld [vmem:[%s0 + $0x1c] sm:$0xf]
  %v22 = vld [vmem:[%s0 + $0x20] sm:$0xf]
  %v23 = vld [vmem:[%s0 + $0x24] sm:$0xf]
  %v24 = vld [vmem:[%s0 + $0x28] sm:$0xf]
  %v25 = vld [vmem:[%s0 + $0x2c] sm:$0xf]
  %v26 = vld [vmem:[%s0 + $0x30] sm:$0xf]
  %v27 = vld [vmem:[%s0 + $0x34] sm:$0xf]
  %v28 = vld [vmem:[%s0 + $0x38] sm:$0xf]
  %v29 = vld [vmem:[%s0 + $0x3c] sm:$0xf]
  %v30 = vld [vmem:[%s1] sm:$0xf]
  %v31 = vld [vmem:[%s1 + $0x4] sm:$0xf]
  %v32 = vld [vmem:[%s1 + $0x8] sm:$0xf]
  %v33 = vld [vmem:[%s1 + $0xc] sm:$0xf]
  %v34 = vld [vmem:[%s1 + $0x10] sm:$0xf]
  %v35 = vld [vmem:[%s1 + $0x14] sm:$0xf]
  %v36 = vld [vmem:[%s1 + $0x18] sm:$0xf]
  %v37 = vld [vmem:[%s1 + $0x1c] sm:$0xf]
  %v38 = vld [vmem:[%s1 + $0x20] sm:$0xf]
  %v39 = vld [vmem:[%s1 + $0x24] sm:$0xf]
  %v40 = vld [vmem:[%s1 + $0x28] sm:$0xf]
  %v41 = vld [vmem:[%s1 + $0x2c] sm:$0xf]
  %v42 = vld [vmem:[%s1 + $0x30] sm:$0xf]
  %v43 = vld [vmem:[%s1 + $0x34] sm:$0xf]
  %v44 = vld [vmem:[%s1 + $0x38] sm:$0xf]
  %v45 = vld [vmem:[%s1 + $0x3c] sm:$0xf]
  %v62 = vunpack.c.l.b16 %v14
  %v63 = vunpack.c.l.b16 %v15
  %v64 = vunpack.c.l.b16 %v16
  %v65 = vunpack.c.l.b16 %v17
  %v66 = vunpack.c.l.b16 %v18
  %v67 = vunpack.c.l.b16 %v19
  %v68 = vunpack.c.l.b16 %v20
  %v69 = vunpack.c.l.b16 %v21
  %v70 = vunpack.c.l.b16 %v22
  %v71 = vunpack.c.l.b16 %v23
  %v72 = vunpack.c.l.b16 %v24
  %v73 = vunpack.c.l.b16 %v25
  %v74 = vunpack.c.l.b16 %v26
  %v75 = vunpack.c.l.b16 %v27
  %v76 = vunpack.c.l.b16 %v28
  %v77 = vunpack.c.l.b16 %v29
  %v78 = vpack.c.b16 %v63, %v62
  %v79 = vpack.c.b16 %v65, %v64
  %v80 = vpack.c.b16 %v67, %v66
  %v81 = vpack.c.b16 %v69, %v68
  %v82 = vpack.c.b16 %v71, %v70
  %v83 = vpack.c.b16 %v73, %v72
  %v84 = vpack.c.b16 %v75, %v74
  %v85 = vpack.c.b16 %v77, %v76
  %v110 = vunpack.c.l.b16 %v30
  %v111 = vunpack.c.l.b16 %v31
  %v112 = vunpack.c.l.b16 %v32
  %v113 = vunpack.c.l.b16 %v33
  %v114 = vunpack.c.l.b16 %v34
  %v115 = vunpack.c.l.b16 %v35
  %v116 = vunpack.c.l.b16 %v36
  %v117 = vunpack.c.l.b16 %v37
  %v118 = vunpack.c.l.b16 %v38
  %v119 = vunpack.c.l.b16 %v39
  %v120 = vunpack.c.l.b16 %v40
  %v121 = vunpack.c.l.b16 %v41
  %v122 = vunpack.c.l.b16 %v42
  %v123 = vunpack.c.l.b16 %v43
  %v124 = vunpack.c.l.b16 %v44
  %v125 = vunpack.c.l.b16 %v45
  %v126 = vpack.c.b16 %v111, %v110
  %v127 = vpack.c.b16 %v113, %v112
  %v128 = vpack.c.b16 %v115, %v114
  %v129 = vpack.c.b16 %v117, %v116
  %v130 = vpack.c.b16 %v119, %v118
  %v131 = vpack.c.b16 %v121, %v120
  %v132 = vpack.c.b16 %v123, %v122
  %v133 = vpack.c.b16 %v125, %v124
  %142 = vmatpush.bf16.msra.mxu0 %v133
  %143 = vmatpush.bf16.msra.mxu0 %v132
  %144 = vmatpush.bf16.msra.mxu0 %v131
  %145 = vmatpush.bf16.msra.mxu0 %v130
  %146 = vmatpush.bf16.msra.mxu0 %v129
  %147 = vmatpush.bf16.msra.mxu0 %v128
  %148 = vmatpush.bf16.msra.mxu0 %v127
  %149 = vmatpush.bf16.msra.mxu0 %v126
  %150 = vmatmul.bf16.gmra.mxu0 %v78
  %v151 = vpop.f32.mrf.mxu0
  %v152 = vadd.f32 0.0, %v151
  %v153 = vpop.f32.mrf.mxu0
  %v154 = vadd.f32 0.0, %v153
  %155 = vmatmul.bf16.gmra.mxu0 %v79
  %v156 = vpop.f32.mrf.mxu0
  %v157 = vadd.f32 0.0, %v156
  %v158 = vpop.f32.mrf.mxu0
  %v159 = vadd.f32 0.0, %v158
  %160 = vmatmul.bf16.gmra.mxu0 %v80
  %v161 = vpop.f32.mrf.mxu0
  %v162 = vadd.f32 0.0, %v161
  %v163 = vpop.f32.mrf.mxu0
  %v164 = vadd.f32 0.0, %v163
  %165 = vmatmul.bf16.gmra.mxu0 %v81
  %v166 = vpop.f32.mrf.mxu0
  %v167 = vadd.f32 0.0, %v166
  %v168 = vpop.f32.mrf.mxu0
  %v169 = vadd.f32 0.0, %v168
  %170 = vmatmul.bf16.gmra.mxu0 %v82
  %v171 = vpop.f32.mrf.mxu0
  %v172 = vadd.f32 0.0, %v171
  %v173 = vpop.f32.mrf.mxu0
  %v174 = vadd.f32 0.0, %v173
  %175 = vmatmul.bf16.gmra.mxu0 %v83
  %v176 = vpop.f32.mrf.mxu0
  %v177 = vadd.f32 0.0, %v176
  %v178 = vpop.f32.mrf.mxu0
  %v179 = vadd.f32 0.0, %v178
  %180 = vmatmul.bf16.gmra.mxu0 %v84
  %v181 = vpop.f32.mrf.mxu0
  %v182 = vadd.f32 0.0, %v181
  %v183 = vpop.f32.mrf.mxu0
  %v184 = vadd.f32 0.0, %v183
  %185 = vmatmul.bf16.gmra.mxu0 %v85
  %v186 = vpop.f32.mrf.mxu0
  %v187 = vadd.f32 0.0, %v186
  %v188 = vpop.f32.mrf.mxu0
  %v189 = vadd.f32 0.0, %v188
  %190 = vdwg.mxu0
  %v191 = vadd.f32 %v152, %v154
  %v192 = vadd.f32 %v191, %v157
  %v193 = vadd.f32 %v192, %v159
  %v194 = vadd.f32 %v193, %v162
  %v195 = vadd.f32 %v194, %v164
  %v196 = vadd.f32 %v195, %v167
  %v197 = vadd.f32 %v196, %v169
  %v198 = vadd.f32 %v197, %v172
  %v199 = vadd.f32 %v198, %v174
  %v200 = vadd.f32 %v199, %v177
  %v201 = vadd.f32 %v200, %v179
  %v202 = vadd.f32 %v201, %v182
  %v203 = vadd.f32 %v202, %v184
  %v204 = vadd.f32 %v203, %v187
  %v205 = vadd.f32 %v204, %v189
  %v206 = vrot.slane %v205, 4
  %v207 = vadd.f32 %v205, %v206
  %v208 = vrot.slane %v207, 2
  %v209 = vadd.f32 %v207, %v208
  %v210 = vrot.slane %v209, 1
  %v211 = vadd.f32 %v209, %v210
  %212 = vst [vmem:[%s3] sm:$0x1] %v211
  %v213 = vmul.f32 %v152, %v152
  %v214 = vmul.f32 %v154, %v154
  %v215 = vmul.f32 %v157, %v157
  %v216 = vmul.f32 %v159, %v159
  %v217 = vmul.f32 %v162, %v162
  %v218 = vmul.f32 %v164, %v164
  %v219 = vmul.f32 %v167, %v167
  %v220 = vmul.f32 %v169, %v169
  %v221 = vmul.f32 %v172, %v172
  %v222 = vmul.f32 %v174, %v174
  %v223 = vmul.f32 %v177, %v177
  %v224 = vmul.f32 %v179, %v179
  %v225 = vmul.f32 %v182, %v182
  %v226 = vmul.f32 %v184, %v184
  %v227 = vmul.f32 %v187, %v187
  %v228 = vmul.f32 %v189, %v189
  %v229 = vadd.f32 %v213, %v214
  %v230 = vadd.f32 %v229, %v215
  %v231 = vadd.f32 %v230, %v216
  %v232 = vadd.f32 %v231, %v217
  %v233 = vadd.f32 %v232, %v218
  %v234 = vadd.f32 %v233, %v219
  %v235 = vadd.f32 %v234, %v220
  %v236 = vadd.f32 %v235, %v221
  %v237 = vadd.f32 %v236, %v222
  %v238 = vadd.f32 %v237, %v223
  %v239 = vadd.f32 %v238, %v224
  %v240 = vadd.f32 %v239, %v225
  %v241 = vadd.f32 %v240, %v226
  %v242 = vadd.f32 %v241, %v227
  %v243 = vadd.f32 %v242, %v228
  %v244 = vrot.slane %v243, 4
  %v245 = vadd.f32 %v243, %v244
  %v246 = vrot.slane %v245, 2
  %v247 = vadd.f32 %v245, %v246
  %v248 = vrot.slane %v247, 1
  %v249 = vadd.f32 %v247, %v248
  %250 = vst [vmem:[%s4] sm:$0x1] %v249
  %v251 = vpack.c.bf16 %v152, %v152
  %v252 = vpack.c.bf16 %v154, %v154
  %v253 = vpack.c.bf16 %v157, %v157
  %v254 = vpack.c.bf16 %v159, %v159
  %v255 = vpack.c.bf16 %v162, %v162
  %v256 = vpack.c.bf16 %v164, %v164
  %v257 = vpack.c.bf16 %v167, %v167
  %v258 = vpack.c.bf16 %v169, %v169
  %v259 = vpack.c.bf16 %v172, %v172
  %v260 = vpack.c.bf16 %v174, %v174
  %v261 = vpack.c.bf16 %v177, %v177
  %v262 = vpack.c.bf16 %v179, %v179
  %v263 = vpack.c.bf16 %v182, %v182
  %v264 = vpack.c.bf16 %v184, %v184
  %v265 = vpack.c.bf16 %v187, %v187
  %v266 = vpack.c.bf16 %v189, %v189
  %267 = vst [vmem:[%s2] sm:$0xf] %v251
  %268 = vst [vmem:[%s2 + $0x4] sm:$0xf] %v252
  %269 = vst [vmem:[%s2 + $0x8] sm:$0xf] %v253
  %270 = vst [vmem:[%s2 + $0xc] sm:$0xf] %v254
  %271 = vst [vmem:[%s2 + $0x10] sm:$0xf] %v255
  %272 = vst [vmem:[%s2 + $0x14] sm:$0xf] %v256
  %273 = vst [vmem:[%s2 + $0x18] sm:$0xf] %v257
  %274 = vst [vmem:[%s2 + $0x1c] sm:$0xf] %v258
  %275 = vst [vmem:[%s2 + $0x20] sm:$0xf] %v259
  %276 = vst [vmem:[%s2 + $0x24] sm:$0xf] %v260
  %277 = vst [vmem:[%s2 + $0x28] sm:$0xf] %v261
  %278 = vst [vmem:[%s2 + $0x2c] sm:$0xf] %v262
  %279 = vst [vmem:[%s2 + $0x30] sm:$0xf] %v263
  %280 = vst [vmem:[%s2 + $0x34] sm:$0xf] %v264
  %281 = vst [vmem:[%s2 + $0x38] sm:$0xf] %v265
  %282 = vst [vmem:[%s2 + $0x3c] sm:$0xf] %v266
  // Predicated region
  $region10: #{unet_generator_forward.18} parent=0 // pred_check
    _
  $region11: #{unet_generator_forward.18} parent=0 // pred_check_branch
    %284 = sbr.rel (0) target = $region13
  $region12: #{unet_generator_forward.18} parent=0 // pred_region
    _
  $region13: #{unet_generator_forward.18} parent=0 // pred_fallthru
    _
  // Predicated region
  $region14: #{unet_generator_forward.18} parent=0 // pred_check
    _
  $region15: #{unet_generator_forward.18} parent=0 // pred_check_branch
    %286 = sbr.rel (0) target = $region17
  $region16: #{unet_generator_forward.18} parent=0 // pred_region
    _
  $region17: #{unet_generator_forward.18} parent=0 // pred_fallthru
    _
  // Predicated region
  $region18: #{unet_generator_forward.18} parent=0 // pred_check
    _
  $region19: #{unet_generator_forward.18} parent=0 // pred_check_branch
    %288 = sbr.rel (0) target = $region21
  $region20: #{unet_generator_forward.18} parent=0 // pred_region
    _
  $region21: #{unet_generator_forward.18} parent=0 // pred_fallthru
    _
  // Predicated region
  $region22: #{unet_generator_forward.18} parent=0 // pred_check
    _
  $region23: #{unet_generator_forward.18} parent=0 // pred_check_branch
    %290 = sbr.rel (0) target = $region25
  $region24: #{unet_generator_forward.18} parent=0 // pred_region
    _
  $region25: #{unet_generator_forward.18} parent=0 // pred_fallthru
    _
  // Predicated region
  $region26: #{unet_generator_forward.18} parent=0 // pred_check
    _
  $region27: #{unet_generator_forward.18} parent=0 // pred_check_branch
    %292 = sbr.rel (0) target = $region29
  $region28: #{unet_generator_forward.18} parent=0 // pred_region
    _
  $region29: #{unet_generator_forward.18} parent=0 // pred_fallthru
    _
  // Predicated region
  $region30: #{unet_generator_forward.18} parent=0 // pred_check
    _
  $region31: #{unet_generator_forward.18} parent=0 // pred_check_branch
    %294 = sbr.rel (0) target = $region33
  $region32: #{unet_generator_forward.18} parent=0 // pred_region
    _
  $region33: #{unet_generator_forward.18} parent=0 // pred_fallthru
    _

// kernel: unet_generator_forward.19
$region0: #{unet_generator_forward.19}
  #allocation0 [shape = 'u32[]', space=smem, size = 0x4, offset = 0x4, fixed_abs, tag = 'smem constant byte address 0x4 - core index']
  #allocation1 [shape = 'u32[72,128]{1,0:T(1,128)}', space=vmem, size = 0x9000, scoped, tag = 'internal scratch']
  %s0 = inlined_call_operand.vmem [shape: bf16[1,128,128], index: 0, kind: input, shape index: {}]
  %s1 = inlined_call_operand.vmem [shape: f32[1,128], index: 1, kind: input, shape index: {}]
  %s2 = inlined_call_operand.vmem [shape: f32[1,128], index: 2, kind: input, shape index: {}]
  %s3 = inlined_call_operand.vmem [shape: bf16[1,128,128], index: 3, kind: output, shape index: {}]
  %s4 = sld [smem:[#allocation0]]
  $region22: #{unet_generator_forward.19} parent=0
    _
  %s6 = ssub.s32 1, %s4
  %s7 = scalar_select 0, %s6, %s4
  // Predicated region
  $region2: #{unet_generator_forward.19} parent=0 // pred_check
    _
  $region3: #{unet_generator_forward.19} parent=0 // pred_check_branch
    %9 = sbr.rel (0) target = $region5
  $region4: #{unet_generator_forward.19} parent=0 // pred_region
    _
  $region5: #{unet_generator_forward.19} parent=0 // pred_fallthru
    _
  // Predicated region
  $region6: #{unet_generator_forward.19} parent=0 // pred_check
    _
  $region7: #{unet_generator_forward.19} parent=0 // pred_check_branch
    %11 = sbr.rel (0) target = $region9
  $region8: #{unet_generator_forward.19} parent=0 // pred_region
    _
  $region9: #{unet_generator_forward.19} parent=0 // pred_fallthru
    _
  // Predicated region
  $region10: #{unet_generator_forward.19} parent=0 // pred_check
    _
  $region11: #{unet_generator_forward.19} parent=0 // pred_check_branch
    %13 = sbr.rel (0) target = $region13
  $region12: #{unet_generator_forward.19} parent=0 // pred_region
    _
  $region13: #{unet_generator_forward.19} parent=0 // pred_fallthru
    _
  %v14 = vld [vmem:[%s0] sm:$0xf]
  %v15 = vld [vmem:[%s0 + $0x4] sm:$0xf]
  %v16 = vld [vmem:[%s0 + $0x8] sm:$0xf]
  %v17 = vld [vmem:[%s0 + $0xc] sm:$0xf]
  %v18 = vld [vmem:[%s0 + $0x10] sm:$0xf]
  %v19 = vld [vmem:[%s0 + $0x14] sm:$0xf]
  %v20 = vld [vmem:[%s0 + $0x18] sm:$0xf]
  %v21 = vld [vmem:[%s0 + $0x1c] sm:$0xf]
  %v22 = vld [vmem:[%s0 + $0x20] sm:$0xf]
  %v23 = vld [vmem:[%s0 + $0x24] sm:$0xf]
  %v24 = vld [vmem:[%s0 + $0x28] sm:$0xf]
  %v25 = vld [vmem:[%s0 + $0x2c] sm:$0xf]
  %v26 = vld [vmem:[%s0 + $0x30] sm:$0xf]
  %v27 = vld [vmem:[%s0 + $0x34] sm:$0xf]
  %v28 = vld [vmem:[%s0 + $0x38] sm:$0xf]
  %v29 = vld [vmem:[%s0 + $0x3c] sm:$0xf]
  %v30 = vunpack.c.l.bf16 %v14
  %v31 = vunpack.c.l.bf16 %v15
  %v32 = vunpack.c.l.bf16 %v16
  %v33 = vunpack.c.l.bf16 %v17
  %v34 = vunpack.c.l.bf16 %v18
  %v35 = vunpack.c.l.bf16 %v19
  %v36 = vunpack.c.l.bf16 %v20
  %v37 = vunpack.c.l.bf16 %v21
  %v38 = vunpack.c.l.bf16 %v22
  %v39 = vunpack.c.l.bf16 %v23
  %v40 = vunpack.c.l.bf16 %v24
  %v41 = vunpack.c.l.bf16 %v25
  %v42 = vunpack.c.l.bf16 %v26
  %v43 = vunpack.c.l.bf16 %v27
  %v44 = vunpack.c.l.bf16 %v28
  %v45 = vunpack.c.l.bf16 %v29
  %v46 = vld [vmem:[%s1] sm:$0x1]
  %v48 = vperm.slane %v46, 0
  %v50 = vmul.f32 %v30, %v48
  %v51 = vmul.f32 %v31, %v48
  %v52 = vmul.f32 %v32, %v48
  %v53 = vmul.f32 %v33, %v48
  %v54 = vmul.f32 %v34, %v48
  %v55 = vmul.f32 %v35, %v48
  %v56 = vmul.f32 %v36, %v48
  %v57 = vmul.f32 %v37, %v48
  %v58 = vmul.f32 %v38, %v48
  %v59 = vmul.f32 %v39, %v48
  %v60 = vmul.f32 %v40, %v48
  %v61 = vmul.f32 %v41, %v48
  %v62 = vmul.f32 %v42, %v48
  %v63 = vmul.f32 %v43, %v48
  %v64 = vmul.f32 %v44, %v48
  %v65 = vmul.f32 %v45, %v48
  %v66 = vld [vmem:[%s2] sm:$0x1]
  %v68 = vperm.slane %v66, 0
  %v70 = vadd.f32 %v50, %v68
  %v71 = vadd.f32 %v51, %v68
  %v72 = vadd.f32 %v52, %v68
  %v73 = vadd.f32 %v53, %v68
  %v74 = vadd.f32 %v54, %v68
  %v75 = vadd.f32 %v55, %v68
  %v76 = vadd.f32 %v56, %v68
  %v77 = vadd.f32 %v57, %v68
  %v78 = vadd.f32 %v58, %v68
  %v79 = vadd.f32 %v59, %v68
  %v80 = vadd.f32 %v60, %v68
  %v81 = vadd.f32 %v61, %v68
  %v82 = vadd.f32 %v62, %v68
  %v83 = vadd.f32 %v63, %v68
  %v84 = vadd.f32 %v64, %v68
  %v85 = vadd.f32 %v65, %v68
  %v86 = vpack.c.bf16 %v70, %v70
  %v87 = vpack.c.bf16 %v71, %v71
  %v88 = vpack.c.bf16 %v72, %v72
  %v89 = vpack.c.bf16 %v73, %v73
  %v90 = vpack.c.bf16 %v74, %v74
  %v91 = vpack.c.bf16 %v75, %v75
  %v92 = vpack.c.bf16 %v76, %v76
  %v93 = vpack.c.bf16 %v77, %v77
  %v94 = vpack.c.bf16 %v78, %v78
  %v95 = vpack.c.bf16 %v79, %v79
  %v96 = vpack.c.bf16 %v80, %v80
  %v97 = vpack.c.bf16 %v81, %v81
  %v98 = vpack.c.bf16 %v82, %v82
  %v99 = vpack.c.bf16 %v83, %v83
  %v100 = vpack.c.bf16 %v84, %v84
  %v101 = vpack.c.bf16 %v85, %v85
  %102 = vst [vmem:[%s3] sm:$0xf] %v86
  %103 = vst [vmem:[%s3 + $0x4] sm:$0xf] %v87
  %104 = vst [vmem:[%s3 + $0x8] sm:$0xf] %v88
  %105 = vst [vmem:[%s3 + $0xc] sm:$0xf] %v89
  %106 = vst [vmem:[%s3 + $0x10] sm:$0xf] %v90
  %107 = vst [vmem:[%s3 + $0x14] sm:$0xf] %v91
  %108 = vst [vmem:[%s3 + $0x18] sm:$0xf] %v92
  %109 = vst [vmem:[%s3 + $0x1c] sm:$0xf] %v93
  %110 = vst [vmem:[%s3 + $0x20] sm:$0xf] %v94
  %111 = vst [vmem:[%s3 + $0x24] sm:$0xf] %v95
  %112 = vst [vmem:[%s3 + $0x28] sm:$0xf] %v96
  %113 = vst [vmem:[%s3 + $0x2c] sm:$0xf] %v97
  %114 = vst [vmem:[%s3 + $0x30] sm:$0xf] %v98
  %115 = vst [vmem:[%s3 + $0x34] sm:$0xf] %v99
  %116 = vst [vmem:[%s3 + $0x38] sm:$0xf] %v100
  %117 = vst [vmem:[%s3 + $0x3c] sm:$0xf] %v101
  // Predicated region
  $region14: #{unet_generator_forward.19} parent=0 // pred_check
    _
  $region15: #{unet_generator_forward.19} parent=0 // pred_check_branch
    %119 = sbr.rel (0) target = $region17
  $region16: #{unet_generator_forward.19} parent=0 // pred_region
    _
  $region17: #{unet_generator_forward.19} parent=0 // pred_fallthru
    _
  // Predicated region
  $region18: #{unet_generator_forward.19} parent=0 // pred_check
    _
  $region19: #{unet_generator_forward.19} parent=0 // pred_check_branch
    %121 = sbr.rel (0) target = $region21
  $region20: #{unet_generator_forward.19} parent=0 // pred_region
    _
  $region21: #{unet_generator_forward.19} parent=0 // pred_fallthru
    _

// kernel: unet_generator_forward.21
$region0: #{unet_generator_forward.21}
  #allocation0 [shape = 'u32[]', space=smem, size = 0x4, offset = 0x4, fixed_abs, tag = 'smem constant byte address 0x4 - core index']
  #allocation1 [shape = 'u32[72,128]{1,0:T(1,128)}', space=vmem, size = 0x9000, scoped, tag = 'internal scratch']
  %s0 = inlined_call_operand.vmem [shape: bf16[1,32,128], index: 0, kind: input, shape index: {}]
  %s1 = inlined_call_operand.vmem [shape: f32[1,128], index: 1, kind: input, shape index: {}]
  %s2 = inlined_call_operand.vmem [shape: f32[1,128], index: 2, kind: input, shape index: {}]
  %s3 = inlined_call_operand.vmem [shape: bf16[1,32,128], index: 3, kind: output, shape index: {}]
  %s4 = sld [smem:[#allocation0]]
  $region22: #{unet_generator_forward.21} parent=0
    _
  %s6 = ssub.s32 1, %s4
  %s7 = scalar_select 0, %s6, %s4
  // Predicated region
  $region2: #{unet_generator_forward.21} parent=0 // pred_check
    _
  $region3: #{unet_generator_forward.21} parent=0 // pred_check_branch
    %9 = sbr.rel (0) target = $region5
  $region4: #{unet_generator_forward.21} parent=0 // pred_region
    _
  $region5: #{unet_generator_forward.21} parent=0 // pred_fallthru
    _
  // Predicated region
  $region6: #{unet_generator_forward.21} parent=0 // pred_check
    _
  $region7: #{unet_generator_forward.21} parent=0 // pred_check_branch
    %11 = sbr.rel (0) target = $region9
  $region8: #{unet_generator_forward.21} parent=0 // pred_region
    _
  $region9: #{unet_generator_forward.21} parent=0 // pred_fallthru
    _
  // Predicated region
  $region10: #{unet_generator_forward.21} parent=0 // pred_check
    _
  $region11: #{unet_generator_forward.21} parent=0 // pred_check_branch
    %13 = sbr.rel (0) target = $region13
  $region12: #{unet_generator_forward.21} parent=0 // pred_region
    _
  $region13: #{unet_generator_forward.21} parent=0 // pred_fallthru
    _
  %v14 = vld [vmem:[%s0] sm:$0xf]
  %v15 = vld [vmem:[%s0 + $0x4] sm:$0xf]
  %v16 = vld [vmem:[%s0 + $0x8] sm:$0xf]
  %v17 = vld [vmem:[%s0 + $0xc] sm:$0xf]
  %v18 = vunpack.c.l.bf16 %v14
  %v19 = vunpack.c.l.bf16 %v15
  %v20 = vunpack.c.l.bf16 %v16
  %v21 = vunpack.c.l.bf16 %v17
  %v22 = vld [vmem:[%s1] sm:$0x1]
  %v24 = vperm.slane %v22, 0
  %v26 = vmul.f32 %v18, %v24
  %v27 = vmul.f32 %v19, %v24
  %v28 = vmul.f32 %v20, %v24
  %v29 = vmul.f32 %v21, %v24
  %v30 = vld [vmem:[%s2] sm:$0x1]
  %v32 = vperm.slane %v30, 0
  %v34 = vadd.f32 %v26, %v32
  %v35 = vadd.f32 %v27, %v32
  %v36 = vadd.f32 %v28, %v32
  %v37 = vadd.f32 %v29, %v32
  %v38 = vpack.c.bf16 %v34, %v34
  %v39 = vpack.c.bf16 %v35, %v35
  %v40 = vpack.c.bf16 %v36, %v36
  %v41 = vpack.c.bf16 %v37, %v37
  %42 = vst [vmem:[%s3] sm:$0xf] %v38
  %43 = vst [vmem:[%s3 + $0x4] sm:$0xf] %v39
  %44 = vst [vmem:[%s3 + $0x8] sm:$0xf] %v40
  %45 = vst [vmem:[%s3 + $0xc] sm:$0xf] %v41
  // Predicated region
  $region14: #{unet_generator_forward.21} parent=0 // pred_check
    _
  $region15: #{unet_generator_forward.21} parent=0 // pred_check_branch
    %47 = sbr.rel (0) target = $region17
  $region16: #{unet_generator_forward.21} parent=0 // pred_region
    _
  $region17: #{unet_generator_forward.21} parent=0 // pred_fallthru
    _
  // Predicated region
  $region18: #{unet_generator_forward.21} parent=0 // pred_check
    _
  $region19: #{unet_generator_forward.21} parent=0 // pred_check_branch
    %49 = sbr.rel (0) target = $region21
  $region20: #{unet_generator_forward.21} parent=0 // pred_region
    _
  $region21: #{unet_generator_forward.21} parent=0 // pred_fallthru
    _

// kernel: unet_generator_forward.20
$region0: #{unet_generator_forward.20}
  #allocation0 [shape = 'u32[]', space=smem, size = 0x4, offset = 0x4, fixed_abs, tag = 'smem constant byte address 0x4 - core index']
  #allocation1 [shape = 'u32[72,128]{1,0:T(1,128)}', space=vmem, size = 0x9000, scoped, tag = 'internal scratch']
  %s0 = inlined_call_operand.vmem [shape: bf16[1,32,256], index: 0, kind: input, shape index: {}]
  %s1 = inlined_call_operand.vmem [shape: bf16[1,256,128], index: 1, kind: input, shape index: {}]
  %s2 = inlined_call_operand.vmem [shape: bf16[1,32,128], index: 2, kind: output, shape index: {0}]
  %s3 = inlined_call_operand.vmem [shape: f32[1,1,1,128], index: 3, kind: output, shape index: {1}]
  %s4 = inlined_call_operand.vmem [shape: f32[1,1,1,128], index: 4, kind: output, shape index: {2}]
  %5 = xla_tuple %s2, %s3, %s4
  %s6 = sld [smem:[#allocation0]]
  $region34: #{unet_generator_forward.20} parent=0
    _
  %s8 = ssub.s32 1, %s6
  %s9 = scalar_select 0, %s8, %s6
  // Predicated region
  $region2: #{unet_generator_forward.20} parent=0 // pred_check
    _
  $region3: #{unet_generator_forward.20} parent=0 // pred_check_branch
    %11 = sbr.rel (0) target = $region5
  $region4: #{unet_generator_forward.20} parent=0 // pred_region
    _
  $region5: #{unet_generator_forward.20} parent=0 // pred_fallthru
    _
  // Predicated region
  $region6: #{unet_generator_forward.20} parent=0 // pred_check
    _
  $region7: #{unet_generator_forward.20} parent=0 // pred_check_branch
    %13 = sbr.rel (0) target = $region9
  $region8: #{unet_generator_forward.20} parent=0 // pred_region
    _
  $region9: #{unet_generator_forward.20} parent=0 // pred_fallthru
    _
  %v14 = vld [vmem:[%s0] sm:$0xff]
  %v15 = vld [vmem:[%s0 + $0x8] sm:$0xff]
  %v16 = vld [vmem:[%s0 + $0x10] sm:$0xff]
  %v17 = vld [vmem:[%s0 + $0x18] sm:$0xff]
  %v18 = vld [vmem:[%s1] sm:$0xf]
  %v19 = vld [vmem:[%s1 + $0x4] sm:$0xf]
  %v20 = vld [vmem:[%s1 + $0x8] sm:$0xf]
  %v21 = vld [vmem:[%s1 + $0xc] sm:$0xf]
  %v22 = vld [vmem:[%s1 + $0x10] sm:$0xf]
  %v23 = vld [vmem:[%s1 + $0x14] sm:$0xf]
  %v24 = vld [vmem:[%s1 + $0x18] sm:$0xf]
  %v25 = vld [vmem:[%s1 + $0x1c] sm:$0xf]
  %v26 = vld [vmem:[%s1 + $0x20] sm:$0xf]
  %v27 = vld [vmem:[%s1 + $0x24] sm:$0xf]
  %v28 = vld [vmem:[%s1 + $0x28] sm:$0xf]
  %v29 = vld [vmem:[%s1 + $0x2c] sm:$0xf]
  %v30 = vld [vmem:[%s1 + $0x30] sm:$0xf]
  %v31 = vld [vmem:[%s1 + $0x34] sm:$0xf]
  %v32 = vld [vmem:[%s1 + $0x38] sm:$0xf]
  %v33 = vld [vmem:[%s1 + $0x3c] sm:$0xf]
  %v34 = vld [vmem:[%s1 + $0x40] sm:$0xf]
  %v35 = vld [vmem:[%s1 + $0x44] sm:$0xf]
  %v36 = vld [vmem:[%s1 + $0x48] sm:$0xf]
  %v37 = vld [vmem:[%s1 + $0x4c] sm:$0xf]
  %v38 = vld [vmem:[%s1 + $0x50] sm:$0xf]
  %v39 = vld [vmem:[%s1 + $0x54] sm:$0xf]
  %v40 = vld [vmem:[%s1 + $0x58] sm:$0xf]
  %v41 = vld [vmem:[%s1 + $0x5c] sm:$0xf]
  %v42 = vld [vmem:[%s1 + $0x60] sm:$0xf]
  %v43 = vld [vmem:[%s1 + $0x64] sm:$0xf]
  %v44 = vld [vmem:[%s1 + $0x68] sm:$0xf]
  %v45 = vld [vmem:[%s1 + $0x6c] sm:$0xf]
  %v46 = vld [vmem:[%s1 + $0x70] sm:$0xf]
  %v47 = vld [vmem:[%s1 + $0x74] sm:$0xf]
  %v48 = vld [vmem:[%s1 + $0x78] sm:$0xf]
  %v49 = vld [vmem:[%s1 + $0x7c] sm:$0xf]
  %v54 = vunpack.c.l.b16 %v14
  %v55 = vunpack.c.h.b16 %v14
  %v56 = vunpack.c.l.b16 %v15
  %v57 = vunpack.c.h.b16 %v15
  %v58 = vunpack.c.l.b16 %v16
  %v59 = vunpack.c.h.b16 %v16
  %v60 = vunpack.c.l.b16 %v17
  %v61 = vunpack.c.h.b16 %v17
  %v62 = vpack.c.b16 %v56, %v54
  %v63 = vpack.c.b16 %v57, %v55
  %v64 = vpack.c.b16 %v60, %v58
  %v65 = vpack.c.b16 %v61, %v59
  %v102 = vunpack.c.l.b16 %v18
  %v103 = vunpack.c.l.b16 %v19
  %v104 = vunpack.c.l.b16 %v20
  %v105 = vunpack.c.l.b16 %v21
  %v106 = vunpack.c.l.b16 %v22
  %v107 = vunpack.c.l.b16 %v23
  %v108 = vunpack.c.l.b16 %v24
  %v109 = vunpack.c.l.b16 %v25
  %v110 = vunpack.c.l.b16 %v26
  %v111 = vunpack.c.l.b16 %v27
  %v112 = vunpack.c.l.b16 %v28
  %v113 = vunpack.c.l.b16 %v29
  %v114 = vunpack.c.l.b16 %v30
  %v115 = vunpack.c.l.b16 %v31
  %v116 = vunpack.c.l.b16 %v32
  %v117 = vunpack.c.l.b16 %v33
  %v118 = vunpack.c.l.b16 %v34
  %v119 = vunpack.c.l.b16 %v35
  %v120 = vunpack.c.l.b16 %v36
  %v121 = vunpack.c.l.b16 %v37
  %v122 = vunpack.c.l.b16 %v38
  %v123 = vunpack.c.l.b16 %v39
  %v124 = vunpack.c.l.b16 %v40
  %v125 = vunpack.c.l.b16 %v41
  %v126 = vunpack.c.l.b16 %v42
  %v127 = vunpack.c.l.b16 %v43
  %v128 = vunpack.c.l.b16 %v44
  %v129 = vunpack.c.l.b16 %v45
  %v130 = vunpack.c.l.b16 %v46
  %v131 = vunpack.c.l.b16 %v47
  %v132 = vunpack.c.l.b16 %v48
  %v133 = vunpack.c.l.b16 %v49
  %v134 = vpack.c.b16 %v103, %v102
  %v135 = vpack.c.b16 %v105, %v104
  %v136 = vpack.c.b16 %v107, %v106
  %v137 = vpack.c.b16 %v109, %v108
  %v138 = vpack.c.b16 %v111, %v110
  %v139 = vpack.c.b16 %v113, %v112
  %v140 = vpack.c.b16 %v115, %v114
  %v141 = vpack.c.b16 %v117, %v116
  %v142 = vpack.c.b16 %v119, %v118
  %v143 = vpack.c.b16 %v121, %v120
  %v144 = vpack.c.b16 %v123, %v122
  %v145 = vpack.c.b16 %v125, %v124
  %v146 = vpack.c.b16 %v127, %v126
  %v147 = vpack.c.b16 %v129, %v128
  %v148 = vpack.c.b16 %v131, %v130
  %v149 = vpack.c.b16 %v133, %v132
  %166 = vmatpush.bf16.msra.mxu0 %v141
  %167 = vmatpush.bf16.msra.mxu0 %v140
  %168 = vmatpush.bf16.msra.mxu0 %v139
  %169 = vmatpush.bf16.msra.mxu0 %v138
  %170 = vmatpush.bf16.msra.mxu0 %v137
  %171 = vmatpush.bf16.msra.mxu0 %v136
  %172 = vmatpush.bf16.msra.mxu0 %v135
  %173 = vmatpush.bf16.msra.mxu0 %v134
  %174 = vmatmul.bf16.gmra.mxu0 %v62
  %v175 = vpop.f32.mrf.mxu0
  %v176 = vadd.f32 0.0, %v175
  %v177 = vpop.f32.mrf.mxu0
  %v178 = vadd.f32 0.0, %v177
  %179 = vmatmul.bf16.gmra.mxu0 %v64
  %v180 = vpop.f32.mrf.mxu0
  %v181 = vadd.f32 0.0, %v180
  %v182 = vpop.f32.mrf.mxu0
  %v183 = vadd.f32 0.0, %v182
  %184 = vdwg.mxu0
  %185 = vmatpush.bf16.msra.mxu0 %v149
  %186 = vmatpush.bf16.msra.mxu0 %v148
  %187 = vmatpush.bf16.msra.mxu0 %v147
  %188 = vmatpush.bf16.msra.mxu0 %v146
  %189 = vmatpush.bf16.msra.mxu0 %v145
  %190 = vmatpush.bf16.msra.mxu0 %v144
  %191 = vmatpush.bf16.msra.mxu0 %v143
  %192 = vmatpush.bf16.msra.mxu0 %v142
  %193 = vmatmul.bf16.gmra.mxu0 %v63
  %v194 = vpop.f32.mrf.mxu0
  %v195 = vadd.f32 %v176, %v194
  %v196 = vpop.f32.mrf.mxu0
  %v197 = vadd.f32 %v178, %v196
  %198 = vmatmul.bf16.gmra.mxu0 %v65
  %v199 = vpop.f32.mrf.mxu0
  %v200 = vadd.f32 %v181, %v199
  %v201 = vpop.f32.mrf.mxu0
  %v202 = vadd.f32 %v183, %v201
  %203 = vdwg.mxu0
  %v204 = vadd.f32 %v195, %v197
  %v205 = vadd.f32 %v204, %v200
  %v206 = vadd.f32 %v205, %v202
  %v207 = vrot.slane %v206, 4
  %v208 = vadd.f32 %v206, %v207
  %v209 = vrot.slane %v208, 2
  %v210 = vadd.f32 %v208, %v209
  %v211 = vrot.slane %v210, 1
  %v212 = vadd.f32 %v210, %v211
  %213 = vst [vmem:[%s3] sm:$0x1] %v212
  %v214 = vmul.f32 %v195, %v195
  %v215 = vmul.f32 %v197, %v197
  %v216 = vmul.f32 %v200, %v200
  %v217 = vmul.f32 %v202, %v202
  %v218 = vadd.f32 %v214, %v215
  %v219 = vadd.f32 %v218, %v216
  %v220 = vadd.f32 %v219, %v217
  %v221 = vrot.slane %v220, 4
  %v222 = vadd.f32 %v220, %v221
  %v223 = vrot.slane %v222, 2
  %v224 = vadd.f32 %v222, %v223
  %v225 = vrot.slane %v224, 1
  %v226 = vadd.f32 %v224, %v225
  %227 = vst [vmem:[%s4] sm:$0x1] %v226
  %v228 = vpack.c.bf16 %v195, %v195
  %v229 = vpack.c.bf16 %v197, %v197
  %v230 = vpack.c.bf16 %v200, %v200
  %v231 = vpack.c.bf16 %v202, %v202
  %232 = vst [vmem:[%s2] sm:$0xf] %v228
  %233 = vst [vmem:[%s2 + $0x4] sm:$0xf] %v229
  %234 = vst [vmem:[%s2 + $0x8] sm:$0xf] %v230
  %235 = vst [vmem:[%s2 + $0xc] sm:$0xf] %v231
  // Predicated region
  $region10: #{unet_generator_forward.20} parent=0 // pred_check
    _
  $region11: #{unet_generator_forward.20} parent=0 // pred_check_branch
    %237 = sbr.rel (0) target = $region13
  $region12: #{unet_generator_forward.20} parent=0 // pred_region
    _
  $region13: #{unet_generator_forward.20} parent=0 // pred_fallthru
    _
  // Predicated region
  $region14: #{unet_generator_forward.20} parent=0 // pred_check
    _
  $region15: #{unet_generator_forward.20} parent=0 // pred_check_branch
    %239 = sbr.rel (0) target = $region17
  $region16: #{unet_generator_forward.20} parent=0 // pred_region
    _
  $region17: #{unet_generator_forward.20} parent=0 // pred_fallthru
    _
  // Predicated region
  $region18: #{unet_generator_forward.20} parent=0 // pred_check
    _
  $region19: #{unet_generator_forward.20} parent=0 // pred_check_branch
    %241 = sbr.rel (0) target = $region21
  $region20: #{unet_generator_forward.20} parent=0 // pred_region
    _
  $region21: #{unet_generator_forward.20} parent=0 // pred_fallthru
    _
  // Predicated region
  $region22: #{unet_generator_forward.20} parent=0 // pred_check
    _
  $region23: #{unet_generator_forward.20} parent=0 // pred_check_branch
    %243 = sbr.rel (0) target = $region25
  $region24: #{unet_generator_forward.20} parent=0 // pred_region
    _
  $region25: #{unet_generator_forward.20} parent=0 // pred_fallthru
    _
  // Predicated region
  $region26: #{unet_generator_forward.20} parent=0 // pred_check
    _
  $region27: #{unet_generator_forward.20} parent=0 // pred_check_branch
    %245 = sbr.rel (0) target = $region29
  $region28: #{unet_generator_forward.20} parent=0 // pred_region
    _
  $region29: #{unet_generator_forward.20} parent=0 // pred_fallthru
    _
  // Predicated region
  $region30: #{unet_generator_forward.20} parent=0 // pred_check
    _
  $region31: #{unet_generator_forward.20} parent=0 // pred_check_branch
    %247 = sbr.rel (0) target = $region33
  $region32: #{unet_generator_forward.20} parent=0 // pred_region
    _
  $region33: #{unet_generator_forward.20} parent=0 // pred_fallthru
    _

// kernel: unet_generator_forward.23
$region0: #{unet_generator_forward.23}
  #allocation0 [shape = 'u32[]', space=smem, size = 0x4, offset = 0x4, fixed_abs, tag = 'smem constant byte address 0x4 - core index']
  #allocation1 [shape = 'u32[72,128]{1,0:T(1,128)}', space=vmem, size = 0x9000, scoped, tag = 'internal scratch']
  %s0 = inlined_call_operand.vmem [shape: bf16[1,16,128], index: 0, kind: input, shape index: {}]
  %s1 = inlined_call_operand.vmem [shape: f32[1,128], index: 1, kind: input, shape index: {}]
  %s2 = inlined_call_operand.vmem [shape: f32[1,128], index: 2, kind: input, shape index: {}]
  %s3 = inlined_call_operand.vmem [shape: bf16[1,16,128], index: 3, kind: output, shape index: {}]
  %s4 = sld [smem:[#allocation0]]
  $region22: #{unet_generator_forward.23} parent=0
    _
  %s6 = ssub.s32 1, %s4
  %s7 = scalar_select 0, %s6, %s4
  // Predicated region
  $region2: #{unet_generator_forward.23} parent=0 // pred_check
    _
  $region3: #{unet_generator_forward.23} parent=0 // pred_check_branch
    %9 = sbr.rel (0) target = $region5
  $region4: #{unet_generator_forward.23} parent=0 // pred_region
    _
  $region5: #{unet_generator_forward.23} parent=0 // pred_fallthru
    _
  // Predicated region
  $region6: #{unet_generator_forward.23} parent=0 // pred_check
    _
  $region7: #{unet_generator_forward.23} parent=0 // pred_check_branch
    %11 = sbr.rel (0) target = $region9
  $region8: #{unet_generator_forward.23} parent=0 // pred_region
    _
  $region9: #{unet_generator_forward.23} parent=0 // pred_fallthru
    _
  // Predicated region
  $region10: #{unet_generator_forward.23} parent=0 // pred_check
    _
  $region11: #{unet_generator_forward.23} parent=0 // pred_check_branch
    %13 = sbr.rel (0) target = $region13
  $region12: #{unet_generator_forward.23} parent=0 // pred_region
    _
  $region13: #{unet_generator_forward.23} parent=0 // pred_fallthru
    _
  %v14 = vld [vmem:[%s0] sm:$0xf]
  %v15 = vld [vmem:[%s0 + $0x4] sm:$0xf]
  %v16 = vunpack.c.l.bf16 %v14
  %v17 = vunpack.c.l.bf16 %v15
  %v18 = vld [vmem:[%s1] sm:$0x1]
  %v20 = vperm.slane %v18, 0
  %v22 = vmul.f32 %v16, %v20
  %v23 = vmul.f32 %v17, %v20
  %v24 = vld [vmem:[%s2] sm:$0x1]
  %v26 = vperm.slane %v24, 0
  %v28 = vadd.f32 %v22, %v26
  %v29 = vadd.f32 %v23, %v26
  %v30 = vpack.c.bf16 %v28, %v28
  %v31 = vpack.c.bf16 %v29, %v29
  %32 = vst [vmem:[%s3] sm:$0xf] %v30
  %33 = vst [vmem:[%s3 + $0x4] sm:$0xf] %v31
  // Predicated region
  $region14: #{unet_generator_forward.23} parent=0 // pred_check
    _
  $region15: #{unet_generator_forward.23} parent=0 // pred_check_branch
    %35 = sbr.rel (0) target = $region17
  $region16: #{unet_generator_forward.23} parent=0 // pred_region
    _
  $region17: #{unet_generator_forward.23} parent=0 // pred_fallthru
    _
  // Predicated region
  $region18: #{unet_generator_forward.23} parent=0 // pred_check
    _
  $region19: #{unet_generator_forward.23} parent=0 // pred_check_branch
    %37 = sbr.rel (0) target = $region21
  $region20: #{unet_generator_forward.23} parent=0 // pred_region
    _
  $region21: #{unet_generator_forward.23} parent=0 // pred_fallthru
    _

// kernel: unet_generator_forward.22
$region0: #{unet_generator_forward.22}
  #allocation0 [shape = 'u32[]', space=smem, size = 0x4, offset = 0x4, fixed_abs, tag = 'smem constant byte address 0x4 - core index']
  #allocation1 [shape = 'u32[72,128]{1,0:T(1,128)}', space=vmem, size = 0x9000, scoped, tag = 'internal scratch']
  %s0 = inlined_call_operand.vmem [shape: bf16[1,16,512], index: 0, kind: input, shape index: {}]
  %s1 = inlined_call_operand.vmem [shape: bf16[1,512,128], index: 1, kind: input, shape index: {}]
  %s2 = inlined_call_operand.vmem [shape: bf16[1,16,128], index: 2, kind: output, shape index: {0}]
  %s3 = inlined_call_operand.vmem [shape: f32[1,1,1,128], index: 3, kind: output, shape index: {1}]
  %s4 = inlined_call_operand.vmem [shape: f32[1,1,1,128], index: 4, kind: output, shape index: {2}]
  %5 = xla_tuple %s2, %s3, %s4
  %s6 = sld [smem:[#allocation0]]
  $region34: #{unet_generator_forward.22} parent=0
    _
  %s8 = ssub.s32 1, %s6
  %s9 = scalar_select 0, %s8, %s6
  // Predicated region
  $region2: #{unet_generator_forward.22} parent=0 // pred_check
    _
  $region3: #{unet_generator_forward.22} parent=0 // pred_check_branch
    %11 = sbr.rel (0) target = $region5
  $region4: #{unet_generator_forward.22} parent=0 // pred_region
    _
  $region5: #{unet_generator_forward.22} parent=0 // pred_fallthru
    _
  // Predicated region
  $region6: #{unet_generator_forward.22} parent=0 // pred_check
    _
  $region7: #{unet_generator_forward.22} parent=0 // pred_check_branch
    %13 = sbr.rel (0) target = $region9
  $region8: #{unet_generator_forward.22} parent=0 // pred_region
    _
  $region9: #{unet_generator_forward.22} parent=0 // pred_fallthru
    _
  %v14 = vld [vmem:[%s0] sm:$0xff]
  %v15 = vld [vmem:[%s0 + $0x8] sm:$0xff]
  %v16 = vld [vmem:[%s0 + $0x10] sm:$0xff]
  %v17 = vld [vmem:[%s0 + $0x18] sm:$0xff]
  %v18 = vld [vmem:[%s1] sm:$0xf]
  %v19 = vld [vmem:[%s1 + $0x4] sm:$0xf]
  %v20 = vld [vmem:[%s1 + $0x8] sm:$0xf]
  %v21 = vld [vmem:[%s1 + $0xc] sm:$0xf]
  %v22 = vld [vmem:[%s1 + $0x10] sm:$0xf]
  %v23 = vld [vmem:[%s1 + $0x14] sm:$0xf]
  %v24 = vld [vmem:[%s1 + $0x18] sm:$0xf]
  %v25 = vld [vmem:[%s1 + $0x1c] sm:$0xf]
  %v26 = vld [vmem:[%s1 + $0x20] sm:$0xf]
  %v27 = vld [vmem:[%s1 + $0x24] sm:$0xf]
  %v28 = vld [vmem:[%s1 + $0x28] sm:$0xf]
  %v29 = vld [vmem:[%s1 + $0x2c] sm:$0xf]
  %v30 = vld [vmem:[%s1 + $0x30] sm:$0xf]
  %v31 = vld [vmem:[%s1 + $0x34] sm:$0xf]
  %v32 = vld [vmem:[%s1 + $0x38] sm:$0xf]
  %v33 = vld [vmem:[%s1 + $0x3c] sm:$0xf]
  %v34 = vld [vmem:[%s1 + $0x40] sm:$0xf]
  %v35 = vld [vmem:[%s1 + $0x44] sm:$0xf]
  %v36 = vld [vmem:[%s1 + $0x48] sm:$0xf]
  %v37 = vld [vmem:[%s1 + $0x4c] sm:$0xf]
  %v38 = vld [vmem:[%s1 + $0x50] sm:$0xf]
  %v39 = vld [vmem:[%s1 + $0x54] sm:$0xf]
  %v40 = vld [vmem:[%s1 + $0x58] sm:$0xf]
  %v41 = vld [vmem:[%s1 + $0x5c] sm:$0xf]
  %v42 = vld [vmem:[%s1 + $0x60] sm:$0xf]
  %v43 = vld [vmem:[%s1 + $0x64] sm:$0xf]
  %v44 = vld [vmem:[%s1 + $0x68] sm:$0xf]
  %v45 = vld [vmem:[%s1 + $0x6c] sm:$0xf]
  %v46 = vld [vmem:[%s1 + $0x70] sm:$0xf]
  %v47 = vld [vmem:[%s1 + $0x74] sm:$0xf]
  %v48 = vld [vmem:[%s1 + $0x78] sm:$0xf]
  %v49 = vld [vmem:[%s1 + $0x7c] sm:$0xf]
  %v50 = vld [vmem:[%s1 + $0x80] sm:$0xf]
  %v51 = vld [vmem:[%s1 + $0x84] sm:$0xf]
  %v52 = vld [vmem:[%s1 + $0x88] sm:$0xf]
  %v53 = vld [vmem:[%s1 + $0x8c] sm:$0xf]
  %v54 = vld [vmem:[%s1 + $0x90] sm:$0xf]
  %v55 = vld [vmem:[%s1 + $0x94] sm:$0xf]
  %v56 = vld [vmem:[%s1 + $0x98] sm:$0xf]
  %v57 = vld [vmem:[%s1 + $0x9c] sm:$0xf]
  %v58 = vld [vmem:[%s1 + $0xa0] sm:$0xf]
  %v59 = vld [vmem:[%s1 + $0xa4] sm:$0xf]
  %v60 = vld [vmem:[%s1 + $0xa8] sm:$0xf]
  %v61 = vld [vmem:[%s1 + $0xac] sm:$0xf]
  %v62 = vld [vmem:[%s1 + $0xb0] sm:$0xf]
  %v63 = vld [vmem:[%s1 + $0xb4] sm:$0xf]
  %v64 = vld [vmem:[%s1 + $0xb8] sm:$0xf]
  %v65 = vld [vmem:[%s1 + $0xbc] sm:$0xf]
  %v66 = vld [vmem:[%s1 + $0xc0] sm:$0xf]
  %v67 = vld [vmem:[%s1 + $0xc4] sm:$0xf]
  %v68 = vld [vmem:[%s1 + $0xc8] sm:$0xf]
  %v69 = vld [vmem:[%s1 + $0xcc] sm:$0xf]
  %v70 = vld [vmem:[%s1 + $0xd0] sm:$0xf]
  %v71 = vld [vmem:[%s1 + $0xd4] sm:$0xf]
  %v72 = vld [vmem:[%s1 + $0xd8] sm:$0xf]
  %v73 = vld [vmem:[%s1 + $0xdc] sm:$0xf]
  %v74 = vld [vmem:[%s1 + $0xe0] sm:$0xf]
  %v75 = vld [vmem:[%s1 + $0xe4] sm:$0xf]
  %v76 = vld [vmem:[%s1 + $0xe8] sm:$0xf]
  %v77 = vld [vmem:[%s1 + $0xec] sm:$0xf]
  %v78 = vld [vmem:[%s1 + $0xf0] sm:$0xf]
  %v79 = vld [vmem:[%s1 + $0xf4] sm:$0xf]
  %v80 = vld [vmem:[%s1 + $0xf8] sm:$0xf]
  %v81 = vld [vmem:[%s1 + $0xfc] sm:$0xf]
  %v86 = vunpack.c.l.b16 %v14
  %v87 = vunpack.c.h.b16 %v14
  %v88 = vunpack.c.l.b16 %v15
  %v89 = vunpack.c.h.b16 %v15
  %v90 = vunpack.c.l.b16 %v16
  %v91 = vunpack.c.h.b16 %v16
  %v92 = vunpack.c.l.b16 %v17
  %v93 = vunpack.c.h.b16 %v17
  %v94 = vpack.c.b16 %v90, %v86
  %v95 = vpack.c.b16 %v91, %v87
  %v96 = vpack.c.b16 %v92, %v88
  %v97 = vpack.c.b16 %v93, %v89
  %v166 = vunpack.c.l.b16 %v18
  %v167 = vunpack.c.l.b16 %v19
  %v168 = vunpack.c.l.b16 %v20
  %v169 = vunpack.c.l.b16 %v21
  %v170 = vunpack.c.l.b16 %v22
  %v171 = vunpack.c.l.b16 %v23
  %v172 = vunpack.c.l.b16 %v24
  %v173 = vunpack.c.l.b16 %v25
  %v174 = vunpack.c.l.b16 %v26
  %v175 = vunpack.c.l.b16 %v27
  %v176 = vunpack.c.l.b16 %v28
  %v177 = vunpack.c.l.b16 %v29
  %v178 = vunpack.c.l.b16 %v30
  %v179 = vunpack.c.l.b16 %v31
  %v180 = vunpack.c.l.b16 %v32
  %v181 = vunpack.c.l.b16 %v33
  %v182 = vunpack.c.l.b16 %v34
  %v183 = vunpack.c.l.b16 %v35
  %v184 = vunpack.c.l.b16 %v36
  %v185 = vunpack.c.l.b16 %v37
  %v186 = vunpack.c.l.b16 %v38
  %v187 = vunpack.c.l.b16 %v39
  %v188 = vunpack.c.l.b16 %v40
  %v189 = vunpack.c.l.b16 %v41
  %v190 = vunpack.c.l.b16 %v42
  %v191 = vunpack.c.l.b16 %v43
  %v192 = vunpack.c.l.b16 %v44
  %v193 = vunpack.c.l.b16 %v45
  %v194 = vunpack.c.l.b16 %v46
  %v195 = vunpack.c.l.b16 %v47
  %v196 = vunpack.c.l.b16 %v48
  %v197 = vunpack.c.l.b16 %v49
  %v198 = vunpack.c.l.b16 %v50
  %v199 = vunpack.c.l.b16 %v51
  %v200 = vunpack.c.l.b16 %v52
  %v201 = vunpack.c.l.b16 %v53
  %v202 = vunpack.c.l.b16 %v54
  %v203 = vunpack.c.l.b16 %v55
  %v204 = vunpack.c.l.b16 %v56
  %v205 = vunpack.c.l.b16 %v57
  %v206 = vunpack.c.l.b16 %v58
  %v207 = vunpack.c.l.b16 %v59
  %v208 = vunpack.c.l.b16 %v60
  %v209 = vunpack.c.l.b16 %v61
  %v210 = vunpack.c.l.b16 %v62
  %v211 = vunpack.c.l.b16 %v63
  %v212 = vunpack.c.l.b16 %v64
  %v213 = vunpack.c.l.b16 %v65
  %v214 = vunpack.c.l.b16 %v66
  %v215 = vunpack.c.l.b16 %v67
  %v216 = vunpack.c.l.b16 %v68
  %v217 = vunpack.c.l.b16 %v69
  %v218 = vunpack.c.l.b16 %v70
  %v219 = vunpack.c.l.b16 %v71
  %v220 = vunpack.c.l.b16 %v72
  %v221 = vunpack.c.l.b16 %v73
  %v222 = vunpack.c.l.b16 %v74
  %v223 = vunpack.c.l.b16 %v75
  %v224 = vunpack.c.l.b16 %v76
  %v225 = vunpack.c.l.b16 %v77
  %v226 = vunpack.c.l.b16 %v78
  %v227 = vunpack.c.l.b16 %v79
  %v228 = vunpack.c.l.b16 %v80
  %v229 = vunpack.c.l.b16 %v81
  %v230 = vpack.c.b16 %v167, %v166
  %v231 = vpack.c.b16 %v169, %v168
  %v232 = vpack.c.b16 %v171, %v170
  %v233 = vpack.c.b16 %v173, %v172
  %v234 = vpack.c.b16 %v175, %v174
  %v235 = vpack.c.b16 %v177, %v176
  %v236 = vpack.c.b16 %v179, %v178
  %v237 = vpack.c.b16 %v181, %v180
  %v238 = vpack.c.b16 %v183, %v182
  %v239 = vpack.c.b16 %v185, %v184
  %v240 = vpack.c.b16 %v187, %v186
  %v241 = vpack.c.b16 %v189, %v188
  %v242 = vpack.c.b16 %v191, %v190
  %v243 = vpack.c.b16 %v193, %v192
  %v244 = vpack.c.b16 %v195, %v194
  %v245 = vpack.c.b16 %v197, %v196
  %v246 = vpack.c.b16 %v199, %v198
  %v247 = vpack.c.b16 %v201, %v200
  %v248 = vpack.c.b16 %v203, %v202
  %v249 = vpack.c.b16 %v205, %v204
  %v250 = vpack.c.b16 %v207, %v206
  %v251 = vpack.c.b16 %v209, %v208
  %v252 = vpack.c.b16 %v211, %v210
  %v253 = vpack.c.b16 %v213, %v212
  %v254 = vpack.c.b16 %v215, %v214
  %v255 = vpack.c.b16 %v217, %v216
  %v256 = vpack.c.b16 %v219, %v218
  %v257 = vpack.c.b16 %v221, %v220
  %v258 = vpack.c.b16 %v223, %v222
  %v259 = vpack.c.b16 %v225, %v224
  %v260 = vpack.c.b16 %v227, %v226
  %v261 = vpack.c.b16 %v229, %v228
  %294 = vmatpush.bf16.msra.mxu0 %v237
  %295 = vmatpush.bf16.msra.mxu0 %v236
  %296 = vmatpush.bf16.msra.mxu0 %v235
  %297 = vmatpush.bf16.msra.mxu0 %v234
  %298 = vmatpush.bf16.msra.mxu0 %v233
  %299 = vmatpush.bf16.msra.mxu0 %v232
  %300 = vmatpush.bf16.msra.mxu0 %v231
  %301 = vmatpush.bf16.msra.mxu0 %v230
  %302 = vmatmul.bf16.gmra.mxu0 %v94
  %v303 = vpop.f32.mrf.mxu0
  %v304 = vadd.f32 0.0, %v303
  %v305 = vpop.f32.mrf.mxu0
  %v306 = vadd.f32 0.0, %v305
  %307 = vdwg.mxu0
  %308 = vmatpush.bf16.msra.mxu0 %v245
  %309 = vmatpush.bf16.msra.mxu0 %v244
  %310 = vmatpush.bf16.msra.mxu0 %v243
  %311 = vmatpush.bf16.msra.mxu0 %v242
  %312 = vmatpush.bf16.msra.mxu0 %v241
  %313 = vmatpush.bf16.msra.mxu0 %v240
  %314 = vmatpush.bf16.msra.mxu0 %v239
  %315 = vmatpush.bf16.msra.mxu0 %v238
  %316 = vmatmul.bf16.gmra.mxu0 %v95
  %v317 = vpop.f32.mrf.mxu0
  %v318 = vadd.f32 %v304, %v317
  %v319 = vpop.f32.mrf.mxu0
  %v320 = vadd.f32 %v306, %v319
  %321 = vdwg.mxu0
  %322 = vmatpush.bf16.msra.mxu0 %v253
  %323 = vmatpush.bf16.msra.mxu0 %v252
  %324 = vmatpush.bf16.msra.mxu0 %v251
  %325 = vmatpush.bf16.msra.mxu0 %v250
  %326 = vmatpush.bf16.msra.mxu0 %v249
  %327 = vmatpush.bf16.msra.mxu0 %v248
  %328 = vmatpush.bf16.msra.mxu0 %v247
  %329 = vmatpush.bf16.msra.mxu0 %v246
  %330 = vmatmul.bf16.gmra.mxu0 %v96
  %v331 = vpop.f32.mrf.mxu0
  %v332 = vadd.f32 %v318, %v331
  %v333 = vpop.f32.mrf.mxu0
  %v334 = vadd.f32 %v320, %v333
  %335 = vdwg.mxu0
  %336 = vmatpush.bf16.msra.mxu0 %v261
  %337 = vmatpush.bf16.msra.mxu0 %v260
  %338 = vmatpush.bf16.msra.mxu0 %v259
  %339 = vmatpush.bf16.msra.mxu0 %v258
  %340 = vmatpush.bf16.msra.mxu0 %v257
  %341 = vmatpush.bf16.msra.mxu0 %v256
  %342 = vmatpush.bf16.msra.mxu0 %v255
  %343 = vmatpush.bf16.msra.mxu0 %v254
  %344 = vmatmul.bf16.gmra.mxu0 %v97
  %v345 = vpop.f32.mrf.mxu0
  %v346 = vadd.f32 %v332, %v345
  %v347 = vpop.f32.mrf.mxu0
  %v348 = vadd.f32 %v334, %v347
  %349 = vdwg.mxu0
  %v350 = vadd.f32 %v346, %v348
  %v351 = vrot.slane %v350, 4
  %v352 = vadd.f32 %v350, %v351
  %v353 = vrot.slane %v352, 2
  %v354 = vadd.f32 %v352, %v353
  %v355 = vrot.slane %v354, 1
  %v356 = vadd.f32 %v354, %v355
  %357 = vst [vmem:[%s3] sm:$0x1] %v356
  %v358 = vmul.f32 %v346, %v346
  %v359 = vmul.f32 %v348, %v348
  %v360 = vadd.f32 %v358, %v359
  %v361 = vrot.slane %v360, 4
  %v362 = vadd.f32 %v360, %v361
  %v363 = vrot.slane %v362, 2
  %v364 = vadd.f32 %v362, %v363
  %v365 = vrot.slane %v364, 1
  %v366 = vadd.f32 %v364, %v365
  %367 = vst [vmem:[%s4] sm:$0x1] %v366
  %v368 = vpack.c.bf16 %v346, %v346
  %v369 = vpack.c.bf16 %v348, %v348
  %370 = vst [vmem:[%s2] sm:$0xf] %v368
  %371 = vst [vmem:[%s2 + $0x4] sm:$0xf] %v369
  // Predicated region
  $region10: #{unet_generator_forward.22} parent=0 // pred_check
    _
  $region11: #{unet_generator_forward.22} parent=0 // pred_check_branch
    %373 = sbr.rel (0) target = $region13
  $region12: #{unet_generator_forward.22} parent=0 // pred_region
    _
  $region13: #{unet_generator_forward.22} parent=0 // pred_fallthru
    _
  // Predicated region
  $region14: #{unet_generator_forward.22} parent=0 // pred_check
    _
  $region15: #{unet_generator_forward.22} parent=0 // pred_check_branch
    %375 = sbr.rel (0) target = $region17
  $region16: #{unet_generator_forward.22} parent=0 // pred_region
    _
  $region17: #{unet_generator_forward.22} parent=0 // pred_fallthru
    _
  // Predicated region
  $region18: #{unet_generator_forward.22} parent=0 // pred_check
    _
  $region19: #{unet_generator_forward.22} parent=0 // pred_check_branch
    %377 = sbr.rel (0) target = $region21
  $region20: #{unet_generator_forward.22} parent=0 // pred_region
    _
  $region21: #{unet_generator_forward.22} parent=0 // pred_fallthru
    _
  // Predicated region
  $region22: #{unet_generator_forward.22} parent=0 // pred_check
    _
  $region23: #{unet_generator_forward.22} parent=0 // pred_check_branch
    %379 = sbr.rel (0) target = $region25
  $region24: #{unet_generator_forward.22} parent=0 // pred_region
    _
  $region25: #{unet_generator_forward.22} parent=0 // pred_fallthru
    _
  // Predicated region
  $region26: #{unet_generator_forward.22} parent=0 // pred_check
    _
  $region27: #{unet_generator_forward.22} parent=0 // pred_check_branch
    %381 = sbr.rel (0) target = $region29
  $region28: #{unet_generator_forward.22} parent=0 // pred_region
    _
  $region29: #{unet_generator_forward.22} parent=0 // pred_fallthru
    _
  // Predicated region
  $region30: #{unet_generator_forward.22} parent=0 // pred_check
    _
  $region31: #{unet_generator_forward.22} parent=0 // pred_check_branch
    %383 = sbr.rel (0) target = $region33
  $region32: #{unet_generator_forward.22} parent=0 // pred_region
    _
  $region33: #{unet_generator_forward.22} parent=0 // pred_fallthru
    _

// kernel: unet_generator_forward.24
$region0: #{unet_generator_forward.24}
  #allocation0 [shape = 'u32[]', space=smem, size = 0x4, offset = 0x4, fixed_abs, tag = 'smem constant byte address 0x4 - core index']
  #allocation1 [shape = 'u32[72,128]{1,0:T(1,128)}', space=vmem, size = 0x9000, scoped, tag = 'internal scratch']
  %s0 = inlined_call_operand.vmem [shape: bf16[1,16,1024], index: 0, kind: input, shape index: {}]
  %s1 = inlined_call_operand.vmem [shape: bf16[1,1024,128], index: 1, kind: input, shape index: {}]
  %s2 = inlined_call_operand.vmem [shape: bf16[1,16,128], index: 2, kind: output, shape index: {}]
  %s3 = sld [smem:[#allocation0]]
  $region18: #{unet_generator_forward.24} parent=0
    _
  %s5 = ssub.s32 1, %s3
  %s6 = scalar_select 0, %s5, %s3
  // Predicated region
  $region2: #{unet_generator_forward.24} parent=0 // pred_check
    _
  $region3: #{unet_generator_forward.24} parent=0 // pred_check_branch
    %8 = sbr.rel (0) target = $region5
  $region4: #{unet_generator_forward.24} parent=0 // pred_region
    _
  $region5: #{unet_generator_forward.24} parent=0 // pred_fallthru
    _
  // Predicated region
  $region6: #{unet_generator_forward.24} parent=0 // pred_check
    _
  $region7: #{unet_generator_forward.24} parent=0 // pred_check_branch
    %10 = sbr.rel (0) target = $region9
  $region8: #{unet_generator_forward.24} parent=0 // pred_region
    _
  $region9: #{unet_generator_forward.24} parent=0 // pred_fallthru
    _
  %v11 = vld [vmem:[%s0] sm:$0xff]
  %v12 = vld [vmem:[%s0 + $0x8] sm:$0xff]
  %v13 = vld [vmem:[%s0 + $0x10] sm:$0xff]
  %v14 = vld [vmem:[%s0 + $0x18] sm:$0xff]
  %v15 = vld [vmem:[%s0 + $0x20] sm:$0xff]
  %v16 = vld [vmem:[%s0 + $0x28] sm:$0xff]
  %v17 = vld [vmem:[%s0 + $0x30] sm:$0xff]
  %v18 = vld [vmem:[%s0 + $0x38] sm:$0xff]
  %v19 = vld [vmem:[%s1] sm:$0xf]
  %v20 = vld [vmem:[%s1 + $0x4] sm:$0xf]
  %v21 = vld [vmem:[%s1 + $0x8] sm:$0xf]
  %v22 = vld [vmem:[%s1 + $0xc] sm:$0xf]
  %v23 = vld [vmem:[%s1 + $0x10] sm:$0xf]
  %v24 = vld [vmem:[%s1 + $0x14] sm:$0xf]
  %v25 = vld [vmem:[%s1 + $0x18] sm:$0xf]
  %v26 = vld [vmem:[%s1 + $0x1c] sm:$0xf]
  %v27 = vld [vmem:[%s1 + $0x20] sm:$0xf]
  %v28 = vld [vmem:[%s1 + $0x24] sm:$0xf]
  %v29 = vld [vmem:[%s1 + $0x28] sm:$0xf]
  %v30 = vld [vmem:[%s1 + $0x2c] sm:$0xf]
  %v31 = vld [vmem:[%s1 + $0x30] sm:$0xf]
  %v32 = vld [vmem:[%s1 + $0x34] sm:$0xf]
  %v33 = vld [vmem:[%s1 + $0x38] sm:$0xf]
  %v34 = vld [vmem:[%s1 + $0x3c] sm:$0xf]
  %v35 = vld [vmem:[%s1 + $0x40] sm:$0xf]
  %v36 = vld [vmem:[%s1 + $0x44] sm:$0xf]
  %v37 = vld [vmem:[%s1 + $0x48] sm:$0xf]
  %v38 = vld [vmem:[%s1 + $0x4c] sm:$0xf]
  %v39 = vld [vmem:[%s1 + $0x50] sm:$0xf]
  %v40 = vld [vmem:[%s1 + $0x54] sm:$0xf]
  %v41 = vld [vmem:[%s1 + $0x58] sm:$0xf]
  %v42 = vld [vmem:[%s1 + $0x5c] sm:$0xf]
  %v43 = vld [vmem:[%s1 + $0x60] sm:$0xf]
  %v44 = vld [vmem:[%s1 + $0x64] sm:$0xf]
  %v45 = vld [vmem:[%s1 + $0x68] sm:$0xf]
  %v46 = vld [vmem:[%s1 + $0x6c] sm:$0xf]
  %v47 = vld [vmem:[%s1 + $0x70] sm:$0xf]
  %v48 = vld [vmem:[%s1 + $0x74] sm:$0xf]
  %v49 = vld [vmem:[%s1 + $0x78] sm:$0xf]
  %v50 = vld [vmem:[%s1 + $0x7c] sm:$0xf]
  %v51 = vld [vmem:[%s1 + $0x80] sm:$0xf]
  %v52 = vld [vmem:[%s1 + $0x84] sm:$0xf]
  %v53 = vld [vmem:[%s1 + $0x88] sm:$0xf]
  %v54 = vld [vmem:[%s1 + $0x8c] sm:$0xf]
  %v55 = vld [vmem:[%s1 + $0x90] sm:$0xf]
  %v56 = vld [vmem:[%s1 + $0x94] sm:$0xf]
  %v57 = vld [vmem:[%s1 + $0x98] sm:$0xf]
  %v58 = vld [vmem:[%s1 + $0x9c] sm:$0xf]
  %v59 = vld [vmem:[%s1 + $0xa0] sm:$0xf]
  %v60 = vld [vmem:[%s1 + $0xa4] sm:$0xf]
  %v61 = vld [vmem:[%s1 + $0xa8] sm:$0xf]
  %v62 = vld [vmem:[%s1 + $0xac] sm:$0xf]
  %v63 = vld [vmem:[%s1 + $0xb0] sm:$0xf]
  %v64 = vld [vmem:[%s1 + $0xb4] sm:$0xf]
  %v65 = vld [vmem:[%s1 + $0xb8] sm:$0xf]
  %v66 = vld [vmem:[%s1 + $0xbc] sm:$0xf]
  %v67 = vld [vmem:[%s1 + $0xc0] sm:$0xf]
  %v68 = vld [vmem:[%s1 + $0xc4] sm:$0xf]
  %v69 = vld [vmem:[%s1 + $0xc8] sm:$0xf]
  %v70 = vld [vmem:[%s1 + $0xcc] sm:$0xf]
  %v71 = vld [vmem:[%s1 + $0xd0] sm:$0xf]
  %v72 = vld [vmem:[%s1 + $0xd4] sm:$0xf]
  %v73 = vld [vmem:[%s1 + $0xd8] sm:$0xf]
  %v74 = vld [vmem:[%s1 + $0xdc] sm:$0xf]
  %v75 = vld [vmem:[%s1 + $0xe0] sm:$0xf]
  %v76 = vld [vmem:[%s1 + $0xe4] sm:$0xf]
  %v77 = vld [vmem:[%s1 + $0xe8] sm:$0xf]
  %v78 = vld [vmem:[%s1 + $0xec] sm:$0xf]
  %v79 = vld [vmem:[%s1 + $0xf0] sm:$0xf]
  %v80 = vld [vmem:[%s1 + $0xf4] sm:$0xf]
  %v81 = vld [vmem:[%s1 + $0xf8] sm:$0xf]
  %v82 = vld [vmem:[%s1 + $0xfc] sm:$0xf]
  %v83 = vld [vmem:[%s1 + $0x100] sm:$0xf]
  %v84 = vld [vmem:[%s1 + $0x104] sm:$0xf]
  %v85 = vld [vmem:[%s1 + $0x108] sm:$0xf]
  %v86 = vld [vmem:[%s1 + $0x10c] sm:$0xf]
  %v87 = vld [vmem:[%s1 + $0x110] sm:$0xf]
  %v88 = vld [vmem:[%s1 + $0x114] sm:$0xf]
  %v89 = vld [vmem:[%s1 + $0x118] sm:$0xf]
  %v90 = vld [vmem:[%s1 + $0x11c] sm:$0xf]
  %v91 = vld [vmem:[%s1 + $0x120] sm:$0xf]
  %v92 = vld [vmem:[%s1 + $0x124] sm:$0xf]
  %v93 = vld [vmem:[%s1 + $0x128] sm:$0xf]
  %v94 = vld [vmem:[%s1 + $0x12c] sm:$0xf]
  %v95 = vld [vmem:[%s1 + $0x130] sm:$0xf]
  %v96 = vld [vmem:[%s1 + $0x134] sm:$0xf]
  %v97 = vld [vmem:[%s1 + $0x138] sm:$0xf]
  %v98 = vld [vmem:[%s1 + $0x13c] sm:$0xf]
  %v99 = vld [vmem:[%s1 + $0x140] sm:$0xf]
  %v100 = vld [vmem:[%s1 + $0x144] sm:$0xf]
  %v101 = vld [vmem:[%s1 + $0x148] sm:$0xf]
  %v102 = vld [vmem:[%s1 + $0x14c] sm:$0xf]
  %v103 = vld [vmem:[%s1 + $0x150] sm:$0xf]
  %v104 = vld [vmem:[%s1 + $0x154] sm:$0xf]
  %v105 = vld [vmem:[%s1 + $0x158] sm:$0xf]
  %v106 = vld [vmem:[%s1 + $0x15c] sm:$0xf]
  %v107 = vld [vmem:[%s1 + $0x160] sm:$0xf]
  %v108 = vld [vmem:[%s1 + $0x164] sm:$0xf]
  %v109 = vld [vmem:[%s1 + $0x168] sm:$0xf]
  %v110 = vld [vmem:[%s1 + $0x16c] sm:$0xf]
  %v111 = vld [vmem:[%s1 + $0x170] sm:$0xf]
  %v112 = vld [vmem:[%s1 + $0x174] sm:$0xf]
  %v113 = vld [vmem:[%s1 + $0x178] sm:$0xf]
  %v114 = vld [vmem:[%s1 + $0x17c] sm:$0xf]
  %v115 = vld [vmem:[%s1 + $0x180] sm:$0xf]
  %v116 = vld [vmem:[%s1 + $0x184] sm:$0xf]
  %v117 = vld [vmem:[%s1 + $0x188] sm:$0xf]
  %v118 = vld [vmem:[%s1 + $0x18c] sm:$0xf]
  %v119 = vld [vmem:[%s1 + $0x190] sm:$0xf]
  %v120 = vld [vmem:[%s1 + $0x194] sm:$0xf]
  %v121 = vld [vmem:[%s1 + $0x198] sm:$0xf]
  %v122 = vld [vmem:[%s1 + $0x19c] sm:$0xf]
  %v123 = vld [vmem:[%s1 + $0x1a0] sm:$0xf]
  %v124 = vld [vmem:[%s1 + $0x1a4] sm:$0xf]
  %v125 = vld [vmem:[%s1 + $0x1a8] sm:$0xf]
  %v126 = vld [vmem:[%s1 + $0x1ac] sm:$0xf]
  %v127 = vld [vmem:[%s1 + $0x1b0] sm:$0xf]
  %v128 = vld [vmem:[%s1 + $0x1b4] sm:$0xf]
  %v129 = vld [vmem:[%s1 + $0x1b8] sm:$0xf]
  %v130 = vld [vmem:[%s1 + $0x1bc] sm:$0xf]
  %v131 = vld [vmem:[%s1 + $0x1c0] sm:$0xf]
  %v132 = vld [vmem:[%s1 + $0x1c4] sm:$0xf]
  %v133 = vld [vmem:[%s1 + $0x1c8] sm:$0xf]
  %v134 = vld [vmem:[%s1 + $0x1cc] sm:$0xf]
  %v135 = vld [vmem:[%s1 + $0x1d0] sm:$0xf]
  %v136 = vld [vmem:[%s1 + $0x1d4] sm:$0xf]
  %v137 = vld [vmem:[%s1 + $0x1d8] sm:$0xf]
  %v138 = vld [vmem:[%s1 + $0x1dc] sm:$0xf]
  %v139 = vld [vmem:[%s1 + $0x1e0] sm:$0xf]
  %v140 = vld [vmem:[%s1 + $0x1e4] sm:$0xf]
  %v141 = vld [vmem:[%s1 + $0x1e8] sm:$0xf]
  %v142 = vld [vmem:[%s1 + $0x1ec] sm:$0xf]
  %v143 = vld [vmem:[%s1 + $0x1f0] sm:$0xf]
  %v144 = vld [vmem:[%s1 + $0x1f4] sm:$0xf]
  %v145 = vld [vmem:[%s1 + $0x1f8] sm:$0xf]
  %v146 = vld [vmem:[%s1 + $0x1fc] sm:$0xf]
  %v155 = vunpack.c.l.b16 %v11
  %v156 = vunpack.c.h.b16 %v11
  %v157 = vunpack.c.l.b16 %v12
  %v158 = vunpack.c.h.b16 %v12
  %v159 = vunpack.c.l.b16 %v13
  %v160 = vunpack.c.h.b16 %v13
  %v161 = vunpack.c.l.b16 %v14
  %v162 = vunpack.c.h.b16 %v14
  %v163 = vunpack.c.l.b16 %v15
  %v164 = vunpack.c.h.b16 %v15
  %v165 = vunpack.c.l.b16 %v16
  %v166 = vunpack.c.h.b16 %v16
  %v167 = vunpack.c.l.b16 %v17
  %v168 = vunpack.c.h.b16 %v17
  %v169 = vunpack.c.l.b16 %v18
  %v170 = vunpack.c.h.b16 %v18
  %v171 = vpack.c.b16 %v163, %v155
  %v172 = vpack.c.b16 %v164, %v156
  %v173 = vpack.c.b16 %v165, %v157
  %v174 = vpack.c.b16 %v166, %v158
  %v175 = vpack.c.b16 %v167, %v159
  %v176 = vpack.c.b16 %v168, %v160
  %v177 = vpack.c.b16 %v169, %v161
  %v178 = vpack.c.b16 %v170, %v162
  %v315 = vunpack.c.l.b16 %v19
  %v316 = vunpack.c.l.b16 %v20
  %v317 = vunpack.c.l.b16 %v21
  %v318 = vunpack.c.l.b16 %v22
  %v319 = vunpack.c.l.b16 %v23
  %v320 = vunpack.c.l.b16 %v24
  %v321 = vunpack.c.l.b16 %v25
  %v322 = vunpack.c.l.b16 %v26
  %v323 = vunpack.c.l.b16 %v27
  %v324 = vunpack.c.l.b16 %v28
  %v325 = vunpack.c.l.b16 %v29
  %v326 = vunpack.c.l.b16 %v30
  %v327 = vunpack.c.l.b16 %v31
  %v328 = vunpack.c.l.b16 %v32
  %v329 = vunpack.c.l.b16 %v33
  %v330 = vunpack.c.l.b16 %v34
  %v331 = vunpack.c.l.b16 %v35
  %v332 = vunpack.c.l.b16 %v36
  %v333 = vunpack.c.l.b16 %v37
  %v334 = vunpack.c.l.b16 %v38
  %v335 = vunpack.c.l.b16 %v39
  %v336 = vunpack.c.l.b16 %v40
  %v337 = vunpack.c.l.b16 %v41
  %v338 = vunpack.c.l.b16 %v42
  %v339 = vunpack.c.l.b16 %v43
  %v340 = vunpack.c.l.b16 %v44
  %v341 = vunpack.c.l.b16 %v45
  %v342 = vunpack.c.l.b16 %v46
  %v343 = vunpack.c.l.b16 %v47
  %v344 = vunpack.c.l.b16 %v48
  %v345 = vunpack.c.l.b16 %v49
  %v346 = vunpack.c.l.b16 %v50
  %v347 = vunpack.c.l.b16 %v51
  %v348 = vunpack.c.l.b16 %v52
  %v349 = vunpack.c.l.b16 %v53
  %v350 = vunpack.c.l.b16 %v54
  %v351 = vunpack.c.l.b16 %v55
  %v352 = vunpack.c.l.b16 %v56
  %v353 = vunpack.c.l.b16 %v57
  %v354 = vunpack.c.l.b16 %v58
  %v355 = vunpack.c.l.b16 %v59
  %v356 = vunpack.c.l.b16 %v60
  %v357 = vunpack.c.l.b16 %v61
  %v358 = vunpack.c.l.b16 %v62
  %v359 = vunpack.c.l.b16 %v63
  %v360 = vunpack.c.l.b16 %v64
  %v361 = vunpack.c.l.b16 %v65
  %v362 = vunpack.c.l.b16 %v66
  %v363 = vunpack.c.l.b16 %v67
  %v364 = vunpack.c.l.b16 %v68
  %v365 = vunpack.c.l.b16 %v69
  %v366 = vunpack.c.l.b16 %v70
  %v367 = vunpack.c.l.b16 %v71
  %v368 = vunpack.c.l.b16 %v72
  %v369 = vunpack.c.l.b16 %v73
  %v370 = vunpack.c.l.b16 %v74
  %v371 = vunpack.c.l.b16 %v75
  %v372 = vunpack.c.l.b16 %v76
  %v373 = vunpack.c.l.b16 %v77
  %v374 = vunpack.c.l.b16 %v78
  %v375 = vunpack.c.l.b16 %v79
  %v376 = vunpack.c.l.b16 %v80
  %v377 = vunpack.c.l.b16 %v81
  %v378 = vunpack.c.l.b16 %v82
  %v379 = vunpack.c.l.b16 %v83
  %v380 = vunpack.c.l.b16 %v84
  %v381 = vunpack.c.l.b16 %v85
  %v382 = vunpack.c.l.b16 %v86
  %v383 = vunpack.c.l.b16 %v87
  %v384 = vunpack.c.l.b16 %v88
  %v385 = vunpack.c.l.b16 %v89
  %v386 = vunpack.c.l.b16 %v90
  %v387 = vunpack.c.l.b16 %v91
  %v388 = vunpack.c.l.b16 %v92
  %v389 = vunpack.c.l.b16 %v93
  %v390 = vunpack.c.l.b16 %v94
  %v391 = vunpack.c.l.b16 %v95
  %v392 = vunpack.c.l.b16 %v96
  %v393 = vunpack.c.l.b16 %v97
  %v394 = vunpack.c.l.b16 %v98
  %v395 = vunpack.c.l.b16 %v99
  %v396 = vunpack.c.l.b16 %v100
  %v397 = vunpack.c.l.b16 %v101
  %v398 = vunpack.c.l.b16 %v102
  %v399 = vunpack.c.l.b16 %v103
  %v400 = vunpack.c.l.b16 %v104
  %v401 = vunpack.c.l.b16 %v105
  %v402 = vunpack.c.l.b16 %v106
  %v403 = vunpack.c.l.b16 %v107
  %v404 = vunpack.c.l.b16 %v108
  %v405 = vunpack.c.l.b16 %v109
  %v406 = vunpack.c.l.b16 %v110
  %v407 = vunpack.c.l.b16 %v111
  %v408 = vunpack.c.l.b16 %v112
  %v409 = vunpack.c.l.b16 %v113
  %v410 = vunpack.c.l.b16 %v114
  %v411 = vunpack.c.l.b16 %v115
  %v412 = vunpack.c.l.b16 %v116
  %v413 = vunpack.c.l.b16 %v117
  %v414 = vunpack.c.l.b16 %v118
  %v415 = vunpack.c.l.b16 %v119
  %v416 = vunpack.c.l.b16 %v120
  %v417 = vunpack.c.l.b16 %v121
  %v418 = vunpack.c.l.b16 %v122
  %v419 = vunpack.c.l.b16 %v123
  %v420 = vunpack.c.l.b16 %v124
  %v421 = vunpack.c.l.b16 %v125
  %v422 = vunpack.c.l.b16 %v126
  %v423 = vunpack.c.l.b16 %v127
  %v424 = vunpack.c.l.b16 %v128
  %v425 = vunpack.c.l.b16 %v129
  %v426 = vunpack.c.l.b16 %v130
  %v427 = vunpack.c.l.b16 %v131
  %v428 = vunpack.c.l.b16 %v132
  %v429 = vunpack.c.l.b16 %v133
  %v430 = vunpack.c.l.b16 %v134
  %v431 = vunpack.c.l.b16 %v135
  %v432 = vunpack.c.l.b16 %v136
  %v433 = vunpack.c.l.b16 %v137
  %v434 = vunpack.c.l.b16 %v138
  %v435 = vunpack.c.l.b16 %v139
  %v436 = vunpack.c.l.b16 %v140
  %v437 = vunpack.c.l.b16 %v141
  %v438 = vunpack.c.l.b16 %v142
  %v439 = vunpack.c.l.b16 %v143
  %v440 = vunpack.c.l.b16 %v144
  %v441 = vunpack.c.l.b16 %v145
  %v442 = vunpack.c.l.b16 %v146
  %v443 = vpack.c.b16 %v316, %v315
  %v444 = vpack.c.b16 %v318, %v317
  %v445 = vpack.c.b16 %v320, %v319
  %v446 = vpack.c.b16 %v322, %v321
  %v447 = vpack.c.b16 %v324, %v323
  %v448 = vpack.c.b16 %v326, %v325
  %v449 = vpack.c.b16 %v328, %v327
  %v450 = vpack.c.b16 %v330, %v329
  %v451 = vpack.c.b16 %v332, %v331
  %v452 = vpack.c.b16 %v334, %v333
  %v453 = vpack.c.b16 %v336, %v335
  %v454 = vpack.c.b16 %v338, %v337
  %v455 = vpack.c.b16 %v340, %v339
  %v456 = vpack.c.b16 %v342, %v341
  %v457 = vpack.c.b16 %v344, %v343
  %v458 = vpack.c.b16 %v346, %v345
  %v459 = vpack.c.b16 %v348, %v347
  %v460 = vpack.c.b16 %v350, %v349
  %v461 = vpack.c.b16 %v352, %v351
  %v462 = vpack.c.b16 %v354, %v353
  %v463 = vpack.c.b16 %v356, %v355
  %v464 = vpack.c.b16 %v358, %v357
  %v465 = vpack.c.b16 %v360, %v359
  %v466 = vpack.c.b16 %v362, %v361
  %v467 = vpack.c.b16 %v364, %v363
  %v468 = vpack.c.b16 %v366, %v365
  %v469 = vpack.c.b16 %v368, %v367
  %v470 = vpack.c.b16 %v370, %v369
  %v471 = vpack.c.b16 %v372, %v371
  %v472 = vpack.c.b16 %v374, %v373
  %v473 = vpack.c.b16 %v376, %v375
  %v474 = vpack.c.b16 %v378, %v377
  %v475 = vpack.c.b16 %v380, %v379
  %v476 = vpack.c.b16 %v382, %v381
  %v477 = vpack.c.b16 %v384, %v383
  %v478 = vpack.c.b16 %v386, %v385
  %v479 = vpack.c.b16 %v388, %v387
  %v480 = vpack.c.b16 %v390, %v389
  %v481 = vpack.c.b16 %v392, %v391
  %v482 = vpack.c.b16 %v394, %v393
  %v483 = vpack.c.b16 %v396, %v395
  %v484 = vpack.c.b16 %v398, %v397
  %v485 = vpack.c.b16 %v400, %v399
  %v486 = vpack.c.b16 %v402, %v401
  %v487 = vpack.c.b16 %v404, %v403
  %v488 = vpack.c.b16 %v406, %v405
  %v489 = vpack.c.b16 %v408, %v407
  %v490 = vpack.c.b16 %v410, %v409
  %v491 = vpack.c.b16 %v412, %v411
  %v492 = vpack.c.b16 %v414, %v413
  %v493 = vpack.c.b16 %v416, %v415
  %v494 = vpack.c.b16 %v418, %v417
  %v495 = vpack.c.b16 %v420, %v419
  %v496 = vpack.c.b16 %v422, %v421
  %v497 = vpack.c.b16 %v424, %v423
  %v498 = vpack.c.b16 %v426, %v425
  %v499 = vpack.c.b16 %v428, %v427
  %v500 = vpack.c.b16 %v430, %v429
  %v501 = vpack.c.b16 %v432, %v431
  %v502 = vpack.c.b16 %v434, %v433
  %v503 = vpack.c.b16 %v436, %v435
  %v504 = vpack.c.b16 %v438, %v437
  %v505 = vpack.c.b16 %v440, %v439
  %v506 = vpack.c.b16 %v442, %v441
  %571 = vmatpush.bf16.msra.mxu0 %v450
  %572 = vmatpush.bf16.msra.mxu0 %v449
  %573 = vmatpush.bf16.msra.mxu0 %v448
  %574 = vmatpush.bf16.msra.mxu0 %v447
  %575 = vmatpush.bf16.msra.mxu0 %v446
  %576 = vmatpush.bf16.msra.mxu0 %v445
  %577 = vmatpush.bf16.msra.mxu0 %v444
  %578 = vmatpush.bf16.msra.mxu0 %v443
  %579 = vmatmul.bf16.gmra.mxu0 %v171
  %v580 = vpop.f32.mrf.mxu0
  %v581 = vadd.f32 0.0, %v580
  %v582 = vpop.f32.mrf.mxu0
  %v583 = vadd.f32 0.0, %v582
  %584 = vdwg.mxu0
  %585 = vmatpush.bf16.msra.mxu0 %v458
  %586 = vmatpush.bf16.msra.mxu0 %v457
  %587 = vmatpush.bf16.msra.mxu0 %v456
  %588 = vmatpush.bf16.msra.mxu0 %v455
  %589 = vmatpush.bf16.msra.mxu0 %v454
  %590 = vmatpush.bf16.msra.mxu0 %v453
  %591 = vmatpush.bf16.msra.mxu0 %v452
  %592 = vmatpush.bf16.msra.mxu0 %v451
  %593 = vmatmul.bf16.gmra.mxu0 %v172
  %v594 = vpop.f32.mrf.mxu0
  %v595 = vadd.f32 %v581, %v594
  %v596 = vpop.f32.mrf.mxu0
  %v597 = vadd.f32 %v583, %v596
  %598 = vdwg.mxu0
  %599 = vmatpush.bf16.msra.mxu0 %v466
  %600 = vmatpush.bf16.msra.mxu0 %v465
  %601 = vmatpush.bf16.msra.mxu0 %v464
  %602 = vmatpush.bf16.msra.mxu0 %v463
  %603 = vmatpush.bf16.msra.mxu0 %v462
  %604 = vmatpush.bf16.msra.mxu0 %v461
  %605 = vmatpush.bf16.msra.mxu0 %v460
  %606 = vmatpush.bf16.msra.mxu0 %v459
  %607 = vmatmul.bf16.gmra.mxu0 %v173
  %v608 = vpop.f32.mrf.mxu0
  %v609 = vadd.f32 %v595, %v608
  %v610 = vpop.f32.mrf.mxu0
  %v611 = vadd.f32 %v597, %v610
  %612 = vdwg.mxu0
  %613 = vmatpush.bf16.msra.mxu0 %v474
  %614 = vmatpush.bf16.msra.mxu0 %v473
  %615 = vmatpush.bf16.msra.mxu0 %v472
  %616 = vmatpush.bf16.msra.mxu0 %v471
  %617 = vmatpush.bf16.msra.mxu0 %v470
  %618 = vmatpush.bf16.msra.mxu0 %v469
  %619 = vmatpush.bf16.msra.mxu0 %v468
  %620 = vmatpush.bf16.msra.mxu0 %v467
  %621 = vmatmul.bf16.gmra.mxu0 %v174
  %v622 = vpop.f32.mrf.mxu0
  %v623 = vadd.f32 %v609, %v622
  %v624 = vpop.f32.mrf.mxu0
  %v625 = vadd.f32 %v611, %v624
  %626 = vdwg.mxu0
  %627 = vmatpush.bf16.msra.mxu0 %v482
  %628 = vmatpush.bf16.msra.mxu0 %v481
  %629 = vmatpush.bf16.msra.mxu0 %v480
  %630 = vmatpush.bf16.msra.mxu0 %v479
  %631 = vmatpush.bf16.msra.mxu0 %v478
  %632 = vmatpush.bf16.msra.mxu0 %v477
  %633 = vmatpush.bf16.msra.mxu0 %v476
  %634 = vmatpush.bf16.msra.mxu0 %v475
  %635 = vmatmul.bf16.gmra.mxu0 %v175
  %v636 = vpop.f32.mrf.mxu0
  %v637 = vadd.f32 %v623, %v636
  %v638 = vpop.f32.mrf.mxu0
  %v639 = vadd.f32 %v625, %v638
  %640 = vdwg.mxu0
  %641 = vmatpush.bf16.msra.mxu0 %v490
  %642 = vmatpush.bf16.msra.mxu0 %v489
  %643 = vmatpush.bf16.msra.mxu0 %v488
  %644 = vmatpush.bf16.msra.mxu0 %v487
  %645 = vmatpush.bf16.msra.mxu0 %v486
  %646 = vmatpush.bf16.msra.mxu0 %v485
  %647 = vmatpush.bf16.msra.mxu0 %v484
  %648 = vmatpush.bf16.msra.mxu0 %v483
  %649 = vmatmul.bf16.gmra.mxu0 %v176
  %v650 = vpop.f32.mrf.mxu0
  %v651 = vadd.f32 %v637, %v650
  %v652 = vpop.f32.mrf.mxu0
  %v653 = vadd.f32 %v639, %v652
  %654 = vdwg.mxu0
  %655 = vmatpush.bf16.msra.mxu0 %v498
  %656 = vmatpush.bf16.msra.mxu0 %v497
  %657 = vmatpush.bf16.msra.mxu0 %v496
  %658 = vmatpush.bf16.msra.mxu0 %v495
  %659 = vmatpush.bf16.msra.mxu0 %v494
  %660 = vmatpush.bf16.msra.mxu0 %v493
  %661 = vmatpush.bf16.msra.mxu0 %v492
  %662 = vmatpush.bf16.msra.mxu0 %v491
  %663 = vmatmul.bf16.gmra.mxu0 %v177
  %v664 = vpop.f32.mrf.mxu0
  %v665 = vadd.f32 %v651, %v664
  %v666 = vpop.f32.mrf.mxu0
  %v667 = vadd.f32 %v653, %v666
  %668 = vdwg.mxu0
  %669 = vmatpush.bf16.msra.mxu0 %v506
  %670 = vmatpush.bf16.msra.mxu0 %v505
  %671 = vmatpush.bf16.msra.mxu0 %v504
  %672 = vmatpush.bf16.msra.mxu0 %v503
  %673 = vmatpush.bf16.msra.mxu0 %v502
  %674 = vmatpush.bf16.msra.mxu0 %v501
  %675 = vmatpush.bf16.msra.mxu0 %v500
  %676 = vmatpush.bf16.msra.mxu0 %v499
  %677 = vmatmul.bf16.gmra.mxu0 %v178
  %v678 = vpop.f32.mrf.mxu0
  %v679 = vadd.f32 %v665, %v678
  %v680 = vpop.f32.mrf.mxu0
  %v681 = vadd.f32 %v667, %v680
  %682 = vdwg.mxu0
  %v683 = vmax.f32 %v679, 0.0
  %v684 = vmax.f32 %v681, 0.0
  %v685 = vpack.c.bf16 %v683, %v683
  %v686 = vpack.c.bf16 %v684, %v684
  %687 = vst [vmem:[%s2] sm:$0xf] %v685
  %688 = vst [vmem:[%s2 + $0x4] sm:$0xf] %v686
  // Predicated region
  $region10: #{unet_generator_forward.24} parent=0 // pred_check
    _
  $region11: #{unet_generator_forward.24} parent=0 // pred_check_branch
    %690 = sbr.rel (0) target = $region13
  $region12: #{unet_generator_forward.24} parent=0 // pred_region
    _
  $region13: #{unet_generator_forward.24} parent=0 // pred_fallthru
    _
  // Predicated region
  $region14: #{unet_generator_forward.24} parent=0 // pred_check
    _
  $region15: #{unet_generator_forward.24} parent=0 // pred_check_branch
    %692 = sbr.rel (0) target = $region17
  $region16: #{unet_generator_forward.24} parent=0 // pred_region
    _
  $region17: #{unet_generator_forward.24} parent=0 // pred_fallthru
    _

// kernel: unet_generator_forward.25
$region0: #{unet_generator_forward.25}
  #allocation0 [shape = 'u32[]', space=smem, size = 0x4, offset = 0x4, fixed_abs, tag = 'smem constant byte address 0x4 - core index']
  #allocation1 [shape = 'u32[72,128]{1,0:T(1,128)}', space=vmem, size = 0x9000, scoped, tag = 'internal scratch']
  %s0 = inlined_call_operand.vmem [shape: bf16[4,16,256], index: 0, kind: input, shape index: {}]
  %s1 = inlined_call_operand.vmem [shape: bf16[4,256,128], index: 1, kind: input, shape index: {}]
  %s2 = inlined_call_operand.vmem [shape: bf16[4,16,128], index: 2, kind: output, shape index: {0}]
  %s3 = inlined_call_operand.vmem [shape: f32[4,1,1,128], index: 3, kind: output, shape index: {1}]
  %s4 = inlined_call_operand.vmem [shape: f32[4,1,1,128], index: 4, kind: output, shape index: {2}]
  %5 = xla_tuple %s2, %s3, %s4
  %s6 = sld [smem:[#allocation0]]
  $region57: #{unet_generator_forward.25} parent=0
    _
  %s8 = ssub.s32 1, %s6
  %s9 = scalar_select 0, %s8, %s6
  loop: start=0, step=1, limit=6
  $region2: #{unet_generator_forward.25} parent=0 // loop_pre_header
    _
  $region3: #{unet_generator_forward.25} parent=0 // loop_header
    %s11 = sphi 0, %s15
    %p12 = scmp.ge.s32.totalorder %s11, 6
    %s18 = sphi 0, %s30
    %s19 = sphi 0, %s26
    %s20 = sphi 0, %s18
    %s21 = sphi 0, %s19
    %s22 = sphi 0, %s20
    %s23 = sphi 0, %s21
    %s35 = sphi 0, %s37
    %s38 = sphi 0, %s35
    %s39 = sphi 0, %s38
    %s55 = sphi 0, %s39
    %s61 = sphi 0, %s63
    %s64 = sphi 0, %s61
    %s65 = sphi 0, %s64
    %s81 = sphi 0, %s65
    %s89 = sphi 0, %s91
    %s92 = sphi 0, %s89
    %s93 = sphi 0, %s92
    %s109 = sphi 0, %s93
    %s117 = sphi 0, %s119
    %s120 = sphi 0, %s117
    %s121 = sphi 0, %s120
    %s137 = sphi 0, %s121
    %s145 = sphi 0, %s147
    %s148 = sphi 0, %s145
    %s149 = sphi 0, %s148
    %s165 = sphi 0, %s149
  $region4: #{unet_generator_forward.25} parent=0 // loop_header_branch
    %14 = sbr.rel (%p12) target = $region8
  $region5: #{unet_generator_forward.25} parent=0 // loop_body
    %s16 = ssub.s32 %s11, 1
    %s17 = ssub.s32 %s11, 2
    %s24 = sadd.s32 1, %s19
    %p25 = scmp.ge.s32.totalorder %s24, 1
    %s26 = scalar_select %p25, 0, %s24
    %s27 = sadd.s32 1, %s18
    %s28 = scalar_select %p25, %s27, %s18
    %p29 = scmp.ge.s32.totalorder %s28, 4
    %s30 = scalar_select %p29, 0, %s28
    %s31 = ssub.s32 %s18, %s30
    %s32 = ssub.s32 %s19, %s26
    %s33 = sor.u32 %s31, %s32
    %p34 = scmp.eq.s32.totalorder %s33, 0
    %s36 = sadd.s32 %s35, 1
    %s37 = scalar_select %p34, %s35, %s36
    %p40 = pneg %p34
    %p41 = scmp.eq.s32.totalorder %s11, 3
    %p42 = por %p40, %p41
    %p43 = scmp.ne.s32.totalorder %s35, %s38
    %p44 = scmp.eq.s32.totalorder %s11, 0
    %p45 = por %p43, %p44
    %p46 = scmp.ne.s32.totalorder %s35, %s38
    %p47 = scmp.eq.s32.totalorder %s16, 3
    %p48 = por %p46, %p47
    %p49 = scmp.ne.s32.totalorder %s38, %s39
    %p50 = scmp.eq.s32.totalorder %s16, 0
    %p51 = por %p49, %p50
    %p52 = scmp.ne.s32.totalorder %s38, %s39
    %p53 = scmp.eq.s32.totalorder %s17, 3
    %p54 = por %p52, %p53
    %p56 = scmp.ne.s32.totalorder %s39, %s55
    %p57 = scmp.eq.s32.totalorder %s17, 0
    %p58 = por %p56, %p57
    %s59 = ssub.s32 %s18, %s30
    %p60 = scmp.eq.s32.totalorder %s59, 0
    %s62 = sadd.s32 %s61, 1
    %s63 = scalar_select %p60, %s61, %s62
    %p66 = pneg %p60
    %p67 = scmp.eq.s32.totalorder %s11, 3
    %p68 = por %p66, %p67
    %p69 = scmp.ne.s32.totalorder %s61, %s64
    %p70 = scmp.eq.s32.totalorder %s11, 0
    %p71 = por %p69, %p70
    %p72 = scmp.ne.s32.totalorder %s61, %s64
    %p73 = scmp.eq.s32.totalorder %s16, 3
    %p74 = por %p72, %p73
    %p75 = scmp.ne.s32.totalorder %s64, %s65
    %p76 = scmp.eq.s32.totalorder %s16, 0
    %p77 = por %p75, %p76
    %p78 = scmp.ne.s32.totalorder %s64, %s65
    %p79 = scmp.eq.s32.totalorder %s17, 3
    %p80 = por %p78, %p79
    %p82 = scmp.ne.s32.totalorder %s65, %s81
    %p83 = scmp.eq.s32.totalorder %s17, 0
    %p84 = por %p82, %p83
    %s85 = ssub.s32 %s18, %s30
    %s86 = ssub.s32 %s19, %s26
    %s87 = sor.u32 %s85, %s86
    %p88 = scmp.eq.s32.totalorder %s87, 0
    %s90 = sadd.s32 %s89, 1
    %s91 = scalar_select %p88, %s89, %s90
    %p94 = pneg %p88
    %p95 = scmp.eq.s32.totalorder %s11, 3
    %p96 = por %p94, %p95
    %p97 = scmp.ne.s32.totalorder %s89, %s92
    %p98 = scmp.eq.s32.totalorder %s11, 0
    %p99 = por %p97, %p98
    %p100 = scmp.ne.s32.totalorder %s89, %s92
    %p101 = scmp.eq.s32.totalorder %s16, 3
    %p102 = por %p100, %p101
    %p103 = scmp.ne.s32.totalorder %s92, %s93
    %p104 = scmp.eq.s32.totalorder %s16, 0
    %p105 = por %p103, %p104
    %p106 = scmp.ne.s32.totalorder %s92, %s93
    %p107 = scmp.eq.s32.totalorder %s17, 3
    %p108 = por %p106, %p107
    %p110 = scmp.ne.s32.totalorder %s93, %s109
    %p111 = scmp.eq.s32.totalorder %s17, 0
    %p112 = por %p110, %p111
    %s113 = ssub.s32 %s18, %s30
    %s114 = ssub.s32 %s19, %s26
    %s115 = sor.u32 %s113, %s114
    %p116 = scmp.eq.s32.totalorder %s115, 0
    %s118 = sadd.s32 %s117, 1
    %s119 = scalar_select %p116, %s117, %s118
    %p122 = pneg %p116
    %p123 = scmp.eq.s32.totalorder %s11, 3
    %p124 = por %p122, %p123
    %p125 = scmp.ne.s32.totalorder %s117, %s120
    %p126 = scmp.eq.s32.totalorder %s11, 0
    %p127 = por %p125, %p126
    %p128 = scmp.ne.s32.totalorder %s117, %s120
    %p129 = scmp.eq.s32.totalorder %s16, 3
    %p130 = por %p128, %p129
    %p131 = scmp.ne.s32.totalorder %s120, %s121
    %p132 = scmp.eq.s32.totalorder %s16, 0
    %p133 = por %p131, %p132
    %p134 = scmp.ne.s32.totalorder %s120, %s121
    %p135 = scmp.eq.s32.totalorder %s17, 3
    %p136 = por %p134, %p135
    %p138 = scmp.ne.s32.totalorder %s121, %s137
    %p139 = scmp.eq.s32.totalorder %s17, 0
    %p140 = por %p138, %p139
    %s141 = ssub.s32 %s18, %s30
    %s142 = ssub.s32 %s19, %s26
    %s143 = sor.u32 %s141, %s142
    %p144 = scmp.eq.s32.totalorder %s143, 0
    %s146 = sadd.s32 %s145, 1
    %s147 = scalar_select %p144, %s145, %s146
    %p150 = pneg %p144
    %p151 = scmp.eq.s32.totalorder %s11, 3
    %p152 = por %p150, %p151
    %p153 = scmp.ne.s32.totalorder %s145, %s148
    %p154 = scmp.eq.s32.totalorder %s11, 0
    %p155 = por %p153, %p154
    %p156 = scmp.ne.s32.totalorder %s145, %s148
    %p157 = scmp.eq.s32.totalorder %s16, 3
    %p158 = por %p156, %p157
    %p159 = scmp.ne.s32.totalorder %s148, %s149
    %p160 = scmp.eq.s32.totalorder %s16, 0
    %p161 = por %p159, %p160
    %p162 = scmp.ne.s32.totalorder %s148, %s149
    %p163 = scmp.eq.s32.totalorder %s17, 3
    %p164 = por %p162, %p163
    %p166 = scmp.ne.s32.totalorder %s149, %s165
    %p167 = scmp.eq.s32.totalorder %s17, 0
    %p168 = por %p166, %p167
    %p169 = scmp.le.s32.totalorder 1, %s11
    %p170 = scmp.lt.s32.totalorder %s11, 5
    %p171 = pnand %p169, %p170
    %p172 = pneg %p171
    // Predicated region
    $region9: #{unet_generator_forward.25} parent=5 // pred_check
      _
    $region10: #{unet_generator_forward.25} parent=5 // pred_check_branch
      %174 = sbr.rel (%p171) target = $region12
    $region11: #{unet_generator_forward.25} parent=5 // pred_region
      %s175 = ssub.s32 %s11, 1
    $region12: #{unet_generator_forward.25} parent=5 // pred_fallthru
      _
    %p176 = scmp.lt.s32.totalorder %s11, 4
    // Predicated region
    $region13: #{unet_generator_forward.25} parent=5 // pred_check
      %p177 = pneg %p176
    $region14: #{unet_generator_forward.25} parent=5 // pred_check_branch
      %179 = sbr.rel (%p177) target = $region16
    $region15: #{unet_generator_forward.25} parent=5 // pred_region
      // Predicated region
      $region17: #{unet_generator_forward.25} parent=15 // pred_check
        %p180 = pneg %p45
      $region18: #{unet_generator_forward.25} parent=15 // pred_check_branch
        %182 = sbr.rel (%p180) target = $region20
      $region19: #{unet_generator_forward.25} parent=15 // pred_region
        %s183 = smul.u32 2, %s19
        %p184 = scmp.lt.s32.totalorder %s18, 3
        %s185 = scalar_select %p184, %s18, 3
        %p186 = scmp.lt.s32.totalorder %s183, 1
        %s187 = scalar_select %p186, %s183, 1
        %s188 = smul.addr %s187, 2
        %s189 = smul.addr %s185, 4
        %s190 = sadd.s32 %s188, %s189
        %s191 = smul.addr %s190, 4
        %s192 = scalar_lea.vmem %s0, %s191
        %s193 = smul.u32 2, %s19
      $region20: #{unet_generator_forward.25} parent=15 // pred_fallthru
        _
      // Predicated region
      $region21: #{unet_generator_forward.25} parent=15 // pred_check
        %p194 = pneg %p71
      $region22: #{unet_generator_forward.25} parent=15 // pred_check_branch
        %196 = sbr.rel (%p194) target = $region24
      $region23: #{unet_generator_forward.25} parent=15 // pred_region
        %p197 = scmp.lt.s32.totalorder %s18, 3
        %s198 = scalar_select %p197, %s18, 3
        %s199 = smul.addr %s198, 32
        %s200 = smul.addr %s199, 4
        %s201 = scalar_lea.vmem %s1, %s200
      $region24: #{unet_generator_forward.25} parent=15 // pred_fallthru
        _
    $region16: #{unet_generator_forward.25} parent=5 // pred_fallthru
      _
    %p202 = scmp.le.s32.totalorder 1, %s11
    %p203 = scmp.lt.s32.totalorder %s11, 5
    %p204 = pnand %p202, %p203
    %p205 = pneg %p204
    // Predicated region
    $region25: #{unet_generator_forward.25} parent=5 // pred_check
      _
    $region26: #{unet_generator_forward.25} parent=5 // pred_check_branch
      %207 = sbr.rel (%p204) target = $region28
    $region27: #{unet_generator_forward.25} parent=5 // pred_region
      %s208 = ssub.s32 %s11, 1
      %s209 = smul.u32 2, %s21
      %p210 = scmp.lt.s32.totalorder %s20, 3
      %s211 = scalar_select %p210, %s20, 3
      %p212 = scmp.lt.s32.totalorder %s209, 1
      %s213 = scalar_select %p212, %s209, 1
      %s214 = smul.addr %s213, 2
      %s215 = smul.addr %s211, 4
      %s216 = sadd.s32 %s214, %s215
      %s217 = smul.addr %s216, 4
      %s218 = scalar_lea.vmem %s0, %s217
      %p219 = pneg %p51
      %p220 = pneg %p48
      %p221 = scmp.lt.s32.totalorder %s20, 3
      %s222 = scalar_select %p221, %s20, 3
      %s223 = smul.addr %s222, 32
      %s224 = smul.addr %s223, 4
      %s225 = scalar_lea.vmem %s1, %s224
      %p226 = pneg %p77
      %p227 = pneg %p74
      %p228 = pneg %p105
      %p229 = pneg %p102
      %s230 = smul.u32 2, %s21
      %p231 = scmp.lt.s32.totalorder %s20, 3
      %s232 = scalar_select %p231, %s20, 3
      %p233 = scmp.lt.s32.totalorder %s230, 1
      %s234 = scalar_select %p233, %s230, 1
      %s235 = smul.addr %s232, 2
      %s236 = sadd.s32 %s234, %s235
      %s237 = smul.addr %s236, 4
      %s238 = scalar_lea.vmem %s2, %s237
      %p239 = pneg %p133
      %p240 = pneg %p130
      %p241 = scmp.lt.s32.totalorder %s20, 3
      %s242 = scalar_select %p241, %s20, 3
      %p243 = scmp.lt.s32.totalorder %s21, 0
      %s244 = scalar_select %p243, %s21, 0
      %s245 = sadd.s32 %s244, %s242
      %s246 = scalar_lea.vmem %s3, %s245
      %p247 = pneg %p161
      %p248 = pneg %p158
      %p249 = scmp.lt.s32.totalorder %s20, 3
      %s250 = scalar_select %p249, %s20, 3
      %p251 = scmp.lt.s32.totalorder %s21, 0
      %s252 = scalar_select %p251, %s21, 0
      %s253 = sadd.s32 %s252, %s250
      %s254 = scalar_lea.vmem %s4, %s253
      %s255 = smul.u32 2, %s21
      %p256 = scmp.lt.s32.totalorder %s20, 3
      %s257 = scalar_select %p256, %s20, 3
      %p258 = scmp.lt.s32.totalorder %s255, 1
      %s259 = scalar_select %p258, %s255, 1
      %s260 = smul.addr %s259, 2
      %s261 = smul.addr %s257, 4
      %s262 = sadd.s32 %s260, %s261
      %s263 = smul.addr %s262, 4
      %s264 = scalar_lea.vmem %s0, %s263
      %s265 = smul.u32 2, %s21
      %p266 = scmp.lt.s32.totalorder %s20, 3
      %s267 = scalar_select %p266, %s20, 3
      %s268 = smul.addr %s267, 32
      %s269 = smul.addr %s268, 4
      %s270 = scalar_lea.vmem %s1, %s269
      %s271 = smul.u32 2, %s21
      %p272 = scmp.lt.s32.totalorder %s20, 3
      %s273 = scalar_select %p272, %s20, 3
      %p274 = scmp.lt.s32.totalorder %s271, 1
      %s275 = scalar_select %p274, %s271, 1
      %s276 = smul.addr %s273, 2
      %s277 = sadd.s32 %s275, %s276
      %s278 = smul.addr %s277, 4
      %s279 = scalar_lea.vmem %s2, %s278
      %s280 = smul.u32 2, %s21
      %p281 = scmp.lt.s32.totalorder %s20, 3
      %s282 = scalar_select %p281, %s20, 3
      %p283 = scmp.lt.s32.totalorder %s21, 0
      %s284 = scalar_select %p283, %s21, 0
      %s285 = sadd.s32 %s284, %s282
      %s286 = scalar_lea.vmem %s3, %s285
      %p287 = scmp.lt.s32.totalorder %s20, 3
      %s288 = scalar_select %p287, %s20, 3
      %p289 = scmp.lt.s32.totalorder %s21, 0
      %s290 = scalar_select %p289, %s21, 0
      %s291 = sadd.s32 %s290, %s288
      %s292 = scalar_lea.vmem %s4, %s291
      %v293 = vld [vmem:[%s264] sm:$0xff]
      %v294 = vld [vmem:[%s264 + $0x8] sm:$0xff]
      %v295 = vld [vmem:[%s270] sm:$0xf]
      %v296 = vld [vmem:[%s270 + $0x4] sm:$0xf]
      %v297 = vld [vmem:[%s270 + $0x8] sm:$0xf]
      %v298 = vld [vmem:[%s270 + $0xc] sm:$0xf]
      %v299 = vld [vmem:[%s270 + $0x10] sm:$0xf]
      %v300 = vld [vmem:[%s270 + $0x14] sm:$0xf]
      %v301 = vld [vmem:[%s270 + $0x18] sm:$0xf]
      %v302 = vld [vmem:[%s270 + $0x1c] sm:$0xf]
      %v303 = vld [vmem:[%s270 + $0x20] sm:$0xf]
      %v304 = vld [vmem:[%s270 + $0x24] sm:$0xf]
      %v305 = vld [vmem:[%s270 + $0x28] sm:$0xf]
      %v306 = vld [vmem:[%s270 + $0x2c] sm:$0xf]
      %v307 = vld [vmem:[%s270 + $0x30] sm:$0xf]
      %v308 = vld [vmem:[%s270 + $0x34] sm:$0xf]
      %v309 = vld [vmem:[%s270 + $0x38] sm:$0xf]
      %v310 = vld [vmem:[%s270 + $0x3c] sm:$0xf]
      %v311 = vld [vmem:[%s270 + $0x40] sm:$0xf]
      %v312 = vld [vmem:[%s270 + $0x44] sm:$0xf]
      %v313 = vld [vmem:[%s270 + $0x48] sm:$0xf]
      %v314 = vld [vmem:[%s270 + $0x4c] sm:$0xf]
      %v315 = vld [vmem:[%s270 + $0x50] sm:$0xf]
      %v316 = vld [vmem:[%s270 + $0x54] sm:$0xf]
      %v317 = vld [vmem:[%s270 + $0x58] sm:$0xf]
      %v318 = vld [vmem:[%s270 + $0x5c] sm:$0xf]
      %v319 = vld [vmem:[%s270 + $0x60] sm:$0xf]
      %v320 = vld [vmem:[%s270 + $0x64] sm:$0xf]
      %v321 = vld [vmem:[%s270 + $0x68] sm:$0xf]
      %v322 = vld [vmem:[%s270 + $0x6c] sm:$0xf]
      %v323 = vld [vmem:[%s270 + $0x70] sm:$0xf]
      %v324 = vld [vmem:[%s270 + $0x74] sm:$0xf]
      %v325 = vld [vmem:[%s270 + $0x78] sm:$0xf]
      %v326 = vld [vmem:[%s270 + $0x7c] sm:$0xf]
      %v329 = vunpack.c.l.b16 %v293
      %v330 = vunpack.c.h.b16 %v293
      %v331 = vunpack.c.l.b16 %v294
      %v332 = vunpack.c.h.b16 %v294
      %v333 = vpack.c.b16 %v331, %v329
      %v334 = vpack.c.b16 %v332, %v330
      %v369 = vunpack.c.l.b16 %v295
      %v370 = vunpack.c.l.b16 %v296
      %v371 = vunpack.c.l.b16 %v297
      %v372 = vunpack.c.l.b16 %v298
      %v373 = vunpack.c.l.b16 %v299
      %v374 = vunpack.c.l.b16 %v300
      %v375 = vunpack.c.l.b16 %v301
      %v376 = vunpack.c.l.b16 %v302
      %v377 = vunpack.c.l.b16 %v303
      %v378 = vunpack.c.l.b16 %v304
      %v379 = vunpack.c.l.b16 %v305
      %v380 = vunpack.c.l.b16 %v306
      %v381 = vunpack.c.l.b16 %v307
      %v382 = vunpack.c.l.b16 %v308
      %v383 = vunpack.c.l.b16 %v309
      %v384 = vunpack.c.l.b16 %v310
      %v385 = vunpack.c.l.b16 %v311
      %v386 = vunpack.c.l.b16 %v312
      %v387 = vunpack.c.l.b16 %v313
      %v388 = vunpack.c.l.b16 %v314
      %v389 = vunpack.c.l.b16 %v315
      %v390 = vunpack.c.l.b16 %v316
      %v391 = vunpack.c.l.b16 %v317
      %v392 = vunpack.c.l.b16 %v318
      %v393 = vunpack.c.l.b16 %v319
      %v394 = vunpack.c.l.b16 %v320
      %v395 = vunpack.c.l.b16 %v321
      %v396 = vunpack.c.l.b16 %v322
      %v397 = vunpack.c.l.b16 %v323
      %v398 = vunpack.c.l.b16 %v324
      %v399 = vunpack.c.l.b16 %v325
      %v400 = vunpack.c.l.b16 %v326
      %v401 = vpack.c.b16 %v370, %v369
      %v402 = vpack.c.b16 %v372, %v371
      %v403 = vpack.c.b16 %v374, %v373
      %v404 = vpack.c.b16 %v376, %v375
      %v405 = vpack.c.b16 %v378, %v377
      %v406 = vpack.c.b16 %v380, %v379
      %v407 = vpack.c.b16 %v382, %v381
      %v408 = vpack.c.b16 %v384, %v383
      %v409 = vpack.c.b16 %v386, %v385
      %v410 = vpack.c.b16 %v388, %v387
      %v411 = vpack.c.b16 %v390, %v389
      %v412 = vpack.c.b16 %v392, %v391
      %v413 = vpack.c.b16 %v394, %v393
      %v414 = vpack.c.b16 %v396, %v395
      %v415 = vpack.c.b16 %v398, %v397
      %v416 = vpack.c.b16 %v400, %v399
      %433 = vmatpush.bf16.msra.mxu0 %v408
      %434 = vmatpush.bf16.msra.mxu0 %v407
      %435 = vmatpush.bf16.msra.mxu0 %v406
      %436 = vmatpush.bf16.msra.mxu0 %v405
      %437 = vmatpush.bf16.msra.mxu0 %v404
      %438 = vmatpush.bf16.msra.mxu0 %v403
      %439 = vmatpush.bf16.msra.mxu0 %v402
      %440 = vmatpush.bf16.msra.mxu0 %v401
      %441 = vmatmul.bf16.gmra.mxu0 %v333
      %v442 = vpop.f32.mrf.mxu0
      %v443 = vadd.f32 0.0, %v442
      %v444 = vpop.f32.mrf.mxu0
      %v445 = vadd.f32 0.0, %v444
      %446 = vdwg.mxu0
      %447 = vmatpush.bf16.msra.mxu0 %v416
      %448 = vmatpush.bf16.msra.mxu0 %v415
      %449 = vmatpush.bf16.msra.mxu0 %v414
      %450 = vmatpush.bf16.msra.mxu0 %v413
      %451 = vmatpush.bf16.msra.mxu0 %v412
      %452 = vmatpush.bf16.msra.mxu0 %v411
      %453 = vmatpush.bf16.msra.mxu0 %v410
      %454 = vmatpush.bf16.msra.mxu0 %v409
      %455 = vmatmul.bf16.gmra.mxu0 %v334
      %v456 = vpop.f32.mrf.mxu0
      %v457 = vadd.f32 %v443, %v456
      %v458 = vpop.f32.mrf.mxu0
      %v459 = vadd.f32 %v445, %v458
      %460 = vdwg.mxu0
      %v461 = vadd.f32 %v457, %v459
      %v462 = vrot.slane %v461, 4
      %v463 = vadd.f32 %v461, %v462
      %v464 = vrot.slane %v463, 2
      %v465 = vadd.f32 %v463, %v464
      %v466 = vrot.slane %v465, 1
      %v467 = vadd.f32 %v465, %v466
      %468 = vst [vmem:[%s286] sm:$0x1] %v467
      %v469 = vmul.f32 %v457, %v457
      %v470 = vmul.f32 %v459, %v459
      %v471 = vadd.f32 %v469, %v470
      %v472 = vrot.slane %v471, 4
      %v473 = vadd.f32 %v471, %v472
      %v474 = vrot.slane %v473, 2
      %v475 = vadd.f32 %v473, %v474
      %v476 = vrot.slane %v475, 1
      %v477 = vadd.f32 %v475, %v476
      %478 = vst [vmem:[%s292] sm:$0x1] %v477
      %v479 = vpack.c.bf16 %v457, %v457
      %v480 = vpack.c.bf16 %v459, %v459
      %481 = vst [vmem:[%s279] sm:$0xf] %v479
      %482 = vst [vmem:[%s279 + $0x4] sm:$0xf] %v480
      %s483 = smul.u32 2, %s21
      %p484 = scmp.lt.s32.totalorder %s20, 3
      %s485 = scalar_select %p484, %s20, 3
      %p486 = scmp.lt.s32.totalorder %s483, 1
      %s487 = scalar_select %p486, %s483, 1
      %s488 = smul.addr %s485, 2
      %s489 = sadd.s32 %s487, %s488
      %s490 = smul.addr %s489, 4
      %s491 = scalar_lea.vmem %s2, %s490
      %p492 = scmp.lt.s32.totalorder %s20, 3
      %s493 = scalar_select %p492, %s20, 3
      %p494 = scmp.lt.s32.totalorder %s21, 0
      %s495 = scalar_select %p494, %s21, 0
      %s496 = sadd.s32 %s495, %s493
      %s497 = scalar_lea.vmem %s3, %s496
      %p498 = scmp.lt.s32.totalorder %s20, 3
      %s499 = scalar_select %p498, %s20, 3
      %p500 = scmp.lt.s32.totalorder %s21, 0
      %s501 = scalar_select %p500, %s21, 0
      %s502 = sadd.s32 %s501, %s499
      %s503 = scalar_lea.vmem %s4, %s502
      // Predicated region
      $region29: #{unet_generator_forward.25} parent=27 // pred_check
        %p504 = pneg %p102
      $region30: #{unet_generator_forward.25} parent=27 // pred_check_branch
        %506 = sbr.rel (%p504) target = $region32
      $region31: #{unet_generator_forward.25} parent=27 // pred_region
        %s507 = smul.u32 2, %s21
      $region32: #{unet_generator_forward.25} parent=27 // pred_fallthru
        _
      // Predicated region
      $region33: #{unet_generator_forward.25} parent=27 // pred_check
        %p508 = pneg %p130
      $region34: #{unet_generator_forward.25} parent=27 // pred_check_branch
        %510 = sbr.rel (%p508) target = $region36
      $region35: #{unet_generator_forward.25} parent=27 // pred_region
        _
      $region36: #{unet_generator_forward.25} parent=27 // pred_fallthru
        _
      // Predicated region
      $region37: #{unet_generator_forward.25} parent=27 // pred_check
        %p511 = pneg %p158
      $region38: #{unet_generator_forward.25} parent=27 // pred_check_branch
        %513 = sbr.rel (%p511) target = $region40
      $region39: #{unet_generator_forward.25} parent=27 // pred_region
        _
      $region40: #{unet_generator_forward.25} parent=27 // pred_fallthru
        _
    $region28: #{unet_generator_forward.25} parent=5 // pred_fallthru
      _
    %p514 = scmp.le.s32.totalorder 2, %s11
    // Predicated region
    $region41: #{unet_generator_forward.25} parent=5 // pred_check
      %p515 = pneg %p514
    $region42: #{unet_generator_forward.25} parent=5 // pred_check_branch
      %517 = sbr.rel (%p515) target = $region44
    $region43: #{unet_generator_forward.25} parent=5 // pred_region
      %s518 = ssub.s32 %s11, 2
      // Predicated region
      $region45: #{unet_generator_forward.25} parent=43 // pred_check
        %p519 = pneg %p108
      $region46: #{unet_generator_forward.25} parent=43 // pred_check_branch
        %521 = sbr.rel (%p519) target = $region48
      $region47: #{unet_generator_forward.25} parent=43 // pred_region
        %s522 = smul.u32 2, %s23
        %p523 = scmp.lt.s32.totalorder %s22, 3
        %s524 = scalar_select %p523, %s22, 3
        %p525 = scmp.lt.s32.totalorder %s522, 1
        %s526 = scalar_select %p525, %s522, 1
        %s527 = smul.addr %s524, 2
        %s528 = sadd.s32 %s526, %s527
        %s529 = smul.addr %s528, 4
        %s530 = scalar_lea.vmem %s2, %s529
      $region48: #{unet_generator_forward.25} parent=43 // pred_fallthru
        _
      // Predicated region
      $region49: #{unet_generator_forward.25} parent=43 // pred_check
        %p531 = pneg %p136
      $region50: #{unet_generator_forward.25} parent=43 // pred_check_branch
        %533 = sbr.rel (%p531) target = $region52
      $region51: #{unet_generator_forward.25} parent=43 // pred_region
        %p534 = scmp.lt.s32.totalorder %s22, 3
        %s535 = scalar_select %p534, %s22, 3
        %p536 = scmp.lt.s32.totalorder %s23, 0
        %s537 = scalar_select %p536, %s23, 0
        %s538 = sadd.s32 %s537, %s535
        %s539 = scalar_lea.vmem %s3, %s538
      $region52: #{unet_generator_forward.25} parent=43 // pred_fallthru
        _
      // Predicated region
      $region53: #{unet_generator_forward.25} parent=43 // pred_check
        %p540 = pneg %p164
      $region54: #{unet_generator_forward.25} parent=43 // pred_check_branch
        %542 = sbr.rel (%p540) target = $region56
      $region55: #{unet_generator_forward.25} parent=43 // pred_region
        %p543 = scmp.lt.s32.totalorder %s22, 3
        %s544 = scalar_select %p543, %s22, 3
        %p545 = scmp.lt.s32.totalorder %s23, 0
        %s546 = scalar_select %p545, %s23, 0
        %s547 = sadd.s32 %s546, %s544
        %s548 = scalar_lea.vmem %s4, %s547
      $region56: #{unet_generator_forward.25} parent=43 // pred_fallthru
        _
    $region44: #{unet_generator_forward.25} parent=5 // pred_fallthru
      _
  $region6: #{unet_generator_forward.25} parent=0 // loop_footer
    %s15 = sadd.s32 1, %s11
  $region7: #{unet_generator_forward.25} parent=0 // loop_footer_branch
    %10 = sbr.rel target = $region3
  $region8: #{unet_generator_forward.25} parent=0 // loop_exit
    _

// kernel: unet_generator_forward.26
$region0: #{unet_generator_forward.26}
  #allocation0 [shape = 'u32[]', space=smem, size = 0x4, offset = 0x4, fixed_abs, tag = 'smem constant byte address 0x4 - core index']
  #allocation1 [shape = 'u32[72,128]{1,0:T(1,128)}', space=vmem, size = 0x9000, scoped, tag = 'internal scratch']
  %s0 = inlined_call_operand.vmem [shape: bf16[4,16,128], index: 0, kind: input, shape index: {}]
  %s1 = inlined_call_operand.vmem [shape: f32[1,128], index: 1, kind: input, shape index: {}]
  %s2 = inlined_call_operand.vmem [shape: f32[1,128], index: 2, kind: input, shape index: {}]
  %s3 = inlined_call_operand.vmem [shape: bf16[4,16,128], index: 3, kind: output, shape index: {}]
  %s4 = sld [smem:[#allocation0]]
  $region45: #{unet_generator_forward.26} parent=0
    _
  %s6 = ssub.s32 1, %s4
  %s7 = scalar_select 0, %s6, %s4
  loop: start=0, step=1, limit=6
  $region2: #{unet_generator_forward.26} parent=0 // loop_pre_header
    _
  $region3: #{unet_generator_forward.26} parent=0 // loop_header
    %s9 = sphi 0, %s13
    %p10 = scmp.ge.s32.totalorder %s9, 6
    %s16 = sphi 0, %s28
    %s17 = sphi 0, %s24
    %s18 = sphi 0, %s16
    %s19 = sphi 0, %s17
    %s20 = sphi 0, %s18
    %s21 = sphi 0, %s19
    %s33 = sphi 0, %s35
    %s36 = sphi 0, %s33
    %s37 = sphi 0, %s36
    %s53 = sphi 0, %s37
    %s57 = sphi 0, %s57
    %s59 = sphi 0, %s57
    %s60 = sphi 0, %s59
    %s74 = sphi 0, %s60
    %s78 = sphi 0, %s78
    %s80 = sphi 0, %s78
    %s81 = sphi 0, %s80
    %s95 = sphi 0, %s81
    %s103 = sphi 0, %s105
    %s106 = sphi 0, %s103
    %s107 = sphi 0, %s106
    %s123 = sphi 0, %s107
  $region4: #{unet_generator_forward.26} parent=0 // loop_header_branch
    %12 = sbr.rel (%p10) target = $region8
  $region5: #{unet_generator_forward.26} parent=0 // loop_body
    %s14 = ssub.s32 %s9, 1
    %s15 = ssub.s32 %s9, 2
    %s22 = sadd.s32 1, %s17
    %p23 = scmp.ge.s32.totalorder %s22, 1
    %s24 = scalar_select %p23, 0, %s22
    %s25 = sadd.s32 1, %s16
    %s26 = scalar_select %p23, %s25, %s16
    %p27 = scmp.ge.s32.totalorder %s26, 4
    %s28 = scalar_select %p27, 0, %s26
    %s29 = ssub.s32 %s16, %s28
    %s30 = ssub.s32 %s17, %s24
    %s31 = sor.u32 %s29, %s30
    %p32 = scmp.eq.s32.totalorder %s31, 0
    %s34 = sadd.s32 %s33, 1
    %s35 = scalar_select %p32, %s33, %s34
    %p38 = pneg %p32
    %p39 = scmp.eq.s32.totalorder %s9, 3
    %p40 = por %p38, %p39
    %p41 = scmp.ne.s32.totalorder %s33, %s36
    %p42 = scmp.eq.s32.totalorder %s9, 0
    %p43 = por %p41, %p42
    %p44 = scmp.ne.s32.totalorder %s33, %s36
    %p45 = scmp.eq.s32.totalorder %s14, 3
    %p46 = por %p44, %p45
    %p47 = scmp.ne.s32.totalorder %s36, %s37
    %p48 = scmp.eq.s32.totalorder %s14, 0
    %p49 = por %p47, %p48
    %p50 = scmp.ne.s32.totalorder %s36, %s37
    %p51 = scmp.eq.s32.totalorder %s15, 3
    %p52 = por %p50, %p51
    %p54 = scmp.ne.s32.totalorder %s37, %s53
    %p55 = scmp.eq.s32.totalorder %s15, 0
    %p56 = por %p54, %p55
    %s58 = sadd.s32 %s57, 1
    %p61 = scmp.eq.s32.totalorder %s9, 3
    %p62 = scmp.ne.s32.totalorder %s57, %s59
    %p63 = scmp.eq.s32.totalorder %s9, 0
    %p64 = por %p62, %p63
    %p65 = scmp.ne.s32.totalorder %s57, %s59
    %p66 = scmp.eq.s32.totalorder %s14, 3
    %p67 = por %p65, %p66
    %p68 = scmp.ne.s32.totalorder %s59, %s60
    %p69 = scmp.eq.s32.totalorder %s14, 0
    %p70 = por %p68, %p69
    %p71 = scmp.ne.s32.totalorder %s59, %s60
    %p72 = scmp.eq.s32.totalorder %s15, 3
    %p73 = por %p71, %p72
    %p75 = scmp.ne.s32.totalorder %s60, %s74
    %p76 = scmp.eq.s32.totalorder %s15, 0
    %p77 = por %p75, %p76
    %s79 = sadd.s32 %s78, 1
    %p82 = scmp.eq.s32.totalorder %s9, 3
    %p83 = scmp.ne.s32.totalorder %s78, %s80
    %p84 = scmp.eq.s32.totalorder %s9, 0
    %p85 = por %p83, %p84
    %p86 = scmp.ne.s32.totalorder %s78, %s80
    %p87 = scmp.eq.s32.totalorder %s14, 3
    %p88 = por %p86, %p87
    %p89 = scmp.ne.s32.totalorder %s80, %s81
    %p90 = scmp.eq.s32.totalorder %s14, 0
    %p91 = por %p89, %p90
    %p92 = scmp.ne.s32.totalorder %s80, %s81
    %p93 = scmp.eq.s32.totalorder %s15, 3
    %p94 = por %p92, %p93
    %p96 = scmp.ne.s32.totalorder %s81, %s95
    %p97 = scmp.eq.s32.totalorder %s15, 0
    %p98 = por %p96, %p97
    %s99 = ssub.s32 %s16, %s28
    %s100 = ssub.s32 %s17, %s24
    %s101 = sor.u32 %s99, %s100
    %p102 = scmp.eq.s32.totalorder %s101, 0
    %s104 = sadd.s32 %s103, 1
    %s105 = scalar_select %p102, %s103, %s104
    %p108 = pneg %p102
    %p109 = scmp.eq.s32.totalorder %s9, 3
    %p110 = por %p108, %p109
    %p111 = scmp.ne.s32.totalorder %s103, %s106
    %p112 = scmp.eq.s32.totalorder %s9, 0
    %p113 = por %p111, %p112
    %p114 = scmp.ne.s32.totalorder %s103, %s106
    %p115 = scmp.eq.s32.totalorder %s14, 3
    %p116 = por %p114, %p115
    %p117 = scmp.ne.s32.totalorder %s106, %s107
    %p118 = scmp.eq.s32.totalorder %s14, 0
    %p119 = por %p117, %p118
    %p120 = scmp.ne.s32.totalorder %s106, %s107
    %p121 = scmp.eq.s32.totalorder %s15, 3
    %p122 = por %p120, %p121
    %p124 = scmp.ne.s32.totalorder %s107, %s123
    %p125 = scmp.eq.s32.totalorder %s15, 0
    %p126 = por %p124, %p125
    %p127 = scmp.le.s32.totalorder 1, %s9
    %p128 = scmp.lt.s32.totalorder %s9, 5
    %p129 = pnand %p127, %p128
    %p130 = pneg %p129
    // Predicated region
    $region9: #{unet_generator_forward.26} parent=5 // pred_check
      _
    $region10: #{unet_generator_forward.26} parent=5 // pred_check_branch
      %132 = sbr.rel (%p129) target = $region12
    $region11: #{unet_generator_forward.26} parent=5 // pred_region
      %s133 = ssub.s32 %s9, 1
      // Predicated region
      $region13: #{unet_generator_forward.26} parent=11 // pred_check
        %p134 = pneg %p70
      $region14: #{unet_generator_forward.26} parent=11 // pred_check_branch
        %136 = sbr.rel (%p134) target = $region16
      $region15: #{unet_generator_forward.26} parent=11 // pred_region
        _
      $region16: #{unet_generator_forward.26} parent=11 // pred_fallthru
        _
      // Predicated region
      $region17: #{unet_generator_forward.26} parent=11 // pred_check
        %p137 = pneg %p91
      $region18: #{unet_generator_forward.26} parent=11 // pred_check_branch
        %139 = sbr.rel (%p137) target = $region20
      $region19: #{unet_generator_forward.26} parent=11 // pred_region
        _
      $region20: #{unet_generator_forward.26} parent=11 // pred_fallthru
        _
    $region12: #{unet_generator_forward.26} parent=5 // pred_fallthru
      _
    %p140 = scmp.lt.s32.totalorder %s9, 4
    // Predicated region
    $region21: #{unet_generator_forward.26} parent=5 // pred_check
      %p141 = pneg %p140
    $region22: #{unet_generator_forward.26} parent=5 // pred_check_branch
      %143 = sbr.rel (%p141) target = $region24
    $region23: #{unet_generator_forward.26} parent=5 // pred_region
      // Predicated region
      $region25: #{unet_generator_forward.26} parent=23 // pred_check
        %p144 = pneg %p43
      $region26: #{unet_generator_forward.26} parent=23 // pred_check_branch
        %146 = sbr.rel (%p144) target = $region28
      $region27: #{unet_generator_forward.26} parent=23 // pred_region
        %s147 = smul.u32 2, %s17
        %p148 = scmp.lt.s32.totalorder %s16, 3
        %s149 = scalar_select %p148, %s16, 3
        %p150 = scmp.lt.s32.totalorder %s147, 1
        %s151 = scalar_select %p150, %s147, 1
        %s152 = smul.addr %s149, 2
        %s153 = sadd.s32 %s151, %s152
        %s154 = smul.addr %s153, 4
        %s155 = scalar_lea.vmem %s0, %s154
        %s156 = smul.u32 2, %s17
      $region28: #{unet_generator_forward.26} parent=23 // pred_fallthru
        _
    $region24: #{unet_generator_forward.26} parent=5 // pred_fallthru
      _
    %p157 = scmp.le.s32.totalorder 1, %s9
    %p158 = scmp.lt.s32.totalorder %s9, 5
    %p159 = pnand %p157, %p158
    %p160 = pneg %p159
    // Predicated region
    $region29: #{unet_generator_forward.26} parent=5 // pred_check
      _
    $region30: #{unet_generator_forward.26} parent=5 // pred_check_branch
      %162 = sbr.rel (%p159) target = $region32
    $region31: #{unet_generator_forward.26} parent=5 // pred_region
      %s163 = ssub.s32 %s9, 1
      %s164 = smul.u32 2, %s19
      %p165 = scmp.lt.s32.totalorder %s18, 3
      %s166 = scalar_select %p165, %s18, 3
      %p167 = scmp.lt.s32.totalorder %s164, 1
      %s168 = scalar_select %p167, %s164, 1
      %s169 = smul.addr %s166, 2
      %s170 = sadd.s32 %s168, %s169
      %s171 = smul.addr %s170, 4
      %s172 = scalar_lea.vmem %s0, %s171
      %p173 = pneg %p49
      %p174 = pneg %p46
      %p175 = pneg %p70
      %p176 = pneg %p67
      %p177 = pneg %p91
      %p178 = pneg %p88
      %p179 = pneg %p119
      %p180 = pneg %p116
      %s181 = smul.u32 2, %s19
      %p182 = scmp.lt.s32.totalorder %s18, 3
      %s183 = scalar_select %p182, %s18, 3
      %p184 = scmp.lt.s32.totalorder %s181, 1
      %s185 = scalar_select %p184, %s181, 1
      %s186 = smul.addr %s183, 2
      %s187 = sadd.s32 %s185, %s186
      %s188 = smul.addr %s187, 4
      %s189 = scalar_lea.vmem %s3, %s188
      %s190 = smul.u32 2, %s19
      %p191 = scmp.lt.s32.totalorder %s18, 3
      %s192 = scalar_select %p191, %s18, 3
      %p193 = scmp.lt.s32.totalorder %s190, 1
      %s194 = scalar_select %p193, %s190, 1
      %s195 = smul.addr %s192, 2
      %s196 = sadd.s32 %s194, %s195
      %s197 = smul.addr %s196, 4
      %s198 = scalar_lea.vmem %s0, %s197
      %s199 = smul.u32 2, %s19
      %s200 = smul.u32 2, %s19
      %p201 = scmp.lt.s32.totalorder %s18, 3
      %s202 = scalar_select %p201, %s18, 3
      %p203 = scmp.lt.s32.totalorder %s200, 1
      %s204 = scalar_select %p203, %s200, 1
      %s205 = smul.addr %s202, 2
      %s206 = sadd.s32 %s204, %s205
      %s207 = smul.addr %s206, 4
      %s208 = scalar_lea.vmem %s3, %s207
      %s209 = smul.u32 2, %s19
      %v210 = vld [vmem:[%s198] sm:$0xf]
      %v211 = vld [vmem:[%s198 + $0x4] sm:$0xf]
      %v212 = vunpack.c.l.bf16 %v210
      %v213 = vunpack.c.l.bf16 %v211
      %v214 = vld [vmem:[%s1] sm:$0x1]
      %v216 = vperm.slane %v214, 0
      %v218 = vmul.f32 %v212, %v216
      %v219 = vmul.f32 %v213, %v216
      %v220 = vld [vmem:[%s2] sm:$0x1]
      %v222 = vperm.slane %v220, 0
      %v224 = vadd.f32 %v218, %v222
      %v225 = vadd.f32 %v219, %v222
      %v226 = vmax.f32 %v224, 0.0
      %v227 = vmax.f32 %v225, 0.0
      %v228 = vpack.c.bf16 %v226, %v226
      %v229 = vpack.c.bf16 %v227, %v227
      %230 = vst [vmem:[%s208] sm:$0xf] %v228
      %231 = vst [vmem:[%s208 + $0x4] sm:$0xf] %v229
      %s232 = smul.u32 2, %s19
      %p233 = scmp.lt.s32.totalorder %s18, 3
      %s234 = scalar_select %p233, %s18, 3
      %p235 = scmp.lt.s32.totalorder %s232, 1
      %s236 = scalar_select %p235, %s232, 1
      %s237 = smul.addr %s234, 2
      %s238 = sadd.s32 %s236, %s237
      %s239 = smul.addr %s238, 4
      %s240 = scalar_lea.vmem %s3, %s239
      // Predicated region
      $region33: #{unet_generator_forward.26} parent=31 // pred_check
        %p241 = pneg %p116
      $region34: #{unet_generator_forward.26} parent=31 // pred_check_branch
        %243 = sbr.rel (%p241) target = $region36
      $region35: #{unet_generator_forward.26} parent=31 // pred_region
        %s244 = smul.u32 2, %s19
      $region36: #{unet_generator_forward.26} parent=31 // pred_fallthru
        _
    $region32: #{unet_generator_forward.26} parent=5 // pred_fallthru
      _
    %p245 = scmp.le.s32.totalorder 2, %s9
    // Predicated region
    $region37: #{unet_generator_forward.26} parent=5 // pred_check
      %p246 = pneg %p245
    $region38: #{unet_generator_forward.26} parent=5 // pred_check_branch
      %248 = sbr.rel (%p246) target = $region40
    $region39: #{unet_generator_forward.26} parent=5 // pred_region
      %s249 = ssub.s32 %s9, 2
      // Predicated region
      $region41: #{unet_generator_forward.26} parent=39 // pred_check
        %p250 = pneg %p122
      $region42: #{unet_generator_forward.26} parent=39 // pred_check_branch
        %252 = sbr.rel (%p250) target = $region44
      $region43: #{unet_generator_forward.26} parent=39 // pred_region
        %s253 = smul.u32 2, %s21
        %p254 = scmp.lt.s32.totalorder %s20, 3
        %s255 = scalar_select %p254, %s20, 3
        %p256 = scmp.lt.s32.totalorder %s253, 1
        %s257 = scalar_select %p256, %s253, 1
        %s258 = smul.addr %s255, 2
        %s259 = sadd.s32 %s257, %s258
        %s260 = smul.addr %s259, 4
        %s261 = scalar_lea.vmem %s3, %s260
      $region44: #{unet_generator_forward.26} parent=39 // pred_fallthru
        _
    $region40: #{unet_generator_forward.26} parent=5 // pred_fallthru
      _
  $region6: #{unet_generator_forward.26} parent=0 // loop_footer
    %s13 = sadd.s32 1, %s9
  $region7: #{unet_generator_forward.26} parent=0 // loop_footer_branch
    %8 = sbr.rel target = $region3
  $region8: #{unet_generator_forward.26} parent=0 // loop_exit
    _

// kernel: unet_generator_forward.27
$region0: #{unet_generator_forward.27}
  #allocation0 [shape = 'u32[]', space=smem, size = 0x4, offset = 0x4, fixed_abs, tag = 'smem constant byte address 0x4 - core index']
  #allocation1 [shape = 'u32[72,128]{1,0:T(1,128)}', space=vmem, size = 0x9000, scoped, tag = 'internal scratch']
  %s0 = inlined_call_operand.vmem [shape: bf16[4,16,512], index: 0, kind: input, shape index: {}]
  %s1 = inlined_call_operand.vmem [shape: bf16[4,512,128], index: 1, kind: input, shape index: {}]
  %s2 = inlined_call_operand.vmem [shape: bf16[4,16,128], index: 2, kind: output, shape index: {0}]
  %s3 = inlined_call_operand.vmem [shape: f32[4,1,1,128], index: 3, kind: output, shape index: {1}]
  %s4 = inlined_call_operand.vmem [shape: f32[4,1,1,128], index: 4, kind: output, shape index: {2}]
  %5 = xla_tuple %s2, %s3, %s4
  %s6 = sld [smem:[#allocation0]]
  $region57: #{unet_generator_forward.27} parent=0
    _
  %s8 = ssub.s32 1, %s6
  %s9 = scalar_select 0, %s8, %s6
  loop: start=0, step=1, limit=6
  $region2: #{unet_generator_forward.27} parent=0 // loop_pre_header
    _
  $region3: #{unet_generator_forward.27} parent=0 // loop_header
    %s11 = sphi 0, %s15
    %p12 = scmp.ge.s32.totalorder %s11, 6
    %s18 = sphi 0, %s30
    %s19 = sphi 0, %s26
    %s20 = sphi 0, %s18
    %s21 = sphi 0, %s19
    %s22 = sphi 0, %s20
    %s23 = sphi 0, %s21
    %s35 = sphi 0, %s37
    %s38 = sphi 0, %s35
    %s39 = sphi 0, %s38
    %s55 = sphi 0, %s39
    %s61 = sphi 0, %s63
    %s64 = sphi 0, %s61
    %s65 = sphi 0, %s64
    %s81 = sphi 0, %s65
    %s89 = sphi 0, %s91
    %s92 = sphi 0, %s89
    %s93 = sphi 0, %s92
    %s109 = sphi 0, %s93
    %s117 = sphi 0, %s119
    %s120 = sphi 0, %s117
    %s121 = sphi 0, %s120
    %s137 = sphi 0, %s121
    %s145 = sphi 0, %s147
    %s148 = sphi 0, %s145
    %s149 = sphi 0, %s148
    %s165 = sphi 0, %s149
  $region4: #{unet_generator_forward.27} parent=0 // loop_header_branch
    %14 = sbr.rel (%p12) target = $region8
  $region5: #{unet_generator_forward.27} parent=0 // loop_body
    %s16 = ssub.s32 %s11, 1
    %s17 = ssub.s32 %s11, 2
    %s24 = sadd.s32 1, %s19
    %p25 = scmp.ge.s32.totalorder %s24, 1
    %s26 = scalar_select %p25, 0, %s24
    %s27 = sadd.s32 1, %s18
    %s28 = scalar_select %p25, %s27, %s18
    %p29 = scmp.ge.s32.totalorder %s28, 4
    %s30 = scalar_select %p29, 0, %s28
    %s31 = ssub.s32 %s18, %s30
    %s32 = ssub.s32 %s19, %s26
    %s33 = sor.u32 %s31, %s32
    %p34 = scmp.eq.s32.totalorder %s33, 0
    %s36 = sadd.s32 %s35, 1
    %s37 = scalar_select %p34, %s35, %s36
    %p40 = pneg %p34
    %p41 = scmp.eq.s32.totalorder %s11, 3
    %p42 = por %p40, %p41
    %p43 = scmp.ne.s32.totalorder %s35, %s38
    %p44 = scmp.eq.s32.totalorder %s11, 0
    %p45 = por %p43, %p44
    %p46 = scmp.ne.s32.totalorder %s35, %s38
    %p47 = scmp.eq.s32.totalorder %s16, 3
    %p48 = por %p46, %p47
    %p49 = scmp.ne.s32.totalorder %s38, %s39
    %p50 = scmp.eq.s32.totalorder %s16, 0
    %p51 = por %p49, %p50
    %p52 = scmp.ne.s32.totalorder %s38, %s39
    %p53 = scmp.eq.s32.totalorder %s17, 3
    %p54 = por %p52, %p53
    %p56 = scmp.ne.s32.totalorder %s39, %s55
    %p57 = scmp.eq.s32.totalorder %s17, 0
    %p58 = por %p56, %p57
    %s59 = ssub.s32 %s18, %s30
    %p60 = scmp.eq.s32.totalorder %s59, 0
    %s62 = sadd.s32 %s61, 1
    %s63 = scalar_select %p60, %s61, %s62
    %p66 = pneg %p60
    %p67 = scmp.eq.s32.totalorder %s11, 3
    %p68 = por %p66, %p67
    %p69 = scmp.ne.s32.totalorder %s61, %s64
    %p70 = scmp.eq.s32.totalorder %s11, 0
    %p71 = por %p69, %p70
    %p72 = scmp.ne.s32.totalorder %s61, %s64
    %p73 = scmp.eq.s32.totalorder %s16, 3
    %p74 = por %p72, %p73
    %p75 = scmp.ne.s32.totalorder %s64, %s65
    %p76 = scmp.eq.s32.totalorder %s16, 0
    %p77 = por %p75, %p76
    %p78 = scmp.ne.s32.totalorder %s64, %s65
    %p79 = scmp.eq.s32.totalorder %s17, 3
    %p80 = por %p78, %p79
    %p82 = scmp.ne.s32.totalorder %s65, %s81
    %p83 = scmp.eq.s32.totalorder %s17, 0
    %p84 = por %p82, %p83
    %s85 = ssub.s32 %s18, %s30
    %s86 = ssub.s32 %s19, %s26
    %s87 = sor.u32 %s85, %s86
    %p88 = scmp.eq.s32.totalorder %s87, 0
    %s90 = sadd.s32 %s89, 1
    %s91 = scalar_select %p88, %s89, %s90
    %p94 = pneg %p88
    %p95 = scmp.eq.s32.totalorder %s11, 3
    %p96 = por %p94, %p95
    %p97 = scmp.ne.s32.totalorder %s89, %s92
    %p98 = scmp.eq.s32.totalorder %s11, 0
    %p99 = por %p97, %p98
    %p100 = scmp.ne.s32.totalorder %s89, %s92
    %p101 = scmp.eq.s32.totalorder %s16, 3
    %p102 = por %p100, %p101
    %p103 = scmp.ne.s32.totalorder %s92, %s93
    %p104 = scmp.eq.s32.totalorder %s16, 0
    %p105 = por %p103, %p104
    %p106 = scmp.ne.s32.totalorder %s92, %s93
    %p107 = scmp.eq.s32.totalorder %s17, 3
    %p108 = por %p106, %p107
    %p110 = scmp.ne.s32.totalorder %s93, %s109
    %p111 = scmp.eq.s32.totalorder %s17, 0
    %p112 = por %p110, %p111
    %s113 = ssub.s32 %s18, %s30
    %s114 = ssub.s32 %s19, %s26
    %s115 = sor.u32 %s113, %s114
    %p116 = scmp.eq.s32.totalorder %s115, 0
    %s118 = sadd.s32 %s117, 1
    %s119 = scalar_select %p116, %s117, %s118
    %p122 = pneg %p116
    %p123 = scmp.eq.s32.totalorder %s11, 3
    %p124 = por %p122, %p123
    %p125 = scmp.ne.s32.totalorder %s117, %s120
    %p126 = scmp.eq.s32.totalorder %s11, 0
    %p127 = por %p125, %p126
    %p128 = scmp.ne.s32.totalorder %s117, %s120
    %p129 = scmp.eq.s32.totalorder %s16, 3
    %p130 = por %p128, %p129
    %p131 = scmp.ne.s32.totalorder %s120, %s121
    %p132 = scmp.eq.s32.totalorder %s16, 0
    %p133 = por %p131, %p132
    %p134 = scmp.ne.s32.totalorder %s120, %s121
    %p135 = scmp.eq.s32.totalorder %s17, 3
    %p136 = por %p134, %p135
    %p138 = scmp.ne.s32.totalorder %s121, %s137
    %p139 = scmp.eq.s32.totalorder %s17, 0
    %p140 = por %p138, %p139
    %s141 = ssub.s32 %s18, %s30
    %s142 = ssub.s32 %s19, %s26
    %s143 = sor.u32 %s141, %s142
    %p144 = scmp.eq.s32.totalorder %s143, 0
    %s146 = sadd.s32 %s145, 1
    %s147 = scalar_select %p144, %s145, %s146
    %p150 = pneg %p144
    %p151 = scmp.eq.s32.totalorder %s11, 3
    %p152 = por %p150, %p151
    %p153 = scmp.ne.s32.totalorder %s145, %s148
    %p154 = scmp.eq.s32.totalorder %s11, 0
    %p155 = por %p153, %p154
    %p156 = scmp.ne.s32.totalorder %s145, %s148
    %p157 = scmp.eq.s32.totalorder %s16, 3
    %p158 = por %p156, %p157
    %p159 = scmp.ne.s32.totalorder %s148, %s149
    %p160 = scmp.eq.s32.totalorder %s16, 0
    %p161 = por %p159, %p160
    %p162 = scmp.ne.s32.totalorder %s148, %s149
    %p163 = scmp.eq.s32.totalorder %s17, 3
    %p164 = por %p162, %p163
    %p166 = scmp.ne.s32.totalorder %s149, %s165
    %p167 = scmp.eq.s32.totalorder %s17, 0
    %p168 = por %p166, %p167
    %p169 = scmp.le.s32.totalorder 1, %s11
    %p170 = scmp.lt.s32.totalorder %s11, 5
    %p171 = pnand %p169, %p170
    %p172 = pneg %p171
    // Predicated region
    $region9: #{unet_generator_forward.27} parent=5 // pred_check
      _
    $region10: #{unet_generator_forward.27} parent=5 // pred_check_branch
      %174 = sbr.rel (%p171) target = $region12
    $region11: #{unet_generator_forward.27} parent=5 // pred_region
      %s175 = ssub.s32 %s11, 1
    $region12: #{unet_generator_forward.27} parent=5 // pred_fallthru
      _
    %p176 = scmp.lt.s32.totalorder %s11, 4
    // Predicated region
    $region13: #{unet_generator_forward.27} parent=5 // pred_check
      %p177 = pneg %p176
    $region14: #{unet_generator_forward.27} parent=5 // pred_check_branch
      %179 = sbr.rel (%p177) target = $region16
    $region15: #{unet_generator_forward.27} parent=5 // pred_region
      // Predicated region
      $region17: #{unet_generator_forward.27} parent=15 // pred_check
        %p180 = pneg %p45
      $region18: #{unet_generator_forward.27} parent=15 // pred_check_branch
        %182 = sbr.rel (%p180) target = $region20
      $region19: #{unet_generator_forward.27} parent=15 // pred_region
        %s183 = smul.u32 2, %s19
        %p184 = scmp.lt.s32.totalorder %s18, 3
        %s185 = scalar_select %p184, %s18, 3
        %p186 = scmp.lt.s32.totalorder %s183, 1
        %s187 = scalar_select %p186, %s183, 1
        %s188 = smul.addr %s187, 4
        %s189 = smul.addr %s185, 8
        %s190 = sadd.s32 %s188, %s189
        %s191 = smul.addr %s190, 4
        %s192 = scalar_lea.vmem %s0, %s191
        %s193 = smul.u32 2, %s19
      $region20: #{unet_generator_forward.27} parent=15 // pred_fallthru
        _
      // Predicated region
      $region21: #{unet_generator_forward.27} parent=15 // pred_check
        %p194 = pneg %p71
      $region22: #{unet_generator_forward.27} parent=15 // pred_check_branch
        %196 = sbr.rel (%p194) target = $region24
      $region23: #{unet_generator_forward.27} parent=15 // pred_region
        %p197 = scmp.lt.s32.totalorder %s18, 3
        %s198 = scalar_select %p197, %s18, 3
        %s199 = smul.addr %s198, 64
        %s200 = smul.addr %s199, 4
        %s201 = scalar_lea.vmem %s1, %s200
      $region24: #{unet_generator_forward.27} parent=15 // pred_fallthru
        _
    $region16: #{unet_generator_forward.27} parent=5 // pred_fallthru
      _
    %p202 = scmp.le.s32.totalorder 1, %s11
    %p203 = scmp.lt.s32.totalorder %s11, 5
    %p204 = pnand %p202, %p203
    %p205 = pneg %p204
    // Predicated region
    $region25: #{unet_generator_forward.27} parent=5 // pred_check
      _
    $region26: #{unet_generator_forward.27} parent=5 // pred_check_branch
      %207 = sbr.rel (%p204) target = $region28
    $region27: #{unet_generator_forward.27} parent=5 // pred_region
      %s208 = ssub.s32 %s11, 1
      %s209 = smul.u32 2, %s21
      %p210 = scmp.lt.s32.totalorder %s20, 3
      %s211 = scalar_select %p210, %s20, 3
      %p212 = scmp.lt.s32.totalorder %s209, 1
      %s213 = scalar_select %p212, %s209, 1
      %s214 = smul.addr %s213, 4
      %s215 = smul.addr %s211, 8
      %s216 = sadd.s32 %s214, %s215
      %s217 = smul.addr %s216, 4
      %s218 = scalar_lea.vmem %s0, %s217
      %p219 = pneg %p51
      %p220 = pneg %p48
      %p221 = scmp.lt.s32.totalorder %s20, 3
      %s222 = scalar_select %p221, %s20, 3
      %s223 = smul.addr %s222, 64
      %s224 = smul.addr %s223, 4
      %s225 = scalar_lea.vmem %s1, %s224
      %p226 = pneg %p77
      %p227 = pneg %p74
      %p228 = pneg %p105
      %p229 = pneg %p102
      %s230 = smul.u32 2, %s21
      %p231 = scmp.lt.s32.totalorder %s20, 3
      %s232 = scalar_select %p231, %s20, 3
      %p233 = scmp.lt.s32.totalorder %s230, 1
      %s234 = scalar_select %p233, %s230, 1
      %s235 = smul.addr %s232, 2
      %s236 = sadd.s32 %s234, %s235
      %s237 = smul.addr %s236, 4
      %s238 = scalar_lea.vmem %s2, %s237
      %p239 = pneg %p133
      %p240 = pneg %p130
      %p241 = scmp.lt.s32.totalorder %s20, 3
      %s242 = scalar_select %p241, %s20, 3
      %p243 = scmp.lt.s32.totalorder %s21, 0
      %s244 = scalar_select %p243, %s21, 0
      %s245 = sadd.s32 %s244, %s242
      %s246 = scalar_lea.vmem %s3, %s245
      %p247 = pneg %p161
      %p248 = pneg %p158
      %p249 = scmp.lt.s32.totalorder %s20, 3
      %s250 = scalar_select %p249, %s20, 3
      %p251 = scmp.lt.s32.totalorder %s21, 0
      %s252 = scalar_select %p251, %s21, 0
      %s253 = sadd.s32 %s252, %s250
      %s254 = scalar_lea.vmem %s4, %s253
      %s255 = smul.u32 2, %s21
      %p256 = scmp.lt.s32.totalorder %s20, 3
      %s257 = scalar_select %p256, %s20, 3
      %p258 = scmp.lt.s32.totalorder %s255, 1
      %s259 = scalar_select %p258, %s255, 1
      %s260 = smul.addr %s259, 4
      %s261 = smul.addr %s257, 8
      %s262 = sadd.s32 %s260, %s261
      %s263 = smul.addr %s262, 4
      %s264 = scalar_lea.vmem %s0, %s263
      %s265 = smul.u32 2, %s21
      %p266 = scmp.lt.s32.totalorder %s20, 3
      %s267 = scalar_select %p266, %s20, 3
      %s268 = smul.addr %s267, 64
      %s269 = smul.addr %s268, 4
      %s270 = scalar_lea.vmem %s1, %s269
      %s271 = smul.u32 2, %s21
      %p272 = scmp.lt.s32.totalorder %s20, 3
      %s273 = scalar_select %p272, %s20, 3
      %p274 = scmp.lt.s32.totalorder %s271, 1
      %s275 = scalar_select %p274, %s271, 1
      %s276 = smul.addr %s273, 2
      %s277 = sadd.s32 %s275, %s276
      %s278 = smul.addr %s277, 4
      %s279 = scalar_lea.vmem %s2, %s278
      %s280 = smul.u32 2, %s21
      %p281 = scmp.lt.s32.totalorder %s20, 3
      %s282 = scalar_select %p281, %s20, 3
      %p283 = scmp.lt.s32.totalorder %s21, 0
      %s284 = scalar_select %p283, %s21, 0
      %s285 = sadd.s32 %s284, %s282
      %s286 = scalar_lea.vmem %s3, %s285
      %p287 = scmp.lt.s32.totalorder %s20, 3
      %s288 = scalar_select %p287, %s20, 3
      %p289 = scmp.lt.s32.totalorder %s21, 0
      %s290 = scalar_select %p289, %s21, 0
      %s291 = sadd.s32 %s290, %s288
      %s292 = scalar_lea.vmem %s4, %s291
      %v293 = vld [vmem:[%s264] sm:$0xff]
      %v294 = vld [vmem:[%s264 + $0x8] sm:$0xff]
      %v295 = vld [vmem:[%s264 + $0x10] sm:$0xff]
      %v296 = vld [vmem:[%s264 + $0x18] sm:$0xff]
      %v297 = vld [vmem:[%s270] sm:$0xf]
      %v298 = vld [vmem:[%s270 + $0x4] sm:$0xf]
      %v299 = vld [vmem:[%s270 + $0x8] sm:$0xf]
      %v300 = vld [vmem:[%s270 + $0xc] sm:$0xf]
      %v301 = vld [vmem:[%s270 + $0x10] sm:$0xf]
      %v302 = vld [vmem:[%s270 + $0x14] sm:$0xf]
      %v303 = vld [vmem:[%s270 + $0x18] sm:$0xf]
      %v304 = vld [vmem:[%s270 + $0x1c] sm:$0xf]
      %v305 = vld [vmem:[%s270 + $0x20] sm:$0xf]
      %v306 = vld [vmem:[%s270 + $0x24] sm:$0xf]
      %v307 = vld [vmem:[%s270 + $0x28] sm:$0xf]
      %v308 = vld [vmem:[%s270 + $0x2c] sm:$0xf]
      %v309 = vld [vmem:[%s270 + $0x30] sm:$0xf]
      %v310 = vld [vmem:[%s270 + $0x34] sm:$0xf]
      %v311 = vld [vmem:[%s270 + $0x38] sm:$0xf]
      %v312 = vld [vmem:[%s270 + $0x3c] sm:$0xf]
      %v313 = vld [vmem:[%s270 + $0x40] sm:$0xf]
      %v314 = vld [vmem:[%s270 + $0x44] sm:$0xf]
      %v315 = vld [vmem:[%s270 + $0x48] sm:$0xf]
      %v316 = vld [vmem:[%s270 + $0x4c] sm:$0xf]
      %v317 = vld [vmem:[%s270 + $0x50] sm:$0xf]
      %v318 = vld [vmem:[%s270 + $0x54] sm:$0xf]
      %v319 = vld [vmem:[%s270 + $0x58] sm:$0xf]
      %v320 = vld [vmem:[%s270 + $0x5c] sm:$0xf]
      %v321 = vld [vmem:[%s270 + $0x60] sm:$0xf]
      %v322 = vld [vmem:[%s270 + $0x64] sm:$0xf]
      %v323 = vld [vmem:[%s270 + $0x68] sm:$0xf]
      %v324 = vld [vmem:[%s270 + $0x6c] sm:$0xf]
      %v325 = vld [vmem:[%s270 + $0x70] sm:$0xf]
      %v326 = vld [vmem:[%s270 + $0x74] sm:$0xf]
      %v327 = vld [vmem:[%s270 + $0x78] sm:$0xf]
      %v328 = vld [vmem:[%s270 + $0x7c] sm:$0xf]
      %v329 = vld [vmem:[%s270 + $0x80] sm:$0xf]
      %v330 = vld [vmem:[%s270 + $0x84] sm:$0xf]
      %v331 = vld [vmem:[%s270 + $0x88] sm:$0xf]
      %v332 = vld [vmem:[%s270 + $0x8c] sm:$0xf]
      %v333 = vld [vmem:[%s270 + $0x90] sm:$0xf]
      %v334 = vld [vmem:[%s270 + $0x94] sm:$0xf]
      %v335 = vld [vmem:[%s270 + $0x98] sm:$0xf]
      %v336 = vld [vmem:[%s270 + $0x9c] sm:$0xf]
      %v337 = vld [vmem:[%s270 + $0xa0] sm:$0xf]
      %v338 = vld [vmem:[%s270 + $0xa4] sm:$0xf]
      %v339 = vld [vmem:[%s270 + $0xa8] sm:$0xf]
      %v340 = vld [vmem:[%s270 + $0xac] sm:$0xf]
      %v341 = vld [vmem:[%s270 + $0xb0] sm:$0xf]
      %v342 = vld [vmem:[%s270 + $0xb4] sm:$0xf]
      %v343 = vld [vmem:[%s270 + $0xb8] sm:$0xf]
      %v344 = vld [vmem:[%s270 + $0xbc] sm:$0xf]
      %v345 = vld [vmem:[%s270 + $0xc0] sm:$0xf]
      %v346 = vld [vmem:[%s270 + $0xc4] sm:$0xf]
      %v347 = vld [vmem:[%s270 + $0xc8] sm:$0xf]
      %v348 = vld [vmem:[%s270 + $0xcc] sm:$0xf]
      %v349 = vld [vmem:[%s270 + $0xd0] sm:$0xf]
      %v350 = vld [vmem:[%s270 + $0xd4] sm:$0xf]
      %v351 = vld [vmem:[%s270 + $0xd8] sm:$0xf]
      %v352 = vld [vmem:[%s270 + $0xdc] sm:$0xf]
      %v353 = vld [vmem:[%s270 + $0xe0] sm:$0xf]
      %v354 = vld [vmem:[%s270 + $0xe4] sm:$0xf]
      %v355 = vld [vmem:[%s270 + $0xe8] sm:$0xf]
      %v356 = vld [vmem:[%s270 + $0xec] sm:$0xf]
      %v357 = vld [vmem:[%s270 + $0xf0] sm:$0xf]
      %v358 = vld [vmem:[%s270 + $0xf4] sm:$0xf]
      %v359 = vld [vmem:[%s270 + $0xf8] sm:$0xf]
      %v360 = vld [vmem:[%s270 + $0xfc] sm:$0xf]
      %v365 = vunpack.c.l.b16 %v293
      %v366 = vunpack.c.h.b16 %v293
      %v367 = vunpack.c.l.b16 %v294
      %v368 = vunpack.c.h.b16 %v294
      %v369 = vunpack.c.l.b16 %v295
      %v370 = vunpack.c.h.b16 %v295
      %v371 = vunpack.c.l.b16 %v296
      %v372 = vunpack.c.h.b16 %v296
      %v373 = vpack.c.b16 %v369, %v365
      %v374 = vpack.c.b16 %v370, %v366
      %v375 = vpack.c.b16 %v371, %v367
      %v376 = vpack.c.b16 %v372, %v368
      %v445 = vunpack.c.l.b16 %v297
      %v446 = vunpack.c.l.b16 %v298
      %v447 = vunpack.c.l.b16 %v299
      %v448 = vunpack.c.l.b16 %v300
      %v449 = vunpack.c.l.b16 %v301
      %v450 = vunpack.c.l.b16 %v302
      %v451 = vunpack.c.l.b16 %v303
      %v452 = vunpack.c.l.b16 %v304
      %v453 = vunpack.c.l.b16 %v305
      %v454 = vunpack.c.l.b16 %v306
      %v455 = vunpack.c.l.b16 %v307
      %v456 = vunpack.c.l.b16 %v308
      %v457 = vunpack.c.l.b16 %v309
      %v458 = vunpack.c.l.b16 %v310
      %v459 = vunpack.c.l.b16 %v311
      %v460 = vunpack.c.l.b16 %v312
      %v461 = vunpack.c.l.b16 %v313
      %v462 = vunpack.c.l.b16 %v314
      %v463 = vunpack.c.l.b16 %v315
      %v464 = vunpack.c.l.b16 %v316
      %v465 = vunpack.c.l.b16 %v317
      %v466 = vunpack.c.l.b16 %v318
      %v467 = vunpack.c.l.b16 %v319
      %v468 = vunpack.c.l.b16 %v320
      %v469 = vunpack.c.l.b16 %v321
      %v470 = vunpack.c.l.b16 %v322
      %v471 = vunpack.c.l.b16 %v323
      %v472 = vunpack.c.l.b16 %v324
      %v473 = vunpack.c.l.b16 %v325
      %v474 = vunpack.c.l.b16 %v326
      %v475 = vunpack.c.l.b16 %v327
      %v476 = vunpack.c.l.b16 %v328
      %v477 = vunpack.c.l.b16 %v329
      %v478 = vunpack.c.l.b16 %v330
      %v479 = vunpack.c.l.b16 %v331
      %v480 = vunpack.c.l.b16 %v332
      %v481 = vunpack.c.l.b16 %v333
      %v482 = vunpack.c.l.b16 %v334
      %v483 = vunpack.c.l.b16 %v335
      %v484 = vunpack.c.l.b16 %v336
      %v485 = vunpack.c.l.b16 %v337
      %v486 = vunpack.c.l.b16 %v338
      %v487 = vunpack.c.l.b16 %v339
      %v488 = vunpack.c.l.b16 %v340
      %v489 = vunpack.c.l.b16 %v341
      %v490 = vunpack.c.l.b16 %v342
      %v491 = vunpack.c.l.b16 %v343
      %v492 = vunpack.c.l.b16 %v344
      %v493 = vunpack.c.l.b16 %v345
      %v494 = vunpack.c.l.b16 %v346
      %v495 = vunpack.c.l.b16 %v347
      %v496 = vunpack.c.l.b16 %v348
      %v497 = vunpack.c.l.b16 %v349
      %v498 = vunpack.c.l.b16 %v350
      %v499 = vunpack.c.l.b16 %v351
      %v500 = vunpack.c.l.b16 %v352
      %v501 = vunpack.c.l.b16 %v353
      %v502 = vunpack.c.l.b16 %v354
      %v503 = vunpack.c.l.b16 %v355
      %v504 = vunpack.c.l.b16 %v356
      %v505 = vunpack.c.l.b16 %v357
      %v506 = vunpack.c.l.b16 %v358
      %v507 = vunpack.c.l.b16 %v359
      %v508 = vunpack.c.l.b16 %v360
      %v509 = vpack.c.b16 %v446, %v445
      %v510 = vpack.c.b16 %v448, %v447
      %v511 = vpack.c.b16 %v450, %v449
      %v512 = vpack.c.b16 %v452, %v451
      %v513 = vpack.c.b16 %v454, %v453
      %v514 = vpack.c.b16 %v456, %v455
      %v515 = vpack.c.b16 %v458, %v457
      %v516 = vpack.c.b16 %v460, %v459
      %v517 = vpack.c.b16 %v462, %v461
      %v518 = vpack.c.b16 %v464, %v463
      %v519 = vpack.c.b16 %v466, %v465
      %v520 = vpack.c.b16 %v468, %v467
      %v521 = vpack.c.b16 %v470, %v469
      %v522 = vpack.c.b16 %v472, %v471
      %v523 = vpack.c.b16 %v474, %v473
      %v524 = vpack.c.b16 %v476, %v475
      %v525 = vpack.c.b16 %v478, %v477
      %v526 = vpack.c.b16 %v480, %v479
      %v527 = vpack.c.b16 %v482, %v481
      %v528 = vpack.c.b16 %v484, %v483
      %v529 = vpack.c.b16 %v486, %v485
      %v530 = vpack.c.b16 %v488, %v487
      %v531 = vpack.c.b16 %v490, %v489
      %v532 = vpack.c.b16 %v492, %v491
      %v533 = vpack.c.b16 %v494, %v493
      %v534 = vpack.c.b16 %v496, %v495
      %v535 = vpack.c.b16 %v498, %v497
      %v536 = vpack.c.b16 %v500, %v499
      %v537 = vpack.c.b16 %v502, %v501
      %v538 = vpack.c.b16 %v504, %v503
      %v539 = vpack.c.b16 %v506, %v505
      %v540 = vpack.c.b16 %v508, %v507
      %573 = vmatpush.bf16.msra.mxu0 %v516
      %574 = vmatpush.bf16.msra.mxu0 %v515
      %575 = vmatpush.bf16.msra.mxu0 %v514
      %576 = vmatpush.bf16.msra.mxu0 %v513
      %577 = vmatpush.bf16.msra.mxu0 %v512
      %578 = vmatpush.bf16.msra.mxu0 %v511
      %579 = vmatpush.bf16.msra.mxu0 %v510
      %580 = vmatpush.bf16.msra.mxu0 %v509
      %581 = vmatmul.bf16.gmra.mxu0 %v373
      %v582 = vpop.f32.mrf.mxu0
      %v583 = vadd.f32 0.0, %v582
      %v584 = vpop.f32.mrf.mxu0
      %v585 = vadd.f32 0.0, %v584
      %586 = vdwg.mxu0
      %587 = vmatpush.bf16.msra.mxu0 %v524
      %588 = vmatpush.bf16.msra.mxu0 %v523
      %589 = vmatpush.bf16.msra.mxu0 %v522
      %590 = vmatpush.bf16.msra.mxu0 %v521
      %591 = vmatpush.bf16.msra.mxu0 %v520
      %592 = vmatpush.bf16.msra.mxu0 %v519
      %593 = vmatpush.bf16.msra.mxu0 %v518
      %594 = vmatpush.bf16.msra.mxu0 %v517
      %595 = vmatmul.bf16.gmra.mxu0 %v374
      %v596 = vpop.f32.mrf.mxu0
      %v597 = vadd.f32 %v583, %v596
      %v598 = vpop.f32.mrf.mxu0
      %v599 = vadd.f32 %v585, %v598
      %600 = vdwg.mxu0
      %601 = vmatpush.bf16.msra.mxu0 %v532
      %602 = vmatpush.bf16.msra.mxu0 %v531
      %603 = vmatpush.bf16.msra.mxu0 %v530
      %604 = vmatpush.bf16.msra.mxu0 %v529
      %605 = vmatpush.bf16.msra.mxu0 %v528
      %606 = vmatpush.bf16.msra.mxu0 %v527
      %607 = vmatpush.bf16.msra.mxu0 %v526
      %608 = vmatpush.bf16.msra.mxu0 %v525
      %609 = vmatmul.bf16.gmra.mxu0 %v375
      %v610 = vpop.f32.mrf.mxu0
      %v611 = vadd.f32 %v597, %v610
      %v612 = vpop.f32.mrf.mxu0
      %v613 = vadd.f32 %v599, %v612
      %614 = vdwg.mxu0
      %615 = vmatpush.bf16.msra.mxu0 %v540
      %616 = vmatpush.bf16.msra.mxu0 %v539
      %617 = vmatpush.bf16.msra.mxu0 %v538
      %618 = vmatpush.bf16.msra.mxu0 %v537
      %619 = vmatpush.bf16.msra.mxu0 %v536
      %620 = vmatpush.bf16.msra.mxu0 %v535
      %621 = vmatpush.bf16.msra.mxu0 %v534
      %622 = vmatpush.bf16.msra.mxu0 %v533
      %623 = vmatmul.bf16.gmra.mxu0 %v376
      %v624 = vpop.f32.mrf.mxu0
      %v625 = vadd.f32 %v611, %v624
      %v626 = vpop.f32.mrf.mxu0
      %v627 = vadd.f32 %v613, %v626
      %628 = vdwg.mxu0
      %v629 = vadd.f32 %v625, %v627
      %v630 = vrot.slane %v629, 4
      %v631 = vadd.f32 %v629, %v630
      %v632 = vrot.slane %v631, 2
      %v633 = vadd.f32 %v631, %v632
      %v634 = vrot.slane %v633, 1
      %v635 = vadd.f32 %v633, %v634
      %636 = vst [vmem:[%s286] sm:$0x1] %v635
      %v637 = vmul.f32 %v625, %v625
      %v638 = vmul.f32 %v627, %v627
      %v639 = vadd.f32 %v637, %v638
      %v640 = vrot.slane %v639, 4
      %v641 = vadd.f32 %v639, %v640
      %v642 = vrot.slane %v641, 2
      %v643 = vadd.f32 %v641, %v642
      %v644 = vrot.slane %v643, 1
      %v645 = vadd.f32 %v643, %v644
      %646 = vst [vmem:[%s292] sm:$0x1] %v645
      %v647 = vpack.c.bf16 %v625, %v625
      %v648 = vpack.c.bf16 %v627, %v627
      %649 = vst [vmem:[%s279] sm:$0xf] %v647
      %650 = vst [vmem:[%s279 + $0x4] sm:$0xf] %v648
      %s651 = smul.u32 2, %s21
      %p652 = scmp.lt.s32.totalorder %s20, 3
      %s653 = scalar_select %p652, %s20, 3
      %p654 = scmp.lt.s32.totalorder %s651, 1
      %s655 = scalar_select %p654, %s651, 1
      %s656 = smul.addr %s653, 2
      %s657 = sadd.s32 %s655, %s656
      %s658 = smul.addr %s657, 4
      %s659 = scalar_lea.vmem %s2, %s658
      %p660 = scmp.lt.s32.totalorder %s20, 3
      %s661 = scalar_select %p660, %s20, 3
      %p662 = scmp.lt.s32.totalorder %s21, 0
      %s663 = scalar_select %p662, %s21, 0
      %s664 = sadd.s32 %s663, %s661
      %s665 = scalar_lea.vmem %s3, %s664
      %p666 = scmp.lt.s32.totalorder %s20, 3
      %s667 = scalar_select %p666, %s20, 3
      %p668 = scmp.lt.s32.totalorder %s21, 0
      %s669 = scalar_select %p668, %s21, 0
      %s670 = sadd.s32 %s669, %s667
      %s671 = scalar_lea.vmem %s4, %s670
      // Predicated region
      $region29: #{unet_generator_forward.27} parent=27 // pred_check
        %p672 = pneg %p102
      $region30: #{unet_generator_forward.27} parent=27 // pred_check_branch
        %674 = sbr.rel (%p672) target = $region32
      $region31: #{unet_generator_forward.27} parent=27 // pred_region
        %s675 = smul.u32 2, %s21
      $region32: #{unet_generator_forward.27} parent=27 // pred_fallthru
        _
      // Predicated region
      $region33: #{unet_generator_forward.27} parent=27 // pred_check
        %p676 = pneg %p130
      $region34: #{unet_generator_forward.27} parent=27 // pred_check_branch
        %678 = sbr.rel (%p676) target = $region36
      $region35: #{unet_generator_forward.27} parent=27 // pred_region
        _
      $region36: #{unet_generator_forward.27} parent=27 // pred_fallthru
        _
      // Predicated region
      $region37: #{unet_generator_forward.27} parent=27 // pred_check
        %p679 = pneg %p158
      $region38: #{unet_generator_forward.27} parent=27 // pred_check_branch
        %681 = sbr.rel (%p679) target = $region40
      $region39: #{unet_generator_forward.27} parent=27 // pred_region
        _
      $region40: #{unet_generator_forward.27} parent=27 // pred_fallthru
        _
    $region28: #{unet_generator_forward.27} parent=5 // pred_fallthru
      _
    %p682 = scmp.le.s32.totalorder 2, %s11
    // Predicated region
    $region41: #{unet_generator_forward.27} parent=5 // pred_check
      %p683 = pneg %p682
    $region42: #{unet_generator_forward.27} parent=5 // pred_check_branch
      %685 = sbr.rel (%p683) target = $region44
    $region43: #{unet_generator_forward.27} parent=5 // pred_region
      %s686 = ssub.s32 %s11, 2
      // Predicated region
      $region45: #{unet_generator_forward.27} parent=43 // pred_check
        %p687 = pneg %p108
      $region46: #{unet_generator_forward.27} parent=43 // pred_check_branch
        %689 = sbr.rel (%p687) target = $region48
      $region47: #{unet_generator_forward.27} parent=43 // pred_region
        %s690 = smul.u32 2, %s23
        %p691 = scmp.lt.s32.totalorder %s22, 3
        %s692 = scalar_select %p691, %s22, 3
        %p693 = scmp.lt.s32.totalorder %s690, 1
        %s694 = scalar_select %p693, %s690, 1
        %s695 = smul.addr %s692, 2
        %s696 = sadd.s32 %s694, %s695
        %s697 = smul.addr %s696, 4
        %s698 = scalar_lea.vmem %s2, %s697
      $region48: #{unet_generator_forward.27} parent=43 // pred_fallthru
        _
      // Predicated region
      $region49: #{unet_generator_forward.27} parent=43 // pred_check
        %p699 = pneg %p136
      $region50: #{unet_generator_forward.27} parent=43 // pred_check_branch
        %701 = sbr.rel (%p699) target = $region52
      $region51: #{unet_generator_forward.27} parent=43 // pred_region
        %p702 = scmp.lt.s32.totalorder %s22, 3
        %s703 = scalar_select %p702, %s22, 3
        %p704 = scmp.lt.s32.totalorder %s23, 0
        %s705 = scalar_select %p704, %s23, 0
        %s706 = sadd.s32 %s705, %s703
        %s707 = scalar_lea.vmem %s3, %s706
      $region52: #{unet_generator_forward.27} parent=43 // pred_fallthru
        _
      // Predicated region
      $region53: #{unet_generator_forward.27} parent=43 // pred_check
        %p708 = pneg %p164
      $region54: #{unet_generator_forward.27} parent=43 // pred_check_branch
        %710 = sbr.rel (%p708) target = $region56
      $region55: #{unet_generator_forward.27} parent=43 // pred_region
        %p711 = scmp.lt.s32.totalorder %s22, 3
        %s712 = scalar_select %p711, %s22, 3
        %p713 = scmp.lt.s32.totalorder %s23, 0
        %s714 = scalar_select %p713, %s23, 0
        %s715 = sadd.s32 %s714, %s712
        %s716 = scalar_lea.vmem %s4, %s715
      $region56: #{unet_generator_forward.27} parent=43 // pred_fallthru
        _
    $region44: #{unet_generator_forward.27} parent=5 // pred_fallthru
      _
  $region6: #{unet_generator_forward.27} parent=0 // loop_footer
    %s15 = sadd.s32 1, %s11
  $region7: #{unet_generator_forward.27} parent=0 // loop_footer_branch
    %10 = sbr.rel target = $region3
  $region8: #{unet_generator_forward.27} parent=0 // loop_exit
    _

// kernel: unet_generator_forward.30
$region0: #{unet_generator_forward.30}
  #allocation0 [shape = 'u32[]', space=smem, size = 0x4, offset = 0x4, fixed_abs, tag = 'smem constant byte address 0x4 - core index']
  #allocation1 [shape = 'u32[72,128]{1,0:T(1,128)}', space=vmem, size = 0x9000, scoped, tag = 'internal scratch']
  %s0 = inlined_call_operand.vmem [shape: bf16[4,32,128], index: 0, kind: input, shape index: {}]
  %s1 = inlined_call_operand.vmem [shape: f32[1,128], index: 1, kind: input, shape index: {}]
  %s2 = inlined_call_operand.vmem [shape: f32[1,128], index: 2, kind: input, shape index: {}]
  %s3 = inlined_call_operand.vmem [shape: bf16[4,32,128], index: 3, kind: output, shape index: {}]
  %s4 = sld [smem:[#allocation0]]
  $region45: #{unet_generator_forward.30} parent=0
    _
  %s6 = ssub.s32 1, %s4
  %s7 = scalar_select 0, %s6, %s4
  loop: start=0, step=1, limit=6
  $region2: #{unet_generator_forward.30} parent=0 // loop_pre_header
    _
  $region3: #{unet_generator_forward.30} parent=0 // loop_header
    %s9 = sphi 0, %s13
    %p10 = scmp.ge.s32.totalorder %s9, 6
    %s16 = sphi 0, %s28
    %s17 = sphi 0, %s24
    %s18 = sphi 0, %s16
    %s19 = sphi 0, %s17
    %s20 = sphi 0, %s18
    %s21 = sphi 0, %s19
    %s33 = sphi 0, %s35
    %s36 = sphi 0, %s33
    %s37 = sphi 0, %s36
    %s53 = sphi 0, %s37
    %s57 = sphi 0, %s57
    %s59 = sphi 0, %s57
    %s60 = sphi 0, %s59
    %s74 = sphi 0, %s60
    %s78 = sphi 0, %s78
    %s80 = sphi 0, %s78
    %s81 = sphi 0, %s80
    %s95 = sphi 0, %s81
    %s103 = sphi 0, %s105
    %s106 = sphi 0, %s103
    %s107 = sphi 0, %s106
    %s123 = sphi 0, %s107
  $region4: #{unet_generator_forward.30} parent=0 // loop_header_branch
    %12 = sbr.rel (%p10) target = $region8
  $region5: #{unet_generator_forward.30} parent=0 // loop_body
    %s14 = ssub.s32 %s9, 1
    %s15 = ssub.s32 %s9, 2
    %s22 = sadd.s32 1, %s17
    %p23 = scmp.ge.s32.totalorder %s22, 1
    %s24 = scalar_select %p23, 0, %s22
    %s25 = sadd.s32 1, %s16
    %s26 = scalar_select %p23, %s25, %s16
    %p27 = scmp.ge.s32.totalorder %s26, 4
    %s28 = scalar_select %p27, 0, %s26
    %s29 = ssub.s32 %s16, %s28
    %s30 = ssub.s32 %s17, %s24
    %s31 = sor.u32 %s29, %s30
    %p32 = scmp.eq.s32.totalorder %s31, 0
    %s34 = sadd.s32 %s33, 1
    %s35 = scalar_select %p32, %s33, %s34
    %p38 = pneg %p32
    %p39 = scmp.eq.s32.totalorder %s9, 3
    %p40 = por %p38, %p39
    %p41 = scmp.ne.s32.totalorder %s33, %s36
    %p42 = scmp.eq.s32.totalorder %s9, 0
    %p43 = por %p41, %p42
    %p44 = scmp.ne.s32.totalorder %s33, %s36
    %p45 = scmp.eq.s32.totalorder %s14, 3
    %p46 = por %p44, %p45
    %p47 = scmp.ne.s32.totalorder %s36, %s37
    %p48 = scmp.eq.s32.totalorder %s14, 0
    %p49 = por %p47, %p48
    %p50 = scmp.ne.s32.totalorder %s36, %s37
    %p51 = scmp.eq.s32.totalorder %s15, 3
    %p52 = por %p50, %p51
    %p54 = scmp.ne.s32.totalorder %s37, %s53
    %p55 = scmp.eq.s32.totalorder %s15, 0
    %p56 = por %p54, %p55
    %s58 = sadd.s32 %s57, 1
    %p61 = scmp.eq.s32.totalorder %s9, 3
    %p62 = scmp.ne.s32.totalorder %s57, %s59
    %p63 = scmp.eq.s32.totalorder %s9, 0
    %p64 = por %p62, %p63
    %p65 = scmp.ne.s32.totalorder %s57, %s59
    %p66 = scmp.eq.s32.totalorder %s14, 3
    %p67 = por %p65, %p66
    %p68 = scmp.ne.s32.totalorder %s59, %s60
    %p69 = scmp.eq.s32.totalorder %s14, 0
    %p70 = por %p68, %p69
    %p71 = scmp.ne.s32.totalorder %s59, %s60
    %p72 = scmp.eq.s32.totalorder %s15, 3
    %p73 = por %p71, %p72
    %p75 = scmp.ne.s32.totalorder %s60, %s74
    %p76 = scmp.eq.s32.totalorder %s15, 0
    %p77 = por %p75, %p76
    %s79 = sadd.s32 %s78, 1
    %p82 = scmp.eq.s32.totalorder %s9, 3
    %p83 = scmp.ne.s32.totalorder %s78, %s80
    %p84 = scmp.eq.s32.totalorder %s9, 0
    %p85 = por %p83, %p84
    %p86 = scmp.ne.s32.totalorder %s78, %s80
    %p87 = scmp.eq.s32.totalorder %s14, 3
    %p88 = por %p86, %p87
    %p89 = scmp.ne.s32.totalorder %s80, %s81
    %p90 = scmp.eq.s32.totalorder %s14, 0
    %p91 = por %p89, %p90
    %p92 = scmp.ne.s32.totalorder %s80, %s81
    %p93 = scmp.eq.s32.totalorder %s15, 3
    %p94 = por %p92, %p93
    %p96 = scmp.ne.s32.totalorder %s81, %s95
    %p97 = scmp.eq.s32.totalorder %s15, 0
    %p98 = por %p96, %p97
    %s99 = ssub.s32 %s16, %s28
    %s100 = ssub.s32 %s17, %s24
    %s101 = sor.u32 %s99, %s100
    %p102 = scmp.eq.s32.totalorder %s101, 0
    %s104 = sadd.s32 %s103, 1
    %s105 = scalar_select %p102, %s103, %s104
    %p108 = pneg %p102
    %p109 = scmp.eq.s32.totalorder %s9, 3
    %p110 = por %p108, %p109
    %p111 = scmp.ne.s32.totalorder %s103, %s106
    %p112 = scmp.eq.s32.totalorder %s9, 0
    %p113 = por %p111, %p112
    %p114 = scmp.ne.s32.totalorder %s103, %s106
    %p115 = scmp.eq.s32.totalorder %s14, 3
    %p116 = por %p114, %p115
    %p117 = scmp.ne.s32.totalorder %s106, %s107
    %p118 = scmp.eq.s32.totalorder %s14, 0
    %p119 = por %p117, %p118
    %p120 = scmp.ne.s32.totalorder %s106, %s107
    %p121 = scmp.eq.s32.totalorder %s15, 3
    %p122 = por %p120, %p121
    %p124 = scmp.ne.s32.totalorder %s107, %s123
    %p125 = scmp.eq.s32.totalorder %s15, 0
    %p126 = por %p124, %p125
    %p127 = scmp.le.s32.totalorder 1, %s9
    %p128 = scmp.lt.s32.totalorder %s9, 5
    %p129 = pnand %p127, %p128
    %p130 = pneg %p129
    // Predicated region
    $region9: #{unet_generator_forward.30} parent=5 // pred_check
      _
    $region10: #{unet_generator_forward.30} parent=5 // pred_check_branch
      %132 = sbr.rel (%p129) target = $region12
    $region11: #{unet_generator_forward.30} parent=5 // pred_region
      %s133 = ssub.s32 %s9, 1
      // Predicated region
      $region13: #{unet_generator_forward.30} parent=11 // pred_check
        %p134 = pneg %p70
      $region14: #{unet_generator_forward.30} parent=11 // pred_check_branch
        %136 = sbr.rel (%p134) target = $region16
      $region15: #{unet_generator_forward.30} parent=11 // pred_region
        _
      $region16: #{unet_generator_forward.30} parent=11 // pred_fallthru
        _
      // Predicated region
      $region17: #{unet_generator_forward.30} parent=11 // pred_check
        %p137 = pneg %p91
      $region18: #{unet_generator_forward.30} parent=11 // pred_check_branch
        %139 = sbr.rel (%p137) target = $region20
      $region19: #{unet_generator_forward.30} parent=11 // pred_region
        _
      $region20: #{unet_generator_forward.30} parent=11 // pred_fallthru
        _
    $region12: #{unet_generator_forward.30} parent=5 // pred_fallthru
      _
    %p140 = scmp.lt.s32.totalorder %s9, 4
    // Predicated region
    $region21: #{unet_generator_forward.30} parent=5 // pred_check
      %p141 = pneg %p140
    $region22: #{unet_generator_forward.30} parent=5 // pred_check_branch
      %143 = sbr.rel (%p141) target = $region24
    $region23: #{unet_generator_forward.30} parent=5 // pred_region
      // Predicated region
      $region25: #{unet_generator_forward.30} parent=23 // pred_check
        %p144 = pneg %p43
      $region26: #{unet_generator_forward.30} parent=23 // pred_check_branch
        %146 = sbr.rel (%p144) target = $region28
      $region27: #{unet_generator_forward.30} parent=23 // pred_region
        %s147 = smul.u32 4, %s17
        %p148 = scmp.lt.s32.totalorder %s16, 3
        %s149 = scalar_select %p148, %s16, 3
        %p150 = scmp.lt.s32.totalorder %s147, 3
        %s151 = scalar_select %p150, %s147, 3
        %s152 = smul.addr %s149, 4
        %s153 = sadd.s32 %s151, %s152
        %s154 = smul.addr %s153, 4
        %s155 = scalar_lea.vmem %s0, %s154
        %s156 = smul.u32 4, %s17
      $region28: #{unet_generator_forward.30} parent=23 // pred_fallthru
        _
    $region24: #{unet_generator_forward.30} parent=5 // pred_fallthru
      _
    %p157 = scmp.le.s32.totalorder 1, %s9
    %p158 = scmp.lt.s32.totalorder %s9, 5
    %p159 = pnand %p157, %p158
    %p160 = pneg %p159
    // Predicated region
    $region29: #{unet_generator_forward.30} parent=5 // pred_check
      _
    $region30: #{unet_generator_forward.30} parent=5 // pred_check_branch
      %162 = sbr.rel (%p159) target = $region32
    $region31: #{unet_generator_forward.30} parent=5 // pred_region
      %s163 = ssub.s32 %s9, 1
      %s164 = smul.u32 4, %s19
      %p165 = scmp.lt.s32.totalorder %s18, 3
      %s166 = scalar_select %p165, %s18, 3
      %p167 = scmp.lt.s32.totalorder %s164, 3
      %s168 = scalar_select %p167, %s164, 3
      %s169 = smul.addr %s166, 4
      %s170 = sadd.s32 %s168, %s169
      %s171 = smul.addr %s170, 4
      %s172 = scalar_lea.vmem %s0, %s171
      %p173 = pneg %p49
      %p174 = pneg %p46
      %p175 = pneg %p70
      %p176 = pneg %p67
      %p177 = pneg %p91
      %p178 = pneg %p88
      %p179 = pneg %p119
      %p180 = pneg %p116
      %s181 = smul.u32 4, %s19
      %p182 = scmp.lt.s32.totalorder %s18, 3
      %s183 = scalar_select %p182, %s18, 3
      %p184 = scmp.lt.s32.totalorder %s181, 3
      %s185 = scalar_select %p184, %s181, 3
      %s186 = smul.addr %s183, 4
      %s187 = sadd.s32 %s185, %s186
      %s188 = smul.addr %s187, 4
      %s189 = scalar_lea.vmem %s3, %s188
      %s190 = smul.u32 4, %s19
      %p191 = scmp.lt.s32.totalorder %s18, 3
      %s192 = scalar_select %p191, %s18, 3
      %p193 = scmp.lt.s32.totalorder %s190, 3
      %s194 = scalar_select %p193, %s190, 3
      %s195 = smul.addr %s192, 4
      %s196 = sadd.s32 %s194, %s195
      %s197 = smul.addr %s196, 4
      %s198 = scalar_lea.vmem %s0, %s197
      %s199 = smul.u32 4, %s19
      %s200 = smul.u32 4, %s19
      %p201 = scmp.lt.s32.totalorder %s18, 3
      %s202 = scalar_select %p201, %s18, 3
      %p203 = scmp.lt.s32.totalorder %s200, 3
      %s204 = scalar_select %p203, %s200, 3
      %s205 = smul.addr %s202, 4
      %s206 = sadd.s32 %s204, %s205
      %s207 = smul.addr %s206, 4
      %s208 = scalar_lea.vmem %s3, %s207
      %s209 = smul.u32 4, %s19
      %v210 = vld [vmem:[%s198] sm:$0xf]
      %v211 = vld [vmem:[%s198 + $0x4] sm:$0xf]
      %v212 = vld [vmem:[%s198 + $0x8] sm:$0xf]
      %v213 = vld [vmem:[%s198 + $0xc] sm:$0xf]
      %v214 = vunpack.c.l.bf16 %v210
      %v215 = vunpack.c.l.bf16 %v211
      %v216 = vunpack.c.l.bf16 %v212
      %v217 = vunpack.c.l.bf16 %v213
      %v218 = vld [vmem:[%s1] sm:$0x1]
      %v220 = vperm.slane %v218, 0
      %v222 = vmul.f32 %v214, %v220
      %v223 = vmul.f32 %v215, %v220
      %v224 = vmul.f32 %v216, %v220
      %v225 = vmul.f32 %v217, %v220
      %v226 = vld [vmem:[%s2] sm:$0x1]
      %v228 = vperm.slane %v226, 0
      %v230 = vadd.f32 %v222, %v228
      %v231 = vadd.f32 %v223, %v228
      %v232 = vadd.f32 %v224, %v228
      %v233 = vadd.f32 %v225, %v228
      %v234 = vmax.f32 %v230, 0.0
      %v235 = vmax.f32 %v231, 0.0
      %v236 = vmax.f32 %v232, 0.0
      %v237 = vmax.f32 %v233, 0.0
      %v238 = vpack.c.bf16 %v234, %v234
      %v239 = vpack.c.bf16 %v235, %v235
      %v240 = vpack.c.bf16 %v236, %v236
      %v241 = vpack.c.bf16 %v237, %v237
      %242 = vst [vmem:[%s208] sm:$0xf] %v238
      %243 = vst [vmem:[%s208 + $0x4] sm:$0xf] %v239
      %244 = vst [vmem:[%s208 + $0x8] sm:$0xf] %v240
      %245 = vst [vmem:[%s208 + $0xc] sm:$0xf] %v241
      %s246 = smul.u32 4, %s19
      %p247 = scmp.lt.s32.totalorder %s18, 3
      %s248 = scalar_select %p247, %s18, 3
      %p249 = scmp.lt.s32.totalorder %s246, 3
      %s250 = scalar_select %p249, %s246, 3
      %s251 = smul.addr %s248, 4
      %s252 = sadd.s32 %s250, %s251
      %s253 = smul.addr %s252, 4
      %s254 = scalar_lea.vmem %s3, %s253
      // Predicated region
      $region33: #{unet_generator_forward.30} parent=31 // pred_check
        %p255 = pneg %p116
      $region34: #{unet_generator_forward.30} parent=31 // pred_check_branch
        %257 = sbr.rel (%p255) target = $region36
      $region35: #{unet_generator_forward.30} parent=31 // pred_region
        %s258 = smul.u32 4, %s19
      $region36: #{unet_generator_forward.30} parent=31 // pred_fallthru
        _
    $region32: #{unet_generator_forward.30} parent=5 // pred_fallthru
      _
    %p259 = scmp.le.s32.totalorder 2, %s9
    // Predicated region
    $region37: #{unet_generator_forward.30} parent=5 // pred_check
      %p260 = pneg %p259
    $region38: #{unet_generator_forward.30} parent=5 // pred_check_branch
      %262 = sbr.rel (%p260) target = $region40
    $region39: #{unet_generator_forward.30} parent=5 // pred_region
      %s263 = ssub.s32 %s9, 2
      // Predicated region
      $region41: #{unet_generator_forward.30} parent=39 // pred_check
        %p264 = pneg %p122
      $region42: #{unet_generator_forward.30} parent=39 // pred_check_branch
        %266 = sbr.rel (%p264) target = $region44
      $region43: #{unet_generator_forward.30} parent=39 // pred_region
        %s267 = smul.u32 4, %s21
        %p268 = scmp.lt.s32.totalorder %s20, 3
        %s269 = scalar_select %p268, %s20, 3
        %p270 = scmp.lt.s32.totalorder %s267, 3
        %s271 = scalar_select %p270, %s267, 3
        %s272 = smul.addr %s269, 4
        %s273 = sadd.s32 %s271, %s272
        %s274 = smul.addr %s273, 4
        %s275 = scalar_lea.vmem %s3, %s274
      $region44: #{unet_generator_forward.30} parent=39 // pred_fallthru
        _
    $region40: #{unet_generator_forward.30} parent=5 // pred_fallthru
      _
  $region6: #{unet_generator_forward.30} parent=0 // loop_footer
    %s13 = sadd.s32 1, %s9
  $region7: #{unet_generator_forward.30} parent=0 // loop_footer_branch
    %8 = sbr.rel target = $region3
  $region8: #{unet_generator_forward.30} parent=0 // loop_exit
    _

// kernel: unet_generator_forward.29
$region0: #{unet_generator_forward.29}
  #allocation0 [shape = 'u32[]', space=smem, size = 0x4, offset = 0x4, fixed_abs, tag = 'smem constant byte address 0x4 - core index']
  #allocation1 [shape = 'u32[72,128]{1,0:T(1,128)}', space=vmem, size = 0x9000, scoped, tag = 'internal scratch']
  %s0 = inlined_call_operand.vmem [shape: bf16[4,32,256], index: 0, kind: input, shape index: {}]
  %s1 = inlined_call_operand.vmem [shape: bf16[4,256,128], index: 1, kind: input, shape index: {}]
  %s2 = inlined_call_operand.vmem [shape: bf16[4,32,128], index: 2, kind: output, shape index: {0}]
  %s3 = inlined_call_operand.vmem [shape: f32[4,1,1,128], index: 3, kind: output, shape index: {1}]
  %s4 = inlined_call_operand.vmem [shape: f32[4,1,1,128], index: 4, kind: output, shape index: {2}]
  %5 = xla_tuple %s2, %s3, %s4
  %s6 = sld [smem:[#allocation0]]
  $region57: #{unet_generator_forward.29} parent=0
    _
  %s8 = ssub.s32 1, %s6
  %s9 = scalar_select 0, %s8, %s6
  loop: start=0, step=1, limit=6
  $region2: #{unet_generator_forward.29} parent=0 // loop_pre_header
    _
  $region3: #{unet_generator_forward.29} parent=0 // loop_header
    %s11 = sphi 0, %s15
    %p12 = scmp.ge.s32.totalorder %s11, 6
    %s18 = sphi 0, %s30
    %s19 = sphi 0, %s26
    %s20 = sphi 0, %s18
    %s21 = sphi 0, %s19
    %s22 = sphi 0, %s20
    %s23 = sphi 0, %s21
    %s35 = sphi 0, %s37
    %s38 = sphi 0, %s35
    %s39 = sphi 0, %s38
    %s55 = sphi 0, %s39
    %s61 = sphi 0, %s63
    %s64 = sphi 0, %s61
    %s65 = sphi 0, %s64
    %s81 = sphi 0, %s65
    %s89 = sphi 0, %s91
    %s92 = sphi 0, %s89
    %s93 = sphi 0, %s92
    %s109 = sphi 0, %s93
    %s117 = sphi 0, %s119
    %s120 = sphi 0, %s117
    %s121 = sphi 0, %s120
    %s137 = sphi 0, %s121
    %s145 = sphi 0, %s147
    %s148 = sphi 0, %s145
    %s149 = sphi 0, %s148
    %s165 = sphi 0, %s149
  $region4: #{unet_generator_forward.29} parent=0 // loop_header_branch
    %14 = sbr.rel (%p12) target = $region8
  $region5: #{unet_generator_forward.29} parent=0 // loop_body
    %s16 = ssub.s32 %s11, 1
    %s17 = ssub.s32 %s11, 2
    %s24 = sadd.s32 1, %s19
    %p25 = scmp.ge.s32.totalorder %s24, 1
    %s26 = scalar_select %p25, 0, %s24
    %s27 = sadd.s32 1, %s18
    %s28 = scalar_select %p25, %s27, %s18
    %p29 = scmp.ge.s32.totalorder %s28, 4
    %s30 = scalar_select %p29, 0, %s28
    %s31 = ssub.s32 %s18, %s30
    %s32 = ssub.s32 %s19, %s26
    %s33 = sor.u32 %s31, %s32
    %p34 = scmp.eq.s32.totalorder %s33, 0
    %s36 = sadd.s32 %s35, 1
    %s37 = scalar_select %p34, %s35, %s36
    %p40 = pneg %p34
    %p41 = scmp.eq.s32.totalorder %s11, 3
    %p42 = por %p40, %p41
    %p43 = scmp.ne.s32.totalorder %s35, %s38
    %p44 = scmp.eq.s32.totalorder %s11, 0
    %p45 = por %p43, %p44
    %p46 = scmp.ne.s32.totalorder %s35, %s38
    %p47 = scmp.eq.s32.totalorder %s16, 3
    %p48 = por %p46, %p47
    %p49 = scmp.ne.s32.totalorder %s38, %s39
    %p50 = scmp.eq.s32.totalorder %s16, 0
    %p51 = por %p49, %p50
    %p52 = scmp.ne.s32.totalorder %s38, %s39
    %p53 = scmp.eq.s32.totalorder %s17, 3
    %p54 = por %p52, %p53
    %p56 = scmp.ne.s32.totalorder %s39, %s55
    %p57 = scmp.eq.s32.totalorder %s17, 0
    %p58 = por %p56, %p57
    %s59 = ssub.s32 %s18, %s30
    %p60 = scmp.eq.s32.totalorder %s59, 0
    %s62 = sadd.s32 %s61, 1
    %s63 = scalar_select %p60, %s61, %s62
    %p66 = pneg %p60
    %p67 = scmp.eq.s32.totalorder %s11, 3
    %p68 = por %p66, %p67
    %p69 = scmp.ne.s32.totalorder %s61, %s64
    %p70 = scmp.eq.s32.totalorder %s11, 0
    %p71 = por %p69, %p70
    %p72 = scmp.ne.s32.totalorder %s61, %s64
    %p73 = scmp.eq.s32.totalorder %s16, 3
    %p74 = por %p72, %p73
    %p75 = scmp.ne.s32.totalorder %s64, %s65
    %p76 = scmp.eq.s32.totalorder %s16, 0
    %p77 = por %p75, %p76
    %p78 = scmp.ne.s32.totalorder %s64, %s65
    %p79 = scmp.eq.s32.totalorder %s17, 3
    %p80 = por %p78, %p79
    %p82 = scmp.ne.s32.totalorder %s65, %s81
    %p83 = scmp.eq.s32.totalorder %s17, 0
    %p84 = por %p82, %p83
    %s85 = ssub.s32 %s18, %s30
    %s86 = ssub.s32 %s19, %s26
    %s87 = sor.u32 %s85, %s86
    %p88 = scmp.eq.s32.totalorder %s87, 0
    %s90 = sadd.s32 %s89, 1
    %s91 = scalar_select %p88, %s89, %s90
    %p94 = pneg %p88
    %p95 = scmp.eq.s32.totalorder %s11, 3
    %p96 = por %p94, %p95
    %p97 = scmp.ne.s32.totalorder %s89, %s92
    %p98 = scmp.eq.s32.totalorder %s11, 0
    %p99 = por %p97, %p98
    %p100 = scmp.ne.s32.totalorder %s89, %s92
    %p101 = scmp.eq.s32.totalorder %s16, 3
    %p102 = por %p100, %p101
    %p103 = scmp.ne.s32.totalorder %s92, %s93
    %p104 = scmp.eq.s32.totalorder %s16, 0
    %p105 = por %p103, %p104
    %p106 = scmp.ne.s32.totalorder %s92, %s93
    %p107 = scmp.eq.s32.totalorder %s17, 3
    %p108 = por %p106, %p107
    %p110 = scmp.ne.s32.totalorder %s93, %s109
    %p111 = scmp.eq.s32.totalorder %s17, 0
    %p112 = por %p110, %p111
    %s113 = ssub.s32 %s18, %s30
    %s114 = ssub.s32 %s19, %s26
    %s115 = sor.u32 %s113, %s114
    %p116 = scmp.eq.s32.totalorder %s115, 0
    %s118 = sadd.s32 %s117, 1
    %s119 = scalar_select %p116, %s117, %s118
    %p122 = pneg %p116
    %p123 = scmp.eq.s32.totalorder %s11, 3
    %p124 = por %p122, %p123
    %p125 = scmp.ne.s32.totalorder %s117, %s120
    %p126 = scmp.eq.s32.totalorder %s11, 0
    %p127 = por %p125, %p126
    %p128 = scmp.ne.s32.totalorder %s117, %s120
    %p129 = scmp.eq.s32.totalorder %s16, 3
    %p130 = por %p128, %p129
    %p131 = scmp.ne.s32.totalorder %s120, %s121
    %p132 = scmp.eq.s32.totalorder %s16, 0
    %p133 = por %p131, %p132
    %p134 = scmp.ne.s32.totalorder %s120, %s121
    %p135 = scmp.eq.s32.totalorder %s17, 3
    %p136 = por %p134, %p135
    %p138 = scmp.ne.s32.totalorder %s121, %s137
    %p139 = scmp.eq.s32.totalorder %s17, 0
    %p140 = por %p138, %p139
    %s141 = ssub.s32 %s18, %s30
    %s142 = ssub.s32 %s19, %s26
    %s143 = sor.u32 %s141, %s142
    %p144 = scmp.eq.s32.totalorder %s143, 0
    %s146 = sadd.s32 %s145, 1
    %s147 = scalar_select %p144, %s145, %s146
    %p150 = pneg %p144
    %p151 = scmp.eq.s32.totalorder %s11, 3
    %p152 = por %p150, %p151
    %p153 = scmp.ne.s32.totalorder %s145, %s148
    %p154 = scmp.eq.s32.totalorder %s11, 0
    %p155 = por %p153, %p154
    %p156 = scmp.ne.s32.totalorder %s145, %s148
    %p157 = scmp.eq.s32.totalorder %s16, 3
    %p158 = por %p156, %p157
    %p159 = scmp.ne.s32.totalorder %s148, %s149
    %p160 = scmp.eq.s32.totalorder %s16, 0
    %p161 = por %p159, %p160
    %p162 = scmp.ne.s32.totalorder %s148, %s149
    %p163 = scmp.eq.s32.totalorder %s17, 3
    %p164 = por %p162, %p163
    %p166 = scmp.ne.s32.totalorder %s149, %s165
    %p167 = scmp.eq.s32.totalorder %s17, 0
    %p168 = por %p166, %p167
    %p169 = scmp.le.s32.totalorder 1, %s11
    %p170 = scmp.lt.s32.totalorder %s11, 5
    %p171 = pnand %p169, %p170
    %p172 = pneg %p171
    // Predicated region
    $region9: #{unet_generator_forward.29} parent=5 // pred_check
      _
    $region10: #{unet_generator_forward.29} parent=5 // pred_check_branch
      %174 = sbr.rel (%p171) target = $region12
    $region11: #{unet_generator_forward.29} parent=5 // pred_region
      %s175 = ssub.s32 %s11, 1
    $region12: #{unet_generator_forward.29} parent=5 // pred_fallthru
      _
    %p176 = scmp.lt.s32.totalorder %s11, 4
    // Predicated region
    $region13: #{unet_generator_forward.29} parent=5 // pred_check
      %p177 = pneg %p176
    $region14: #{unet_generator_forward.29} parent=5 // pred_check_branch
      %179 = sbr.rel (%p177) target = $region16
    $region15: #{unet_generator_forward.29} parent=5 // pred_region
      // Predicated region
      $region17: #{unet_generator_forward.29} parent=15 // pred_check
        %p180 = pneg %p45
      $region18: #{unet_generator_forward.29} parent=15 // pred_check_branch
        %182 = sbr.rel (%p180) target = $region20
      $region19: #{unet_generator_forward.29} parent=15 // pred_region
        %s183 = smul.u32 4, %s19
        %p184 = scmp.lt.s32.totalorder %s18, 3
        %s185 = scalar_select %p184, %s18, 3
        %p186 = scmp.lt.s32.totalorder %s183, 3
        %s187 = scalar_select %p186, %s183, 3
        %s188 = smul.addr %s187, 2
        %s189 = smul.addr %s185, 8
        %s190 = sadd.s32 %s188, %s189
        %s191 = smul.addr %s190, 4
        %s192 = scalar_lea.vmem %s0, %s191
        %s193 = smul.u32 4, %s19
      $region20: #{unet_generator_forward.29} parent=15 // pred_fallthru
        _
      // Predicated region
      $region21: #{unet_generator_forward.29} parent=15 // pred_check
        %p194 = pneg %p71
      $region22: #{unet_generator_forward.29} parent=15 // pred_check_branch
        %196 = sbr.rel (%p194) target = $region24
      $region23: #{unet_generator_forward.29} parent=15 // pred_region
        %p197 = scmp.lt.s32.totalorder %s18, 3
        %s198 = scalar_select %p197, %s18, 3
        %s199 = smul.addr %s198, 32
        %s200 = smul.addr %s199, 4
        %s201 = scalar_lea.vmem %s1, %s200
      $region24: #{unet_generator_forward.29} parent=15 // pred_fallthru
        _
    $region16: #{unet_generator_forward.29} parent=5 // pred_fallthru
      _
    %p202 = scmp.le.s32.totalorder 1, %s11
    %p203 = scmp.lt.s32.totalorder %s11, 5
    %p204 = pnand %p202, %p203
    %p205 = pneg %p204
    // Predicated region
    $region25: #{unet_generator_forward.29} parent=5 // pred_check
      _
    $region26: #{unet_generator_forward.29} parent=5 // pred_check_branch
      %207 = sbr.rel (%p204) target = $region28
    $region27: #{unet_generator_forward.29} parent=5 // pred_region
      %s208 = ssub.s32 %s11, 1
      %s209 = smul.u32 4, %s21
      %p210 = scmp.lt.s32.totalorder %s20, 3
      %s211 = scalar_select %p210, %s20, 3
      %p212 = scmp.lt.s32.totalorder %s209, 3
      %s213 = scalar_select %p212, %s209, 3
      %s214 = smul.addr %s213, 2
      %s215 = smul.addr %s211, 8
      %s216 = sadd.s32 %s214, %s215
      %s217 = smul.addr %s216, 4
      %s218 = scalar_lea.vmem %s0, %s217
      %p219 = pneg %p51
      %p220 = pneg %p48
      %p221 = scmp.lt.s32.totalorder %s20, 3
      %s222 = scalar_select %p221, %s20, 3
      %s223 = smul.addr %s222, 32
      %s224 = smul.addr %s223, 4
      %s225 = scalar_lea.vmem %s1, %s224
      %p226 = pneg %p77
      %p227 = pneg %p74
      %p228 = pneg %p105
      %p229 = pneg %p102
      %s230 = smul.u32 4, %s21
      %p231 = scmp.lt.s32.totalorder %s20, 3
      %s232 = scalar_select %p231, %s20, 3
      %p233 = scmp.lt.s32.totalorder %s230, 3
      %s234 = scalar_select %p233, %s230, 3
      %s235 = smul.addr %s232, 4
      %s236 = sadd.s32 %s234, %s235
      %s237 = smul.addr %s236, 4
      %s238 = scalar_lea.vmem %s2, %s237
      %p239 = pneg %p133
      %p240 = pneg %p130
      %p241 = scmp.lt.s32.totalorder %s20, 3
      %s242 = scalar_select %p241, %s20, 3
      %p243 = scmp.lt.s32.totalorder %s21, 0
      %s244 = scalar_select %p243, %s21, 0
      %s245 = sadd.s32 %s244, %s242
      %s246 = scalar_lea.vmem %s3, %s245
      %p247 = pneg %p161
      %p248 = pneg %p158
      %p249 = scmp.lt.s32.totalorder %s20, 3
      %s250 = scalar_select %p249, %s20, 3
      %p251 = scmp.lt.s32.totalorder %s21, 0
      %s252 = scalar_select %p251, %s21, 0
      %s253 = sadd.s32 %s252, %s250
      %s254 = scalar_lea.vmem %s4, %s253
      %s255 = smul.u32 4, %s21
      %p256 = scmp.lt.s32.totalorder %s20, 3
      %s257 = scalar_select %p256, %s20, 3
      %p258 = scmp.lt.s32.totalorder %s255, 3
      %s259 = scalar_select %p258, %s255, 3
      %s260 = smul.addr %s259, 2
      %s261 = smul.addr %s257, 8
      %s262 = sadd.s32 %s260, %s261
      %s263 = smul.addr %s262, 4
      %s264 = scalar_lea.vmem %s0, %s263
      %s265 = smul.u32 4, %s21
      %p266 = scmp.lt.s32.totalorder %s20, 3
      %s267 = scalar_select %p266, %s20, 3
      %s268 = smul.addr %s267, 32
      %s269 = smul.addr %s268, 4
      %s270 = scalar_lea.vmem %s1, %s269
      %s271 = smul.u32 4, %s21
      %p272 = scmp.lt.s32.totalorder %s20, 3
      %s273 = scalar_select %p272, %s20, 3
      %p274 = scmp.lt.s32.totalorder %s271, 3
      %s275 = scalar_select %p274, %s271, 3
      %s276 = smul.addr %s273, 4
      %s277 = sadd.s32 %s275, %s276
      %s278 = smul.addr %s277, 4
      %s279 = scalar_lea.vmem %s2, %s278
      %s280 = smul.u32 4, %s21
      %p281 = scmp.lt.s32.totalorder %s20, 3
      %s282 = scalar_select %p281, %s20, 3
      %p283 = scmp.lt.s32.totalorder %s21, 0
      %s284 = scalar_select %p283, %s21, 0
      %s285 = sadd.s32 %s284, %s282
      %s286 = scalar_lea.vmem %s3, %s285
      %p287 = scmp.lt.s32.totalorder %s20, 3
      %s288 = scalar_select %p287, %s20, 3
      %p289 = scmp.lt.s32.totalorder %s21, 0
      %s290 = scalar_select %p289, %s21, 0
      %s291 = sadd.s32 %s290, %s288
      %s292 = scalar_lea.vmem %s4, %s291
      %v293 = vld [vmem:[%s264] sm:$0xff]
      %v294 = vld [vmem:[%s264 + $0x8] sm:$0xff]
      %v295 = vld [vmem:[%s264 + $0x10] sm:$0xff]
      %v296 = vld [vmem:[%s264 + $0x18] sm:$0xff]
      %v297 = vld [vmem:[%s270] sm:$0xf]
      %v298 = vld [vmem:[%s270 + $0x4] sm:$0xf]
      %v299 = vld [vmem:[%s270 + $0x8] sm:$0xf]
      %v300 = vld [vmem:[%s270 + $0xc] sm:$0xf]
      %v301 = vld [vmem:[%s270 + $0x10] sm:$0xf]
      %v302 = vld [vmem:[%s270 + $0x14] sm:$0xf]
      %v303 = vld [vmem:[%s270 + $0x18] sm:$0xf]
      %v304 = vld [vmem:[%s270 + $0x1c] sm:$0xf]
      %v305 = vld [vmem:[%s270 + $0x20] sm:$0xf]
      %v306 = vld [vmem:[%s270 + $0x24] sm:$0xf]
      %v307 = vld [vmem:[%s270 + $0x28] sm:$0xf]
      %v308 = vld [vmem:[%s270 + $0x2c] sm:$0xf]
      %v309 = vld [vmem:[%s270 + $0x30] sm:$0xf]
      %v310 = vld [vmem:[%s270 + $0x34] sm:$0xf]
      %v311 = vld [vmem:[%s270 + $0x38] sm:$0xf]
      %v312 = vld [vmem:[%s270 + $0x3c] sm:$0xf]
      %v313 = vld [vmem:[%s270 + $0x40] sm:$0xf]
      %v314 = vld [vmem:[%s270 + $0x44] sm:$0xf]
      %v315 = vld [vmem:[%s270 + $0x48] sm:$0xf]
      %v316 = vld [vmem:[%s270 + $0x4c] sm:$0xf]
      %v317 = vld [vmem:[%s270 + $0x50] sm:$0xf]
      %v318 = vld [vmem:[%s270 + $0x54] sm:$0xf]
      %v319 = vld [vmem:[%s270 + $0x58] sm:$0xf]
      %v320 = vld [vmem:[%s270 + $0x5c] sm:$0xf]
      %v321 = vld [vmem:[%s270 + $0x60] sm:$0xf]
      %v322 = vld [vmem:[%s270 + $0x64] sm:$0xf]
      %v323 = vld [vmem:[%s270 + $0x68] sm:$0xf]
      %v324 = vld [vmem:[%s270 + $0x6c] sm:$0xf]
      %v325 = vld [vmem:[%s270 + $0x70] sm:$0xf]
      %v326 = vld [vmem:[%s270 + $0x74] sm:$0xf]
      %v327 = vld [vmem:[%s270 + $0x78] sm:$0xf]
      %v328 = vld [vmem:[%s270 + $0x7c] sm:$0xf]
      %v333 = vunpack.c.l.b16 %v293
      %v334 = vunpack.c.h.b16 %v293
      %v335 = vunpack.c.l.b16 %v294
      %v336 = vunpack.c.h.b16 %v294
      %v337 = vunpack.c.l.b16 %v295
      %v338 = vunpack.c.h.b16 %v295
      %v339 = vunpack.c.l.b16 %v296
      %v340 = vunpack.c.h.b16 %v296
      %v341 = vpack.c.b16 %v335, %v333
      %v342 = vpack.c.b16 %v336, %v334
      %v343 = vpack.c.b16 %v339, %v337
      %v344 = vpack.c.b16 %v340, %v338
      %v381 = vunpack.c.l.b16 %v297
      %v382 = vunpack.c.l.b16 %v298
      %v383 = vunpack.c.l.b16 %v299
      %v384 = vunpack.c.l.b16 %v300
      %v385 = vunpack.c.l.b16 %v301
      %v386 = vunpack.c.l.b16 %v302
      %v387 = vunpack.c.l.b16 %v303
      %v388 = vunpack.c.l.b16 %v304
      %v389 = vunpack.c.l.b16 %v305
      %v390 = vunpack.c.l.b16 %v306
      %v391 = vunpack.c.l.b16 %v307
      %v392 = vunpack.c.l.b16 %v308
      %v393 = vunpack.c.l.b16 %v309
      %v394 = vunpack.c.l.b16 %v310
      %v395 = vunpack.c.l.b16 %v311
      %v396 = vunpack.c.l.b16 %v312
      %v397 = vunpack.c.l.b16 %v313
      %v398 = vunpack.c.l.b16 %v314
      %v399 = vunpack.c.l.b16 %v315
      %v400 = vunpack.c.l.b16 %v316
      %v401 = vunpack.c.l.b16 %v317
      %v402 = vunpack.c.l.b16 %v318
      %v403 = vunpack.c.l.b16 %v319
      %v404 = vunpack.c.l.b16 %v320
      %v405 = vunpack.c.l.b16 %v321
      %v406 = vunpack.c.l.b16 %v322
      %v407 = vunpack.c.l.b16 %v323
      %v408 = vunpack.c.l.b16 %v324
      %v409 = vunpack.c.l.b16 %v325
      %v410 = vunpack.c.l.b16 %v326
      %v411 = vunpack.c.l.b16 %v327
      %v412 = vunpack.c.l.b16 %v328
      %v413 = vpack.c.b16 %v382, %v381
      %v414 = vpack.c.b16 %v384, %v383
      %v415 = vpack.c.b16 %v386, %v385
      %v416 = vpack.c.b16 %v388, %v387
      %v417 = vpack.c.b16 %v390, %v389
      %v418 = vpack.c.b16 %v392, %v391
      %v419 = vpack.c.b16 %v394, %v393
      %v420 = vpack.c.b16 %v396, %v395
      %v421 = vpack.c.b16 %v398, %v397
      %v422 = vpack.c.b16 %v400, %v399
      %v423 = vpack.c.b16 %v402, %v401
      %v424 = vpack.c.b16 %v404, %v403
      %v425 = vpack.c.b16 %v406, %v405
      %v426 = vpack.c.b16 %v408, %v407
      %v427 = vpack.c.b16 %v410, %v409
      %v428 = vpack.c.b16 %v412, %v411
      %445 = vmatpush.bf16.msra.mxu0 %v420
      %446 = vmatpush.bf16.msra.mxu0 %v419
      %447 = vmatpush.bf16.msra.mxu0 %v418
      %448 = vmatpush.bf16.msra.mxu0 %v417
      %449 = vmatpush.bf16.msra.mxu0 %v416
      %450 = vmatpush.bf16.msra.mxu0 %v415
      %451 = vmatpush.bf16.msra.mxu0 %v414
      %452 = vmatpush.bf16.msra.mxu0 %v413
      %453 = vmatmul.bf16.gmra.mxu0 %v341
      %v454 = vpop.f32.mrf.mxu0
      %v455 = vadd.f32 0.0, %v454
      %v456 = vpop.f32.mrf.mxu0
      %v457 = vadd.f32 0.0, %v456
      %458 = vmatmul.bf16.gmra.mxu0 %v343
      %v459 = vpop.f32.mrf.mxu0
      %v460 = vadd.f32 0.0, %v459
      %v461 = vpop.f32.mrf.mxu0
      %v462 = vadd.f32 0.0, %v461
      %463 = vdwg.mxu0
      %464 = vmatpush.bf16.msra.mxu0 %v428
      %465 = vmatpush.bf16.msra.mxu0 %v427
      %466 = vmatpush.bf16.msra.mxu0 %v426
      %467 = vmatpush.bf16.msra.mxu0 %v425
      %468 = vmatpush.bf16.msra.mxu0 %v424
      %469 = vmatpush.bf16.msra.mxu0 %v423
      %470 = vmatpush.bf16.msra.mxu0 %v422
      %471 = vmatpush.bf16.msra.mxu0 %v421
      %472 = vmatmul.bf16.gmra.mxu0 %v342
      %v473 = vpop.f32.mrf.mxu0
      %v474 = vadd.f32 %v455, %v473
      %v475 = vpop.f32.mrf.mxu0
      %v476 = vadd.f32 %v457, %v475
      %477 = vmatmul.bf16.gmra.mxu0 %v344
      %v478 = vpop.f32.mrf.mxu0
      %v479 = vadd.f32 %v460, %v478
      %v480 = vpop.f32.mrf.mxu0
      %v481 = vadd.f32 %v462, %v480
      %482 = vdwg.mxu0
      %v483 = vadd.f32 %v474, %v476
      %v484 = vadd.f32 %v483, %v479
      %v485 = vadd.f32 %v484, %v481
      %v486 = vrot.slane %v485, 4
      %v487 = vadd.f32 %v485, %v486
      %v488 = vrot.slane %v487, 2
      %v489 = vadd.f32 %v487, %v488
      %v490 = vrot.slane %v489, 1
      %v491 = vadd.f32 %v489, %v490
      %492 = vst [vmem:[%s286] sm:$0x1] %v491
      %v493 = vmul.f32 %v474, %v474
      %v494 = vmul.f32 %v476, %v476
      %v495 = vmul.f32 %v479, %v479
      %v496 = vmul.f32 %v481, %v481
      %v497 = vadd.f32 %v493, %v494
      %v498 = vadd.f32 %v497, %v495
      %v499 = vadd.f32 %v498, %v496
      %v500 = vrot.slane %v499, 4
      %v501 = vadd.f32 %v499, %v500
      %v502 = vrot.slane %v501, 2
      %v503 = vadd.f32 %v501, %v502
      %v504 = vrot.slane %v503, 1
      %v505 = vadd.f32 %v503, %v504
      %506 = vst [vmem:[%s292] sm:$0x1] %v505
      %v507 = vpack.c.bf16 %v474, %v474
      %v508 = vpack.c.bf16 %v476, %v476
      %v509 = vpack.c.bf16 %v479, %v479
      %v510 = vpack.c.bf16 %v481, %v481
      %511 = vst [vmem:[%s279] sm:$0xf] %v507
      %512 = vst [vmem:[%s279 + $0x4] sm:$0xf] %v508
      %513 = vst [vmem:[%s279 + $0x8] sm:$0xf] %v509
      %514 = vst [vmem:[%s279 + $0xc] sm:$0xf] %v510
      %s515 = smul.u32 4, %s21
      %p516 = scmp.lt.s32.totalorder %s20, 3
      %s517 = scalar_select %p516, %s20, 3
      %p518 = scmp.lt.s32.totalorder %s515, 3
      %s519 = scalar_select %p518, %s515, 3
      %s520 = smul.addr %s517, 4
      %s521 = sadd.s32 %s519, %s520
      %s522 = smul.addr %s521, 4
      %s523 = scalar_lea.vmem %s2, %s522
      %p524 = scmp.lt.s32.totalorder %s20, 3
      %s525 = scalar_select %p524, %s20, 3
      %p526 = scmp.lt.s32.totalorder %s21, 0
      %s527 = scalar_select %p526, %s21, 0
      %s528 = sadd.s32 %s527, %s525
      %s529 = scalar_lea.vmem %s3, %s528
      %p530 = scmp.lt.s32.totalorder %s20, 3
      %s531 = scalar_select %p530, %s20, 3
      %p532 = scmp.lt.s32.totalorder %s21, 0
      %s533 = scalar_select %p532, %s21, 0
      %s534 = sadd.s32 %s533, %s531
      %s535 = scalar_lea.vmem %s4, %s534
      // Predicated region
      $region29: #{unet_generator_forward.29} parent=27 // pred_check
        %p536 = pneg %p102
      $region30: #{unet_generator_forward.29} parent=27 // pred_check_branch
        %538 = sbr.rel (%p536) target = $region32
      $region31: #{unet_generator_forward.29} parent=27 // pred_region
        %s539 = smul.u32 4, %s21
      $region32: #{unet_generator_forward.29} parent=27 // pred_fallthru
        _
      // Predicated region
      $region33: #{unet_generator_forward.29} parent=27 // pred_check
        %p540 = pneg %p130
      $region34: #{unet_generator_forward.29} parent=27 // pred_check_branch
        %542 = sbr.rel (%p540) target = $region36
      $region35: #{unet_generator_forward.29} parent=27 // pred_region
        _
      $region36: #{unet_generator_forward.29} parent=27 // pred_fallthru
        _
      // Predicated region
      $region37: #{unet_generator_forward.29} parent=27 // pred_check
        %p543 = pneg %p158
      $region38: #{unet_generator_forward.29} parent=27 // pred_check_branch
        %545 = sbr.rel (%p543) target = $region40
      $region39: #{unet_generator_forward.29} parent=27 // pred_region
        _
      $region40: #{unet_generator_forward.29} parent=27 // pred_fallthru
        _
    $region28: #{unet_generator_forward.29} parent=5 // pred_fallthru
      _
    %p546 = scmp.le.s32.totalorder 2, %s11
    // Predicated region
    $region41: #{unet_generator_forward.29} parent=5 // pred_check
      %p547 = pneg %p546
    $region42: #{unet_generator_forward.29} parent=5 // pred_check_branch
      %549 = sbr.rel (%p547) target = $region44
    $region43: #{unet_generator_forward.29} parent=5 // pred_region
      %s550 = ssub.s32 %s11, 2
      // Predicated region
      $region45: #{unet_generator_forward.29} parent=43 // pred_check
        %p551 = pneg %p108
      $region46: #{unet_generator_forward.29} parent=43 // pred_check_branch
        %553 = sbr.rel (%p551) target = $region48
      $region47: #{unet_generator_forward.29} parent=43 // pred_region
        %s554 = smul.u32 4, %s23
        %p555 = scmp.lt.s32.totalorder %s22, 3
        %s556 = scalar_select %p555, %s22, 3
        %p557 = scmp.lt.s32.totalorder %s554, 3
        %s558 = scalar_select %p557, %s554, 3
        %s559 = smul.addr %s556, 4
        %s560 = sadd.s32 %s558, %s559
        %s561 = smul.addr %s560, 4
        %s562 = scalar_lea.vmem %s2, %s561
      $region48: #{unet_generator_forward.29} parent=43 // pred_fallthru
        _
      // Predicated region
      $region49: #{unet_generator_forward.29} parent=43 // pred_check
        %p563 = pneg %p136
      $region50: #{unet_generator_forward.29} parent=43 // pred_check_branch
        %565 = sbr.rel (%p563) target = $region52
      $region51: #{unet_generator_forward.29} parent=43 // pred_region
        %p566 = scmp.lt.s32.totalorder %s22, 3
        %s567 = scalar_select %p566, %s22, 3
        %p568 = scmp.lt.s32.totalorder %s23, 0
        %s569 = scalar_select %p568, %s23, 0
        %s570 = sadd.s32 %s569, %s567
        %s571 = scalar_lea.vmem %s3, %s570
      $region52: #{unet_generator_forward.29} parent=43 // pred_fallthru
        _
      // Predicated region
      $region53: #{unet_generator_forward.29} parent=43 // pred_check
        %p572 = pneg %p164
      $region54: #{unet_generator_forward.29} parent=43 // pred_check_branch
        %574 = sbr.rel (%p572) target = $region56
      $region55: #{unet_generator_forward.29} parent=43 // pred_region
        %p575 = scmp.lt.s32.totalorder %s22, 3
        %s576 = scalar_select %p575, %s22, 3
        %p577 = scmp.lt.s32.totalorder %s23, 0
        %s578 = scalar_select %p577, %s23, 0
        %s579 = sadd.s32 %s578, %s576
        %s580 = scalar_lea.vmem %s4, %s579
      $region56: #{unet_generator_forward.29} parent=43 // pred_fallthru
        _
    $region44: #{unet_generator_forward.29} parent=5 // pred_fallthru
      _
  $region6: #{unet_generator_forward.29} parent=0 // loop_footer
    %s15 = sadd.s32 1, %s11
  $region7: #{unet_generator_forward.29} parent=0 // loop_footer_branch
    %10 = sbr.rel target = $region3
  $region8: #{unet_generator_forward.29} parent=0 // loop_exit
    _

// kernel: unet_generator_forward.32
$region0: #{unet_generator_forward.32}
  #allocation0 [shape = 'u32[]', space=smem, size = 0x4, offset = 0x4, fixed_abs, tag = 'smem constant byte address 0x4 - core index']
  #allocation1 [shape = 'u32[72,128]{1,0:T(1,128)}', space=vmem, size = 0x9000, scoped, tag = 'internal scratch']
  %s0 = inlined_call_operand.vmem [shape: bf16[4,128,128], index: 0, kind: input, shape index: {}]
  %s1 = inlined_call_operand.vmem [shape: f32[1,128], index: 1, kind: input, shape index: {}]
  %s2 = inlined_call_operand.vmem [shape: f32[1,128], index: 2, kind: input, shape index: {}]
  %s3 = inlined_call_operand.vmem [shape: bf16[4,128,128], index: 3, kind: output, shape index: {}]
  %s4 = sld [smem:[#allocation0]]
  $region45: #{unet_generator_forward.32} parent=0
    _
  %s6 = ssub.s32 1, %s4
  %s7 = scalar_select 0, %s6, %s4
  loop: start=0, step=1, limit=6
  $region2: #{unet_generator_forward.32} parent=0 // loop_pre_header
    _
  $region3: #{unet_generator_forward.32} parent=0 // loop_header
    %s9 = sphi 0, %s13
    %p10 = scmp.ge.s32.totalorder %s9, 6
    %s16 = sphi 0, %s28
    %s17 = sphi 0, %s24
    %s18 = sphi 0, %s16
    %s19 = sphi 0, %s17
    %s20 = sphi 0, %s18
    %s21 = sphi 0, %s19
    %s33 = sphi 0, %s35
    %s36 = sphi 0, %s33
    %s37 = sphi 0, %s36
    %s53 = sphi 0, %s37
    %s57 = sphi 0, %s57
    %s59 = sphi 0, %s57
    %s60 = sphi 0, %s59
    %s74 = sphi 0, %s60
    %s78 = sphi 0, %s78
    %s80 = sphi 0, %s78
    %s81 = sphi 0, %s80
    %s95 = sphi 0, %s81
    %s103 = sphi 0, %s105
    %s106 = sphi 0, %s103
    %s107 = sphi 0, %s106
    %s123 = sphi 0, %s107
  $region4: #{unet_generator_forward.32} parent=0 // loop_header_branch
    %12 = sbr.rel (%p10) target = $region8
  $region5: #{unet_generator_forward.32} parent=0 // loop_body
    %s14 = ssub.s32 %s9, 1
    %s15 = ssub.s32 %s9, 2
    %s22 = sadd.s32 1, %s17
    %p23 = scmp.ge.s32.totalorder %s22, 1
    %s24 = scalar_select %p23, 0, %s22
    %s25 = sadd.s32 1, %s16
    %s26 = scalar_select %p23, %s25, %s16
    %p27 = scmp.ge.s32.totalorder %s26, 4
    %s28 = scalar_select %p27, 0, %s26
    %s29 = ssub.s32 %s16, %s28
    %s30 = ssub.s32 %s17, %s24
    %s31 = sor.u32 %s29, %s30
    %p32 = scmp.eq.s32.totalorder %s31, 0
    %s34 = sadd.s32 %s33, 1
    %s35 = scalar_select %p32, %s33, %s34
    %p38 = pneg %p32
    %p39 = scmp.eq.s32.totalorder %s9, 3
    %p40 = por %p38, %p39
    %p41 = scmp.ne.s32.totalorder %s33, %s36
    %p42 = scmp.eq.s32.totalorder %s9, 0
    %p43 = por %p41, %p42
    %p44 = scmp.ne.s32.totalorder %s33, %s36
    %p45 = scmp.eq.s32.totalorder %s14, 3
    %p46 = por %p44, %p45
    %p47 = scmp.ne.s32.totalorder %s36, %s37
    %p48 = scmp.eq.s32.totalorder %s14, 0
    %p49 = por %p47, %p48
    %p50 = scmp.ne.s32.totalorder %s36, %s37
    %p51 = scmp.eq.s32.totalorder %s15, 3
    %p52 = por %p50, %p51
    %p54 = scmp.ne.s32.totalorder %s37, %s53
    %p55 = scmp.eq.s32.totalorder %s15, 0
    %p56 = por %p54, %p55
    %s58 = sadd.s32 %s57, 1
    %p61 = scmp.eq.s32.totalorder %s9, 3
    %p62 = scmp.ne.s32.totalorder %s57, %s59
    %p63 = scmp.eq.s32.totalorder %s9, 0
    %p64 = por %p62, %p63
    %p65 = scmp.ne.s32.totalorder %s57, %s59
    %p66 = scmp.eq.s32.totalorder %s14, 3
    %p67 = por %p65, %p66
    %p68 = scmp.ne.s32.totalorder %s59, %s60
    %p69 = scmp.eq.s32.totalorder %s14, 0
    %p70 = por %p68, %p69
    %p71 = scmp.ne.s32.totalorder %s59, %s60
    %p72 = scmp.eq.s32.totalorder %s15, 3
    %p73 = por %p71, %p72
    %p75 = scmp.ne.s32.totalorder %s60, %s74
    %p76 = scmp.eq.s32.totalorder %s15, 0
    %p77 = por %p75, %p76
    %s79 = sadd.s32 %s78, 1
    %p82 = scmp.eq.s32.totalorder %s9, 3
    %p83 = scmp.ne.s32.totalorder %s78, %s80
    %p84 = scmp.eq.s32.totalorder %s9, 0
    %p85 = por %p83, %p84
    %p86 = scmp.ne.s32.totalorder %s78, %s80
    %p87 = scmp.eq.s32.totalorder %s14, 3
    %p88 = por %p86, %p87
    %p89 = scmp.ne.s32.totalorder %s80, %s81
    %p90 = scmp.eq.s32.totalorder %s14, 0
    %p91 = por %p89, %p90
    %p92 = scmp.ne.s32.totalorder %s80, %s81
    %p93 = scmp.eq.s32.totalorder %s15, 3
    %p94 = por %p92, %p93
    %p96 = scmp.ne.s32.totalorder %s81, %s95
    %p97 = scmp.eq.s32.totalorder %s15, 0
    %p98 = por %p96, %p97
    %s99 = ssub.s32 %s16, %s28
    %s100 = ssub.s32 %s17, %s24
    %s101 = sor.u32 %s99, %s100
    %p102 = scmp.eq.s32.totalorder %s101, 0
    %s104 = sadd.s32 %s103, 1
    %s105 = scalar_select %p102, %s103, %s104
    %p108 = pneg %p102
    %p109 = scmp.eq.s32.totalorder %s9, 3
    %p110 = por %p108, %p109
    %p111 = scmp.ne.s32.totalorder %s103, %s106
    %p112 = scmp.eq.s32.totalorder %s9, 0
    %p113 = por %p111, %p112
    %p114 = scmp.ne.s32.totalorder %s103, %s106
    %p115 = scmp.eq.s32.totalorder %s14, 3
    %p116 = por %p114, %p115
    %p117 = scmp.ne.s32.totalorder %s106, %s107
    %p118 = scmp.eq.s32.totalorder %s14, 0
    %p119 = por %p117, %p118
    %p120 = scmp.ne.s32.totalorder %s106, %s107
    %p121 = scmp.eq.s32.totalorder %s15, 3
    %p122 = por %p120, %p121
    %p124 = scmp.ne.s32.totalorder %s107, %s123
    %p125 = scmp.eq.s32.totalorder %s15, 0
    %p126 = por %p124, %p125
    %p127 = scmp.le.s32.totalorder 1, %s9
    %p128 = scmp.lt.s32.totalorder %s9, 5
    %p129 = pnand %p127, %p128
    %p130 = pneg %p129
    // Predicated region
    $region9: #{unet_generator_forward.32} parent=5 // pred_check
      _
    $region10: #{unet_generator_forward.32} parent=5 // pred_check_branch
      %132 = sbr.rel (%p129) target = $region12
    $region11: #{unet_generator_forward.32} parent=5 // pred_region
      %s133 = ssub.s32 %s9, 1
      // Predicated region
      $region13: #{unet_generator_forward.32} parent=11 // pred_check
        %p134 = pneg %p70
      $region14: #{unet_generator_forward.32} parent=11 // pred_check_branch
        %136 = sbr.rel (%p134) target = $region16
      $region15: #{unet_generator_forward.32} parent=11 // pred_region
        _
      $region16: #{unet_generator_forward.32} parent=11 // pred_fallthru
        _
      // Predicated region
      $region17: #{unet_generator_forward.32} parent=11 // pred_check
        %p137 = pneg %p91
      $region18: #{unet_generator_forward.32} parent=11 // pred_check_branch
        %139 = sbr.rel (%p137) target = $region20
      $region19: #{unet_generator_forward.32} parent=11 // pred_region
        _
      $region20: #{unet_generator_forward.32} parent=11 // pred_fallthru
        _
    $region12: #{unet_generator_forward.32} parent=5 // pred_fallthru
      _
    %p140 = scmp.lt.s32.totalorder %s9, 4
    // Predicated region
    $region21: #{unet_generator_forward.32} parent=5 // pred_check
      %p141 = pneg %p140
    $region22: #{unet_generator_forward.32} parent=5 // pred_check_branch
      %143 = sbr.rel (%p141) target = $region24
    $region23: #{unet_generator_forward.32} parent=5 // pred_region
      // Predicated region
      $region25: #{unet_generator_forward.32} parent=23 // pred_check
        %p144 = pneg %p43
      $region26: #{unet_generator_forward.32} parent=23 // pred_check_branch
        %146 = sbr.rel (%p144) target = $region28
      $region27: #{unet_generator_forward.32} parent=23 // pred_region
        %s147 = smul.u32 16, %s17
        %p148 = scmp.lt.s32.totalorder %s16, 3
        %s149 = scalar_select %p148, %s16, 3
        %p150 = scmp.lt.s32.totalorder %s147, 15
        %s151 = scalar_select %p150, %s147, 15
        %s152 = smul.addr %s149, 16
        %s153 = sadd.s32 %s151, %s152
        %s154 = smul.addr %s153, 4
        %s155 = scalar_lea.vmem %s0, %s154
        %s156 = smul.u32 16, %s17
      $region28: #{unet_generator_forward.32} parent=23 // pred_fallthru
        _
    $region24: #{unet_generator_forward.32} parent=5 // pred_fallthru
      _
    %p157 = scmp.le.s32.totalorder 1, %s9
    %p158 = scmp.lt.s32.totalorder %s9, 5
    %p159 = pnand %p157, %p158
    %p160 = pneg %p159
    // Predicated region
    $region29: #{unet_generator_forward.32} parent=5 // pred_check
      _
    $region30: #{unet_generator_forward.32} parent=5 // pred_check_branch
      %162 = sbr.rel (%p159) target = $region32
    $region31: #{unet_generator_forward.32} parent=5 // pred_region
      %s163 = ssub.s32 %s9, 1
      %s164 = smul.u32 16, %s19
      %p165 = scmp.lt.s32.totalorder %s18, 3
      %s166 = scalar_select %p165, %s18, 3
      %p167 = scmp.lt.s32.totalorder %s164, 15
      %s168 = scalar_select %p167, %s164, 15
      %s169 = smul.addr %s166, 16
      %s170 = sadd.s32 %s168, %s169
      %s171 = smul.addr %s170, 4
      %s172 = scalar_lea.vmem %s0, %s171
      %p173 = pneg %p49
      %p174 = pneg %p46
      %p175 = pneg %p70
      %p176 = pneg %p67
      %p177 = pneg %p91
      %p178 = pneg %p88
      %p179 = pneg %p119
      %p180 = pneg %p116
      %s181 = smul.u32 16, %s19
      %p182 = scmp.lt.s32.totalorder %s18, 3
      %s183 = scalar_select %p182, %s18, 3
      %p184 = scmp.lt.s32.totalorder %s181, 15
      %s185 = scalar_select %p184, %s181, 15
      %s186 = smul.addr %s183, 16
      %s187 = sadd.s32 %s185, %s186
      %s188 = smul.addr %s187, 4
      %s189 = scalar_lea.vmem %s3, %s188
      %s190 = smul.u32 16, %s19
      %p191 = scmp.lt.s32.totalorder %s18, 3
      %s192 = scalar_select %p191, %s18, 3
      %p193 = scmp.lt.s32.totalorder %s190, 15
      %s194 = scalar_select %p193, %s190, 15
      %s195 = smul.addr %s192, 16
      %s196 = sadd.s32 %s194, %s195
      %s197 = smul.addr %s196, 4
      %s198 = scalar_lea.vmem %s0, %s197
      %s199 = smul.u32 16, %s19
      %s200 = smul.u32 16, %s19
      %p201 = scmp.lt.s32.totalorder %s18, 3
      %s202 = scalar_select %p201, %s18, 3
      %p203 = scmp.lt.s32.totalorder %s200, 15
      %s204 = scalar_select %p203, %s200, 15
      %s205 = smul.addr %s202, 16
      %s206 = sadd.s32 %s204, %s205
      %s207 = smul.addr %s206, 4
      %s208 = scalar_lea.vmem %s3, %s207
      %s209 = smul.u32 16, %s19
      %v210 = vld [vmem:[%s198] sm:$0xf]
      %v211 = vld [vmem:[%s198 + $0x4] sm:$0xf]
      %v212 = vld [vmem:[%s198 + $0x8] sm:$0xf]
      %v213 = vld [vmem:[%s198 + $0xc] sm:$0xf]
      %v214 = vld [vmem:[%s198 + $0x10] sm:$0xf]
      %v215 = vld [vmem:[%s198 + $0x14] sm:$0xf]
      %v216 = vld [vmem:[%s198 + $0x18] sm:$0xf]
      %v217 = vld [vmem:[%s198 + $0x1c] sm:$0xf]
      %v218 = vld [vmem:[%s198 + $0x20] sm:$0xf]
      %v219 = vld [vmem:[%s198 + $0x24] sm:$0xf]
      %v220 = vld [vmem:[%s198 + $0x28] sm:$0xf]
      %v221 = vld [vmem:[%s198 + $0x2c] sm:$0xf]
      %v222 = vld [vmem:[%s198 + $0x30] sm:$0xf]
      %v223 = vld [vmem:[%s198 + $0x34] sm:$0xf]
      %v224 = vld [vmem:[%s198 + $0x38] sm:$0xf]
      %v225 = vld [vmem:[%s198 + $0x3c] sm:$0xf]
      %v226 = vunpack.c.l.bf16 %v210
      %v227 = vunpack.c.l.bf16 %v211
      %v228 = vunpack.c.l.bf16 %v212
      %v229 = vunpack.c.l.bf16 %v213
      %v230 = vunpack.c.l.bf16 %v214
      %v231 = vunpack.c.l.bf16 %v215
      %v232 = vunpack.c.l.bf16 %v216
      %v233 = vunpack.c.l.bf16 %v217
      %v234 = vunpack.c.l.bf16 %v218
      %v235 = vunpack.c.l.bf16 %v219
      %v236 = vunpack.c.l.bf16 %v220
      %v237 = vunpack.c.l.bf16 %v221
      %v238 = vunpack.c.l.bf16 %v222
      %v239 = vunpack.c.l.bf16 %v223
      %v240 = vunpack.c.l.bf16 %v224
      %v241 = vunpack.c.l.bf16 %v225
      %v242 = vld [vmem:[%s1] sm:$0x1]
      %v244 = vperm.slane %v242, 0
      %v246 = vmul.f32 %v226, %v244
      %v247 = vmul.f32 %v227, %v244
      %v248 = vmul.f32 %v228, %v244
      %v249 = vmul.f32 %v229, %v244
      %v250 = vmul.f32 %v230, %v244
      %v251 = vmul.f32 %v231, %v244
      %v252 = vmul.f32 %v232, %v244
      %v253 = vmul.f32 %v233, %v244
      %v254 = vmul.f32 %v234, %v244
      %v255 = vmul.f32 %v235, %v244
      %v256 = vmul.f32 %v236, %v244
      %v257 = vmul.f32 %v237, %v244
      %v258 = vmul.f32 %v238, %v244
      %v259 = vmul.f32 %v239, %v244
      %v260 = vmul.f32 %v240, %v244
      %v261 = vmul.f32 %v241, %v244
      %v262 = vld [vmem:[%s2] sm:$0x1]
      %v264 = vperm.slane %v262, 0
      %v266 = vadd.f32 %v246, %v264
      %v267 = vadd.f32 %v247, %v264
      %v268 = vadd.f32 %v248, %v264
      %v269 = vadd.f32 %v249, %v264
      %v270 = vadd.f32 %v250, %v264
      %v271 = vadd.f32 %v251, %v264
      %v272 = vadd.f32 %v252, %v264
      %v273 = vadd.f32 %v253, %v264
      %v274 = vadd.f32 %v254, %v264
      %v275 = vadd.f32 %v255, %v264
      %v276 = vadd.f32 %v256, %v264
      %v277 = vadd.f32 %v257, %v264
      %v278 = vadd.f32 %v258, %v264
      %v279 = vadd.f32 %v259, %v264
      %v280 = vadd.f32 %v260, %v264
      %v281 = vadd.f32 %v261, %v264
      %v282 = vmax.f32 %v266, 0.0
      %v283 = vmax.f32 %v267, 0.0
      %v284 = vmax.f32 %v268, 0.0
      %v285 = vmax.f32 %v269, 0.0
      %v286 = vmax.f32 %v270, 0.0
      %v287 = vmax.f32 %v271, 0.0
      %v288 = vmax.f32 %v272, 0.0
      %v289 = vmax.f32 %v273, 0.0
      %v290 = vmax.f32 %v274, 0.0
      %v291 = vmax.f32 %v275, 0.0
      %v292 = vmax.f32 %v276, 0.0
      %v293 = vmax.f32 %v277, 0.0
      %v294 = vmax.f32 %v278, 0.0
      %v295 = vmax.f32 %v279, 0.0
      %v296 = vmax.f32 %v280, 0.0
      %v297 = vmax.f32 %v281, 0.0
      %v298 = vpack.c.bf16 %v282, %v282
      %v299 = vpack.c.bf16 %v283, %v283
      %v300 = vpack.c.bf16 %v284, %v284
      %v301 = vpack.c.bf16 %v285, %v285
      %v302 = vpack.c.bf16 %v286, %v286
      %v303 = vpack.c.bf16 %v287, %v287
      %v304 = vpack.c.bf16 %v288, %v288
      %v305 = vpack.c.bf16 %v289, %v289
      %v306 = vpack.c.bf16 %v290, %v290
      %v307 = vpack.c.bf16 %v291, %v291
      %v308 = vpack.c.bf16 %v292, %v292
      %v309 = vpack.c.bf16 %v293, %v293
      %v310 = vpack.c.bf16 %v294, %v294
      %v311 = vpack.c.bf16 %v295, %v295
      %v312 = vpack.c.bf16 %v296, %v296
      %v313 = vpack.c.bf16 %v297, %v297
      %314 = vst [vmem:[%s208] sm:$0xf] %v298
      %315 = vst [vmem:[%s208 + $0x4] sm:$0xf] %v299
      %316 = vst [vmem:[%s208 + $0x8] sm:$0xf] %v300
      %317 = vst [vmem:[%s208 + $0xc] sm:$0xf] %v301
      %318 = vst [vmem:[%s208 + $0x10] sm:$0xf] %v302
      %319 = vst [vmem:[%s208 + $0x14] sm:$0xf] %v303
      %320 = vst [vmem:[%s208 + $0x18] sm:$0xf] %v304
      %321 = vst [vmem:[%s208 + $0x1c] sm:$0xf] %v305
      %322 = vst [vmem:[%s208 + $0x20] sm:$0xf] %v306
      %323 = vst [vmem:[%s208 + $0x24] sm:$0xf] %v307
      %324 = vst [vmem:[%s208 + $0x28] sm:$0xf] %v308
      %325 = vst [vmem:[%s208 + $0x2c] sm:$0xf] %v309
      %326 = vst [vmem:[%s208 + $0x30] sm:$0xf] %v310
      %327 = vst [vmem:[%s208 + $0x34] sm:$0xf] %v311
      %328 = vst [vmem:[%s208 + $0x38] sm:$0xf] %v312
      %329 = vst [vmem:[%s208 + $0x3c] sm:$0xf] %v313
      %s330 = smul.u32 16, %s19
      %p331 = scmp.lt.s32.totalorder %s18, 3
      %s332 = scalar_select %p331, %s18, 3
      %p333 = scmp.lt.s32.totalorder %s330, 15
      %s334 = scalar_select %p333, %s330, 15
      %s335 = smul.addr %s332, 16
      %s336 = sadd.s32 %s334, %s335
      %s337 = smul.addr %s336, 4
      %s338 = scalar_lea.vmem %s3, %s337
      // Predicated region
      $region33: #{unet_generator_forward.32} parent=31 // pred_check
        %p339 = pneg %p116
      $region34: #{unet_generator_forward.32} parent=31 // pred_check_branch
        %341 = sbr.rel (%p339) target = $region36
      $region35: #{unet_generator_forward.32} parent=31 // pred_region
        %s342 = smul.u32 16, %s19
      $region36: #{unet_generator_forward.32} parent=31 // pred_fallthru
        _
    $region32: #{unet_generator_forward.32} parent=5 // pred_fallthru
      _
    %p343 = scmp.le.s32.totalorder 2, %s9
    // Predicated region
    $region37: #{unet_generator_forward.32} parent=5 // pred_check
      %p344 = pneg %p343
    $region38: #{unet_generator_forward.32} parent=5 // pred_check_branch
      %346 = sbr.rel (%p344) target = $region40
    $region39: #{unet_generator_forward.32} parent=5 // pred_region
      %s347 = ssub.s32 %s9, 2
      // Predicated region
      $region41: #{unet_generator_forward.32} parent=39 // pred_check
        %p348 = pneg %p122
      $region42: #{unet_generator_forward.32} parent=39 // pred_check_branch
        %350 = sbr.rel (%p348) target = $region44
      $region43: #{unet_generator_forward.32} parent=39 // pred_region
        %s351 = smul.u32 16, %s21
        %p352 = scmp.lt.s32.totalorder %s20, 3
        %s353 = scalar_select %p352, %s20, 3
        %p354 = scmp.lt.s32.totalorder %s351, 15
        %s355 = scalar_select %p354, %s351, 15
        %s356 = smul.addr %s353, 16
        %s357 = sadd.s32 %s355, %s356
        %s358 = smul.addr %s357, 4
        %s359 = scalar_lea.vmem %s3, %s358
      $region44: #{unet_generator_forward.32} parent=39 // pred_fallthru
        _
    $region40: #{unet_generator_forward.32} parent=5 // pred_fallthru
      _
  $region6: #{unet_generator_forward.32} parent=0 // loop_footer
    %s13 = sadd.s32 1, %s9
  $region7: #{unet_generator_forward.32} parent=0 // loop_footer_branch
    %8 = sbr.rel target = $region3
  $region8: #{unet_generator_forward.32} parent=0 // loop_exit
    _

// kernel: unet_generator_forward.31
$region0: #{unet_generator_forward.31}
  #allocation0 [shape = 'u32[]', space=smem, size = 0x4, offset = 0x4, fixed_abs, tag = 'smem constant byte address 0x4 - core index']
  #allocation1 [shape = 'u32[72,128]{1,0:T(1,128)}', space=vmem, size = 0x9000, scoped, tag = 'internal scratch']
  %s0 = inlined_call_operand.vmem [shape: bf16[4,128,128], index: 0, kind: input, shape index: {}]
  %s1 = inlined_call_operand.vmem [shape: bf16[4,128,128], index: 1, kind: input, shape index: {}]
  %s2 = inlined_call_operand.vmem [shape: bf16[4,128,128], index: 2, kind: output, shape index: {0}]
  %s3 = inlined_call_operand.vmem [shape: f32[4,1,1,128], index: 3, kind: output, shape index: {1}]
  %s4 = inlined_call_operand.vmem [shape: f32[4,1,1,128], index: 4, kind: output, shape index: {2}]
  %5 = xla_tuple %s2, %s3, %s4
  %s6 = sld [smem:[#allocation0]]
  $region57: #{unet_generator_forward.31} parent=0
    _
  %s8 = ssub.s32 1, %s6
  %s9 = scalar_select 0, %s8, %s6
  loop: start=0, step=1, limit=6
  $region2: #{unet_generator_forward.31} parent=0 // loop_pre_header
    _
  $region3: #{unet_generator_forward.31} parent=0 // loop_header
    %s11 = sphi 0, %s15
    %p12 = scmp.ge.s32.totalorder %s11, 6
    %s18 = sphi 0, %s30
    %s19 = sphi 0, %s26
    %s20 = sphi 0, %s18
    %s21 = sphi 0, %s19
    %s22 = sphi 0, %s20
    %s23 = sphi 0, %s21
    %s35 = sphi 0, %s37
    %s38 = sphi 0, %s35
    %s39 = sphi 0, %s38
    %s55 = sphi 0, %s39
    %s61 = sphi 0, %s63
    %s64 = sphi 0, %s61
    %s65 = sphi 0, %s64
    %s81 = sphi 0, %s65
    %s89 = sphi 0, %s91
    %s92 = sphi 0, %s89
    %s93 = sphi 0, %s92
    %s109 = sphi 0, %s93
    %s117 = sphi 0, %s119
    %s120 = sphi 0, %s117
    %s121 = sphi 0, %s120
    %s137 = sphi 0, %s121
    %s145 = sphi 0, %s147
    %s148 = sphi 0, %s145
    %s149 = sphi 0, %s148
    %s165 = sphi 0, %s149
  $region4: #{unet_generator_forward.31} parent=0 // loop_header_branch
    %14 = sbr.rel (%p12) target = $region8
  $region5: #{unet_generator_forward.31} parent=0 // loop_body
    %s16 = ssub.s32 %s11, 1
    %s17 = ssub.s32 %s11, 2
    %s24 = sadd.s32 1, %s19
    %p25 = scmp.ge.s32.totalorder %s24, 1
    %s26 = scalar_select %p25, 0, %s24
    %s27 = sadd.s32 1, %s18
    %s28 = scalar_select %p25, %s27, %s18
    %p29 = scmp.ge.s32.totalorder %s28, 4
    %s30 = scalar_select %p29, 0, %s28
    %s31 = ssub.s32 %s18, %s30
    %s32 = ssub.s32 %s19, %s26
    %s33 = sor.u32 %s31, %s32
    %p34 = scmp.eq.s32.totalorder %s33, 0
    %s36 = sadd.s32 %s35, 1
    %s37 = scalar_select %p34, %s35, %s36
    %p40 = pneg %p34
    %p41 = scmp.eq.s32.totalorder %s11, 3
    %p42 = por %p40, %p41
    %p43 = scmp.ne.s32.totalorder %s35, %s38
    %p44 = scmp.eq.s32.totalorder %s11, 0
    %p45 = por %p43, %p44
    %p46 = scmp.ne.s32.totalorder %s35, %s38
    %p47 = scmp.eq.s32.totalorder %s16, 3
    %p48 = por %p46, %p47
    %p49 = scmp.ne.s32.totalorder %s38, %s39
    %p50 = scmp.eq.s32.totalorder %s16, 0
    %p51 = por %p49, %p50
    %p52 = scmp.ne.s32.totalorder %s38, %s39
    %p53 = scmp.eq.s32.totalorder %s17, 3
    %p54 = por %p52, %p53
    %p56 = scmp.ne.s32.totalorder %s39, %s55
    %p57 = scmp.eq.s32.totalorder %s17, 0
    %p58 = por %p56, %p57
    %s59 = ssub.s32 %s18, %s30
    %p60 = scmp.eq.s32.totalorder %s59, 0
    %s62 = sadd.s32 %s61, 1
    %s63 = scalar_select %p60, %s61, %s62
    %p66 = pneg %p60
    %p67 = scmp.eq.s32.totalorder %s11, 3
    %p68 = por %p66, %p67
    %p69 = scmp.ne.s32.totalorder %s61, %s64
    %p70 = scmp.eq.s32.totalorder %s11, 0
    %p71 = por %p69, %p70
    %p72 = scmp.ne.s32.totalorder %s61, %s64
    %p73 = scmp.eq.s32.totalorder %s16, 3
    %p74 = por %p72, %p73
    %p75 = scmp.ne.s32.totalorder %s64, %s65
    %p76 = scmp.eq.s32.totalorder %s16, 0
    %p77 = por %p75, %p76
    %p78 = scmp.ne.s32.totalorder %s64, %s65
    %p79 = scmp.eq.s32.totalorder %s17, 3
    %p80 = por %p78, %p79
    %p82 = scmp.ne.s32.totalorder %s65, %s81
    %p83 = scmp.eq.s32.totalorder %s17, 0
    %p84 = por %p82, %p83
    %s85 = ssub.s32 %s18, %s30
    %s86 = ssub.s32 %s19, %s26
    %s87 = sor.u32 %s85, %s86
    %p88 = scmp.eq.s32.totalorder %s87, 0
    %s90 = sadd.s32 %s89, 1
    %s91 = scalar_select %p88, %s89, %s90
    %p94 = pneg %p88
    %p95 = scmp.eq.s32.totalorder %s11, 3
    %p96 = por %p94, %p95
    %p97 = scmp.ne.s32.totalorder %s89, %s92
    %p98 = scmp.eq.s32.totalorder %s11, 0
    %p99 = por %p97, %p98
    %p100 = scmp.ne.s32.totalorder %s89, %s92
    %p101 = scmp.eq.s32.totalorder %s16, 3
    %p102 = por %p100, %p101
    %p103 = scmp.ne.s32.totalorder %s92, %s93
    %p104 = scmp.eq.s32.totalorder %s16, 0
    %p105 = por %p103, %p104
    %p106 = scmp.ne.s32.totalorder %s92, %s93
    %p107 = scmp.eq.s32.totalorder %s17, 3
    %p108 = por %p106, %p107
    %p110 = scmp.ne.s32.totalorder %s93, %s109
    %p111 = scmp.eq.s32.totalorder %s17, 0
    %p112 = por %p110, %p111
    %s113 = ssub.s32 %s18, %s30
    %s114 = ssub.s32 %s19, %s26
    %s115 = sor.u32 %s113, %s114
    %p116 = scmp.eq.s32.totalorder %s115, 0
    %s118 = sadd.s32 %s117, 1
    %s119 = scalar_select %p116, %s117, %s118
    %p122 = pneg %p116
    %p123 = scmp.eq.s32.totalorder %s11, 3
    %p124 = por %p122, %p123
    %p125 = scmp.ne.s32.totalorder %s117, %s120
    %p126 = scmp.eq.s32.totalorder %s11, 0
    %p127 = por %p125, %p126
    %p128 = scmp.ne.s32.totalorder %s117, %s120
    %p129 = scmp.eq.s32.totalorder %s16, 3
    %p130 = por %p128, %p129
    %p131 = scmp.ne.s32.totalorder %s120, %s121
    %p132 = scmp.eq.s32.totalorder %s16, 0
    %p133 = por %p131, %p132
    %p134 = scmp.ne.s32.totalorder %s120, %s121
    %p135 = scmp.eq.s32.totalorder %s17, 3
    %p136 = por %p134, %p135
    %p138 = scmp.ne.s32.totalorder %s121, %s137
    %p139 = scmp.eq.s32.totalorder %s17, 0
    %p140 = por %p138, %p139
    %s141 = ssub.s32 %s18, %s30
    %s142 = ssub.s32 %s19, %s26
    %s143 = sor.u32 %s141, %s142
    %p144 = scmp.eq.s32.totalorder %s143, 0
    %s146 = sadd.s32 %s145, 1
    %s147 = scalar_select %p144, %s145, %s146
    %p150 = pneg %p144
    %p151 = scmp.eq.s32.totalorder %s11, 3
    %p152 = por %p150, %p151
    %p153 = scmp.ne.s32.totalorder %s145, %s148
    %p154 = scmp.eq.s32.totalorder %s11, 0
    %p155 = por %p153, %p154
    %p156 = scmp.ne.s32.totalorder %s145, %s148
    %p157 = scmp.eq.s32.totalorder %s16, 3
    %p158 = por %p156, %p157
    %p159 = scmp.ne.s32.totalorder %s148, %s149
    %p160 = scmp.eq.s32.totalorder %s16, 0
    %p161 = por %p159, %p160
    %p162 = scmp.ne.s32.totalorder %s148, %s149
    %p163 = scmp.eq.s32.totalorder %s17, 3
    %p164 = por %p162, %p163
    %p166 = scmp.ne.s32.totalorder %s149, %s165
    %p167 = scmp.eq.s32.totalorder %s17, 0
    %p168 = por %p166, %p167
    %p169 = scmp.le.s32.totalorder 1, %s11
    %p170 = scmp.lt.s32.totalorder %s11, 5
    %p171 = pnand %p169, %p170
    %p172 = pneg %p171
    // Predicated region
    $region9: #{unet_generator_forward.31} parent=5 // pred_check
      _
    $region10: #{unet_generator_forward.31} parent=5 // pred_check_branch
      %174 = sbr.rel (%p171) target = $region12
    $region11: #{unet_generator_forward.31} parent=5 // pred_region
      %s175 = ssub.s32 %s11, 1
    $region12: #{unet_generator_forward.31} parent=5 // pred_fallthru
      _
    %p176 = scmp.lt.s32.totalorder %s11, 4
    // Predicated region
    $region13: #{unet_generator_forward.31} parent=5 // pred_check
      %p177 = pneg %p176
    $region14: #{unet_generator_forward.31} parent=5 // pred_check_branch
      %179 = sbr.rel (%p177) target = $region16
    $region15: #{unet_generator_forward.31} parent=5 // pred_region
      // Predicated region
      $region17: #{unet_generator_forward.31} parent=15 // pred_check
        %p180 = pneg %p45
      $region18: #{unet_generator_forward.31} parent=15 // pred_check_branch
        %182 = sbr.rel (%p180) target = $region20
      $region19: #{unet_generator_forward.31} parent=15 // pred_region
        %s183 = smul.u32 16, %s19
        %p184 = scmp.lt.s32.totalorder %s18, 3
        %s185 = scalar_select %p184, %s18, 3
        %p186 = scmp.lt.s32.totalorder %s183, 15
        %s187 = scalar_select %p186, %s183, 15
        %s188 = smul.addr %s185, 16
        %s189 = sadd.s32 %s187, %s188
        %s190 = smul.addr %s189, 4
        %s191 = scalar_lea.vmem %s0, %s190
        %s192 = smul.u32 16, %s19
      $region20: #{unet_generator_forward.31} parent=15 // pred_fallthru
        _
      // Predicated region
      $region21: #{unet_generator_forward.31} parent=15 // pred_check
        %p193 = pneg %p71
      $region22: #{unet_generator_forward.31} parent=15 // pred_check_branch
        %195 = sbr.rel (%p193) target = $region24
      $region23: #{unet_generator_forward.31} parent=15 // pred_region
        %p196 = scmp.lt.s32.totalorder %s18, 3
        %s197 = scalar_select %p196, %s18, 3
        %s198 = smul.addr %s197, 16
        %s199 = smul.addr %s198, 4
        %s200 = scalar_lea.vmem %s1, %s199
      $region24: #{unet_generator_forward.31} parent=15 // pred_fallthru
        _
    $region16: #{unet_generator_forward.31} parent=5 // pred_fallthru
      _
    %p201 = scmp.le.s32.totalorder 1, %s11
    %p202 = scmp.lt.s32.totalorder %s11, 5
    %p203 = pnand %p201, %p202
    %p204 = pneg %p203
    // Predicated region
    $region25: #{unet_generator_forward.31} parent=5 // pred_check
      _
    $region26: #{unet_generator_forward.31} parent=5 // pred_check_branch
      %206 = sbr.rel (%p203) target = $region28
    $region27: #{unet_generator_forward.31} parent=5 // pred_region
      %s207 = ssub.s32 %s11, 1
      %s208 = smul.u32 16, %s21
      %p209 = scmp.lt.s32.totalorder %s20, 3
      %s210 = scalar_select %p209, %s20, 3
      %p211 = scmp.lt.s32.totalorder %s208, 15
      %s212 = scalar_select %p211, %s208, 15
      %s213 = smul.addr %s210, 16
      %s214 = sadd.s32 %s212, %s213
      %s215 = smul.addr %s214, 4
      %s216 = scalar_lea.vmem %s0, %s215
      %p217 = pneg %p51
      %p218 = pneg %p48
      %p219 = scmp.lt.s32.totalorder %s20, 3
      %s220 = scalar_select %p219, %s20, 3
      %s221 = smul.addr %s220, 16
      %s222 = smul.addr %s221, 4
      %s223 = scalar_lea.vmem %s1, %s222
      %p224 = pneg %p77
      %p225 = pneg %p74
      %p226 = pneg %p105
      %p227 = pneg %p102
      %s228 = smul.u32 16, %s21
      %p229 = scmp.lt.s32.totalorder %s20, 3
      %s230 = scalar_select %p229, %s20, 3
      %p231 = scmp.lt.s32.totalorder %s228, 15
      %s232 = scalar_select %p231, %s228, 15
      %s233 = smul.addr %s230, 16
      %s234 = sadd.s32 %s232, %s233
      %s235 = smul.addr %s234, 4
      %s236 = scalar_lea.vmem %s2, %s235
      %p237 = pneg %p133
      %p238 = pneg %p130
      %p239 = scmp.lt.s32.totalorder %s20, 3
      %s240 = scalar_select %p239, %s20, 3
      %p241 = scmp.lt.s32.totalorder %s21, 0
      %s242 = scalar_select %p241, %s21, 0
      %s243 = sadd.s32 %s242, %s240
      %s244 = scalar_lea.vmem %s3, %s243
      %p245 = pneg %p161
      %p246 = pneg %p158
      %p247 = scmp.lt.s32.totalorder %s20, 3
      %s248 = scalar_select %p247, %s20, 3
      %p249 = scmp.lt.s32.totalorder %s21, 0
      %s250 = scalar_select %p249, %s21, 0
      %s251 = sadd.s32 %s250, %s248
      %s252 = scalar_lea.vmem %s4, %s251
      %s253 = smul.u32 16, %s21
      %p254 = scmp.lt.s32.totalorder %s20, 3
      %s255 = scalar_select %p254, %s20, 3
      %p256 = scmp.lt.s32.totalorder %s253, 15
      %s257 = scalar_select %p256, %s253, 15
      %s258 = smul.addr %s255, 16
      %s259 = sadd.s32 %s257, %s258
      %s260 = smul.addr %s259, 4
      %s261 = scalar_lea.vmem %s0, %s260
      %s262 = smul.u32 16, %s21
      %p263 = scmp.lt.s32.totalorder %s20, 3
      %s264 = scalar_select %p263, %s20, 3
      %s265 = smul.addr %s264, 16
      %s266 = smul.addr %s265, 4
      %s267 = scalar_lea.vmem %s1, %s266
      %s268 = smul.u32 16, %s21
      %p269 = scmp.lt.s32.totalorder %s20, 3
      %s270 = scalar_select %p269, %s20, 3
      %p271 = scmp.lt.s32.totalorder %s268, 15
      %s272 = scalar_select %p271, %s268, 15
      %s273 = smul.addr %s270, 16
      %s274 = sadd.s32 %s272, %s273
      %s275 = smul.addr %s274, 4
      %s276 = scalar_lea.vmem %s2, %s275
      %s277 = smul.u32 16, %s21
      %p278 = scmp.lt.s32.totalorder %s20, 3
      %s279 = scalar_select %p278, %s20, 3
      %p280 = scmp.lt.s32.totalorder %s21, 0
      %s281 = scalar_select %p280, %s21, 0
      %s282 = sadd.s32 %s281, %s279
      %s283 = scalar_lea.vmem %s3, %s282
      %p284 = scmp.lt.s32.totalorder %s20, 3
      %s285 = scalar_select %p284, %s20, 3
      %p286 = scmp.lt.s32.totalorder %s21, 0
      %s287 = scalar_select %p286, %s21, 0
      %s288 = sadd.s32 %s287, %s285
      %s289 = scalar_lea.vmem %s4, %s288
      %v290 = vld [vmem:[%s261] sm:$0xf]
      %v291 = vld [vmem:[%s261 + $0x4] sm:$0xf]
      %v292 = vld [vmem:[%s261 + $0x8] sm:$0xf]
      %v293 = vld [vmem:[%s261 + $0xc] sm:$0xf]
      %v294 = vld [vmem:[%s261 + $0x10] sm:$0xf]
      %v295 = vld [vmem:[%s261 + $0x14] sm:$0xf]
      %v296 = vld [vmem:[%s261 + $0x18] sm:$0xf]
      %v297 = vld [vmem:[%s261 + $0x1c] sm:$0xf]
      %v298 = vld [vmem:[%s261 + $0x20] sm:$0xf]
      %v299 = vld [vmem:[%s261 + $0x24] sm:$0xf]
      %v300 = vld [vmem:[%s261 + $0x28] sm:$0xf]
      %v301 = vld [vmem:[%s261 + $0x2c] sm:$0xf]
      %v302 = vld [vmem:[%s261 + $0x30] sm:$0xf]
      %v303 = vld [vmem:[%s261 + $0x34] sm:$0xf]
      %v304 = vld [vmem:[%s261 + $0x38] sm:$0xf]
      %v305 = vld [vmem:[%s261 + $0x3c] sm:$0xf]
      %v306 = vld [vmem:[%s267] sm:$0xf]
      %v307 = vld [vmem:[%s267 + $0x4] sm:$0xf]
      %v308 = vld [vmem:[%s267 + $0x8] sm:$0xf]
      %v309 = vld [vmem:[%s267 + $0xc] sm:$0xf]
      %v310 = vld [vmem:[%s267 + $0x10] sm:$0xf]
      %v311 = vld [vmem:[%s267 + $0x14] sm:$0xf]
      %v312 = vld [vmem:[%s267 + $0x18] sm:$0xf]
      %v313 = vld [vmem:[%s267 + $0x1c] sm:$0xf]
      %v314 = vld [vmem:[%s267 + $0x20] sm:$0xf]
      %v315 = vld [vmem:[%s267 + $0x24] sm:$0xf]
      %v316 = vld [vmem:[%s267 + $0x28] sm:$0xf]
      %v317 = vld [vmem:[%s267 + $0x2c] sm:$0xf]
      %v318 = vld [vmem:[%s267 + $0x30] sm:$0xf]
      %v319 = vld [vmem:[%s267 + $0x34] sm:$0xf]
      %v320 = vld [vmem:[%s267 + $0x38] sm:$0xf]
      %v321 = vld [vmem:[%s267 + $0x3c] sm:$0xf]
      %v338 = vunpack.c.l.b16 %v290
      %v339 = vunpack.c.l.b16 %v291
      %v340 = vunpack.c.l.b16 %v292
      %v341 = vunpack.c.l.b16 %v293
      %v342 = vunpack.c.l.b16 %v294
      %v343 = vunpack.c.l.b16 %v295
      %v344 = vunpack.c.l.b16 %v296
      %v345 = vunpack.c.l.b16 %v297
      %v346 = vunpack.c.l.b16 %v298
      %v347 = vunpack.c.l.b16 %v299
      %v348 = vunpack.c.l.b16 %v300
      %v349 = vunpack.c.l.b16 %v301
      %v350 = vunpack.c.l.b16 %v302
      %v351 = vunpack.c.l.b16 %v303
      %v352 = vunpack.c.l.b16 %v304
      %v353 = vunpack.c.l.b16 %v305
      %v354 = vpack.c.b16 %v339, %v338
      %v355 = vpack.c.b16 %v341, %v340
      %v356 = vpack.c.b16 %v343, %v342
      %v357 = vpack.c.b16 %v345, %v344
      %v358 = vpack.c.b16 %v347, %v346
      %v359 = vpack.c.b16 %v349, %v348
      %v360 = vpack.c.b16 %v351, %v350
      %v361 = vpack.c.b16 %v353, %v352
      %v386 = vunpack.c.l.b16 %v306
      %v387 = vunpack.c.l.b16 %v307
      %v388 = vunpack.c.l.b16 %v308
      %v389 = vunpack.c.l.b16 %v309
      %v390 = vunpack.c.l.b16 %v310
      %v391 = vunpack.c.l.b16 %v311
      %v392 = vunpack.c.l.b16 %v312
      %v393 = vunpack.c.l.b16 %v313
      %v394 = vunpack.c.l.b16 %v314
      %v395 = vunpack.c.l.b16 %v315
      %v396 = vunpack.c.l.b16 %v316
      %v397 = vunpack.c.l.b16 %v317
      %v398 = vunpack.c.l.b16 %v318
      %v399 = vunpack.c.l.b16 %v319
      %v400 = vunpack.c.l.b16 %v320
      %v401 = vunpack.c.l.b16 %v321
      %v402 = vpack.c.b16 %v387, %v386
      %v403 = vpack.c.b16 %v389, %v388
      %v404 = vpack.c.b16 %v391, %v390
      %v405 = vpack.c.b16 %v393, %v392
      %v406 = vpack.c.b16 %v395, %v394
      %v407 = vpack.c.b16 %v397, %v396
      %v408 = vpack.c.b16 %v399, %v398
      %v409 = vpack.c.b16 %v401, %v400
      %418 = vmatpush.bf16.msra.mxu0 %v409
      %419 = vmatpush.bf16.msra.mxu0 %v408
      %420 = vmatpush.bf16.msra.mxu0 %v407
      %421 = vmatpush.bf16.msra.mxu0 %v406
      %422 = vmatpush.bf16.msra.mxu0 %v405
      %423 = vmatpush.bf16.msra.mxu0 %v404
      %424 = vmatpush.bf16.msra.mxu0 %v403
      %425 = vmatpush.bf16.msra.mxu0 %v402
      %426 = vmatmul.bf16.gmra.mxu0 %v354
      %v427 = vpop.f32.mrf.mxu0
      %v428 = vadd.f32 0.0, %v427
      %v429 = vpop.f32.mrf.mxu0
      %v430 = vadd.f32 0.0, %v429
      %431 = vmatmul.bf16.gmra.mxu0 %v355
      %v432 = vpop.f32.mrf.mxu0
      %v433 = vadd.f32 0.0, %v432
      %v434 = vpop.f32.mrf.mxu0
      %v435 = vadd.f32 0.0, %v434
      %436 = vmatmul.bf16.gmra.mxu0 %v356
      %v437 = vpop.f32.mrf.mxu0
      %v438 = vadd.f32 0.0, %v437
      %v439 = vpop.f32.mrf.mxu0
      %v440 = vadd.f32 0.0, %v439
      %441 = vmatmul.bf16.gmra.mxu0 %v357
      %v442 = vpop.f32.mrf.mxu0
      %v443 = vadd.f32 0.0, %v442
      %v444 = vpop.f32.mrf.mxu0
      %v445 = vadd.f32 0.0, %v444
      %446 = vmatmul.bf16.gmra.mxu0 %v358
      %v447 = vpop.f32.mrf.mxu0
      %v448 = vadd.f32 0.0, %v447
      %v449 = vpop.f32.mrf.mxu0
      %v450 = vadd.f32 0.0, %v449
      %451 = vmatmul.bf16.gmra.mxu0 %v359
      %v452 = vpop.f32.mrf.mxu0
      %v453 = vadd.f32 0.0, %v452
      %v454 = vpop.f32.mrf.mxu0
      %v455 = vadd.f32 0.0, %v454
      %456 = vmatmul.bf16.gmra.mxu0 %v360
      %v457 = vpop.f32.mrf.mxu0
      %v458 = vadd.f32 0.0, %v457
      %v459 = vpop.f32.mrf.mxu0
      %v460 = vadd.f32 0.0, %v459
      %461 = vmatmul.bf16.gmra.mxu0 %v361
      %v462 = vpop.f32.mrf.mxu0
      %v463 = vadd.f32 0.0, %v462
      %v464 = vpop.f32.mrf.mxu0
      %v465 = vadd.f32 0.0, %v464
      %466 = vdwg.mxu0
      %v467 = vadd.f32 %v428, %v430
      %v468 = vadd.f32 %v467, %v433
      %v469 = vadd.f32 %v468, %v435
      %v470 = vadd.f32 %v469, %v438
      %v471 = vadd.f32 %v470, %v440
      %v472 = vadd.f32 %v471, %v443
      %v473 = vadd.f32 %v472, %v445
      %v474 = vadd.f32 %v473, %v448
      %v475 = vadd.f32 %v474, %v450
      %v476 = vadd.f32 %v475, %v453
      %v477 = vadd.f32 %v476, %v455
      %v478 = vadd.f32 %v477, %v458
      %v479 = vadd.f32 %v478, %v460
      %v480 = vadd.f32 %v479, %v463
      %v481 = vadd.f32 %v480, %v465
      %v482 = vrot.slane %v481, 4
      %v483 = vadd.f32 %v481, %v482
      %v484 = vrot.slane %v483, 2
      %v485 = vadd.f32 %v483, %v484
      %v486 = vrot.slane %v485, 1
      %v487 = vadd.f32 %v485, %v486
      %488 = vst [vmem:[%s283] sm:$0x1] %v487
      %v489 = vmul.f32 %v428, %v428
      %v490 = vmul.f32 %v430, %v430
      %v491 = vmul.f32 %v433, %v433
      %v492 = vmul.f32 %v435, %v435
      %v493 = vmul.f32 %v438, %v438
      %v494 = vmul.f32 %v440, %v440
      %v495 = vmul.f32 %v443, %v443
      %v496 = vmul.f32 %v445, %v445
      %v497 = vmul.f32 %v448, %v448
      %v498 = vmul.f32 %v450, %v450
      %v499 = vmul.f32 %v453, %v453
      %v500 = vmul.f32 %v455, %v455
      %v501 = vmul.f32 %v458, %v458
      %v502 = vmul.f32 %v460, %v460
      %v503 = vmul.f32 %v463, %v463
      %v504 = vmul.f32 %v465, %v465
      %v505 = vadd.f32 %v489, %v490
      %v506 = vadd.f32 %v505, %v491
      %v507 = vadd.f32 %v506, %v492
      %v508 = vadd.f32 %v507, %v493
      %v509 = vadd.f32 %v508, %v494
      %v510 = vadd.f32 %v509, %v495
      %v511 = vadd.f32 %v510, %v496
      %v512 = vadd.f32 %v511, %v497
      %v513 = vadd.f32 %v512, %v498
      %v514 = vadd.f32 %v513, %v499
      %v515 = vadd.f32 %v514, %v500
      %v516 = vadd.f32 %v515, %v501
      %v517 = vadd.f32 %v516, %v502
      %v518 = vadd.f32 %v517, %v503
      %v519 = vadd.f32 %v518, %v504
      %v520 = vrot.slane %v519, 4
      %v521 = vadd.f32 %v519, %v520
      %v522 = vrot.slane %v521, 2
      %v523 = vadd.f32 %v521, %v522
      %v524 = vrot.slane %v523, 1
      %v525 = vadd.f32 %v523, %v524
      %526 = vst [vmem:[%s289] sm:$0x1] %v525
      %v527 = vpack.c.bf16 %v428, %v428
      %v528 = vpack.c.bf16 %v430, %v430
      %v529 = vpack.c.bf16 %v433, %v433
      %v530 = vpack.c.bf16 %v435, %v435
      %v531 = vpack.c.bf16 %v438, %v438
      %v532 = vpack.c.bf16 %v440, %v440
      %v533 = vpack.c.bf16 %v443, %v443
      %v534 = vpack.c.bf16 %v445, %v445
      %v535 = vpack.c.bf16 %v448, %v448
      %v536 = vpack.c.bf16 %v450, %v450
      %v537 = vpack.c.bf16 %v453, %v453
      %v538 = vpack.c.bf16 %v455, %v455
      %v539 = vpack.c.bf16 %v458, %v458
      %v540 = vpack.c.bf16 %v460, %v460
      %v541 = vpack.c.bf16 %v463, %v463
      %v542 = vpack.c.bf16 %v465, %v465
      %543 = vst [vmem:[%s276] sm:$0xf] %v527
      %544 = vst [vmem:[%s276 + $0x4] sm:$0xf] %v528
      %545 = vst [vmem:[%s276 + $0x8] sm:$0xf] %v529
      %546 = vst [vmem:[%s276 + $0xc] sm:$0xf] %v530
      %547 = vst [vmem:[%s276 + $0x10] sm:$0xf] %v531
      %548 = vst [vmem:[%s276 + $0x14] sm:$0xf] %v532
      %549 = vst [vmem:[%s276 + $0x18] sm:$0xf] %v533
      %550 = vst [vmem:[%s276 + $0x1c] sm:$0xf] %v534
      %551 = vst [vmem:[%s276 + $0x20] sm:$0xf] %v535
      %552 = vst [vmem:[%s276 + $0x24] sm:$0xf] %v536
      %553 = vst [vmem:[%s276 + $0x28] sm:$0xf] %v537
      %554 = vst [vmem:[%s276 + $0x2c] sm:$0xf] %v538
      %555 = vst [vmem:[%s276 + $0x30] sm:$0xf] %v539
      %556 = vst [vmem:[%s276 + $0x34] sm:$0xf] %v540
      %557 = vst [vmem:[%s276 + $0x38] sm:$0xf] %v541
      %558 = vst [vmem:[%s276 + $0x3c] sm:$0xf] %v542
      %s559 = smul.u32 16, %s21
      %p560 = scmp.lt.s32.totalorder %s20, 3
      %s561 = scalar_select %p560, %s20, 3
      %p562 = scmp.lt.s32.totalorder %s559, 15
      %s563 = scalar_select %p562, %s559, 15
      %s564 = smul.addr %s561, 16
      %s565 = sadd.s32 %s563, %s564
      %s566 = smul.addr %s565, 4
      %s567 = scalar_lea.vmem %s2, %s566
      %p568 = scmp.lt.s32.totalorder %s20, 3
      %s569 = scalar_select %p568, %s20, 3
      %p570 = scmp.lt.s32.totalorder %s21, 0
      %s571 = scalar_select %p570, %s21, 0
      %s572 = sadd.s32 %s571, %s569
      %s573 = scalar_lea.vmem %s3, %s572
      %p574 = scmp.lt.s32.totalorder %s20, 3
      %s575 = scalar_select %p574, %s20, 3
      %p576 = scmp.lt.s32.totalorder %s21, 0
      %s577 = scalar_select %p576, %s21, 0
      %s578 = sadd.s32 %s577, %s575
      %s579 = scalar_lea.vmem %s4, %s578
      // Predicated region
      $region29: #{unet_generator_forward.31} parent=27 // pred_check
        %p580 = pneg %p102
      $region30: #{unet_generator_forward.31} parent=27 // pred_check_branch
        %582 = sbr.rel (%p580) target = $region32
      $region31: #{unet_generator_forward.31} parent=27 // pred_region
        %s583 = smul.u32 16, %s21
      $region32: #{unet_generator_forward.31} parent=27 // pred_fallthru
        _
      // Predicated region
      $region33: #{unet_generator_forward.31} parent=27 // pred_check
        %p584 = pneg %p130
      $region34: #{unet_generator_forward.31} parent=27 // pred_check_branch
        %586 = sbr.rel (%p584) target = $region36
      $region35: #{unet_generator_forward.31} parent=27 // pred_region
        _
      $region36: #{unet_generator_forward.31} parent=27 // pred_fallthru
        _
      // Predicated region
      $region37: #{unet_generator_forward.31} parent=27 // pred_check
        %p587 = pneg %p158
      $region38: #{unet_generator_forward.31} parent=27 // pred_check_branch
        %589 = sbr.rel (%p587) target = $region40
      $region39: #{unet_generator_forward.31} parent=27 // pred_region
        _
      $region40: #{unet_generator_forward.31} parent=27 // pred_fallthru
        _
    $region28: #{unet_generator_forward.31} parent=5 // pred_fallthru
      _
    %p590 = scmp.le.s32.totalorder 2, %s11
    // Predicated region
    $region41: #{unet_generator_forward.31} parent=5 // pred_check
      %p591 = pneg %p590
    $region42: #{unet_generator_forward.31} parent=5 // pred_check_branch
      %593 = sbr.rel (%p591) target = $region44
    $region43: #{unet_generator_forward.31} parent=5 // pred_region
      %s594 = ssub.s32 %s11, 2
      // Predicated region
      $region45: #{unet_generator_forward.31} parent=43 // pred_check
        %p595 = pneg %p108
      $region46: #{unet_generator_forward.31} parent=43 // pred_check_branch
        %597 = sbr.rel (%p595) target = $region48
      $region47: #{unet_generator_forward.31} parent=43 // pred_region
        %s598 = smul.u32 16, %s23
        %p599 = scmp.lt.s32.totalorder %s22, 3
        %s600 = scalar_select %p599, %s22, 3
        %p601 = scmp.lt.s32.totalorder %s598, 15
        %s602 = scalar_select %p601, %s598, 15
        %s603 = smul.addr %s600, 16
        %s604 = sadd.s32 %s602, %s603
        %s605 = smul.addr %s604, 4
        %s606 = scalar_lea.vmem %s2, %s605
      $region48: #{unet_generator_forward.31} parent=43 // pred_fallthru
        _
      // Predicated region
      $region49: #{unet_generator_forward.31} parent=43 // pred_check
        %p607 = pneg %p136
      $region50: #{unet_generator_forward.31} parent=43 // pred_check_branch
        %609 = sbr.rel (%p607) target = $region52
      $region51: #{unet_generator_forward.31} parent=43 // pred_region
        %p610 = scmp.lt.s32.totalorder %s22, 3
        %s611 = scalar_select %p610, %s22, 3
        %p612 = scmp.lt.s32.totalorder %s23, 0
        %s613 = scalar_select %p612, %s23, 0
        %s614 = sadd.s32 %s613, %s611
        %s615 = scalar_lea.vmem %s3, %s614
      $region52: #{unet_generator_forward.31} parent=43 // pred_fallthru
        _
      // Predicated region
      $region53: #{unet_generator_forward.31} parent=43 // pred_check
        %p616 = pneg %p164
      $region54: #{unet_generator_forward.31} parent=43 // pred_check_branch
        %618 = sbr.rel (%p616) target = $region56
      $region55: #{unet_generator_forward.31} parent=43 // pred_region
        %p619 = scmp.lt.s32.totalorder %s22, 3
        %s620 = scalar_select %p619, %s22, 3
        %p621 = scmp.lt.s32.totalorder %s23, 0
        %s622 = scalar_select %p621, %s23, 0
        %s623 = sadd.s32 %s622, %s620
        %s624 = scalar_lea.vmem %s4, %s623
      $region56: #{unet_generator_forward.31} parent=43 // pred_fallthru
        _
    $region44: #{unet_generator_forward.31} parent=5 // pred_fallthru
      _
  $region6: #{unet_generator_forward.31} parent=0 // loop_footer
    %s15 = sadd.s32 1, %s11
  $region7: #{unet_generator_forward.31} parent=0 // loop_footer_branch
    %10 = sbr.rel target = $region3
  $region8: #{unet_generator_forward.31} parent=0 // loop_exit
    _

// kernel: unet_generator_forward.33
$region0: #{unet_generator_forward.33}
  #allocation0 [shape = 'u32[]', space=smem, size = 0x4, offset = 0x4, fixed_abs, tag = 'smem constant byte address 0x4 - core index']
  #allocation1 [shape = 'u32[72,128]{1,0:T(1,128)}', space=vmem, size = 0x9000, scoped, tag = 'internal scratch']
  %s0 = inlined_call_operand.vmem [shape: bf16[4,512,128], index: 0, kind: input, shape index: {}]
  %s1 = inlined_call_operand.vmem [shape: bf16[4,128,128], index: 1, kind: input, shape index: {}]
  %s2 = inlined_call_operand.vmem [shape: f32[1,128], index: 2, kind: input, shape index: {}]
  %s3 = inlined_call_operand.vmem [shape: f32[4,512,128], index: 3, kind: output, shape index: {}]
  %s4 = sld [smem:[#allocation0]]
  $region45: #{unet_generator_forward.33} parent=0
    _
  %s6 = ssub.s32 1, %s4
  %s7 = scalar_select 0, %s6, %s4
  loop: start=0, step=1, limit=6
  $region2: #{unet_generator_forward.33} parent=0 // loop_pre_header
    _
  $region3: #{unet_generator_forward.33} parent=0 // loop_header
    %s9 = sphi 0, %s13
    %p10 = scmp.ge.s32.totalorder %s9, 6
    %s16 = sphi 0, %s28
    %s17 = sphi 0, %s24
    %s18 = sphi 0, %s16
    %s19 = sphi 0, %s17
    %s20 = sphi 0, %s18
    %s21 = sphi 0, %s19
    %s33 = sphi 0, %s35
    %s36 = sphi 0, %s33
    %s37 = sphi 0, %s36
    %s53 = sphi 0, %s37
    %s59 = sphi 0, %s61
    %s62 = sphi 0, %s59
    %s63 = sphi 0, %s62
    %s79 = sphi 0, %s63
    %s83 = sphi 0, %s83
    %s85 = sphi 0, %s83
    %s86 = sphi 0, %s85
    %s100 = sphi 0, %s86
    %s108 = sphi 0, %s110
    %s111 = sphi 0, %s108
    %s112 = sphi 0, %s111
    %s128 = sphi 0, %s112
  $region4: #{unet_generator_forward.33} parent=0 // loop_header_branch
    %12 = sbr.rel (%p10) target = $region8
  $region5: #{unet_generator_forward.33} parent=0 // loop_body
    %s14 = ssub.s32 %s9, 1
    %s15 = ssub.s32 %s9, 2
    %s22 = sadd.s32 1, %s17
    %p23 = scmp.ge.s32.totalorder %s22, 1
    %s24 = scalar_select %p23, 0, %s22
    %s25 = sadd.s32 1, %s16
    %s26 = scalar_select %p23, %s25, %s16
    %p27 = scmp.ge.s32.totalorder %s26, 4
    %s28 = scalar_select %p27, 0, %s26
    %s29 = ssub.s32 %s16, %s28
    %s30 = ssub.s32 %s17, %s24
    %s31 = sor.u32 %s29, %s30
    %p32 = scmp.eq.s32.totalorder %s31, 0
    %s34 = sadd.s32 %s33, 1
    %s35 = scalar_select %p32, %s33, %s34
    %p38 = pneg %p32
    %p39 = scmp.eq.s32.totalorder %s9, 3
    %p40 = por %p38, %p39
    %p41 = scmp.ne.s32.totalorder %s33, %s36
    %p42 = scmp.eq.s32.totalorder %s9, 0
    %p43 = por %p41, %p42
    %p44 = scmp.ne.s32.totalorder %s33, %s36
    %p45 = scmp.eq.s32.totalorder %s14, 3
    %p46 = por %p44, %p45
    %p47 = scmp.ne.s32.totalorder %s36, %s37
    %p48 = scmp.eq.s32.totalorder %s14, 0
    %p49 = por %p47, %p48
    %p50 = scmp.ne.s32.totalorder %s36, %s37
    %p51 = scmp.eq.s32.totalorder %s15, 3
    %p52 = por %p50, %p51
    %p54 = scmp.ne.s32.totalorder %s37, %s53
    %p55 = scmp.eq.s32.totalorder %s15, 0
    %p56 = por %p54, %p55
    %s57 = ssub.s32 %s16, %s28
    %p58 = scmp.eq.s32.totalorder %s57, 0
    %s60 = sadd.s32 %s59, 1
    %s61 = scalar_select %p58, %s59, %s60
    %p64 = pneg %p58
    %p65 = scmp.eq.s32.totalorder %s9, 3
    %p66 = por %p64, %p65
    %p67 = scmp.ne.s32.totalorder %s59, %s62
    %p68 = scmp.eq.s32.totalorder %s9, 0
    %p69 = por %p67, %p68
    %p70 = scmp.ne.s32.totalorder %s59, %s62
    %p71 = scmp.eq.s32.totalorder %s14, 3
    %p72 = por %p70, %p71
    %p73 = scmp.ne.s32.totalorder %s62, %s63
    %p74 = scmp.eq.s32.totalorder %s14, 0
    %p75 = por %p73, %p74
    %p76 = scmp.ne.s32.totalorder %s62, %s63
    %p77 = scmp.eq.s32.totalorder %s15, 3
    %p78 = por %p76, %p77
    %p80 = scmp.ne.s32.totalorder %s63, %s79
    %p81 = scmp.eq.s32.totalorder %s15, 0
    %p82 = por %p80, %p81
    %s84 = sadd.s32 %s83, 1
    %p87 = scmp.eq.s32.totalorder %s9, 3
    %p88 = scmp.ne.s32.totalorder %s83, %s85
    %p89 = scmp.eq.s32.totalorder %s9, 0
    %p90 = por %p88, %p89
    %p91 = scmp.ne.s32.totalorder %s83, %s85
    %p92 = scmp.eq.s32.totalorder %s14, 3
    %p93 = por %p91, %p92
    %p94 = scmp.ne.s32.totalorder %s85, %s86
    %p95 = scmp.eq.s32.totalorder %s14, 0
    %p96 = por %p94, %p95
    %p97 = scmp.ne.s32.totalorder %s85, %s86
    %p98 = scmp.eq.s32.totalorder %s15, 3
    %p99 = por %p97, %p98
    %p101 = scmp.ne.s32.totalorder %s86, %s100
    %p102 = scmp.eq.s32.totalorder %s15, 0
    %p103 = por %p101, %p102
    %s104 = ssub.s32 %s16, %s28
    %s105 = ssub.s32 %s17, %s24
    %s106 = sor.u32 %s104, %s105
    %p107 = scmp.eq.s32.totalorder %s106, 0
    %s109 = sadd.s32 %s108, 1
    %s110 = scalar_select %p107, %s108, %s109
    %p113 = pneg %p107
    %p114 = scmp.eq.s32.totalorder %s9, 3
    %p115 = por %p113, %p114
    %p116 = scmp.ne.s32.totalorder %s108, %s111
    %p117 = scmp.eq.s32.totalorder %s9, 0
    %p118 = por %p116, %p117
    %p119 = scmp.ne.s32.totalorder %s108, %s111
    %p120 = scmp.eq.s32.totalorder %s14, 3
    %p121 = por %p119, %p120
    %p122 = scmp.ne.s32.totalorder %s111, %s112
    %p123 = scmp.eq.s32.totalorder %s14, 0
    %p124 = por %p122, %p123
    %p125 = scmp.ne.s32.totalorder %s111, %s112
    %p126 = scmp.eq.s32.totalorder %s15, 3
    %p127 = por %p125, %p126
    %p129 = scmp.ne.s32.totalorder %s112, %s128
    %p130 = scmp.eq.s32.totalorder %s15, 0
    %p131 = por %p129, %p130
    %p132 = scmp.le.s32.totalorder 1, %s9
    %p133 = scmp.lt.s32.totalorder %s9, 5
    %p134 = pnand %p132, %p133
    %p135 = pneg %p134
    // Predicated region
    $region9: #{unet_generator_forward.33} parent=5 // pred_check
      _
    $region10: #{unet_generator_forward.33} parent=5 // pred_check_branch
      %137 = sbr.rel (%p134) target = $region12
    $region11: #{unet_generator_forward.33} parent=5 // pred_region
      %s138 = ssub.s32 %s9, 1
      // Predicated region
      $region13: #{unet_generator_forward.33} parent=11 // pred_check
        %p139 = pneg %p96
      $region14: #{unet_generator_forward.33} parent=11 // pred_check_branch
        %141 = sbr.rel (%p139) target = $region16
      $region15: #{unet_generator_forward.33} parent=11 // pred_region
        _
      $region16: #{unet_generator_forward.33} parent=11 // pred_fallthru
        _
    $region12: #{unet_generator_forward.33} parent=5 // pred_fallthru
      _
    %p142 = scmp.lt.s32.totalorder %s9, 4
    // Predicated region
    $region17: #{unet_generator_forward.33} parent=5 // pred_check
      %p143 = pneg %p142
    $region18: #{unet_generator_forward.33} parent=5 // pred_check_branch
      %145 = sbr.rel (%p143) target = $region20
    $region19: #{unet_generator_forward.33} parent=5 // pred_region
      // Predicated region
      $region21: #{unet_generator_forward.33} parent=19 // pred_check
        %p146 = pneg %p43
      $region22: #{unet_generator_forward.33} parent=19 // pred_check_branch
        %148 = sbr.rel (%p146) target = $region24
      $region23: #{unet_generator_forward.33} parent=19 // pred_region
        %s149 = smul.u32 64, %s17
        %p150 = scmp.lt.s32.totalorder %s16, 3
        %s151 = scalar_select %p150, %s16, 3
        %p152 = scmp.lt.s32.totalorder %s149, 63
        %s153 = scalar_select %p152, %s149, 63
        %s154 = smul.addr %s151, 64
        %s155 = sadd.s32 %s153, %s154
        %s156 = smul.addr %s155, 4
        %s157 = scalar_lea.vmem %s0, %s156
        %s158 = smul.u32 64, %s17
      $region24: #{unet_generator_forward.33} parent=19 // pred_fallthru
        _
      // Predicated region
      $region25: #{unet_generator_forward.33} parent=19 // pred_check
        %p159 = pneg %p69
      $region26: #{unet_generator_forward.33} parent=19 // pred_check_branch
        %161 = sbr.rel (%p159) target = $region28
      $region27: #{unet_generator_forward.33} parent=19 // pred_region
        %p162 = scmp.lt.s32.totalorder %s16, 3
        %s163 = scalar_select %p162, %s16, 3
        %s164 = smul.addr %s163, 16
        %s165 = smul.addr %s164, 4
        %s166 = scalar_lea.vmem %s1, %s165
      $region28: #{unet_generator_forward.33} parent=19 // pred_fallthru
        _
    $region20: #{unet_generator_forward.33} parent=5 // pred_fallthru
      _
    %p167 = scmp.le.s32.totalorder 1, %s9
    %p168 = scmp.lt.s32.totalorder %s9, 5
    %p169 = pnand %p167, %p168
    %p170 = pneg %p169
    // Predicated region
    $region29: #{unet_generator_forward.33} parent=5 // pred_check
      _
    $region30: #{unet_generator_forward.33} parent=5 // pred_check_branch
      %172 = sbr.rel (%p169) target = $region32
    $region31: #{unet_generator_forward.33} parent=5 // pred_region
      %s173 = ssub.s32 %s9, 1
      %s174 = smul.u32 64, %s19
      %p175 = scmp.lt.s32.totalorder %s18, 3
      %s176 = scalar_select %p175, %s18, 3
      %p177 = scmp.lt.s32.totalorder %s174, 63
      %s178 = scalar_select %p177, %s174, 63
      %s179 = smul.addr %s176, 64
      %s180 = sadd.s32 %s178, %s179
      %s181 = smul.addr %s180, 4
      %s182 = scalar_lea.vmem %s0, %s181
      %p183 = pneg %p49
      %p184 = pneg %p46
      %p185 = scmp.lt.s32.totalorder %s18, 3
      %s186 = scalar_select %p185, %s18, 3
      %s187 = smul.addr %s186, 16
      %s188 = smul.addr %s187, 4
      %s189 = scalar_lea.vmem %s1, %s188
      %p190 = pneg %p75
      %p191 = pneg %p72
      %p192 = pneg %p96
      %p193 = pneg %p93
      %p194 = pneg %p124
      %p195 = pneg %p121
      %s196 = smul.u32 64, %s19
      %p197 = scmp.lt.s32.totalorder %s18, 3
      %s198 = scalar_select %p197, %s18, 3
      %p199 = scmp.lt.s32.totalorder %s196, 63
      %s200 = scalar_select %p199, %s196, 63
      %s201 = smul.addr %s198, 64
      %s202 = sadd.s32 %s200, %s201
      %s203 = smul.addr %s202, 8
      %s204 = scalar_lea.vmem %s3, %s203
      %s205 = smul.u32 64, %s19
      %p206 = scmp.lt.s32.totalorder %s18, 3
      %s207 = scalar_select %p206, %s18, 3
      %p208 = scmp.lt.s32.totalorder %s205, 63
      %s209 = scalar_select %p208, %s205, 63
      %s210 = smul.addr %s207, 64
      %s211 = sadd.s32 %s209, %s210
      %s212 = smul.addr %s211, 4
      %s213 = scalar_lea.vmem %s0, %s212
      %s214 = smul.u32 64, %s19
      %p215 = scmp.lt.s32.totalorder %s18, 3
      %s216 = scalar_select %p215, %s18, 3
      %s217 = smul.addr %s216, 16
      %s218 = smul.addr %s217, 4
      %s219 = scalar_lea.vmem %s1, %s218
      %s220 = smul.u32 64, %s19
      %p221 = scmp.lt.s32.totalorder %s18, 3
      %s222 = scalar_select %p221, %s18, 3
      %p223 = scmp.lt.s32.totalorder %s220, 63
      %s224 = scalar_select %p223, %s220, 63
      %s225 = smul.addr %s222, 64
      %s226 = sadd.s32 %s224, %s225
      %s227 = smul.addr %s226, 8
      %s228 = scalar_lea.vmem %s3, %s227
      %s229 = smul.u32 64, %s19
      %v230 = vld [vmem:[%s213] sm:$0xf]
      %v231 = vld [vmem:[%s213 + $0x4] sm:$0xf]
      %v232 = vld [vmem:[%s213 + $0x8] sm:$0xf]
      %v233 = vld [vmem:[%s213 + $0xc] sm:$0xf]
      %v234 = vld [vmem:[%s213 + $0x10] sm:$0xf]
      %v235 = vld [vmem:[%s213 + $0x14] sm:$0xf]
      %v236 = vld [vmem:[%s213 + $0x18] sm:$0xf]
      %v237 = vld [vmem:[%s213 + $0x1c] sm:$0xf]
      %v238 = vld [vmem:[%s213 + $0x20] sm:$0xf]
      %v239 = vld [vmem:[%s213 + $0x24] sm:$0xf]
      %v240 = vld [vmem:[%s213 + $0x28] sm:$0xf]
      %v241 = vld [vmem:[%s213 + $0x2c] sm:$0xf]
      %v242 = vld [vmem:[%s213 + $0x30] sm:$0xf]
      %v243 = vld [vmem:[%s213 + $0x34] sm:$0xf]
      %v244 = vld [vmem:[%s213 + $0x38] sm:$0xf]
      %v245 = vld [vmem:[%s213 + $0x3c] sm:$0xf]
      %v246 = vld [vmem:[%s213 + $0x40] sm:$0xf]
      %v247 = vld [vmem:[%s213 + $0x44] sm:$0xf]
      %v248 = vld [vmem:[%s213 + $0x48] sm:$0xf]
      %v249 = vld [vmem:[%s213 + $0x4c] sm:$0xf]
      %v250 = vld [vmem:[%s213 + $0x50] sm:$0xf]
      %v251 = vld [vmem:[%s213 + $0x54] sm:$0xf]
      %v252 = vld [vmem:[%s213 + $0x58] sm:$0xf]
      %v253 = vld [vmem:[%s213 + $0x5c] sm:$0xf]
      %v254 = vld [vmem:[%s213 + $0x60] sm:$0xf]
      %v255 = vld [vmem:[%s213 + $0x64] sm:$0xf]
      %v256 = vld [vmem:[%s213 + $0x68] sm:$0xf]
      %v257 = vld [vmem:[%s213 + $0x6c] sm:$0xf]
      %v258 = vld [vmem:[%s213 + $0x70] sm:$0xf]
      %v259 = vld [vmem:[%s213 + $0x74] sm:$0xf]
      %v260 = vld [vmem:[%s213 + $0x78] sm:$0xf]
      %v261 = vld [vmem:[%s213 + $0x7c] sm:$0xf]
      %v262 = vld [vmem:[%s213 + $0x80] sm:$0xf]
      %v263 = vld [vmem:[%s213 + $0x84] sm:$0xf]
      %v264 = vld [vmem:[%s213 + $0x88] sm:$0xf]
      %v265 = vld [vmem:[%s213 + $0x8c] sm:$0xf]
      %v266 = vld [vmem:[%s213 + $0x90] sm:$0xf]
      %v267 = vld [vmem:[%s213 + $0x94] sm:$0xf]
      %v268 = vld [vmem:[%s213 + $0x98] sm:$0xf]
      %v269 = vld [vmem:[%s213 + $0x9c] sm:$0xf]
      %v270 = vld [vmem:[%s213 + $0xa0] sm:$0xf]
      %v271 = vld [vmem:[%s213 + $0xa4] sm:$0xf]
      %v272 = vld [vmem:[%s213 + $0xa8] sm:$0xf]
      %v273 = vld [vmem:[%s213 + $0xac] sm:$0xf]
      %v274 = vld [vmem:[%s213 + $0xb0] sm:$0xf]
      %v275 = vld [vmem:[%s213 + $0xb4] sm:$0xf]
      %v276 = vld [vmem:[%s213 + $0xb8] sm:$0xf]
      %v277 = vld [vmem:[%s213 + $0xbc] sm:$0xf]
      %v278 = vld [vmem:[%s213 + $0xc0] sm:$0xf]
      %v279 = vld [vmem:[%s213 + $0xc4] sm:$0xf]
      %v280 = vld [vmem:[%s213 + $0xc8] sm:$0xf]
      %v281 = vld [vmem:[%s213 + $0xcc] sm:$0xf]
      %v282 = vld [vmem:[%s213 + $0xd0] sm:$0xf]
      %v283 = vld [vmem:[%s213 + $0xd4] sm:$0xf]
      %v284 = vld [vmem:[%s213 + $0xd8] sm:$0xf]
      %v285 = vld [vmem:[%s213 + $0xdc] sm:$0xf]
      %v286 = vld [vmem:[%s213 + $0xe0] sm:$0xf]
      %v287 = vld [vmem:[%s213 + $0xe4] sm:$0xf]
      %v288 = vld [vmem:[%s213 + $0xe8] sm:$0xf]
      %v289 = vld [vmem:[%s213 + $0xec] sm:$0xf]
      %v290 = vld [vmem:[%s213 + $0xf0] sm:$0xf]
      %v291 = vld [vmem:[%s213 + $0xf4] sm:$0xf]
      %v292 = vld [vmem:[%s213 + $0xf8] sm:$0xf]
      %v293 = vld [vmem:[%s213 + $0xfc] sm:$0xf]
      %v294 = vld [vmem:[%s219] sm:$0xf]
      %v295 = vld [vmem:[%s219 + $0x4] sm:$0xf]
      %v296 = vld [vmem:[%s219 + $0x8] sm:$0xf]
      %v297 = vld [vmem:[%s219 + $0xc] sm:$0xf]
      %v298 = vld [vmem:[%s219 + $0x10] sm:$0xf]
      %v299 = vld [vmem:[%s219 + $0x14] sm:$0xf]
      %v300 = vld [vmem:[%s219 + $0x18] sm:$0xf]
      %v301 = vld [vmem:[%s219 + $0x1c] sm:$0xf]
      %v302 = vld [vmem:[%s219 + $0x20] sm:$0xf]
      %v303 = vld [vmem:[%s219 + $0x24] sm:$0xf]
      %v304 = vld [vmem:[%s219 + $0x28] sm:$0xf]
      %v305 = vld [vmem:[%s219 + $0x2c] sm:$0xf]
      %v306 = vld [vmem:[%s219 + $0x30] sm:$0xf]
      %v307 = vld [vmem:[%s219 + $0x34] sm:$0xf]
      %v308 = vld [vmem:[%s219 + $0x38] sm:$0xf]
      %v309 = vld [vmem:[%s219 + $0x3c] sm:$0xf]
      %v310 = vld [vmem:[%s2] sm:$0x1]
      %v312 = vperm.slane %v310, 0
      %v378 = vunpack.c.l.b16 %v230
      %v379 = vunpack.c.l.b16 %v231
      %v380 = vunpack.c.l.b16 %v232
      %v381 = vunpack.c.l.b16 %v233
      %v382 = vunpack.c.l.b16 %v234
      %v383 = vunpack.c.l.b16 %v235
      %v384 = vunpack.c.l.b16 %v236
      %v385 = vunpack.c.l.b16 %v237
      %v386 = vunpack.c.l.b16 %v238
      %v387 = vunpack.c.l.b16 %v239
      %v388 = vunpack.c.l.b16 %v240
      %v389 = vunpack.c.l.b16 %v241
      %v390 = vunpack.c.l.b16 %v242
      %v391 = vunpack.c.l.b16 %v243
      %v392 = vunpack.c.l.b16 %v244
      %v393 = vunpack.c.l.b16 %v245
      %v394 = vunpack.c.l.b16 %v246
      %v395 = vunpack.c.l.b16 %v247
      %v396 = vunpack.c.l.b16 %v248
      %v397 = vunpack.c.l.b16 %v249
      %v398 = vunpack.c.l.b16 %v250
      %v399 = vunpack.c.l.b16 %v251
      %v400 = vunpack.c.l.b16 %v252
      %v401 = vunpack.c.l.b16 %v253
      %v402 = vunpack.c.l.b16 %v254
      %v403 = vunpack.c.l.b16 %v255
      %v404 = vunpack.c.l.b16 %v256
      %v405 = vunpack.c.l.b16 %v257
      %v406 = vunpack.c.l.b16 %v258
      %v407 = vunpack.c.l.b16 %v259
      %v408 = vunpack.c.l.b16 %v260
      %v409 = vunpack.c.l.b16 %v261
      %v410 = vunpack.c.l.b16 %v262
      %v411 = vunpack.c.l.b16 %v263
      %v412 = vunpack.c.l.b16 %v264
      %v413 = vunpack.c.l.b16 %v265
      %v414 = vunpack.c.l.b16 %v266
      %v415 = vunpack.c.l.b16 %v267
      %v416 = vunpack.c.l.b16 %v268
      %v417 = vunpack.c.l.b16 %v269
      %v418 = vunpack.c.l.b16 %v270
      %v419 = vunpack.c.l.b16 %v271
      %v420 = vunpack.c.l.b16 %v272
      %v421 = vunpack.c.l.b16 %v273
      %v422 = vunpack.c.l.b16 %v274
      %v423 = vunpack.c.l.b16 %v275
      %v424 = vunpack.c.l.b16 %v276
      %v425 = vunpack.c.l.b16 %v277
      %v426 = vunpack.c.l.b16 %v278
      %v427 = vunpack.c.l.b16 %v279
      %v428 = vunpack.c.l.b16 %v280
      %v429 = vunpack.c.l.b16 %v281
      %v430 = vunpack.c.l.b16 %v282
      %v431 = vunpack.c.l.b16 %v283
      %v432 = vunpack.c.l.b16 %v284
      %v433 = vunpack.c.l.b16 %v285
      %v434 = vunpack.c.l.b16 %v286
      %v435 = vunpack.c.l.b16 %v287
      %v436 = vunpack.c.l.b16 %v288
      %v437 = vunpack.c.l.b16 %v289
      %v438 = vunpack.c.l.b16 %v290
      %v439 = vunpack.c.l.b16 %v291
      %v440 = vunpack.c.l.b16 %v292
      %v441 = vunpack.c.l.b16 %v293
      %v442 = vpack.c.b16 %v379, %v378
      %v443 = vpack.c.b16 %v381, %v380
      %v444 = vpack.c.b16 %v383, %v382
      %v445 = vpack.c.b16 %v385, %v384
      %v446 = vpack.c.b16 %v387, %v386
      %v447 = vpack.c.b16 %v389, %v388
      %v448 = vpack.c.b16 %v391, %v390
      %v449 = vpack.c.b16 %v393, %v392
      %v450 = vpack.c.b16 %v395, %v394
      %v451 = vpack.c.b16 %v397, %v396
      %v452 = vpack.c.b16 %v399, %v398
      %v453 = vpack.c.b16 %v401, %v400
      %v454 = vpack.c.b16 %v403, %v402
      %v455 = vpack.c.b16 %v405, %v404
      %v456 = vpack.c.b16 %v407, %v406
      %v457 = vpack.c.b16 %v409, %v408
      %v458 = vpack.c.b16 %v411, %v410
      %v459 = vpack.c.b16 %v413, %v412
      %v460 = vpack.c.b16 %v415, %v414
      %v461 = vpack.c.b16 %v417, %v416
      %v462 = vpack.c.b16 %v419, %v418
      %v463 = vpack.c.b16 %v421, %v420
      %v464 = vpack.c.b16 %v423, %v422
      %v465 = vpack.c.b16 %v425, %v424
      %v466 = vpack.c.b16 %v427, %v426
      %v467 = vpack.c.b16 %v429, %v428
      %v468 = vpack.c.b16 %v431, %v430
      %v469 = vpack.c.b16 %v433, %v432
      %v470 = vpack.c.b16 %v435, %v434
      %v471 = vpack.c.b16 %v437, %v436
      %v472 = vpack.c.b16 %v439, %v438
      %v473 = vpack.c.b16 %v441, %v440
      %v522 = vunpack.c.l.b16 %v294
      %v523 = vunpack.c.l.b16 %v295
      %v524 = vunpack.c.l.b16 %v296
      %v525 = vunpack.c.l.b16 %v297
      %v526 = vunpack.c.l.b16 %v298
      %v527 = vunpack.c.l.b16 %v299
      %v528 = vunpack.c.l.b16 %v300
      %v529 = vunpack.c.l.b16 %v301
      %v530 = vunpack.c.l.b16 %v302
      %v531 = vunpack.c.l.b16 %v303
      %v532 = vunpack.c.l.b16 %v304
      %v533 = vunpack.c.l.b16 %v305
      %v534 = vunpack.c.l.b16 %v306
      %v535 = vunpack.c.l.b16 %v307
      %v536 = vunpack.c.l.b16 %v308
      %v537 = vunpack.c.l.b16 %v309
      %v538 = vpack.c.b16 %v523, %v522
      %v539 = vpack.c.b16 %v525, %v524
      %v540 = vpack.c.b16 %v527, %v526
      %v541 = vpack.c.b16 %v529, %v528
      %v542 = vpack.c.b16 %v531, %v530
      %v543 = vpack.c.b16 %v533, %v532
      %v544 = vpack.c.b16 %v535, %v534
      %v545 = vpack.c.b16 %v537, %v536
      %554 = vmatpush.bf16.msra.mxu0 %v545
      %555 = vmatpush.bf16.msra.mxu0 %v544
      %556 = vmatpush.bf16.msra.mxu0 %v543
      %557 = vmatpush.bf16.msra.mxu0 %v542
      %558 = vmatpush.bf16.msra.mxu0 %v541
      %559 = vmatpush.bf16.msra.mxu0 %v540
      %560 = vmatpush.bf16.msra.mxu0 %v539
      %561 = vmatpush.bf16.msra.mxu0 %v538
      %562 = vmatmul.bf16.gmra.mxu0 %v442
      %v563 = vpop.f32.mrf.mxu0
      %v564 = vadd.f32 %v312, %v563
      %v565 = vpop.f32.mrf.mxu0
      %v566 = vadd.f32 %v312, %v565
      %567 = vmatmul.bf16.gmra.mxu0 %v443
      %v568 = vpop.f32.mrf.mxu0
      %v569 = vadd.f32 %v312, %v568
      %v570 = vpop.f32.mrf.mxu0
      %v571 = vadd.f32 %v312, %v570
      %572 = vmatmul.bf16.gmra.mxu0 %v444
      %v573 = vpop.f32.mrf.mxu0
      %v574 = vadd.f32 %v312, %v573
      %v575 = vpop.f32.mrf.mxu0
      %v576 = vadd.f32 %v312, %v575
      %577 = vmatmul.bf16.gmra.mxu0 %v445
      %v578 = vpop.f32.mrf.mxu0
      %v579 = vadd.f32 %v312, %v578
      %v580 = vpop.f32.mrf.mxu0
      %v581 = vadd.f32 %v312, %v580
      %582 = vmatmul.bf16.gmra.mxu0 %v446
      %v583 = vpop.f32.mrf.mxu0
      %v584 = vadd.f32 %v312, %v583
      %v585 = vpop.f32.mrf.mxu0
      %v586 = vadd.f32 %v312, %v585
      %587 = vmatmul.bf16.gmra.mxu0 %v447
      %v588 = vpop.f32.mrf.mxu0
      %v589 = vadd.f32 %v312, %v588
      %v590 = vpop.f32.mrf.mxu0
      %v591 = vadd.f32 %v312, %v590
      %592 = vmatmul.bf16.gmra.mxu0 %v448
      %v593 = vpop.f32.mrf.mxu0
      %v594 = vadd.f32 %v312, %v593
      %v595 = vpop.f32.mrf.mxu0
      %v596 = vadd.f32 %v312, %v595
      %597 = vmatmul.bf16.gmra.mxu0 %v449
      %v598 = vpop.f32.mrf.mxu0
      %v599 = vadd.f32 %v312, %v598
      %v600 = vpop.f32.mrf.mxu0
      %v601 = vadd.f32 %v312, %v600
      %602 = vmatmul.bf16.gmra.mxu0 %v450
      %v603 = vpop.f32.mrf.mxu0
      %v604 = vadd.f32 %v312, %v603
      %v605 = vpop.f32.mrf.mxu0
      %v606 = vadd.f32 %v312, %v605
      %607 = vmatmul.bf16.gmra.mxu0 %v451
      %v608 = vpop.f32.mrf.mxu0
      %v609 = vadd.f32 %v312, %v608
      %v610 = vpop.f32.mrf.mxu0
      %v611 = vadd.f32 %v312, %v610
      %612 = vmatmul.bf16.gmra.mxu0 %v452
      %v613 = vpop.f32.mrf.mxu0
      %v614 = vadd.f32 %v312, %v613
      %v615 = vpop.f32.mrf.mxu0
      %v616 = vadd.f32 %v312, %v615
      %617 = vmatmul.bf16.gmra.mxu0 %v453
      %v618 = vpop.f32.mrf.mxu0
      %v619 = vadd.f32 %v312, %v618
      %v620 = vpop.f32.mrf.mxu0
      %v621 = vadd.f32 %v312, %v620
      %622 = vmatmul.bf16.gmra.mxu0 %v454
      %v623 = vpop.f32.mrf.mxu0
      %v624 = vadd.f32 %v312, %v623
      %v625 = vpop.f32.mrf.mxu0
      %v626 = vadd.f32 %v312, %v625
      %627 = vmatmul.bf16.gmra.mxu0 %v455
      %v628 = vpop.f32.mrf.mxu0
      %v629 = vadd.f32 %v312, %v628
      %v630 = vpop.f32.mrf.mxu0
      %v631 = vadd.f32 %v312, %v630
      %632 = vmatmul.bf16.gmra.mxu0 %v456
      %v633 = vpop.f32.mrf.mxu0
      %v634 = vadd.f32 %v312, %v633
      %v635 = vpop.f32.mrf.mxu0
      %v636 = vadd.f32 %v312, %v635
      %637 = vmatmul.bf16.gmra.mxu0 %v457
      %v638 = vpop.f32.mrf.mxu0
      %v639 = vadd.f32 %v312, %v638
      %v640 = vpop.f32.mrf.mxu0
      %v641 = vadd.f32 %v312, %v640
      %642 = vmatmul.bf16.gmra.mxu0 %v458
      %v643 = vpop.f32.mrf.mxu0
      %v644 = vadd.f32 %v312, %v643
      %v645 = vpop.f32.mrf.mxu0
      %v646 = vadd.f32 %v312, %v645
      %647 = vmatmul.bf16.gmra.mxu0 %v459
      %v648 = vpop.f32.mrf.mxu0
      %v649 = vadd.f32 %v312, %v648
      %v650 = vpop.f32.mrf.mxu0
      %v651 = vadd.f32 %v312, %v650
      %652 = vmatmul.bf16.gmra.mxu0 %v460
      %v653 = vpop.f32.mrf.mxu0
      %v654 = vadd.f32 %v312, %v653
      %v655 = vpop.f32.mrf.mxu0
      %v656 = vadd.f32 %v312, %v655
      %657 = vmatmul.bf16.gmra.mxu0 %v461
      %v658 = vpop.f32.mrf.mxu0
      %v659 = vadd.f32 %v312, %v658
      %v660 = vpop.f32.mrf.mxu0
      %v661 = vadd.f32 %v312, %v660
      %662 = vmatmul.bf16.gmra.mxu0 %v462
      %v663 = vpop.f32.mrf.mxu0
      %v664 = vadd.f32 %v312, %v663
      %v665 = vpop.f32.mrf.mxu0
      %v666 = vadd.f32 %v312, %v665
      %667 = vmatmul.bf16.gmra.mxu0 %v463
      %v668 = vpop.f32.mrf.mxu0
      %v669 = vadd.f32 %v312, %v668
      %v670 = vpop.f32.mrf.mxu0
      %v671 = vadd.f32 %v312, %v670
      %672 = vmatmul.bf16.gmra.mxu0 %v464
      %v673 = vpop.f32.mrf.mxu0
      %v674 = vadd.f32 %v312, %v673
      %v675 = vpop.f32.mrf.mxu0
      %v676 = vadd.f32 %v312, %v675
      %677 = vmatmul.bf16.gmra.mxu0 %v465
      %v678 = vpop.f32.mrf.mxu0
      %v679 = vadd.f32 %v312, %v678
      %v680 = vpop.f32.mrf.mxu0
      %v681 = vadd.f32 %v312, %v680
      %682 = vmatmul.bf16.gmra.mxu0 %v466
      %v683 = vpop.f32.mrf.mxu0
      %v684 = vadd.f32 %v312, %v683
      %v685 = vpop.f32.mrf.mxu0
      %v686 = vadd.f32 %v312, %v685
      %687 = vmatmul.bf16.gmra.mxu0 %v467
      %v688 = vpop.f32.mrf.mxu0
      %v689 = vadd.f32 %v312, %v688
      %v690 = vpop.f32.mrf.mxu0
      %v691 = vadd.f32 %v312, %v690
      %692 = vmatmul.bf16.gmra.mxu0 %v468
      %v693 = vpop.f32.mrf.mxu0
      %v694 = vadd.f32 %v312, %v693
      %v695 = vpop.f32.mrf.mxu0
      %v696 = vadd.f32 %v312, %v695
      %697 = vmatmul.bf16.gmra.mxu0 %v469
      %v698 = vpop.f32.mrf.mxu0
      %v699 = vadd.f32 %v312, %v698
      %v700 = vpop.f32.mrf.mxu0
      %v701 = vadd.f32 %v312, %v700
      %702 = vmatmul.bf16.gmra.mxu0 %v470
      %v703 = vpop.f32.mrf.mxu0
      %v704 = vadd.f32 %v312, %v703
      %v705 = vpop.f32.mrf.mxu0
      %v706 = vadd.f32 %v312, %v705
      %707 = vmatmul.bf16.gmra.mxu0 %v471
      %v708 = vpop.f32.mrf.mxu0
      %v709 = vadd.f32 %v312, %v708
      %v710 = vpop.f32.mrf.mxu0
      %v711 = vadd.f32 %v312, %v710
      %712 = vmatmul.bf16.gmra.mxu0 %v472
      %v713 = vpop.f32.mrf.mxu0
      %v714 = vadd.f32 %v312, %v713
      %v715 = vpop.f32.mrf.mxu0
      %v716 = vadd.f32 %v312, %v715
      %717 = vmatmul.bf16.gmra.mxu0 %v473
      %v718 = vpop.f32.mrf.mxu0
      %v719 = vadd.f32 %v312, %v718
      %v720 = vpop.f32.mrf.mxu0
      %v721 = vadd.f32 %v312, %v720
      %722 = vdwg.mxu0
      %v723 = vtanh.pop %v564
      %v724 = vtanh.pop %v566
      %v725 = vtanh.pop %v569
      %v726 = vtanh.pop %v571
      %v727 = vtanh.pop %v574
      %v728 = vtanh.pop %v576
      %v729 = vtanh.pop %v579
      %v730 = vtanh.pop %v581
      %v731 = vtanh.pop %v584
      %v732 = vtanh.pop %v586
      %v733 = vtanh.pop %v589
      %v734 = vtanh.pop %v591
      %v735 = vtanh.pop %v594
      %v736 = vtanh.pop %v596
      %v737 = vtanh.pop %v599
      %v738 = vtanh.pop %v601
      %v739 = vtanh.pop %v604
      %v740 = vtanh.pop %v606
      %v741 = vtanh.pop %v609
      %v742 = vtanh.pop %v611
      %v743 = vtanh.pop %v614
      %v744 = vtanh.pop %v616
      %v745 = vtanh.pop %v619
      %v746 = vtanh.pop %v621
      %v747 = vtanh.pop %v624
      %v748 = vtanh.pop %v626
      %v749 = vtanh.pop %v629
      %v750 = vtanh.pop %v631
      %v751 = vtanh.pop %v634
      %v752 = vtanh.pop %v636
      %v753 = vtanh.pop %v639
      %v754 = vtanh.pop %v641
      %v755 = vtanh.pop %v644
      %v756 = vtanh.pop %v646
      %v757 = vtanh.pop %v649
      %v758 = vtanh.pop %v651
      %v759 = vtanh.pop %v654
      %v760 = vtanh.pop %v656
      %v761 = vtanh.pop %v659
      %v762 = vtanh.pop %v661
      %v763 = vtanh.pop %v664
      %v764 = vtanh.pop %v666
      %v765 = vtanh.pop %v669
      %v766 = vtanh.pop %v671
      %v767 = vtanh.pop %v674
      %v768 = vtanh.pop %v676
      %v769 = vtanh.pop %v679
      %v770 = vtanh.pop %v681
      %v771 = vtanh.pop %v684
      %v772 = vtanh.pop %v686
      %v773 = vtanh.pop %v689
      %v774 = vtanh.pop %v691
      %v775 = vtanh.pop %v694
      %v776 = vtanh.pop %v696
      %v777 = vtanh.pop %v699
      %v778 = vtanh.pop %v701
      %v779 = vtanh.pop %v704
      %v780 = vtanh.pop %v706
      %v781 = vtanh.pop %v709
      %v782 = vtanh.pop %v711
      %v783 = vtanh.pop %v714
      %v784 = vtanh.pop %v716
      %v785 = vtanh.pop %v719
      %v786 = vtanh.pop %v721
      %787 = vst [vmem:[%s228] sm:$0xff] %v723
      %788 = vst [vmem:[%s228 + $0x8] sm:$0xff] %v724
      %789 = vst [vmem:[%s228 + $0x10] sm:$0xff] %v725
      %790 = vst [vmem:[%s228 + $0x18] sm:$0xff] %v726
      %791 = vst [vmem:[%s228 + $0x20] sm:$0xff] %v727
      %792 = vst [vmem:[%s228 + $0x28] sm:$0xff] %v728
      %793 = vst [vmem:[%s228 + $0x30] sm:$0xff] %v729
      %794 = vst [vmem:[%s228 + $0x38] sm:$0xff] %v730
      %795 = vst [vmem:[%s228 + $0x40] sm:$0xff] %v731
      %796 = vst [vmem:[%s228 + $0x48] sm:$0xff] %v732
      %797 = vst [vmem:[%s228 + $0x50] sm:$0xff] %v733
      %798 = vst [vmem:[%s228 + $0x58] sm:$0xff] %v734
      %799 = vst [vmem:[%s228 + $0x60] sm:$0xff] %v735
      %800 = vst [vmem:[%s228 + $0x68] sm:$0xff] %v736
      %801 = vst [vmem:[%s228 + $0x70] sm:$0xff] %v737
      %802 = vst [vmem:[%s228 + $0x78] sm:$0xff] %v738
      %803 = vst [vmem:[%s228 + $0x80] sm:$0xff] %v739
      %804 = vst [vmem:[%s228 + $0x88] sm:$0xff] %v740
      %805 = vst [vmem:[%s228 + $0x90] sm:$0xff] %v741
      %806 = vst [vmem:[%s228 + $0x98] sm:$0xff] %v742
      %807 = vst [vmem:[%s228 + $0xa0] sm:$0xff] %v743
      %808 = vst [vmem:[%s228 + $0xa8] sm:$0xff] %v744
      %809 = vst [vmem:[%s228 + $0xb0] sm:$0xff] %v745
      %810 = vst [vmem:[%s228 + $0xb8] sm:$0xff] %v746
      %811 = vst [vmem:[%s228 + $0xc0] sm:$0xff] %v747
      %812 = vst [vmem:[%s228 + $0xc8] sm:$0xff] %v748
      %813 = vst [vmem:[%s228 + $0xd0] sm:$0xff] %v749
      %814 = vst [vmem:[%s228 + $0xd8] sm:$0xff] %v750
      %815 = vst [vmem:[%s228 + $0xe0] sm:$0xff] %v751
      %816 = vst [vmem:[%s228 + $0xe8] sm:$0xff] %v752
      %817 = vst [vmem:[%s228 + $0xf0] sm:$0xff] %v753
      %818 = vst [vmem:[%s228 + $0xf8] sm:$0xff] %v754
      %819 = vst [vmem:[%s228 + $0x100] sm:$0xff] %v755
      %820 = vst [vmem:[%s228 + $0x108] sm:$0xff] %v756
      %821 = vst [vmem:[%s228 + $0x110] sm:$0xff] %v757
      %822 = vst [vmem:[%s228 + $0x118] sm:$0xff] %v758
      %823 = vst [vmem:[%s228 + $0x120] sm:$0xff] %v759
      %824 = vst [vmem:[%s228 + $0x128] sm:$0xff] %v760
      %825 = vst [vmem:[%s228 + $0x130] sm:$0xff] %v761
      %826 = vst [vmem:[%s228 + $0x138] sm:$0xff] %v762
      %827 = vst [vmem:[%s228 + $0x140] sm:$0xff] %v763
      %828 = vst [vmem:[%s228 + $0x148] sm:$0xff] %v764
      %829 = vst [vmem:[%s228 + $0x150] sm:$0xff] %v765
      %830 = vst [vmem:[%s228 + $0x158] sm:$0xff] %v766
      %831 = vst [vmem:[%s228 + $0x160] sm:$0xff] %v767
      %832 = vst [vmem:[%s228 + $0x168] sm:$0xff] %v768
      %833 = vst [vmem:[%s228 + $0x170] sm:$0xff] %v769
      %834 = vst [vmem:[%s228 + $0x178] sm:$0xff] %v770
      %835 = vst [vmem:[%s228 + $0x180] sm:$0xff] %v771
      %836 = vst [vmem:[%s228 + $0x188] sm:$0xff] %v772
      %837 = vst [vmem:[%s228 + $0x190] sm:$0xff] %v773
      %838 = vst [vmem:[%s228 + $0x198] sm:$0xff] %v774
      %839 = vst [vmem:[%s228 + $0x1a0] sm:$0xff] %v775
      %840 = vst [vmem:[%s228 + $0x1a8] sm:$0xff] %v776
      %841 = vst [vmem:[%s228 + $0x1b0] sm:$0xff] %v777
      %842 = vst [vmem:[%s228 + $0x1b8] sm:$0xff] %v778
      %843 = vst [vmem:[%s228 + $0x1c0] sm:$0xff] %v779
      %844 = vst [vmem:[%s228 + $0x1c8] sm:$0xff] %v780
      %845 = vst [vmem:[%s228 + $0x1d0] sm:$0xff] %v781
      %846 = vst [vmem:[%s228 + $0x1d8] sm:$0xff] %v782
      %847 = vst [vmem:[%s228 + $0x1e0] sm:$0xff] %v783
      %848 = vst [vmem:[%s228 + $0x1e8] sm:$0xff] %v784
      %849 = vst [vmem:[%s228 + $0x1f0] sm:$0xff] %v785
      %850 = vst [vmem:[%s228 + $0x1f8] sm:$0xff] %v786
      %s851 = smul.u32 64, %s19
      %p852 = scmp.lt.s32.totalorder %s18, 3
      %s853 = scalar_select %p852, %s18, 3
      %p854 = scmp.lt.s32.totalorder %s851, 63
      %s855 = scalar_select %p854, %s851, 63
      %s856 = smul.addr %s853, 64
      %s857 = sadd.s32 %s855, %s856
      %s858 = smul.addr %s857, 8
      %s859 = scalar_lea.vmem %s3, %s858
      // Predicated region
      $region33: #{unet_generator_forward.33} parent=31 // pred_check
        %p860 = pneg %p121
      $region34: #{unet_generator_forward.33} parent=31 // pred_check_branch
        %862 = sbr.rel (%p860) target = $region36
      $region35: #{unet_generator_forward.33} parent=31 // pred_region
        %s863 = smul.u32 64, %s19
      $region36: #{unet_generator_forward.33} parent=31 // pred_fallthru
        _
    $region32: #{unet_generator_forward.33} parent=5 // pred_fallthru
      _
    %p864 = scmp.le.s32.totalorder 2, %s9
    // Predicated region
    $region37: #{unet_generator_forward.33} parent=5 // pred_check
      %p865 = pneg %p864
    $region38: #{unet_generator_forward.33} parent=5 // pred_check_branch
      %867 = sbr.rel (%p865) target = $region40
    $region39: #{unet_generator_forward.33} parent=5 // pred_region
      %s868 = ssub.s32 %s9, 2
      // Predicated region
      $region41: #{unet_generator_forward.33} parent=39 // pred_check
        %p869 = pneg %p127
      $region42: #{unet_generator_forward.33} parent=39 // pred_check_branch
        %871 = sbr.rel (%p869) target = $region44
      $region43: #{unet_generator_forward.33} parent=39 // pred_region
        %s872 = smul.u32 64, %s21
        %p873 = scmp.lt.s32.totalorder %s20, 3
        %s874 = scalar_select %p873, %s20, 3
        %p875 = scmp.lt.s32.totalorder %s872, 63
        %s876 = scalar_select %p875, %s872, 63
        %s877 = smul.addr %s874, 64
        %s878 = sadd.s32 %s876, %s877
        %s879 = smul.addr %s878, 8
        %s880 = scalar_lea.vmem %s3, %s879
      $region44: #{unet_generator_forward.33} parent=39 // pred_fallthru
        _
    $region40: #{unet_generator_forward.33} parent=5 // pred_fallthru
      _
  $region6: #{unet_generator_forward.33} parent=0 // loop_footer
    %s13 = sadd.s32 1, %s9
  $region7: #{unet_generator_forward.33} parent=0 // loop_footer_branch
    %8 = sbr.rel target = $region3
  $region8: #{unet_generator_forward.33} parent=0 // loop_exit
    _

</llo_original>
